<compile_context>
chip_gen: v7x
topology: tpu7x:2x2x1
jax: 0.10.0
libtpu: 0.0.40
codegen_flags: <defaults>
</compile_context>

<pallas_src>
import jax
import jax.numpy as jnp
from jax.experimental import pallas as pl
from jax.experimental.pallas import tpu as pltpu


def _sigmoid(x):
    # Shared by kernel and reference so the only numerical differences are
    # accumulation order / transcendental lowering.
    return 1.0 / (1.0 + jnp.exp(-x))


# ----------------------------------------------------------------------------
# Fused Pallas kernel: pad + 3x3 conv (split weights) + bias + gating
# ----------------------------------------------------------------------------
def _hidden_reinforcer_kernel(g_ref, h_ref, wg_ref, wh_ref, b_ref, o_ref,
                              gpad_ref, hpad_ref):
    """One (batch*object) image per grid step.

    g_ref    : (1, H, W, Gd)     bf16
    h_ref    : (1, H, W, Hd)     f32
    wg_ref   : (3, 3, Gd, 3*Hd)  bf16  (HWIO, g-channel slice of the conv weight)
    wh_ref   : (3, 3, Hd, 3*Hd)  bf16  (HWIO, h-channel slice of the conv weight)
    b_ref    : (1, 3*Hd)         f32
    o_ref    : (1, H, W, Hd)     f32
    gpad_ref : (H+2, Wp, Gd)     bf16 scratch  (row 0 / H+1 and cols >= W are zero)
    hpad_ref : (H+2, Wp, Hd)     bf16 scratch
    """
    _, H, W, Gd = g_ref.shape
    Hd = h_ref.shape[3]
    Cout = wg_ref.shape[3]                 # = 3 * Hd
    Wp = gpad_ref.shape[1]                 # padded width, multiple of 8 -> free reshapes
    n_rows = H * Wp

    f32 = jnp.float32
    bf16 = jnp.bfloat16

    g_val = g_ref[0]                       # (H, W, Gd)  bf16
    h_val = h_ref[0]                       # (H, W, Hd)  f32

    # --- build zero-halo padded tiles in VMEM scratch (rewritten every step) ----
    gpad_ref[0:1, :, :] = jnp.zeros((1, Wp, Gd), bf16)
    gpad_ref[H + 1:H + 2, :, :] = jnp.zeros((1, Wp, Gd), bf16)
    gpad_ref[:, W:Wp, :] = jnp.zeros((H + 2, Wp - W, Gd), bf16)
    gpad_ref[1:H + 1, :W, :] = g_val

    hpad_ref[0:1, :, :] = jnp.zeros((1, Wp, Hd), bf16)
    hpad_ref[H + 1:H + 2, :, :] = jnp.zeros((1, Wp, Hd), bf16)
    hpad_ref[:, W:Wp, :] = jnp.zeros((H + 2, Wp - W, Hd), bf16)
    hpad_ref[1:H + 1, :W, :] = h_val.astype(bf16)

    # --- 3x3 conv: 9 taps x {g,h} full-width bf16 matmuls, f32 accumulation ------
    # accs[dx] accumulates sum_dy (strip_dy @ w[dy, dx]); the +-1 column shift for
    # dx=0/2 is applied once at the end via pltpu.roll (wrapped elements land only in
    # zero / discarded padded columns).
    bias = b_ref[...].astype(f32)                                   # (1, Cout)
    accs = [
        jnp.zeros((n_rows, Cout), f32),
        jnp.broadcast_to(bias, (n_rows, Cout)),                     # centre tap + bias
        jnp.zeros((n_rows, Cout), f32),
    ]
    for dy in range(3):
        # Leading-axis slice + sublane-aligned merge: no strided patch copies.
        sg = gpad_ref[dy:dy + H, :, :].reshape(n_rows, Gd)          # (H*Wp, Gd) bf16
        sh = hpad_ref[dy:dy + H, :, :].reshape(n_rows, Hd)          # (H*Wp, Hd) bf16
        for dx in range(3):
            accs[dx] = (accs[dx]
                        + jnp.dot(sg, wg_ref[dy, dx], preferred_element_type=f32)
                        + jnp.dot(sh, wh_ref[dy, dx], preferred_element_type=f32))

    vals = (accs[1]
            + pltpu.roll(accs[0], 1, axis=0)                        # tap at col j-1
            + pltpu.roll(accs[2], n_rows - 1, axis=0))              # tap at col j+1
    vals = vals.reshape(H, Wp, Cout)[:, :W, :]                      # (H, W, 3*Hd) f32

    # --- gating (f32) -------------------------------------------------------------
    forget = _sigmoid(vals[..., :Hd])
    update = _sigmoid(vals[..., Hd:2 * Hd])
    cand = jnp.tanh(vals[..., 2 * Hd:])
    new_h = forget * h_val * (1.0 - update) + update * cand
    o_ref[0] = new_h.astype(o_ref.dtype)


# ----------------------------------------------------------------------------
# Wrapper
# ----------------------------------------------------------------------------
def hidden_reinforcer_forward(params, g, h):
    """g: [B, N, g_dim, H, W] f32, h: [B, N, hidden_dim, H, W] f32 -> new_h like h."""
    B, N, Gd, H, W = g.shape
    Hd = h.shape[2]
    Cout = 3 * Hd
    Wp = ((W + 1 + 7) // 8) * 8            # >= W+1 zero columns, multiple of 8

    # NCHW -> NHWC, object groups folded into the batch / grid dimension.
    # g is only used by the conv, so it travels to HBM as bf16 (half the traffic);
    # h stays f32 because the gating multiplies by it.
    g_n = jnp.transpose(g.reshape(B * N, Gd, H, W), (0, 2, 3, 1)).astype(jnp.bfloat16)
    h_n = jnp.transpose(h.reshape(B * N, Hd, H, W), (0, 2, 3, 1))

    w_bf16 = params["w"].astype(jnp.bfloat16)            # (3, 3, Gd+Hd, Cout) HWIO
    wg = w_bf16[:, :, :Gd, :]                            # conv(cat([g,h])) == ...
    wh = w_bf16[:, :, Gd:, :]                            # ... conv_g(g) + conv_h(h)
    b2 = params["b"].reshape(1, Cout).astype(jnp.float32)

    out = pl.pallas_call(
        _hidden_reinforcer_kernel,
        out_shape=jax.ShapeDtypeStruct((B * N, H, W, Hd), h.dtype),
        grid_spec=pltpu.PrefetchScalarGridSpec(
            num_scalar_prefetch=0,
            grid=(B * N,),
            in_specs=[
                pl.BlockSpec((1, H, W, Gd), lambda i: (i, 0, 0, 0)),
                pl.BlockSpec((1, H, W, Hd), lambda i: (i, 0, 0, 0)),
                pl.BlockSpec((3, 3, Gd, Cout), lambda i: (0, 0, 0, 0)),
                pl.BlockSpec((3, 3, Hd, Cout), lambda i: (0, 0, 0, 0)),
                pl.BlockSpec((1, Cout), lambda i: (0, 0)),
            ],
            out_specs=pl.BlockSpec((1, H, W, Hd), lambda i: (i, 0, 0, 0)),
            scratch_shapes=[
                pltpu.VMEM((H + 2, Wp, Gd), jnp.bfloat16),
                pltpu.VMEM((H + 2, Wp, Hd), jnp.bfloat16),
            ],
        ),
        compiler_params=pltpu.CompilerParams(
            dimension_semantics=("parallel",),
            vmem_limit_bytes=32 * 1024 * 1024,
        ),
    )(g_n, h_n, wg, wh, b2)

    # Back to PyTorch layout [B, N, hidden_dim, H, W].
    return jnp.transpose(out, (0, 3, 1, 2)).reshape(B, N, Hd, H, W)


# ----------------------------------------------------------------------------
# Deterministic parameter init (shapes follow the module's __init__)
# ----------------------------------------------------------------------------
def init_params(key, g_dim, hidden_dim):
    kw, kb = jax.random.split(key)
    cin = g_dim + hidden_dim
    cout = 3 * hidden_dim
    fan_in, fan_out = 9 * cin, 9 * cout
    std = (2.0 / (fan_in + fan_out)) ** 0.5            # xavier_normal_
    w = std * jax.random.normal(kw, (3, 3, cin, cout), jnp.float32)   # HWIO
    bound = 1.0 / (fan_in ** 0.5)                      # PyTorch Conv2d bias default
    b = jax.random.uniform(kb, (cout,), jnp.float32, -bound, bound)
    return {"w": w, "b": b}


# ----------------------------------------------------------------------------
# Pure-JAX reference (same precision choices: bf16 matmul inputs, f32 accum)
# ----------------------------------------------------------------------------
def ref_forward(params, g, h):
    B, N, Gd, H, W = g.shape
    Hd = h.shape[2]
    x = jnp.concatenate([g, h], axis=2).reshape(B * N, Gd + Hd, H, W)
    x = jnp.transpose(x, (0, 2, 3, 1))                 # NHWC
    y = jax.lax.conv_general_dilated(
        x.astype(jnp.bfloat16), params["w"].astype(jnp.bfloat16),
        (1, 1), "SAME", dimension_numbers=("NHWC", "HWIO", "NHWC"),
        preferred_element_type=jnp.float32)
    y = y + params["b"].astype(jnp.float32)
    forget = _sigmoid(y[..., :Hd])
    update = _sigmoid(y[..., Hd:2 * Hd])
    cand = jnp.tanh(y[..., 2 * Hd:])
    h_n = jnp.transpose(h.reshape(B * N, Hd, H, W), (0, 2, 3, 1)).astype(jnp.float32)
    new_h = forget * h_n * (1.0 - update) + update * cand
    return jnp.transpose(new_h, (0, 3, 1, 2)).reshape(B, N, Hd, H, W)


# ----------------------------------------------------------------------------
if __name__ == "__main__":
    key = jax.random.PRNGKey(0)
    B, N = 2, 2
    g_dim, hidden_dim = 8, 16
    H = W = 16

    kg, kh, kp = jax.random.split(key, 3)
    g = jax.random.normal(kg, (B, N, g_dim, H, W), jnp.float32)
    h = jax.random.normal(kh, (B, N, hidden_dim, H, W), jnp.float32)
    params = init_params(kp, g_dim, hidden_dim)

    fwd = jax.jit(hidden_reinforcer_forward)
    out = jax.block_until_ready(fwd(params, g, h))
    assert out.shape == (B, N, hidden_dim, H, W), out.shape

    ref = jax.block_until_ready(ref_forward(params, g, h))
    max_err = float(jnp.max(jnp.abs(out - ref)))
    assert max_err < 5e-3, f"mismatch vs reference, max abs err = {max_err}"

    print("KERNEL_OK")
</pallas_src>

<mosaic_0001>
module attributes {stable_mosaic.version = 11 : i64} {
  func.func @_hidden_reinforcer_kernel(%arg0: i32, %arg1: memref<1x16x16x8xbf16, #tpu.memory_space<vmem>>, %arg2: memref<1x16x16x16xf32, #tpu.memory_space<vmem>>, %arg3: memref<3x3x8x48xbf16, #tpu.memory_space<vmem>>, %arg4: memref<3x3x16x48xbf16, #tpu.memory_space<vmem>>, %arg5: memref<1x48xf32, #tpu.memory_space<vmem>>, %arg6: memref<1x16x16x16xf32, #tpu.memory_space<vmem>>, %arg7: memref<18x24x8xbf16, #tpu.memory_space<vmem>>, %arg8: memref<18x24x16xbf16, #tpu.memory_space<vmem>>) attributes {dimension_semantics = [#tpu.dimension_semantics<parallel>], iteration_bounds = array<i64: 4>, scalar_prefetch = 0 : i64, scratch_operands = 2 : i64, tpu.core_type = #tpu.core_type<tc>, window_params = [{transform_indices = @transform_0, window_bounds = array<i64: 1, 16, 16, 8>}, {transform_indices = @transform_1, window_bounds = array<i64: 1, 16, 16, 16>}, {pipeline_mode = #tpu.pipeline_mode<synchronous>, transform_indices = @transform_2, window_bounds = array<i64: 3, 3, 8, 48>}, {pipeline_mode = #tpu.pipeline_mode<synchronous>, transform_indices = @transform_3, window_bounds = array<i64: 3, 3, 16, 48>}, {pipeline_mode = #tpu.pipeline_mode<synchronous>, transform_indices = @transform_4, window_bounds = array<i64: 1, 48>}, {transform_indices = @transform_5, window_bounds = array<i64: 1, 16, 16, 16>}]} {
    %c0 = arith.constant 0 : index
    %c0_0 = arith.constant 0 : index
    %c0_1 = arith.constant 0 : index
    %c0_2 = arith.constant 0 : index
    %0 = vector.load %arg1[%c0, %c0_0, %c0_1, %c0_2] : memref<1x16x16x8xbf16, #tpu.memory_space<vmem>>, vector<1x16x16x8xbf16>
    %1 = vector.shape_cast %0 : vector<1x16x16x8xbf16> to vector<16x16x8xbf16>
    %c0_3 = arith.constant 0 : index
    %c0_4 = arith.constant 0 : index
    %c0_5 = arith.constant 0 : index
    %c0_6 = arith.constant 0 : index
    %2 = vector.load %arg2[%c0_3, %c0_4, %c0_5, %c0_6] : memref<1x16x16x16xf32, #tpu.memory_space<vmem>>, vector<1x16x16x16xf32>
    %3 = vector.shape_cast %2 : vector<1x16x16x16xf32> to vector<16x16x16xf32>
    %cst = arith.constant 0.000000e+00 : bf16
    %4 = vector.broadcast %cst : bf16 to vector<1x24x8xbf16>
    %c0_7 = arith.constant 0 : index
    %c0_8 = arith.constant 0 : index
    %c0_9 = arith.constant 0 : index
    %5 = vector.load %arg7[%c0_7, %c0_8, %c0_9] : memref<18x24x8xbf16, #tpu.memory_space<vmem>>, vector<1x24x8xbf16>
    tpu.vector_store %arg7[%c0_7, %c0_8, %c0_9], %4 {strides = array<i32>} : memref<18x24x8xbf16, #tpu.memory_space<vmem>>, vector<1x24x8xbf16>,
    %cst_10 = arith.constant 0.000000e+00 : bf16
    %6 = vector.broadcast %cst_10 : bf16 to vector<1x24x8xbf16>
    %c17 = arith.constant 17 : index
    %c0_11 = arith.constant 0 : index
    %c0_12 = arith.constant 0 : index
    %7 = vector.load %arg7[%c17, %c0_11, %c0_12] : memref<18x24x8xbf16, #tpu.memory_space<vmem>>, vector<1x24x8xbf16>
    tpu.vector_store %arg7[%c17, %c0_11, %c0_12], %6 {strides = array<i32>} : memref<18x24x8xbf16, #tpu.memory_space<vmem>>, vector<1x24x8xbf16>,
    %cst_13 = arith.constant 0.000000e+00 : bf16
    %8 = vector.broadcast %cst_13 : bf16 to vector<18x8x8xbf16>
    %c0_14 = arith.constant 0 : index
    %c16 = arith.constant 16 : index
    %c0_15 = arith.constant 0 : index
    %9 = vector.load %arg7[%c0_14, %c16, %c0_15] : memref<18x24x8xbf16, #tpu.memory_space<vmem>>, vector<18x8x8xbf16>
    tpu.vector_store %arg7[%c0_14, %c16, %c0_15], %8 {strides = array<i32>} : memref<18x24x8xbf16, #tpu.memory_space<vmem>>, vector<18x8x8xbf16>,
    %c1 = arith.constant 1 : index
    %c0_16 = arith.constant 0 : index
    %c0_17 = arith.constant 0 : index
    %10 = vector.load %arg7[%c1, %c0_16, %c0_17] : memref<18x24x8xbf16, #tpu.memory_space<vmem>>, vector<16x16x8xbf16>
    tpu.vector_store %arg7[%c1, %c0_16, %c0_17], %1 {strides = array<i32>} : memref<18x24x8xbf16, #tpu.memory_space<vmem>>, vector<16x16x8xbf16>,
    %cst_18 = arith.constant 0.000000e+00 : bf16
    %11 = vector.broadcast %cst_18 : bf16 to vector<1x24x16xbf16>
    %c0_19 = arith.constant 0 : index
    %c0_20 = arith.constant 0 : index
    %c0_21 = arith.constant 0 : index
    %12 = vector.load %arg8[%c0_19, %c0_20, %c0_21] : memref<18x24x16xbf16, #tpu.memory_space<vmem>>, vector<1x24x16xbf16>
    tpu.vector_store %arg8[%c0_19, %c0_20, %c0_21], %11 {strides = array<i32>} : memref<18x24x16xbf16, #tpu.memory_space<vmem>>, vector<1x24x16xbf16>,
    %cst_22 = arith.constant 0.000000e+00 : bf16
    %13 = vector.broadcast %cst_22 : bf16 to vector<1x24x16xbf16>
    %c17_23 = arith.constant 17 : index
    %c0_24 = arith.constant 0 : index
    %c0_25 = arith.constant 0 : index
    %14 = vector.load %arg8[%c17_23, %c0_24, %c0_25] : memref<18x24x16xbf16, #tpu.memory_space<vmem>>, vector<1x24x16xbf16>
    tpu.vector_store %arg8[%c17_23, %c0_24, %c0_25], %13 {strides = array<i32>} : memref<18x24x16xbf16, #tpu.memory_space<vmem>>, vector<1x24x16xbf16>,
    %cst_26 = arith.constant 0.000000e+00 : bf16
    %15 = vector.broadcast %cst_26 : bf16 to vector<18x8x16xbf16>
    %c0_27 = arith.constant 0 : index
    %c16_28 = arith.constant 16 : index
    %c0_29 = arith.constant 0 : index
    %16 = vector.load %arg8[%c0_27, %c16_28, %c0_29] : memref<18x24x16xbf16, #tpu.memory_space<vmem>>, vector<18x8x16xbf16>
    tpu.vector_store %arg8[%c0_27, %c16_28, %c0_29], %15 {strides = array<i32>} : memref<18x24x16xbf16, #tpu.memory_space<vmem>>, vector<18x8x16xbf16>,
    %17 = arith.truncf %3 : vector<16x16x16xf32> to vector<16x16x16xbf16>
    %c1_30 = arith.constant 1 : index
    %c0_31 = arith.constant 0 : index
    %c0_32 = arith.constant 0 : index
    %18 = vector.load %arg8[%c1_30, %c0_31, %c0_32] : memref<18x24x16xbf16, #tpu.memory_space<vmem>>, vector<16x16x16xbf16>
    tpu.vector_store %arg8[%c1_30, %c0_31, %c0_32], %17 {strides = array<i32>} : memref<18x24x16xbf16, #tpu.memory_space<vmem>>, vector<16x16x16xbf16>,
    %c0_33 = arith.constant 0 : index
    %c0_34 = arith.constant 0 : index
    %19 = vector.load %arg5[%c0_33, %c0_34] : memref<1x48xf32, #tpu.memory_space<vmem>>, vector<1x48xf32>
    %cst_35 = arith.constant 0.000000e+00 : f32
    %20 = vector.broadcast %cst_35 : f32 to vector<384x48xf32>
    %21 = vector.shape_cast %19 : vector<1x48xf32> to vector<1x48xf32>
    %22 = vector.broadcast %21 : vector<1x48xf32> to vector<384x48xf32>
    %cst_36 = arith.constant 0.000000e+00 : f32
    %23 = vector.broadcast %cst_36 : f32 to vector<384x48xf32>
    %c0_37 = arith.constant 0 : index
    %c0_38 = arith.constant 0 : index
    %c0_39 = arith.constant 0 : index
    %24 = vector.load %arg7[%c0_37, %c0_38, %c0_39] : memref<18x24x8xbf16, #tpu.memory_space<vmem>>, vector<16x24x8xbf16>
    %25 = vector.shape_cast %24 : vector<16x24x8xbf16> to vector<384x8xbf16>
    %c0_40 = arith.constant 0 : index
    %c0_41 = arith.constant 0 : index
    %c0_42 = arith.constant 0 : index
    %26 = vector.load %arg8[%c0_40, %c0_41, %c0_42] : memref<18x24x16xbf16, #tpu.memory_space<vmem>>, vector<16x24x16xbf16>
    %27 = vector.shape_cast %26 : vector<16x24x16xbf16> to vector<384x16xbf16>
    %c0_43 = arith.constant 0 : index
    %c0_44 = arith.constant 0 : index
    %c0_45 = arith.constant 0 : index
    %c0_46 = arith.constant 0 : index
    %28 = vector.load %arg3[%c0_43, %c0_44, %c0_45, %c0_46] : memref<3x3x8x48xbf16, #tpu.memory_space<vmem>>, vector<1x1x8x48xbf16>
    %29 = vector.shape_cast %28 : vector<1x1x8x48xbf16> to vector<8x48xbf16>
    %cst_47 = arith.constant dense<0.000000e+00> : vector<384x48xf32>
    %30 = tpu.matmul %25, %29, %cst_47 {dimension_numbers = #tpu.dot_dimension_numbers<[1], [0], [0], [1], [0, 0, 1, 1], [], []>} : vector<384x8xbf16>, vector<8x48xbf16>, vector<384x48xf32> -> vector<384x48xf32>
    %31 = arith.addf %20, %30 : vector<384x48xf32>
    %c0_48 = arith.constant 0 : index
    %c0_49 = arith.constant 0 : index
    %c0_50 = arith.constant 0 : index
    %c0_51 = arith.constant 0 : index
    %32 = vector.load %arg4[%c0_48, %c0_49, %c0_50, %c0_51] : memref<3x3x16x48xbf16, #tpu.memory_space<vmem>>, vector<1x1x16x48xbf16>
    %33 = vector.shape_cast %32 : vector<1x1x16x48xbf16> to vector<16x48xbf16>
    %cst_52 = arith.constant dense<0.000000e+00> : vector<384x48xf32>
    %34 = tpu.matmul %27, %33, %cst_52 {dimension_numbers = #tpu.dot_dimension_numbers<[1], [0], [0], [1], [0, 0, 1, 1], [], []>} : vector<384x16xbf16>, vector<16x48xbf16>, vector<384x48xf32> -> vector<384x48xf32>
    %35 = arith.addf %31, %34 : vector<384x48xf32>
    %c0_53 = arith.constant 0 : index
    %c1_54 = arith.constant 1 : index
    %c0_55 = arith.constant 0 : index
    %c0_56 = arith.constant 0 : index
    %36 = vector.load %arg3[%c0_53, %c1_54, %c0_55, %c0_56] : memref<3x3x8x48xbf16, #tpu.memory_space<vmem>>, vector<1x1x8x48xbf16>
    %37 = vector.shape_cast %36 : vector<1x1x8x48xbf16> to vector<8x48xbf16>
    %cst_57 = arith.constant dense<0.000000e+00> : vector<384x48xf32>
    %38 = tpu.matmul %25, %37, %cst_57 {dimension_numbers = #tpu.dot_dimension_numbers<[1], [0], [0], [1], [0, 0, 1, 1], [], []>} : vector<384x8xbf16>, vector<8x48xbf16>, vector<384x48xf32> -> vector<384x48xf32>
    %39 = arith.addf %22, %38 : vector<384x48xf32>
    %c0_58 = arith.constant 0 : index
    %c1_59 = arith.constant 1 : index
    %c0_60 = arith.constant 0 : index
    %c0_61 = arith.constant 0 : index
    %40 = vector.load %arg4[%c0_58, %c1_59, %c0_60, %c0_61] : memref<3x3x16x48xbf16, #tpu.memory_space<vmem>>, vector<1x1x16x48xbf16>
    %41 = vector.shape_cast %40 : vector<1x1x16x48xbf16> to vector<16x48xbf16>
    %cst_62 = arith.constant dense<0.000000e+00> : vector<384x48xf32>
    %42 = tpu.matmul %27, %41, %cst_62 {dimension_numbers = #tpu.dot_dimension_numbers<[1], [0], [0], [1], [0, 0, 1, 1], [], []>} : vector<384x16xbf16>, vector<16x48xbf16>, vector<384x48xf32> -> vector<384x48xf32>
    %43 = arith.addf %39, %42 : vector<384x48xf32>
    %c0_63 = arith.constant 0 : index
    %c2 = arith.constant 2 : index
    %c0_64 = arith.constant 0 : index
    %c0_65 = arith.constant 0 : index
    %44 = vector.load %arg3[%c0_63, %c2, %c0_64, %c0_65] : memref<3x3x8x48xbf16, #tpu.memory_space<vmem>>, vector<1x1x8x48xbf16>
    %45 = vector.shape_cast %44 : vector<1x1x8x48xbf16> to vector<8x48xbf16>
    %cst_66 = arith.constant dense<0.000000e+00> : vector<384x48xf32>
    %46 = tpu.matmul %25, %45, %cst_66 {dimension_numbers = #tpu.dot_dimension_numbers<[1], [0], [0], [1], [0, 0, 1, 1], [], []>} : vector<384x8xbf16>, vector<8x48xbf16>, vector<384x48xf32> -> vector<384x48xf32>
    %47 = arith.addf %23, %46 : vector<384x48xf32>
    %c0_67 = arith.constant 0 : index
    %c2_68 = arith.constant 2 : index
    %c0_69 = arith.constant 0 : index
    %c0_70 = arith.constant 0 : index
    %48 = vector.load %arg4[%c0_67, %c2_68, %c0_69, %c0_70] : memref<3x3x16x48xbf16, #tpu.memory_space<vmem>>, vector<1x1x16x48xbf16>
    %49 = vector.shape_cast %48 : vector<1x1x16x48xbf16> to vector<16x48xbf16>
    %cst_71 = arith.constant dense<0.000000e+00> : vector<384x48xf32>
    %50 = tpu.matmul %27, %49, %cst_71 {dimension_numbers = #tpu.dot_dimension_numbers<[1], [0], [0], [1], [0, 0, 1, 1], [], []>} : vector<384x16xbf16>, vector<16x48xbf16>, vector<384x48xf32> -> vector<384x48xf32>
    %51 = arith.addf %47, %50 : vector<384x48xf32>
    %c1_72 = arith.constant 1 : index
    %c0_73 = arith.constant 0 : index
    %c0_74 = arith.constant 0 : index
    %52 = vector.load %arg7[%c1_72, %c0_73, %c0_74] : memref<18x24x8xbf16, #tpu.memory_space<vmem>>, vector<16x24x8xbf16>
    %53 = vector.shape_cast %52 : vector<16x24x8xbf16> to vector<384x8xbf16>
    %c1_75 = arith.constant 1 : index
    %c0_76 = arith.constant 0 : index
    %c0_77 = arith.constant 0 : index
    %54 = vector.load %arg8[%c1_75, %c0_76, %c0_77] : memref<18x24x16xbf16, #tpu.memory_space<vmem>>, vector<16x24x16xbf16>
    %55 = vector.shape_cast %54 : vector<16x24x16xbf16> to vector<384x16xbf16>
    %c1_78 = arith.constant 1 : index
    %c0_79 = arith.constant 0 : index
    %c0_80 = arith.constant 0 : index
    %c0_81 = arith.constant 0 : index
    %56 = vector.load %arg3[%c1_78, %c0_79, %c0_80, %c0_81] : memref<3x3x8x48xbf16, #tpu.memory_space<vmem>>, vector<1x1x8x48xbf16>
    %57 = vector.shape_cast %56 : vector<1x1x8x48xbf16> to vector<8x48xbf16>
    %cst_82 = arith.constant dense<0.000000e+00> : vector<384x48xf32>
    %58 = tpu.matmul %53, %57, %cst_82 {dimension_numbers = #tpu.dot_dimension_numbers<[1], [0], [0], [1], [0, 0, 1, 1], [], []>} : vector<384x8xbf16>, vector<8x48xbf16>, vector<384x48xf32> -> vector<384x48xf32>
    %59 = arith.addf %35, %58 : vector<384x48xf32>
    %c1_83 = arith.constant 1 : index
    %c0_84 = arith.constant 0 : index
    %c0_85 = arith.constant 0 : index
    %c0_86 = arith.constant 0 : index
    %60 = vector.load %arg4[%c1_83, %c0_84, %c0_85, %c0_86] : memref<3x3x16x48xbf16, #tpu.memory_space<vmem>>, vector<1x1x16x48xbf16>
    %61 = vector.shape_cast %60 : vector<1x1x16x48xbf16> to vector<16x48xbf16>
    %cst_87 = arith.constant dense<0.000000e+00> : vector<384x48xf32>
    %62 = tpu.matmul %55, %61, %cst_87 {dimension_numbers = #tpu.dot_dimension_numbers<[1], [0], [0], [1], [0, 0, 1, 1], [], []>} : vector<384x16xbf16>, vector<16x48xbf16>, vector<384x48xf32> -> vector<384x48xf32>
    %63 = arith.addf %59, %62 : vector<384x48xf32>
    %c1_88 = arith.constant 1 : index
    %c1_89 = arith.constant 1 : index
    %c0_90 = arith.constant 0 : index
    %c0_91 = arith.constant 0 : index
    %64 = vector.load %arg3[%c1_88, %c1_89, %c0_90, %c0_91] : memref<3x3x8x48xbf16, #tpu.memory_space<vmem>>, vector<1x1x8x48xbf16>
    %65 = vector.shape_cast %64 : vector<1x1x8x48xbf16> to vector<8x48xbf16>
    %cst_92 = arith.constant dense<0.000000e+00> : vector<384x48xf32>
    %66 = tpu.matmul %53, %65, %cst_92 {dimension_numbers = #tpu.dot_dimension_numbers<[1], [0], [0], [1], [0, 0, 1, 1], [], []>} : vector<384x8xbf16>, vector<8x48xbf16>, vector<384x48xf32> -> vector<384x48xf32>
    %67 = arith.addf %43, %66 : vector<384x48xf32>
    %c1_93 = arith.constant 1 : index
    %c1_94 = arith.constant 1 : index
    %c0_95 = arith.constant 0 : index
    %c0_96 = arith.constant 0 : index
    %68 = vector.load %arg4[%c1_93, %c1_94, %c0_95, %c0_96] : memref<3x3x16x48xbf16, #tpu.memory_space<vmem>>, vector<1x1x16x48xbf16>
    %69 = vector.shape_cast %68 : vector<1x1x16x48xbf16> to vector<16x48xbf16>
    %cst_97 = arith.constant dense<0.000000e+00> : vector<384x48xf32>
    %70 = tpu.matmul %55, %69, %cst_97 {dimension_numbers = #tpu.dot_dimension_numbers<[1], [0], [0], [1], [0, 0, 1, 1], [], []>} : vector<384x16xbf16>, vector<16x48xbf16>, vector<384x48xf32> -> vector<384x48xf32>
    %71 = arith.addf %67, %70 : vector<384x48xf32>
    %c1_98 = arith.constant 1 : index
    %c2_99 = arith.constant 2 : index
    %c0_100 = arith.constant 0 : index
    %c0_101 = arith.constant 0 : index
    %72 = vector.load %arg3[%c1_98, %c2_99, %c0_100, %c0_101] : memref<3x3x8x48xbf16, #tpu.memory_space<vmem>>, vector<1x1x8x48xbf16>
    %73 = vector.shape_cast %72 : vector<1x1x8x48xbf16> to vector<8x48xbf16>
    %cst_102 = arith.constant dense<0.000000e+00> : vector<384x48xf32>
    %74 = tpu.matmul %53, %73, %cst_102 {dimension_numbers = #tpu.dot_dimension_numbers<[1], [0], [0], [1], [0, 0, 1, 1], [], []>} : vector<384x8xbf16>, vector<8x48xbf16>, vector<384x48xf32> -> vector<384x48xf32>
    %75 = arith.addf %51, %74 : vector<384x48xf32>
    %c1_103 = arith.constant 1 : index
    %c2_104 = arith.constant 2 : index
    %c0_105 = arith.constant 0 : index
    %c0_106 = arith.constant 0 : index
    %76 = vector.load %arg4[%c1_103, %c2_104, %c0_105, %c0_106] : memref<3x3x16x48xbf16, #tpu.memory_space<vmem>>, vector<1x1x16x48xbf16>
    %77 = vector.shape_cast %76 : vector<1x1x16x48xbf16> to vector<16x48xbf16>
    %cst_107 = arith.constant dense<0.000000e+00> : vector<384x48xf32>
    %78 = tpu.matmul %55, %77, %cst_107 {dimension_numbers = #tpu.dot_dimension_numbers<[1], [0], [0], [1], [0, 0, 1, 1], [], []>} : vector<384x16xbf16>, vector<16x48xbf16>, vector<384x48xf32> -> vector<384x48xf32>
    %79 = arith.addf %75, %78 : vector<384x48xf32>
    %c2_108 = arith.constant 2 : index
    %c0_109 = arith.constant 0 : index
    %c0_110 = arith.constant 0 : index
    %80 = vector.load %arg7[%c2_108, %c0_109, %c0_110] : memref<18x24x8xbf16, #tpu.memory_space<vmem>>, vector<16x24x8xbf16>
    %81 = vector.shape_cast %80 : vector<16x24x8xbf16> to vector<384x8xbf16>
    %c2_111 = arith.constant 2 : index
    %c0_112 = arith.constant 0 : index
    %c0_113 = arith.constant 0 : index
    %82 = vector.load %arg8[%c2_111, %c0_112, %c0_113] : memref<18x24x16xbf16, #tpu.memory_space<vmem>>, vector<16x24x16xbf16>
    %83 = vector.shape_cast %82 : vector<16x24x16xbf16> to vector<384x16xbf16>
    %c2_114 = arith.constant 2 : index
    %c0_115 = arith.constant 0 : index
    %c0_116 = arith.constant 0 : index
    %c0_117 = arith.constant 0 : index
    %84 = vector.load %arg3[%c2_114, %c0_115, %c0_116, %c0_117] : memref<3x3x8x48xbf16, #tpu.memory_space<vmem>>, vector<1x1x8x48xbf16>
    %85 = vector.shape_cast %84 : vector<1x1x8x48xbf16> to vector<8x48xbf16>
    %cst_118 = arith.constant dense<0.000000e+00> : vector<384x48xf32>
    %86 = tpu.matmul %81, %85, %cst_118 {dimension_numbers = #tpu.dot_dimension_numbers<[1], [0], [0], [1], [0, 0, 1, 1], [], []>} : vector<384x8xbf16>, vector<8x48xbf16>, vector<384x48xf32> -> vector<384x48xf32>
    %87 = arith.addf %63, %86 : vector<384x48xf32>
    %c2_119 = arith.constant 2 : index
    %c0_120 = arith.constant 0 : index
    %c0_121 = arith.constant 0 : index
    %c0_122 = arith.constant 0 : index
    %88 = vector.load %arg4[%c2_119, %c0_120, %c0_121, %c0_122] : memref<3x3x16x48xbf16, #tpu.memory_space<vmem>>, vector<1x1x16x48xbf16>
    %89 = vector.shape_cast %88 : vector<1x1x16x48xbf16> to vector<16x48xbf16>
    %cst_123 = arith.constant dense<0.000000e+00> : vector<384x48xf32>
    %90 = tpu.matmul %83, %89, %cst_123 {dimension_numbers = #tpu.dot_dimension_numbers<[1], [0], [0], [1], [0, 0, 1, 1], [], []>} : vector<384x16xbf16>, vector<16x48xbf16>, vector<384x48xf32> -> vector<384x48xf32>
    %91 = arith.addf %87, %90 : vector<384x48xf32>
    %c2_124 = arith.constant 2 : index
    %c1_125 = arith.constant 1 : index
    %c0_126 = arith.constant 0 : index
    %c0_127 = arith.constant 0 : index
    %92 = vector.load %arg3[%c2_124, %c1_125, %c0_126, %c0_127] : memref<3x3x8x48xbf16, #tpu.memory_space<vmem>>, vector<1x1x8x48xbf16>
    %93 = vector.shape_cast %92 : vector<1x1x8x48xbf16> to vector<8x48xbf16>
    %cst_128 = arith.constant dense<0.000000e+00> : vector<384x48xf32>
    %94 = tpu.matmul %81, %93, %cst_128 {dimension_numbers = #tpu.dot_dimension_numbers<[1], [0], [0], [1], [0, 0, 1, 1], [], []>} : vector<384x8xbf16>, vector<8x48xbf16>, vector<384x48xf32> -> vector<384x48xf32>
    %95 = arith.addf %71, %94 : vector<384x48xf32>
    %c2_129 = arith.constant 2 : index
    %c1_130 = arith.constant 1 : index
    %c0_131 = arith.constant 0 : index
    %c0_132 = arith.constant 0 : index
    %96 = vector.load %arg4[%c2_129, %c1_130, %c0_131, %c0_132] : memref<3x3x16x48xbf16, #tpu.memory_space<vmem>>, vector<1x1x16x48xbf16>
    %97 = vector.shape_cast %96 : vector<1x1x16x48xbf16> to vector<16x48xbf16>
    %cst_133 = arith.constant dense<0.000000e+00> : vector<384x48xf32>
    %98 = tpu.matmul %83, %97, %cst_133 {dimension_numbers = #tpu.dot_dimension_numbers<[1], [0], [0], [1], [0, 0, 1, 1], [], []>} : vector<384x16xbf16>, vector<16x48xbf16>, vector<384x48xf32> -> vector<384x48xf32>
    %99 = arith.addf %95, %98 : vector<384x48xf32>
    %c2_134 = arith.constant 2 : index
    %c2_135 = arith.constant 2 : index
    %c0_136 = arith.constant 0 : index
    %c0_137 = arith.constant 0 : index
    %100 = vector.load %arg3[%c2_134, %c2_135, %c0_136, %c0_137] : memref<3x3x8x48xbf16, #tpu.memory_space<vmem>>, vector<1x1x8x48xbf16>
    %101 = vector.shape_cast %100 : vector<1x1x8x48xbf16> to vector<8x48xbf16>
    %cst_138 = arith.constant dense<0.000000e+00> : vector<384x48xf32>
    %102 = tpu.matmul %81, %101, %cst_138 {dimension_numbers = #tpu.dot_dimension_numbers<[1], [0], [0], [1], [0, 0, 1, 1], [], []>} : vector<384x8xbf16>, vector<8x48xbf16>, vector<384x48xf32> -> vector<384x48xf32>
    %103 = arith.addf %79, %102 : vector<384x48xf32>
    %c2_139 = arith.constant 2 : index
    %c2_140 = arith.constant 2 : index
    %c0_141 = arith.constant 0 : index
    %c0_142 = arith.constant 0 : index
    %104 = vector.load %arg4[%c2_139, %c2_140, %c0_141, %c0_142] : memref<3x3x16x48xbf16, #tpu.memory_space<vmem>>, vector<1x1x16x48xbf16>
    %105 = vector.shape_cast %104 : vector<1x1x16x48xbf16> to vector<16x48xbf16>
    %cst_143 = arith.constant dense<0.000000e+00> : vector<384x48xf32>
    %106 = tpu.matmul %83, %105, %cst_143 {dimension_numbers = #tpu.dot_dimension_numbers<[1], [0], [0], [1], [0, 0, 1, 1], [], []>} : vector<384x16xbf16>, vector<16x48xbf16>, vector<384x48xf32> -> vector<384x48xf32>
    %107 = arith.addf %103, %106 : vector<384x48xf32>
    %c1_i32 = arith.constant 1 : i32
    %108 = tpu.dynamic_rotate %91 by %c1_i32 dim 0 : vector<384x48xf32>, i32 -> vector<384x48xf32>
    %109 = arith.addf %99, %108 : vector<384x48xf32>
    %c383_i32 = arith.constant 383 : i32
    %110 = tpu.dynamic_rotate %107 by %c383_i32 dim 0 : vector<384x48xf32>, i32 -> vector<384x48xf32>
    %111 = arith.addf %109, %110 : vector<384x48xf32>
    %112 = vector.shape_cast %111 : vector<384x48xf32> to vector<16x24x48xf32>
    %113 = vector.extract_strided_slice %112 {offsets = [0, 0, 0], sizes = [16, 16, 48], strides = [1, 1, 1]} : vector<16x24x48xf32> to vector<16x16x48xf32>
    %114 = vector.extract_strided_slice %113 {offsets = [0, 0, 0], sizes = [16, 16, 16], strides = [1, 1, 1]} : vector<16x16x48xf32> to vector<16x16x16xf32>
    %cst_144 = arith.constant 0.000000e+00 : f32
    %115 = vector.broadcast %cst_144 : f32 to vector<16x16x16xf32>
    %116 = arith.subf %115, %114 : vector<16x16x16xf32>
    %117 = math.exp %116 : vector<16x16x16xf32>
    %cst_145 = arith.constant 1.000000e+00 : f32
    %118 = vector.broadcast %cst_145 : f32 to vector<16x16x16xf32>
    %119 = arith.addf %118, %117 : vector<16x16x16xf32>
    %cst_146 = arith.constant 1.000000e+00 : f32
    %120 = vector.broadcast %cst_146 : f32 to vector<16x16x16xf32>
    %121 = arith.divf %120, %119 : vector<16x16x16xf32>
    %122 = vector.extract_strided_slice %113 {offsets = [0, 0, 16], sizes = [16, 16, 16], strides = [1, 1, 1]} : vector<16x16x48xf32> to vector<16x16x16xf32>
    %cst_147 = arith.constant 0.000000e+00 : f32
    %123 = vector.broadcast %cst_147 : f32 to vector<16x16x16xf32>
    %124 = arith.subf %123, %122 : vector<16x16x16xf32>
    %125 = math.exp %124 : vector<16x16x16xf32>
    %cst_148 = arith.constant 1.000000e+00 : f32
    %126 = vector.broadcast %cst_148 : f32 to vector<16x16x16xf32>
    %127 = arith.addf %126, %125 : vector<16x16x16xf32>
    %cst_149 = arith.constant 1.000000e+00 : f32
    %128 = vector.broadcast %cst_149 : f32 to vector<16x16x16xf32>
    %129 = arith.divf %128, %127 : vector<16x16x16xf32>
    %130 = vector.extract_strided_slice %113 {offsets = [0, 0, 32], sizes = [16, 16, 16], strides = [1, 1, 1]} : vector<16x16x48xf32> to vector<16x16x16xf32>
    %131 = math.tanh %130 : vector<16x16x16xf32>
    %132 = arith.mulf %121, %3 : vector<16x16x16xf32>
    %cst_150 = arith.constant 1.000000e+00 : f32
    %133 = vector.broadcast %cst_150 : f32 to vector<16x16x16xf32>
    %134 = arith.subf %133, %129 : vector<16x16x16xf32>
    %135 = arith.mulf %132, %134 : vector<16x16x16xf32>
    %136 = arith.mulf %129, %131 : vector<16x16x16xf32>
    %137 = arith.addf %135, %136 : vector<16x16x16xf32>
    %c0_151 = arith.constant 0 : index
    %c0_152 = arith.constant 0 : index
    %c0_153 = arith.constant 0 : index
    %c0_154 = arith.constant 0 : index
    %138 = vector.load %arg6[%c0_151, %c0_152, %c0_153, %c0_154] : memref<1x16x16x16xf32, #tpu.memory_space<vmem>>, vector<1x16x16x16xf32>
    %139 = vector.shape_cast %138 : vector<1x16x16x16xf32> to vector<16x16x16xf32>
    %140 = vector.shape_cast %137 : vector<16x16x16xf32> to vector<1x16x16x16xf32>
    tpu.vector_store %arg6[%c0_151, %c0_152, %c0_153, %c0_154], %140 {strides = array<i32>} : memref<1x16x16x16xf32, #tpu.memory_space<vmem>>, vector<1x16x16x16xf32>,
    return
  }
  func.func @transform_0(%arg0: i32) -> (i32, i32, i32, i32) {
    %c0_i32 = arith.constant 0 : i32
    %c0_i32_0 = arith.constant 0 : i32
    %c0_i32_1 = arith.constant 0 : i32
    %c0_i32_2 = arith.constant 0 : i32
    return %arg0, %c0_i32, %c0_i32_0, %c0_i32_1 : i32, i32, i32, i32
  }
  func.func @transform_1(%arg0: i32) -> (i32, i32, i32, i32) {
    %c0_i32 = arith.constant 0 : i32
    %c0_i32_0 = arith.constant 0 : i32
    %c0_i32_1 = arith.constant 0 : i32
    %c0_i32_2 = arith.constant 0 : i32
    return %arg0, %c0_i32, %c0_i32_0, %c0_i32_1 : i32, i32, i32, i32
  }
  func.func @transform_2(%arg0: i32) -> (i32, i32, i32, i32) {
    %c0_i32 = arith.constant 0 : i32
    %c0_i32_0 = arith.constant 0 : i32
    %c0_i32_1 = arith.constant 0 : i32
    %c0_i32_2 = arith.constant 0 : i32
    %c0_i32_3 = arith.constant 0 : i32
    return %c0_i32, %c0_i32_0, %c0_i32_1, %c0_i32_2 : i32, i32, i32, i32
  }
  func.func @transform_3(%arg0: i32) -> (i32, i32, i32, i32) {
    %c0_i32 = arith.constant 0 : i32
    %c0_i32_0 = arith.constant 0 : i32
    %c0_i32_1 = arith.constant 0 : i32
    %c0_i32_2 = arith.constant 0 : i32
    %c0_i32_3 = arith.constant 0 : i32
    return %c0_i32, %c0_i32_0, %c0_i32_1, %c0_i32_2 : i32, i32, i32, i32
  }
  func.func @transform_4(%arg0: i32) -> (i32, i32) {
    %c0_i32 = arith.constant 0 : i32
    %c0_i32_0 = arith.constant 0 : i32
    %c0_i32_1 = arith.constant 0 : i32
    return %c0_i32, %c0_i32_0 : i32, i32
  }
  func.func @transform_5(%arg0: i32) -> (i32, i32, i32, i32) {
    %c0_i32 = arith.constant 0 : i32
    %c0_i32_0 = arith.constant 0 : i32
    %c0_i32_1 = arith.constant 0 : i32
    %c0_i32_2 = arith.constant 0 : i32
    return %arg0, %c0_i32, %c0_i32_0, %c0_i32_1 : i32, i32, i32, i32
  }
}

</mosaic_0001>

<llo_original>
// kernel: hidden_reinforcer_forward.1
$region0: #{hidden_reinforcer_forward.1}
  #allocation0 [shape = 'u32[]', space=smem, size = 0x4, offset = 0x4, fixed_abs, tag = 'smem constant byte address 0x4 - core index']
  #allocation1 [shape = 'u32[144,128]{1,0:T(1,128)}', space=vmem, size = 0x12000, scoped, tag = 'internal scratch']
  #allocation2 [shape = 'bf16[18,24,8]{2,1,0:T(8,128)(2,1)}', space=vmem, size = 0x1b000, scoped, tag = 'scratch operand']
  #allocation3 [shape = 'bf16[18,24,16]{2,1,0:T(8,128)(2,1)}', space=vmem, size = 0x1b000, scoped, tag = 'scratch operand']
  %s0 = inlined_call_operand.vmem [shape: bf16[4,16,16,8], index: 0, kind: input, shape index: {}]
  %s1 = inlined_call_operand.vmem [shape: f32[4,16,16,16], index: 1, kind: input, shape index: {}]
  %s2 = inlined_call_operand.vmem [shape: bf16[3,3,8,48], index: 2, kind: input, shape index: {}]
  %s3 = inlined_call_operand.vmem [shape: bf16[3,3,16,48], index: 3, kind: input, shape index: {}]
  %s4 = inlined_call_operand.vmem [shape: f32[1,48], index: 4, kind: input, shape index: {}]
  %s5 = inlined_call_operand.vmem [shape: f32[4,16,16,16], index: 5, kind: output, shape index: {}]
  %s6 = sld [smem:[#allocation0]]
  $region53: #{hidden_reinforcer_forward.1} parent=0
    _
  %s8 = ssub.s32 1, %s6
  %s9 = scalar_select 0, %s8, %s6
  loop: start=0, step=1, limit=6
  $region2: #{hidden_reinforcer_forward.1} parent=0 // loop_pre_header
    _
  $region3: #{hidden_reinforcer_forward.1} parent=0 // loop_header
    %s11 = sphi 0, %s15
    %p12 = scmp.ge.s32.totalorder %s11, 6
    %s21 = sphi 0, %s23
    %s24 = sphi 0, %s21
    %s25 = sphi 0, %s24
    %s41 = sphi 0, %s25
    %s47 = sphi 0, %s49
    %s50 = sphi 0, %s47
    %s51 = sphi 0, %s50
    %s67 = sphi 0, %s51
    %s71 = sphi 0, %s71
    %s73 = sphi 0, %s71
    %s74 = sphi 0, %s73
    %s88 = sphi 0, %s74
    %s92 = sphi 0, %s92
    %s94 = sphi 0, %s92
    %s95 = sphi 0, %s94
    %s109 = sphi 0, %s95
    %s113 = sphi 0, %s113
    %s115 = sphi 0, %s113
    %s116 = sphi 0, %s115
    %s130 = sphi 0, %s116
    %s136 = sphi 0, %s138
    %s139 = sphi 0, %s136
    %s140 = sphi 0, %s139
    %s156 = sphi 0, %s140
  $region4: #{hidden_reinforcer_forward.1} parent=0 // loop_header_branch
    %14 = sbr.rel (%p12) target = $region8
  $region5: #{hidden_reinforcer_forward.1} parent=0 // loop_body
    %s16 = ssub.s32 %s11, 1
    %s17 = ssub.s32 %s11, 2
    %s18 = sadd.s32 %s11, 1
    %s19 = ssub.s32 %s11, %s18
    %p20 = scmp.eq.s32.totalorder %s19, 0
    %s22 = sadd.s32 %s21, 1
    %s23 = scalar_select %p20, %s21, %s22
    %p26 = pneg %p20
    %p27 = scmp.eq.s32.totalorder %s11, 3
    %p28 = por %p26, %p27
    %p29 = scmp.ne.s32.totalorder %s21, %s24
    %p30 = scmp.eq.s32.totalorder %s11, 0
    %p31 = por %p29, %p30
    %p32 = scmp.ne.s32.totalorder %s21, %s24
    %p33 = scmp.eq.s32.totalorder %s16, 3
    %p34 = por %p32, %p33
    %p35 = scmp.ne.s32.totalorder %s24, %s25
    %p36 = scmp.eq.s32.totalorder %s16, 0
    %p37 = por %p35, %p36
    %p38 = scmp.ne.s32.totalorder %s24, %s25
    %p39 = scmp.eq.s32.totalorder %s17, 3
    %p40 = por %p38, %p39
    %p42 = scmp.ne.s32.totalorder %s25, %s41
    %p43 = scmp.eq.s32.totalorder %s17, 0
    %p44 = por %p42, %p43
    %s45 = ssub.s32 %s11, %s18
    %p46 = scmp.eq.s32.totalorder %s45, 0
    %s48 = sadd.s32 %s47, 1
    %s49 = scalar_select %p46, %s47, %s48
    %p52 = pneg %p46
    %p53 = scmp.eq.s32.totalorder %s11, 3
    %p54 = por %p52, %p53
    %p55 = scmp.ne.s32.totalorder %s47, %s50
    %p56 = scmp.eq.s32.totalorder %s11, 0
    %p57 = por %p55, %p56
    %p58 = scmp.ne.s32.totalorder %s47, %s50
    %p59 = scmp.eq.s32.totalorder %s16, 3
    %p60 = por %p58, %p59
    %p61 = scmp.ne.s32.totalorder %s50, %s51
    %p62 = scmp.eq.s32.totalorder %s16, 0
    %p63 = por %p61, %p62
    %p64 = scmp.ne.s32.totalorder %s50, %s51
    %p65 = scmp.eq.s32.totalorder %s17, 3
    %p66 = por %p64, %p65
    %p68 = scmp.ne.s32.totalorder %s51, %s67
    %p69 = scmp.eq.s32.totalorder %s17, 0
    %p70 = por %p68, %p69
    %s72 = sadd.s32 %s71, 1
    %p75 = scmp.eq.s32.totalorder %s11, 3
    %p76 = scmp.ne.s32.totalorder %s71, %s73
    %p77 = scmp.eq.s32.totalorder %s11, 0
    %p78 = por %p76, %p77
    %p79 = scmp.ne.s32.totalorder %s71, %s73
    %p80 = scmp.eq.s32.totalorder %s16, 3
    %p81 = por %p79, %p80
    %p82 = scmp.ne.s32.totalorder %s73, %s74
    %p83 = scmp.eq.s32.totalorder %s16, 0
    %p84 = por %p82, %p83
    %p85 = scmp.ne.s32.totalorder %s73, %s74
    %p86 = scmp.eq.s32.totalorder %s17, 3
    %p87 = por %p85, %p86
    %p89 = scmp.ne.s32.totalorder %s74, %s88
    %p90 = scmp.eq.s32.totalorder %s17, 0
    %p91 = por %p89, %p90
    %s93 = sadd.s32 %s92, 1
    %p96 = scmp.eq.s32.totalorder %s11, 3
    %p97 = scmp.ne.s32.totalorder %s92, %s94
    %p98 = scmp.eq.s32.totalorder %s11, 0
    %p99 = por %p97, %p98
    %p100 = scmp.ne.s32.totalorder %s92, %s94
    %p101 = scmp.eq.s32.totalorder %s16, 3
    %p102 = por %p100, %p101
    %p103 = scmp.ne.s32.totalorder %s94, %s95
    %p104 = scmp.eq.s32.totalorder %s16, 0
    %p105 = por %p103, %p104
    %p106 = scmp.ne.s32.totalorder %s94, %s95
    %p107 = scmp.eq.s32.totalorder %s17, 3
    %p108 = por %p106, %p107
    %p110 = scmp.ne.s32.totalorder %s95, %s109
    %p111 = scmp.eq.s32.totalorder %s17, 0
    %p112 = por %p110, %p111
    %s114 = sadd.s32 %s113, 1
    %p117 = scmp.eq.s32.totalorder %s11, 3
    %p118 = scmp.ne.s32.totalorder %s113, %s115
    %p119 = scmp.eq.s32.totalorder %s11, 0
    %p120 = por %p118, %p119
    %p121 = scmp.ne.s32.totalorder %s113, %s115
    %p122 = scmp.eq.s32.totalorder %s16, 3
    %p123 = por %p121, %p122
    %p124 = scmp.ne.s32.totalorder %s115, %s116
    %p125 = scmp.eq.s32.totalorder %s16, 0
    %p126 = por %p124, %p125
    %p127 = scmp.ne.s32.totalorder %s115, %s116
    %p128 = scmp.eq.s32.totalorder %s17, 3
    %p129 = por %p127, %p128
    %p131 = scmp.ne.s32.totalorder %s116, %s130
    %p132 = scmp.eq.s32.totalorder %s17, 0
    %p133 = por %p131, %p132
    %s134 = ssub.s32 %s11, %s18
    %p135 = scmp.eq.s32.totalorder %s134, 0
    %s137 = sadd.s32 %s136, 1
    %s138 = scalar_select %p135, %s136, %s137
    %p141 = pneg %p135
    %p142 = scmp.eq.s32.totalorder %s11, 3
    %p143 = por %p141, %p142
    %p144 = scmp.ne.s32.totalorder %s136, %s139
    %p145 = scmp.eq.s32.totalorder %s11, 0
    %p146 = por %p144, %p145
    %p147 = scmp.ne.s32.totalorder %s136, %s139
    %p148 = scmp.eq.s32.totalorder %s16, 3
    %p149 = por %p147, %p148
    %p150 = scmp.ne.s32.totalorder %s139, %s140
    %p151 = scmp.eq.s32.totalorder %s16, 0
    %p152 = por %p150, %p151
    %p153 = scmp.ne.s32.totalorder %s139, %s140
    %p154 = scmp.eq.s32.totalorder %s17, 3
    %p155 = por %p153, %p154
    %p157 = scmp.ne.s32.totalorder %s140, %s156
    %p158 = scmp.eq.s32.totalorder %s17, 0
    %p159 = por %p157, %p158
    %p160 = scmp.le.s32.totalorder 1, %s11
    %p161 = scmp.lt.s32.totalorder %s11, 5
    %p162 = pnand %p160, %p161
    %p163 = pneg %p162
    // Predicated region
    $region9: #{hidden_reinforcer_forward.1} parent=5 // pred_check
      _
    $region10: #{hidden_reinforcer_forward.1} parent=5 // pred_check_branch
      %165 = sbr.rel (%p162) target = $region12
    $region11: #{hidden_reinforcer_forward.1} parent=5 // pred_region
      %s166 = ssub.s32 %s11, 1
      // Predicated region
      $region13: #{hidden_reinforcer_forward.1} parent=11 // pred_check
        %p167 = pneg %p84
      $region14: #{hidden_reinforcer_forward.1} parent=11 // pred_check_branch
        %169 = sbr.rel (%p167) target = $region16
      $region15: #{hidden_reinforcer_forward.1} parent=11 // pred_region
        _
      $region16: #{hidden_reinforcer_forward.1} parent=11 // pred_fallthru
        _
      // Predicated region
      $region17: #{hidden_reinforcer_forward.1} parent=11 // pred_check
        %p170 = pneg %p105
      $region18: #{hidden_reinforcer_forward.1} parent=11 // pred_check_branch
        %172 = sbr.rel (%p170) target = $region20
      $region19: #{hidden_reinforcer_forward.1} parent=11 // pred_region
        _
      $region20: #{hidden_reinforcer_forward.1} parent=11 // pred_fallthru
        _
      // Predicated region
      $region21: #{hidden_reinforcer_forward.1} parent=11 // pred_check
        %p173 = pneg %p126
      $region22: #{hidden_reinforcer_forward.1} parent=11 // pred_check_branch
        %175 = sbr.rel (%p173) target = $region24
      $region23: #{hidden_reinforcer_forward.1} parent=11 // pred_region
        _
      $region24: #{hidden_reinforcer_forward.1} parent=11 // pred_fallthru
        _
    $region12: #{hidden_reinforcer_forward.1} parent=5 // pred_fallthru
      _
    %p176 = scmp.lt.s32.totalorder %s11, 4
    // Predicated region
    $region25: #{hidden_reinforcer_forward.1} parent=5 // pred_check
      %p177 = pneg %p176
    $region26: #{hidden_reinforcer_forward.1} parent=5 // pred_check_branch
      %179 = sbr.rel (%p177) target = $region28
    $region27: #{hidden_reinforcer_forward.1} parent=5 // pred_region
      // Predicated region
      $region29: #{hidden_reinforcer_forward.1} parent=27 // pred_check
        %p180 = pneg %p31
      $region30: #{hidden_reinforcer_forward.1} parent=27 // pred_check_branch
        %182 = sbr.rel (%p180) target = $region32
      $region31: #{hidden_reinforcer_forward.1} parent=27 // pred_region
        %p183 = scmp.lt.s32.totalorder %s11, 3
        %s184 = scalar_select %p183, %s11, 3
        %s185 = smul.addr %s184, 32
        %s186 = smul.addr %s185, 4
        %s187 = scalar_lea.vmem %s0, %s186
      $region32: #{hidden_reinforcer_forward.1} parent=27 // pred_fallthru
        _
      // Predicated region
      $region33: #{hidden_reinforcer_forward.1} parent=27 // pred_check
        %p188 = pneg %p57
      $region34: #{hidden_reinforcer_forward.1} parent=27 // pred_check_branch
        %190 = sbr.rel (%p188) target = $region36
      $region35: #{hidden_reinforcer_forward.1} parent=27 // pred_region
        %p191 = scmp.lt.s32.totalorder %s11, 3
        %s192 = scalar_select %p191, %s11, 3
        %s193 = smul.addr %s192, 32
        %s194 = smul.addr %s193, 8
        %s195 = scalar_lea.vmem %s1, %s194
      $region36: #{hidden_reinforcer_forward.1} parent=27 // pred_fallthru
        _
    $region28: #{hidden_reinforcer_forward.1} parent=5 // pred_fallthru
      _
    %p196 = scmp.le.s32.totalorder 1, %s11
    %p197 = scmp.lt.s32.totalorder %s11, 5
    %p198 = pnand %p196, %p197
    %p199 = pneg %p198
    // Predicated region
    $region37: #{hidden_reinforcer_forward.1} parent=5 // pred_check
      _
    $region38: #{hidden_reinforcer_forward.1} parent=5 // pred_check_branch
      %201 = sbr.rel (%p198) target = $region40
    $region39: #{hidden_reinforcer_forward.1} parent=5 // pred_region
      %s202 = ssub.s32 %s11, 1
      %p203 = scmp.lt.s32.totalorder %s16, 3
      %s204 = scalar_select %p203, %s16, 3
      %s205 = smul.addr %s204, 32
      %s206 = smul.addr %s205, 4
      %s207 = scalar_lea.vmem %s0, %s206
      %p208 = pneg %p37
      %p209 = pneg %p34
      %p210 = scmp.lt.s32.totalorder %s16, 3
      %s211 = scalar_select %p210, %s16, 3
      %s212 = smul.addr %s211, 32
      %s213 = smul.addr %s212, 8
      %s214 = scalar_lea.vmem %s1, %s213
      %p215 = pneg %p63
      %p216 = pneg %p60
      %p217 = pneg %p84
      %p218 = pneg %p81
      %p219 = pneg %p105
      %p220 = pneg %p102
      %p221 = pneg %p126
      %p222 = pneg %p123
      %p223 = pneg %p152
      %p224 = pneg %p149
      %p225 = scmp.lt.s32.totalorder %s16, 3
      %s226 = scalar_select %p225, %s16, 3
      %s227 = smul.addr %s226, 32
      %s228 = smul.addr %s227, 8
      %s229 = scalar_lea.vmem %s5, %s228
      %p230 = scmp.lt.s32.totalorder %s16, 3
      %s231 = scalar_select %p230, %s16, 3
      %s232 = smul.addr %s231, 32
      %s233 = smul.addr %s232, 4
      %s234 = scalar_lea.vmem %s0, %s233
      %p235 = scmp.lt.s32.totalorder %s16, 3
      %s236 = scalar_select %p235, %s16, 3
      %s237 = smul.addr %s236, 32
      %s238 = smul.addr %s237, 8
      %s239 = scalar_lea.vmem %s1, %s238
      %p240 = scmp.lt.s32.totalorder %s16, 3
      %s241 = scalar_select %p240, %s16, 3
      %s242 = smul.addr %s241, 32
      %s243 = smul.addr %s242, 8
      %s244 = scalar_lea.vmem %s5, %s243
      %v246 = vld [vmem:[%s234] sm:$0xf]
      %v247 = vld [vmem:[%s234 + $0x4] sm:$0xf]
      %v248 = vld [vmem:[%s234 + $0x8] sm:$0xf]
      %v249 = vld [vmem:[%s234 + $0xc] sm:$0xf]
      %v250 = vld [vmem:[%s234 + $0x10] sm:$0xf]
      %v251 = vld [vmem:[%s234 + $0x14] sm:$0xf]
      %v252 = vld [vmem:[%s234 + $0x18] sm:$0xf]
      %v253 = vld [vmem:[%s234 + $0x1c] sm:$0xf]
      %v254 = vld [vmem:[%s234 + $0x20] sm:$0xf]
      %v255 = vld [vmem:[%s234 + $0x24] sm:$0xf]
      %v256 = vld [vmem:[%s234 + $0x28] sm:$0xf]
      %v257 = vld [vmem:[%s234 + $0x2c] sm:$0xf]
      %v258 = vld [vmem:[%s234 + $0x30] sm:$0xf]
      %v259 = vld [vmem:[%s234 + $0x34] sm:$0xf]
      %v260 = vld [vmem:[%s234 + $0x38] sm:$0xf]
      %v261 = vld [vmem:[%s234 + $0x3c] sm:$0xf]
      %v262 = vld [vmem:[%s234 + $0x40] sm:$0xf]
      %v263 = vld [vmem:[%s234 + $0x44] sm:$0xf]
      %v264 = vld [vmem:[%s234 + $0x48] sm:$0xf]
      %v265 = vld [vmem:[%s234 + $0x4c] sm:$0xf]
      %v266 = vld [vmem:[%s234 + $0x50] sm:$0xf]
      %v267 = vld [vmem:[%s234 + $0x54] sm:$0xf]
      %v268 = vld [vmem:[%s234 + $0x58] sm:$0xf]
      %v269 = vld [vmem:[%s234 + $0x5c] sm:$0xf]
      %v270 = vld [vmem:[%s234 + $0x60] sm:$0xf]
      %v271 = vld [vmem:[%s234 + $0x64] sm:$0xf]
      %v272 = vld [vmem:[%s234 + $0x68] sm:$0xf]
      %v273 = vld [vmem:[%s234 + $0x6c] sm:$0xf]
      %v274 = vld [vmem:[%s234 + $0x70] sm:$0xf]
      %v275 = vld [vmem:[%s234 + $0x74] sm:$0xf]
      %v276 = vld [vmem:[%s234 + $0x78] sm:$0xf]
      %v277 = vld [vmem:[%s234 + $0x7c] sm:$0xf]
      %v278 = vld [vmem:[%s239] sm:$0xff]
      %v279 = vld [vmem:[%s239 + $0x8] sm:$0xff]
      %v280 = vld [vmem:[%s239 + $0x10] sm:$0xff]
      %v281 = vld [vmem:[%s239 + $0x18] sm:$0xff]
      %v282 = vld [vmem:[%s239 + $0x20] sm:$0xff]
      %v283 = vld [vmem:[%s239 + $0x28] sm:$0xff]
      %v284 = vld [vmem:[%s239 + $0x30] sm:$0xff]
      %v285 = vld [vmem:[%s239 + $0x38] sm:$0xff]
      %v286 = vld [vmem:[%s239 + $0x40] sm:$0xff]
      %v287 = vld [vmem:[%s239 + $0x48] sm:$0xff]
      %v288 = vld [vmem:[%s239 + $0x50] sm:$0xff]
      %v289 = vld [vmem:[%s239 + $0x58] sm:$0xff]
      %v290 = vld [vmem:[%s239 + $0x60] sm:$0xff]
      %v291 = vld [vmem:[%s239 + $0x68] sm:$0xff]
      %v292 = vld [vmem:[%s239 + $0x70] sm:$0xff]
      %v293 = vld [vmem:[%s239 + $0x78] sm:$0xff]
      %v294 = vld [vmem:[%s239 + $0x80] sm:$0xff]
      %v295 = vld [vmem:[%s239 + $0x88] sm:$0xff]
      %v296 = vld [vmem:[%s239 + $0x90] sm:$0xff]
      %v297 = vld [vmem:[%s239 + $0x98] sm:$0xff]
      %v298 = vld [vmem:[%s239 + $0xa0] sm:$0xff]
      %v299 = vld [vmem:[%s239 + $0xa8] sm:$0xff]
      %v300 = vld [vmem:[%s239 + $0xb0] sm:$0xff]
      %v301 = vld [vmem:[%s239 + $0xb8] sm:$0xff]
      %v302 = vld [vmem:[%s239 + $0xc0] sm:$0xff]
      %v303 = vld [vmem:[%s239 + $0xc8] sm:$0xff]
      %v304 = vld [vmem:[%s239 + $0xd0] sm:$0xff]
      %v305 = vld [vmem:[%s239 + $0xd8] sm:$0xff]
      %v306 = vld [vmem:[%s239 + $0xe0] sm:$0xff]
      %v307 = vld [vmem:[%s239 + $0xe8] sm:$0xff]
      %v308 = vld [vmem:[%s239 + $0xf0] sm:$0xff]
      %v309 = vld [vmem:[%s239 + $0xf8] sm:$0xff]
      %vm310 = vcmask 60416
      %311 = vst.msk [vmem:[#allocation2] sm:$0xf] %vm310, 0
      %312 = vst.msk [vmem:[#allocation2 + $0x4] sm:$0xf] %vm310, 0
      %313 = vst.msk [vmem:[#allocation2 + $0x8] sm:$0xf] %vm310, 0
      %s314 = scalar_lea.vmem [#allocation2], 204
      %315 = vst.msk [vmem:[%s314] sm:$0xf] %vm310, 0
      %316 = vst.msk [vmem:[%s314 + $0x4] sm:$0xf] %vm310, 0
      %317 = vst.msk [vmem:[%s314 + $0x8] sm:$0xf] %vm310, 0
      %318 = vst.msk [vmem:[#allocation2 + $0x8] sm:$0xf] %vm310, 0
      %319 = vst.msk [vmem:[#allocation2 + $0x14] sm:$0xf] %vm310, 0
      %320 = vst.msk [vmem:[#allocation2 + $0x20] sm:$0xf] %vm310, 0
      %321 = vst.msk [vmem:[#allocation2 + $0x2c] sm:$0xf] %vm310, 0
      %322 = vst.msk [vmem:[#allocation2 + $0x38] sm:$0xf] %vm310, 0
      %323 = vst.msk [vmem:[#allocation2 + $0x44] sm:$0xf] %vm310, 0
      %324 = vst.msk [vmem:[#allocation2 + $0x50] sm:$0xf] %vm310, 0
      %325 = vst.msk [vmem:[#allocation2 + $0x5c] sm:$0xf] %vm310, 0
      %326 = vst.msk [vmem:[#allocation2 + $0x68] sm:$0xf] %vm310, 0
      %327 = vst.msk [vmem:[#allocation2 + $0x74] sm:$0xf] %vm310, 0
      %328 = vst.msk [vmem:[#allocation2 + $0x80] sm:$0xf] %vm310, 0
      %329 = vst.msk [vmem:[#allocation2 + $0x8c] sm:$0xf] %vm310, 0
      %330 = vst.msk [vmem:[#allocation2 + $0x98] sm:$0xf] %vm310, 0
      %331 = vst.msk [vmem:[#allocation2 + $0xa4] sm:$0xf] %vm310, 0
      %332 = vst.msk [vmem:[#allocation2 + $0xb0] sm:$0xf] %vm310, 0
      %333 = vst.msk [vmem:[#allocation2 + $0xbc] sm:$0xf] %vm310, 0
      %334 = vst.msk [vmem:[#allocation2 + $0xc8] sm:$0xf] %vm310, 0
      %335 = vst.msk [vmem:[#allocation2 + $0xd4] sm:$0xf] %vm310, 0
      %s336 = scalar_lea.vmem [#allocation2], 12
      %337 = vst.msk [vmem:[%s336] sm:$0xf] %vm310, %v246
      %338 = vst.msk [vmem:[%s336 + $0x4] sm:$0xf] %vm310, %v247
      %339 = vst.msk [vmem:[%s336 + $0xc] sm:$0xf] %vm310, %v248
      %340 = vst.msk [vmem:[%s336 + $0x10] sm:$0xf] %vm310, %v249
      %341 = vst.msk [vmem:[%s336 + $0x18] sm:$0xf] %vm310, %v250
      %342 = vst.msk [vmem:[%s336 + $0x1c] sm:$0xf] %vm310, %v251
      %343 = vst.msk [vmem:[%s336 + $0x24] sm:$0xf] %vm310, %v252
      %344 = vst.msk [vmem:[%s336 + $0x28] sm:$0xf] %vm310, %v253
      %345 = vst.msk [vmem:[%s336 + $0x30] sm:$0xf] %vm310, %v254
      %346 = vst.msk [vmem:[%s336 + $0x34] sm:$0xf] %vm310, %v255
      %347 = vst.msk [vmem:[%s336 + $0x3c] sm:$0xf] %vm310, %v256
      %348 = vst.msk [vmem:[%s336 + $0x40] sm:$0xf] %vm310, %v257
      %349 = vst.msk [vmem:[%s336 + $0x48] sm:$0xf] %vm310, %v258
      %350 = vst.msk [vmem:[%s336 + $0x4c] sm:$0xf] %vm310, %v259
      %351 = vst.msk [vmem:[%s336 + $0x54] sm:$0xf] %vm310, %v260
      %352 = vst.msk [vmem:[%s336 + $0x58] sm:$0xf] %vm310, %v261
      %353 = vst.msk [vmem:[%s336 + $0x60] sm:$0xf] %vm310, %v262
      %354 = vst.msk [vmem:[%s336 + $0x64] sm:$0xf] %vm310, %v263
      %355 = vst.msk [vmem:[%s336 + $0x6c] sm:$0xf] %vm310, %v264
      %356 = vst.msk [vmem:[%s336 + $0x70] sm:$0xf] %vm310, %v265
      %357 = vst.msk [vmem:[%s336 + $0x78] sm:$0xf] %vm310, %v266
      %358 = vst.msk [vmem:[%s336 + $0x7c] sm:$0xf] %vm310, %v267
      %359 = vst.msk [vmem:[%s336 + $0x84] sm:$0xf] %vm310, %v268
      %360 = vst.msk [vmem:[%s336 + $0x88] sm:$0xf] %vm310, %v269
      %361 = vst.msk [vmem:[%s336 + $0x90] sm:$0xf] %vm310, %v270
      %362 = vst.msk [vmem:[%s336 + $0x94] sm:$0xf] %vm310, %v271
      %363 = vst.msk [vmem:[%s336 + $0x9c] sm:$0xf] %vm310, %v272
      %364 = vst.msk [vmem:[%s336 + $0xa0] sm:$0xf] %vm310, %v273
      %365 = vst.msk [vmem:[%s336 + $0xa8] sm:$0xf] %vm310, %v274
      %366 = vst.msk [vmem:[%s336 + $0xac] sm:$0xf] %vm310, %v275
      %367 = vst.msk [vmem:[%s336 + $0xb4] sm:$0xf] %vm310, %v276
      %368 = vst.msk [vmem:[%s336 + $0xb8] sm:$0xf] %vm310, %v277
      %vm369 = vcmask 125952
      %370 = vst.msk [vmem:[#allocation3] sm:$0xf] %vm369, 0
      %371 = vst.msk [vmem:[#allocation3 + $0x4] sm:$0xf] %vm369, 0
      %372 = vst.msk [vmem:[#allocation3 + $0x8] sm:$0xf] %vm369, 0
      %s373 = scalar_lea.vmem [#allocation3], 204
      %374 = vst.msk [vmem:[%s373] sm:$0xf] %vm369, 0
      %375 = vst.msk [vmem:[%s373 + $0x4] sm:$0xf] %vm369, 0
      %376 = vst.msk [vmem:[%s373 + $0x8] sm:$0xf] %vm369, 0
      %377 = vst.msk [vmem:[#allocation3 + $0x8] sm:$0xf] %vm369, 0
      %378 = vst.msk [vmem:[#allocation3 + $0x14] sm:$0xf] %vm369, 0
      %379 = vst.msk [vmem:[#allocation3 + $0x20] sm:$0xf] %vm369, 0
      %380 = vst.msk [vmem:[#allocation3 + $0x2c] sm:$0xf] %vm369, 0
      %381 = vst.msk [vmem:[#allocation3 + $0x38] sm:$0xf] %vm369, 0
      %382 = vst.msk [vmem:[#allocation3 + $0x44] sm:$0xf] %vm369, 0
      %383 = vst.msk [vmem:[#allocation3 + $0x50] sm:$0xf] %vm369, 0
      %384 = vst.msk [vmem:[#allocation3 + $0x5c] sm:$0xf] %vm369, 0
      %385 = vst.msk [vmem:[#allocation3 + $0x68] sm:$0xf] %vm369, 0
      %386 = vst.msk [vmem:[#allocation3 + $0x74] sm:$0xf] %vm369, 0
      %387 = vst.msk [vmem:[#allocation3 + $0x80] sm:$0xf] %vm369, 0
      %388 = vst.msk [vmem:[#allocation3 + $0x8c] sm:$0xf] %vm369, 0
      %389 = vst.msk [vmem:[#allocation3 + $0x98] sm:$0xf] %vm369, 0
      %390 = vst.msk [vmem:[#allocation3 + $0xa4] sm:$0xf] %vm369, 0
      %391 = vst.msk [vmem:[#allocation3 + $0xb0] sm:$0xf] %vm369, 0
      %392 = vst.msk [vmem:[#allocation3 + $0xbc] sm:$0xf] %vm369, 0
      %393 = vst.msk [vmem:[#allocation3 + $0xc8] sm:$0xf] %vm369, 0
      %394 = vst.msk [vmem:[#allocation3 + $0xd4] sm:$0xf] %vm369, 0
      %v395 = vpack.c.bf16 %v279, %v278
      %v396 = vpack.c.bf16 %v281, %v280
      %v397 = vpack.c.bf16 %v283, %v282
      %v398 = vpack.c.bf16 %v285, %v284
      %v399 = vpack.c.bf16 %v287, %v286
      %v400 = vpack.c.bf16 %v289, %v288
      %v401 = vpack.c.bf16 %v291, %v290
      %v402 = vpack.c.bf16 %v293, %v292
      %v403 = vpack.c.bf16 %v295, %v294
      %v404 = vpack.c.bf16 %v297, %v296
      %v405 = vpack.c.bf16 %v299, %v298
      %v406 = vpack.c.bf16 %v301, %v300
      %v407 = vpack.c.bf16 %v303, %v302
      %v408 = vpack.c.bf16 %v305, %v304
      %v409 = vpack.c.bf16 %v307, %v306
      %v410 = vpack.c.bf16 %v309, %v308
      %v427 = vunpack.c.l.b16 %v395
      %v428 = vunpack.c.h.b16 %v395
      %v429 = vunpack.c.l.b16 %v396
      %v430 = vunpack.c.h.b16 %v396
      %v431 = vunpack.c.l.b16 %v397
      %v432 = vunpack.c.h.b16 %v397
      %v433 = vunpack.c.l.b16 %v398
      %v434 = vunpack.c.h.b16 %v398
      %v435 = vunpack.c.l.b16 %v399
      %v436 = vunpack.c.h.b16 %v399
      %v437 = vunpack.c.l.b16 %v400
      %v438 = vunpack.c.h.b16 %v400
      %v439 = vunpack.c.l.b16 %v401
      %v440 = vunpack.c.h.b16 %v401
      %v441 = vunpack.c.l.b16 %v402
      %v442 = vunpack.c.h.b16 %v402
      %v443 = vunpack.c.l.b16 %v403
      %v444 = vunpack.c.h.b16 %v403
      %v445 = vunpack.c.l.b16 %v404
      %v446 = vunpack.c.h.b16 %v404
      %v447 = vunpack.c.l.b16 %v405
      %v448 = vunpack.c.h.b16 %v405
      %v449 = vunpack.c.l.b16 %v406
      %v450 = vunpack.c.h.b16 %v406
      %v451 = vunpack.c.l.b16 %v407
      %v452 = vunpack.c.h.b16 %v407
      %v453 = vunpack.c.l.b16 %v408
      %v454 = vunpack.c.h.b16 %v408
      %v455 = vunpack.c.l.b16 %v409
      %v456 = vunpack.c.h.b16 %v409
      %v457 = vunpack.c.l.b16 %v410
      %v458 = vunpack.c.h.b16 %v410
      %v459 = vpack.c.b16 %v427, %v427
      %v460 = vpack.c.b16 %v428, %v428
      %v461 = vpack.c.b16 %v429, %v429
      %v462 = vpack.c.b16 %v430, %v430
      %v463 = vpack.c.b16 %v431, %v431
      %v464 = vpack.c.b16 %v432, %v432
      %v465 = vpack.c.b16 %v433, %v433
      %v466 = vpack.c.b16 %v434, %v434
      %v467 = vpack.c.b16 %v435, %v435
      %v468 = vpack.c.b16 %v436, %v436
      %v469 = vpack.c.b16 %v437, %v437
      %v470 = vpack.c.b16 %v438, %v438
      %v471 = vpack.c.b16 %v439, %v439
      %v472 = vpack.c.b16 %v440, %v440
      %v473 = vpack.c.b16 %v441, %v441
      %v474 = vpack.c.b16 %v442, %v442
      %v475 = vpack.c.b16 %v443, %v443
      %v476 = vpack.c.b16 %v444, %v444
      %v477 = vpack.c.b16 %v445, %v445
      %v478 = vpack.c.b16 %v446, %v446
      %v479 = vpack.c.b16 %v447, %v447
      %v480 = vpack.c.b16 %v448, %v448
      %v481 = vpack.c.b16 %v449, %v449
      %v482 = vpack.c.b16 %v450, %v450
      %v483 = vpack.c.b16 %v451, %v451
      %v484 = vpack.c.b16 %v452, %v452
      %v485 = vpack.c.b16 %v453, %v453
      %v486 = vpack.c.b16 %v454, %v454
      %v487 = vpack.c.b16 %v455, %v455
      %v488 = vpack.c.b16 %v456, %v456
      %v489 = vpack.c.b16 %v457, %v457
      %v490 = vpack.c.b16 %v458, %v458
      %s523 = scalar_lea.vmem [#allocation3], 12
      %524 = vst.msk [vmem:[%s523] sm:$0xf] %vm369, %v459
      %525 = vst.msk [vmem:[%s523 + $0x4] sm:$0xf] %vm369, %v460
      %526 = vst.msk [vmem:[%s523 + $0xc] sm:$0xf] %vm369, %v461
      %527 = vst.msk [vmem:[%s523 + $0x10] sm:$0xf] %vm369, %v462
      %528 = vst.msk [vmem:[%s523 + $0x18] sm:$0xf] %vm369, %v463
      %529 = vst.msk [vmem:[%s523 + $0x1c] sm:$0xf] %vm369, %v464
      %530 = vst.msk [vmem:[%s523 + $0x24] sm:$0xf] %vm369, %v465
      %531 = vst.msk [vmem:[%s523 + $0x28] sm:$0xf] %vm369, %v466
      %532 = vst.msk [vmem:[%s523 + $0x30] sm:$0xf] %vm369, %v467
      %533 = vst.msk [vmem:[%s523 + $0x34] sm:$0xf] %vm369, %v468
      %534 = vst.msk [vmem:[%s523 + $0x3c] sm:$0xf] %vm369, %v469
      %535 = vst.msk [vmem:[%s523 + $0x40] sm:$0xf] %vm369, %v470
      %536 = vst.msk [vmem:[%s523 + $0x48] sm:$0xf] %vm369, %v471
      %537 = vst.msk [vmem:[%s523 + $0x4c] sm:$0xf] %vm369, %v472
      %538 = vst.msk [vmem:[%s523 + $0x54] sm:$0xf] %vm369, %v473
      %539 = vst.msk [vmem:[%s523 + $0x58] sm:$0xf] %vm369, %v474
      %540 = vst.msk [vmem:[%s523 + $0x60] sm:$0xf] %vm369, %v475
      %541 = vst.msk [vmem:[%s523 + $0x64] sm:$0xf] %vm369, %v476
      %542 = vst.msk [vmem:[%s523 + $0x6c] sm:$0xf] %vm369, %v477
      %543 = vst.msk [vmem:[%s523 + $0x70] sm:$0xf] %vm369, %v478
      %544 = vst.msk [vmem:[%s523 + $0x78] sm:$0xf] %vm369, %v479
      %545 = vst.msk [vmem:[%s523 + $0x7c] sm:$0xf] %vm369, %v480
      %546 = vst.msk [vmem:[%s523 + $0x84] sm:$0xf] %vm369, %v481
      %547 = vst.msk [vmem:[%s523 + $0x88] sm:$0xf] %vm369, %v482
      %548 = vst.msk [vmem:[%s523 + $0x90] sm:$0xf] %vm369, %v483
      %549 = vst.msk [vmem:[%s523 + $0x94] sm:$0xf] %vm369, %v484
      %550 = vst.msk [vmem:[%s523 + $0x9c] sm:$0xf] %vm369, %v485
      %551 = vst.msk [vmem:[%s523 + $0xa0] sm:$0xf] %vm369, %v486
      %552 = vst.msk [vmem:[%s523 + $0xa8] sm:$0xf] %vm369, %v487
      %553 = vst.msk [vmem:[%s523 + $0xac] sm:$0xf] %vm369, %v488
      %554 = vst.msk [vmem:[%s523 + $0xb4] sm:$0xf] %vm369, %v489
      %555 = vst.msk [vmem:[%s523 + $0xb8] sm:$0xf] %vm369, %v490
      %v556 = vld [vmem:[%s4] sm:$0x1]
      %v558 = vlaneseq
      %v559 = vshrl.u32 %v558, 7
      %v560 = vsub.s32 0, %v559
      %v561 = vrot.slane %v556, %v560
      %v563 = vld [vmem:[#allocation2] sm:$0xf]
      %v564 = vld [vmem:[#allocation2 + $0x4] sm:$0xf]
      %v565 = vld [vmem:[#allocation2 + $0x8] sm:$0xf]
      %v566 = vld [vmem:[#allocation2 + $0xc] sm:$0xf]
      %v567 = vld [vmem:[#allocation2 + $0x10] sm:$0xf]
      %v568 = vld [vmem:[#allocation2 + $0x14] sm:$0xf]
      %v569 = vld [vmem:[#allocation2 + $0x18] sm:$0xf]
      %v570 = vld [vmem:[#allocation2 + $0x1c] sm:$0xf]
      %v571 = vld [vmem:[#allocation2 + $0x20] sm:$0xf]
      %v572 = vld [vmem:[#allocation2 + $0x24] sm:$0xf]
      %v573 = vld [vmem:[#allocation2 + $0x28] sm:$0xf]
      %v574 = vld [vmem:[#allocation2 + $0x2c] sm:$0xf]
      %v575 = vld [vmem:[#allocation2 + $0x30] sm:$0xf]
      %v576 = vld [vmem:[#allocation2 + $0x34] sm:$0xf]
      %v577 = vld [vmem:[#allocation2 + $0x38] sm:$0xf]
      %v578 = vld [vmem:[#allocation2 + $0x3c] sm:$0xf]
      %v579 = vld [vmem:[#allocation2 + $0x40] sm:$0xf]
      %v580 = vld [vmem:[#allocation2 + $0x44] sm:$0xf]
      %v581 = vld [vmem:[#allocation2 + $0x48] sm:$0xf]
      %v582 = vld [vmem:[#allocation2 + $0x4c] sm:$0xf]
      %v583 = vld [vmem:[#allocation2 + $0x50] sm:$0xf]
      %v584 = vld [vmem:[#allocation2 + $0x54] sm:$0xf]
      %v585 = vld [vmem:[#allocation2 + $0x58] sm:$0xf]
      %v586 = vld [vmem:[#allocation2 + $0x5c] sm:$0xf]
      %v587 = vld [vmem:[#allocation2 + $0x60] sm:$0xf]
      %v588 = vld [vmem:[#allocation2 + $0x64] sm:$0xf]
      %v589 = vld [vmem:[#allocation2 + $0x68] sm:$0xf]
      %v590 = vld [vmem:[#allocation2 + $0x6c] sm:$0xf]
      %v591 = vld [vmem:[#allocation2 + $0x70] sm:$0xf]
      %v592 = vld [vmem:[#allocation2 + $0x74] sm:$0xf]
      %v593 = vld [vmem:[#allocation2 + $0x78] sm:$0xf]
      %v594 = vld [vmem:[#allocation2 + $0x7c] sm:$0xf]
      %v595 = vld [vmem:[#allocation2 + $0x80] sm:$0xf]
      %v596 = vld [vmem:[#allocation2 + $0x84] sm:$0xf]
      %v597 = vld [vmem:[#allocation2 + $0x88] sm:$0xf]
      %v598 = vld [vmem:[#allocation2 + $0x8c] sm:$0xf]
      %v599 = vld [vmem:[#allocation2 + $0x90] sm:$0xf]
      %v600 = vld [vmem:[#allocation2 + $0x94] sm:$0xf]
      %v601 = vld [vmem:[#allocation2 + $0x98] sm:$0xf]
      %v602 = vld [vmem:[#allocation2 + $0x9c] sm:$0xf]
      %v603 = vld [vmem:[#allocation2 + $0xa0] sm:$0xf]
      %v604 = vld [vmem:[#allocation2 + $0xa4] sm:$0xf]
      %v605 = vld [vmem:[#allocation2 + $0xa8] sm:$0xf]
      %v606 = vld [vmem:[#allocation2 + $0xac] sm:$0xf]
      %v607 = vld [vmem:[#allocation2 + $0xb0] sm:$0xf]
      %v608 = vld [vmem:[#allocation2 + $0xb4] sm:$0xf]
      %v609 = vld [vmem:[#allocation2 + $0xb8] sm:$0xf]
      %v610 = vld [vmem:[#allocation2 + $0xbc] sm:$0xf]
      %v611 = vld [vmem:[#allocation3] sm:$0xf]
      %v612 = vld [vmem:[#allocation3 + $0x4] sm:$0xf]
      %v613 = vld [vmem:[#allocation3 + $0x8] sm:$0xf]
      %v614 = vld [vmem:[#allocation3 + $0xc] sm:$0xf]
      %v615 = vld [vmem:[#allocation3 + $0x10] sm:$0xf]
      %v616 = vld [vmem:[#allocation3 + $0x14] sm:$0xf]
      %v617 = vld [vmem:[#allocation3 + $0x18] sm:$0xf]
      %v618 = vld [vmem:[#allocation3 + $0x1c] sm:$0xf]
      %v619 = vld [vmem:[#allocation3 + $0x20] sm:$0xf]
      %v620 = vld [vmem:[#allocation3 + $0x24] sm:$0xf]
      %v621 = vld [vmem:[#allocation3 + $0x28] sm:$0xf]
      %v622 = vld [vmem:[#allocation3 + $0x2c] sm:$0xf]
      %v623 = vld [vmem:[#allocation3 + $0x30] sm:$0xf]
      %v624 = vld [vmem:[#allocation3 + $0x34] sm:$0xf]
      %v625 = vld [vmem:[#allocation3 + $0x38] sm:$0xf]
      %v626 = vld [vmem:[#allocation3 + $0x3c] sm:$0xf]
      %v627 = vld [vmem:[#allocation3 + $0x40] sm:$0xf]
      %v628 = vld [vmem:[#allocation3 + $0x44] sm:$0xf]
      %v629 = vld [vmem:[#allocation3 + $0x48] sm:$0xf]
      %v630 = vld [vmem:[#allocation3 + $0x4c] sm:$0xf]
      %v631 = vld [vmem:[#allocation3 + $0x50] sm:$0xf]
      %v632 = vld [vmem:[#allocation3 + $0x54] sm:$0xf]
      %v633 = vld [vmem:[#allocation3 + $0x58] sm:$0xf]
      %v634 = vld [vmem:[#allocation3 + $0x5c] sm:$0xf]
      %v635 = vld [vmem:[#allocation3 + $0x60] sm:$0xf]
      %v636 = vld [vmem:[#allocation3 + $0x64] sm:$0xf]
      %v637 = vld [vmem:[#allocation3 + $0x68] sm:$0xf]
      %v638 = vld [vmem:[#allocation3 + $0x6c] sm:$0xf]
      %v639 = vld [vmem:[#allocation3 + $0x70] sm:$0xf]
      %v640 = vld [vmem:[#allocation3 + $0x74] sm:$0xf]
      %v641 = vld [vmem:[#allocation3 + $0x78] sm:$0xf]
      %v642 = vld [vmem:[#allocation3 + $0x7c] sm:$0xf]
      %v643 = vld [vmem:[#allocation3 + $0x80] sm:$0xf]
      %v644 = vld [vmem:[#allocation3 + $0x84] sm:$0xf]
      %v645 = vld [vmem:[#allocation3 + $0x88] sm:$0xf]
      %v646 = vld [vmem:[#allocation3 + $0x8c] sm:$0xf]
      %v647 = vld [vmem:[#allocation3 + $0x90] sm:$0xf]
      %v648 = vld [vmem:[#allocation3 + $0x94] sm:$0xf]
      %v649 = vld [vmem:[#allocation3 + $0x98] sm:$0xf]
      %v650 = vld [vmem:[#allocation3 + $0x9c] sm:$0xf]
      %v651 = vld [vmem:[#allocation3 + $0xa0] sm:$0xf]
      %v652 = vld [vmem:[#allocation3 + $0xa4] sm:$0xf]
      %v653 = vld [vmem:[#allocation3 + $0xa8] sm:$0xf]
      %v654 = vld [vmem:[#allocation3 + $0xac] sm:$0xf]
      %v655 = vld [vmem:[#allocation3 + $0xb0] sm:$0xf]
      %v656 = vld [vmem:[#allocation3 + $0xb4] sm:$0xf]
      %v657 = vld [vmem:[#allocation3 + $0xb8] sm:$0xf]
      %v658 = vld [vmem:[#allocation3 + $0xbc] sm:$0xf]
      %v659 = vld [vmem:[%s2] sm:$0xf]
      %v660 = vld [vmem:[%s3] sm:$0xf]
      %v661 = vld [vmem:[%s3 + $0x4] sm:$0xf]
      %v710 = vunpack.c.l.b16 %v611
      %v711 = vunpack.c.l.b16 %v612
      %v712 = vunpack.c.l.b16 %v613
      %v713 = vunpack.c.l.b16 %v614
      %v714 = vunpack.c.l.b16 %v615
      %v715 = vunpack.c.l.b16 %v616
      %v716 = vunpack.c.l.b16 %v617
      %v717 = vunpack.c.l.b16 %v618
      %v718 = vunpack.c.l.b16 %v619
      %v719 = vunpack.c.l.b16 %v620
      %v720 = vunpack.c.l.b16 %v621
      %v721 = vunpack.c.l.b16 %v622
      %v722 = vunpack.c.l.b16 %v623
      %v723 = vunpack.c.l.b16 %v624
      %v724 = vunpack.c.l.b16 %v625
      %v725 = vunpack.c.l.b16 %v626
      %v726 = vunpack.c.l.b16 %v627
      %v727 = vunpack.c.l.b16 %v628
      %v728 = vunpack.c.l.b16 %v629
      %v729 = vunpack.c.l.b16 %v630
      %v730 = vunpack.c.l.b16 %v631
      %v731 = vunpack.c.l.b16 %v632
      %v732 = vunpack.c.l.b16 %v633
      %v733 = vunpack.c.l.b16 %v634
      %v734 = vunpack.c.l.b16 %v635
      %v735 = vunpack.c.l.b16 %v636
      %v736 = vunpack.c.l.b16 %v637
      %v737 = vunpack.c.l.b16 %v638
      %v738 = vunpack.c.l.b16 %v639
      %v739 = vunpack.c.l.b16 %v640
      %v740 = vunpack.c.l.b16 %v641
      %v741 = vunpack.c.l.b16 %v642
      %v742 = vunpack.c.l.b16 %v643
      %v743 = vunpack.c.l.b16 %v644
      %v744 = vunpack.c.l.b16 %v645
      %v745 = vunpack.c.l.b16 %v646
      %v746 = vunpack.c.l.b16 %v647
      %v747 = vunpack.c.l.b16 %v648
      %v748 = vunpack.c.l.b16 %v649
      %v749 = vunpack.c.l.b16 %v650
      %v750 = vunpack.c.l.b16 %v651
      %v751 = vunpack.c.l.b16 %v652
      %v752 = vunpack.c.l.b16 %v653
      %v753 = vunpack.c.l.b16 %v654
      %v754 = vunpack.c.l.b16 %v655
      %v755 = vunpack.c.l.b16 %v656
      %v756 = vunpack.c.l.b16 %v657
      %v757 = vunpack.c.l.b16 %v658
      %v758 = vpack.c.b16 %v711, %v710
      %v759 = vpack.c.b16 %v713, %v712
      %v760 = vpack.c.b16 %v715, %v714
      %v761 = vpack.c.b16 %v717, %v716
      %v762 = vpack.c.b16 %v719, %v718
      %v763 = vpack.c.b16 %v721, %v720
      %v764 = vpack.c.b16 %v723, %v722
      %v765 = vpack.c.b16 %v725, %v724
      %v766 = vpack.c.b16 %v727, %v726
      %v767 = vpack.c.b16 %v729, %v728
      %v768 = vpack.c.b16 %v731, %v730
      %v769 = vpack.c.b16 %v733, %v732
      %v770 = vpack.c.b16 %v735, %v734
      %v771 = vpack.c.b16 %v737, %v736
      %v772 = vpack.c.b16 %v739, %v738
      %v773 = vpack.c.b16 %v741, %v740
      %v774 = vpack.c.b16 %v743, %v742
      %v775 = vpack.c.b16 %v745, %v744
      %v776 = vpack.c.b16 %v747, %v746
      %v777 = vpack.c.b16 %v749, %v748
      %v778 = vpack.c.b16 %v751, %v750
      %v779 = vpack.c.b16 %v753, %v752
      %v780 = vpack.c.b16 %v755, %v754
      %v781 = vpack.c.b16 %v757, %v756
      %v784 = vunpack.c.l.b16 %v660
      %v785 = vunpack.c.l.b16 %v661
      %v786 = vpack.c.b16 %v785, %v784
      %vm788 = vcmask 130048
      %v790 = vsel %vm788, %v758, 0
      %v793 = vsel %vm788, %v759, 0
      %v796 = vsel %vm788, %v760, 0
      %v799 = vsel %vm788, %v761, 0
      %v802 = vsel %vm788, %v762, 0
      %v805 = vsel %vm788, %v763, 0
      %v808 = vsel %vm788, %v764, 0
      %v811 = vsel %vm788, %v765, 0
      %v814 = vsel %vm788, %v766, 0
      %v817 = vsel %vm788, %v767, 0
      %v820 = vsel %vm788, %v768, 0
      %v823 = vsel %vm788, %v769, 0
      %v826 = vsel %vm788, %v770, 0
      %v829 = vsel %vm788, %v771, 0
      %v832 = vsel %vm788, %v772, 0
      %v835 = vsel %vm788, %v773, 0
      %v838 = vsel %vm788, %v774, 0
      %v841 = vsel %vm788, %v775, 0
      %v844 = vsel %vm788, %v776, 0
      %v847 = vsel %vm788, %v777, 0
      %v850 = vsel %vm788, %v778, 0
      %v853 = vsel %vm788, %v779, 0
      %v856 = vsel %vm788, %v780, 0
      %v859 = vsel %vm788, %v781, 0
      %861 = vmatprep.subr.bf16.mxu0 0
      %862 = vmatpush1.bf16.msra.mxu0 %v786
      %863 = vmatprep.subr.bf16.mxu0 0
      %864 = vmatpush1.bf16.msra.mxu0 0
      %865 = vmatprep.subr.bf16.mxu0 0
      %866 = vmatpush1.bf16.msra.mxu0 0
      %867 = vmatprep.subr.bf16.mxu0 0
      %868 = vmatpush1.bf16.msra.mxu0 0
      %869 = vmatprep.subr.bf16.mxu0 0
      %870 = vmatpush1.bf16.msra.mxu0 0
      %871 = vmatprep.subr.bf16.mxu0 0
      %872 = vmatpush1.bf16.msra.mxu0 0
      %873 = vmatprep.subr.bf16.mxu0 0
      %874 = vmatpush1.bf16.msra.mxu0 0
      %875 = vmatprep.subr.bf16.mxu0 0
      %876 = vmatpush1.bf16.msra.mxu0 0
      %877 = vmatprep.subr.bf16.mxu0 0
      %878 = vmatpush1.bf16.msra.mxu0 0
      %879 = vmatprep.subr.bf16.mxu0 0
      %880 = vmatpush1.bf16.msra.mxu0 0
      %881 = vmatprep.subr.bf16.mxu0 0
      %882 = vmatpush1.bf16.msra.mxu0 0
      %883 = vmatprep.subr.bf16.mxu0 0
      %884 = vmatpush1.bf16.msra.mxu0 0
      %885 = vmatprep.subr.bf16.mxu0 0
      %886 = vmatpush1.bf16.msra.mxu0 0
      %887 = vmatprep.subr.bf16.mxu0 0
      %888 = vmatpush1.bf16.msra.mxu0 0
      %889 = vmatprep.subr.bf16.mxu0 0
      %890 = vmatpush1.bf16.msra.mxu0 0
      %891 = vmatprep.subr.bf16.mxu0 0
      %892 = vmatpush1.bf16.msra.mxu0 0
      %893 = vmatprep.mubr.bf16.mxu0 0
      %894 = vmatmul.mubr.bf16.gmra.mrb[0].mxu0 %v790
      %v895 = vpop.f32.mrb[0].mxu0
      %v896 = vadd.f32 0.0, %v895
      %v897 = vpop.f32.mrb[0].mxu0
      %v898 = vpop.f32.mrb[0].mxu0
      %v899 = vadd.f32 0.0, %v898
      %v900 = vpop.f32.mrb[0].mxu0
      %901 = vmatprep.mubr.bf16.mxu0 0
      %902 = vmatmul.mubr.bf16.gmra.mrb[0].mxu0 %v793
      %v903 = vpop.f32.mrb[0].mxu0
      %v904 = vadd.f32 0.0, %v903
      %v905 = vpop.f32.mrb[0].mxu0
      %v906 = vpop.f32.mrb[0].mxu0
      %v907 = vadd.f32 0.0, %v906
      %v908 = vpop.f32.mrb[0].mxu0
      %909 = vmatprep.mubr.bf16.mxu0 0
      %910 = vmatmul.mubr.bf16.gmra.mrb[0].mxu0 %v796
      %v911 = vpop.f32.mrb[0].mxu0
      %v912 = vadd.f32 0.0, %v911
      %v913 = vpop.f32.mrb[0].mxu0
      %v914 = vpop.f32.mrb[0].mxu0
      %v915 = vadd.f32 0.0, %v914
      %v916 = vpop.f32.mrb[0].mxu0
      %917 = vmatprep.mubr.bf16.mxu0 0
      %918 = vmatmul.mubr.bf16.gmra.mrb[0].mxu0 %v799
      %v919 = vpop.f32.mrb[0].mxu0
      %v920 = vadd.f32 0.0, %v919
      %v921 = vpop.f32.mrb[0].mxu0
      %v922 = vpop.f32.mrb[0].mxu0
      %v923 = vadd.f32 0.0, %v922
      %v924 = vpop.f32.mrb[0].mxu0
      %925 = vmatprep.mubr.bf16.mxu0 0
      %926 = vmatmul.mubr.bf16.gmra.mrb[0].mxu0 %v802
      %v927 = vpop.f32.mrb[0].mxu0
      %v928 = vadd.f32 0.0, %v927
      %v929 = vpop.f32.mrb[0].mxu0
      %v930 = vpop.f32.mrb[0].mxu0
      %v931 = vadd.f32 0.0, %v930
      %v932 = vpop.f32.mrb[0].mxu0
      %933 = vmatprep.mubr.bf16.mxu0 0
      %934 = vmatmul.mubr.bf16.gmra.mrb[0].mxu0 %v805
      %v935 = vpop.f32.mrb[0].mxu0
      %v936 = vadd.f32 0.0, %v935
      %v937 = vpop.f32.mrb[0].mxu0
      %v938 = vpop.f32.mrb[0].mxu0
      %v939 = vadd.f32 0.0, %v938
      %v940 = vpop.f32.mrb[0].mxu0
      %941 = vmatprep.mubr.bf16.mxu0 0
      %942 = vmatmul.mubr.bf16.gmra.mrb[0].mxu0 %v808
      %v943 = vpop.f32.mrb[0].mxu0
      %v944 = vadd.f32 0.0, %v943
      %v945 = vpop.f32.mrb[0].mxu0
      %v946 = vpop.f32.mrb[0].mxu0
      %v947 = vadd.f32 0.0, %v946
      %v948 = vpop.f32.mrb[0].mxu0
      %949 = vmatprep.mubr.bf16.mxu0 0
      %950 = vmatmul.mubr.bf16.gmra.mrb[0].mxu0 %v811
      %v951 = vpop.f32.mrb[0].mxu0
      %v952 = vadd.f32 0.0, %v951
      %v953 = vpop.f32.mrb[0].mxu0
      %v954 = vpop.f32.mrb[0].mxu0
      %v955 = vadd.f32 0.0, %v954
      %v956 = vpop.f32.mrb[0].mxu0
      %957 = vmatprep.mubr.bf16.mxu0 0
      %958 = vmatmul.mubr.bf16.gmra.mrb[0].mxu0 %v814
      %v959 = vpop.f32.mrb[0].mxu0
      %v960 = vadd.f32 0.0, %v959
      %v961 = vpop.f32.mrb[0].mxu0
      %v962 = vpop.f32.mrb[0].mxu0
      %v963 = vadd.f32 0.0, %v962
      %v964 = vpop.f32.mrb[0].mxu0
      %965 = vmatprep.mubr.bf16.mxu0 0
      %966 = vmatmul.mubr.bf16.gmra.mrb[0].mxu0 %v817
      %v967 = vpop.f32.mrb[0].mxu0
      %v968 = vadd.f32 0.0, %v967
      %v969 = vpop.f32.mrb[0].mxu0
      %v970 = vpop.f32.mrb[0].mxu0
      %v971 = vadd.f32 0.0, %v970
      %v972 = vpop.f32.mrb[0].mxu0
      %973 = vmatprep.mubr.bf16.mxu0 0
      %974 = vmatmul.mubr.bf16.gmra.mrb[0].mxu0 %v820
      %v975 = vpop.f32.mrb[0].mxu0
      %v976 = vadd.f32 0.0, %v975
      %v977 = vpop.f32.mrb[0].mxu0
      %v978 = vpop.f32.mrb[0].mxu0
      %v979 = vadd.f32 0.0, %v978
      %v980 = vpop.f32.mrb[0].mxu0
      %981 = vmatprep.mubr.bf16.mxu0 0
      %982 = vmatmul.mubr.bf16.gmra.mrb[0].mxu0 %v823
      %v983 = vpop.f32.mrb[0].mxu0
      %v984 = vadd.f32 0.0, %v983
      %v985 = vpop.f32.mrb[0].mxu0
      %v986 = vpop.f32.mrb[0].mxu0
      %v987 = vadd.f32 0.0, %v986
      %v988 = vpop.f32.mrb[0].mxu0
      %989 = vmatprep.mubr.bf16.mxu0 0
      %990 = vmatmul.mubr.bf16.gmra.mrb[0].mxu0 %v826
      %v991 = vpop.f32.mrb[0].mxu0
      %v992 = vadd.f32 0.0, %v991
      %v993 = vpop.f32.mrb[0].mxu0
      %v994 = vpop.f32.mrb[0].mxu0
      %v995 = vadd.f32 0.0, %v994
      %v996 = vpop.f32.mrb[0].mxu0
      %997 = vmatprep.mubr.bf16.mxu0 0
      %998 = vmatmul.mubr.bf16.gmra.mrb[0].mxu0 %v829
      %v999 = vpop.f32.mrb[0].mxu0
      %v1000 = vadd.f32 0.0, %v999
      %v1001 = vpop.f32.mrb[0].mxu0
      %v1002 = vpop.f32.mrb[0].mxu0
      %v1003 = vadd.f32 0.0, %v1002
      %v1004 = vpop.f32.mrb[0].mxu0
      %1005 = vmatprep.mubr.bf16.mxu0 0
      %1006 = vmatmul.mubr.bf16.gmra.mrb[0].mxu0 %v832
      %v1007 = vpop.f32.mrb[0].mxu0
      %v1008 = vadd.f32 0.0, %v1007
      %v1009 = vpop.f32.mrb[0].mxu0
      %v1010 = vpop.f32.mrb[0].mxu0
      %v1011 = vadd.f32 0.0, %v1010
      %v1012 = vpop.f32.mrb[0].mxu0
      %1013 = vmatprep.mubr.bf16.mxu0 0
      %1014 = vmatmul.mubr.bf16.gmra.mrb[0].mxu0 %v835
      %v1015 = vpop.f32.mrb[0].mxu0
      %v1016 = vadd.f32 0.0, %v1015
      %v1017 = vpop.f32.mrb[0].mxu0
      %v1018 = vpop.f32.mrb[0].mxu0
      %v1019 = vadd.f32 0.0, %v1018
      %v1020 = vpop.f32.mrb[0].mxu0
      %1021 = vmatprep.mubr.bf16.mxu0 0
      %1022 = vmatmul.mubr.bf16.gmra.mrb[0].mxu0 %v838
      %v1023 = vpop.f32.mrb[0].mxu0
      %v1024 = vadd.f32 0.0, %v1023
      %v1025 = vpop.f32.mrb[0].mxu0
      %v1026 = vpop.f32.mrb[0].mxu0
      %v1027 = vadd.f32 0.0, %v1026
      %v1028 = vpop.f32.mrb[0].mxu0
      %1029 = vmatprep.mubr.bf16.mxu0 0
      %1030 = vmatmul.mubr.bf16.gmra.mrb[0].mxu0 %v841
      %v1031 = vpop.f32.mrb[0].mxu0
      %v1032 = vadd.f32 0.0, %v1031
      %v1033 = vpop.f32.mrb[0].mxu0
      %v1034 = vpop.f32.mrb[0].mxu0
      %v1035 = vadd.f32 0.0, %v1034
      %v1036 = vpop.f32.mrb[0].mxu0
      %1037 = vmatprep.mubr.bf16.mxu0 0
      %1038 = vmatmul.mubr.bf16.gmra.mrb[0].mxu0 %v844
      %v1039 = vpop.f32.mrb[0].mxu0
      %v1040 = vadd.f32 0.0, %v1039
      %v1041 = vpop.f32.mrb[0].mxu0
      %v1042 = vpop.f32.mrb[0].mxu0
      %v1043 = vadd.f32 0.0, %v1042
      %v1044 = vpop.f32.mrb[0].mxu0
      %1045 = vmatprep.mubr.bf16.mxu0 0
      %1046 = vmatmul.mubr.bf16.gmra.mrb[0].mxu0 %v847
      %v1047 = vpop.f32.mrb[0].mxu0
      %v1048 = vadd.f32 0.0, %v1047
      %v1049 = vpop.f32.mrb[0].mxu0
      %v1050 = vpop.f32.mrb[0].mxu0
      %v1051 = vadd.f32 0.0, %v1050
      %v1052 = vpop.f32.mrb[0].mxu0
      %1053 = vmatprep.mubr.bf16.mxu0 0
      %1054 = vmatmul.mubr.bf16.gmra.mrb[0].mxu0 %v850
      %v1055 = vpop.f32.mrb[0].mxu0
      %v1056 = vadd.f32 0.0, %v1055
      %v1057 = vpop.f32.mrb[0].mxu0
      %v1058 = vpop.f32.mrb[0].mxu0
      %v1059 = vadd.f32 0.0, %v1058
      %v1060 = vpop.f32.mrb[0].mxu0
      %1061 = vmatprep.mubr.bf16.mxu0 0
      %1062 = vmatmul.mubr.bf16.gmra.mrb[0].mxu0 %v853
      %v1063 = vpop.f32.mrb[0].mxu0
      %v1064 = vadd.f32 0.0, %v1063
      %v1065 = vpop.f32.mrb[0].mxu0
      %v1066 = vpop.f32.mrb[0].mxu0
      %v1067 = vadd.f32 0.0, %v1066
      %v1068 = vpop.f32.mrb[0].mxu0
      %1069 = vmatprep.mubr.bf16.mxu0 0
      %1070 = vmatmul.mubr.bf16.gmra.mrb[0].mxu0 %v856
      %v1071 = vpop.f32.mrb[0].mxu0
      %v1072 = vadd.f32 0.0, %v1071
      %v1073 = vpop.f32.mrb[0].mxu0
      %v1074 = vpop.f32.mrb[0].mxu0
      %v1075 = vadd.f32 0.0, %v1074
      %v1076 = vpop.f32.mrb[0].mxu0
      %1077 = vmatprep.mubr.bf16.mxu0 0
      %1078 = vmatmul.mubr.bf16.gmra.mrb[0].mxu0 %v859
      %v1079 = vpop.f32.mrb[0].mxu0
      %v1080 = vadd.f32 0.0, %v1079
      %v1081 = vpop.f32.mrb[0].mxu0
      %v1082 = vpop.f32.mrb[0].mxu0
      %v1083 = vadd.f32 0.0, %v1082
      %v1084 = vpop.f32.mrb[0].mxu0
      %1085 = vdwg.mxu0
      %v1134 = vunpack.c.l.b16 %v563
      %v1135 = vunpack.c.l.b16 %v564
      %v1136 = vunpack.c.l.b16 %v565
      %v1137 = vunpack.c.l.b16 %v566
      %v1138 = vunpack.c.l.b16 %v567
      %v1139 = vunpack.c.l.b16 %v568
      %v1140 = vunpack.c.l.b16 %v569
      %v1141 = vunpack.c.l.b16 %v570
      %v1142 = vunpack.c.l.b16 %v571
      %v1143 = vunpack.c.l.b16 %v572
      %v1144 = vunpack.c.l.b16 %v573
      %v1145 = vunpack.c.l.b16 %v574
      %v1146 = vunpack.c.l.b16 %v575
      %v1147 = vunpack.c.l.b16 %v576
      %v1148 = vunpack.c.l.b16 %v577
      %v1149 = vunpack.c.l.b16 %v578
      %v1150 = vunpack.c.l.b16 %v579
      %v1151 = vunpack.c.l.b16 %v580
      %v1152 = vunpack.c.l.b16 %v581
      %v1153 = vunpack.c.l.b16 %v582
      %v1154 = vunpack.c.l.b16 %v583
      %v1155 = vunpack.c.l.b16 %v584
      %v1156 = vunpack.c.l.b16 %v585
      %v1157 = vunpack.c.l.b16 %v586
      %v1158 = vunpack.c.l.b16 %v587
      %v1159 = vunpack.c.l.b16 %v588
      %v1160 = vunpack.c.l.b16 %v589
      %v1161 = vunpack.c.l.b16 %v590
      %v1162 = vunpack.c.l.b16 %v591
      %v1163 = vunpack.c.l.b16 %v592
      %v1164 = vunpack.c.l.b16 %v593
      %v1165 = vunpack.c.l.b16 %v594
      %v1166 = vunpack.c.l.b16 %v595
      %v1167 = vunpack.c.l.b16 %v596
      %v1168 = vunpack.c.l.b16 %v597
      %v1169 = vunpack.c.l.b16 %v598
      %v1170 = vunpack.c.l.b16 %v599
      %v1171 = vunpack.c.l.b16 %v600
      %v1172 = vunpack.c.l.b16 %v601
      %v1173 = vunpack.c.l.b16 %v602
      %v1174 = vunpack.c.l.b16 %v603
      %v1175 = vunpack.c.l.b16 %v604
      %v1176 = vunpack.c.l.b16 %v605
      %v1177 = vunpack.c.l.b16 %v606
      %v1178 = vunpack.c.l.b16 %v607
      %v1179 = vunpack.c.l.b16 %v608
      %v1180 = vunpack.c.l.b16 %v609
      %v1181 = vunpack.c.l.b16 %v610
      %v1182 = vpack.c.b16 %v1135, %v1134
      %v1183 = vpack.c.b16 %v1137, %v1136
      %v1184 = vpack.c.b16 %v1139, %v1138
      %v1185 = vpack.c.b16 %v1141, %v1140
      %v1186 = vpack.c.b16 %v1143, %v1142
      %v1187 = vpack.c.b16 %v1145, %v1144
      %v1188 = vpack.c.b16 %v1147, %v1146
      %v1189 = vpack.c.b16 %v1149, %v1148
      %v1190 = vpack.c.b16 %v1151, %v1150
      %v1191 = vpack.c.b16 %v1153, %v1152
      %v1192 = vpack.c.b16 %v1155, %v1154
      %v1193 = vpack.c.b16 %v1157, %v1156
      %v1194 = vpack.c.b16 %v1159, %v1158
      %v1195 = vpack.c.b16 %v1161, %v1160
      %v1196 = vpack.c.b16 %v1163, %v1162
      %v1197 = vpack.c.b16 %v1165, %v1164
      %v1198 = vpack.c.b16 %v1167, %v1166
      %v1199 = vpack.c.b16 %v1169, %v1168
      %v1200 = vpack.c.b16 %v1171, %v1170
      %v1201 = vpack.c.b16 %v1173, %v1172
      %v1202 = vpack.c.b16 %v1175, %v1174
      %v1203 = vpack.c.b16 %v1177, %v1176
      %v1204 = vpack.c.b16 %v1179, %v1178
      %v1205 = vpack.c.b16 %v1181, %v1180
      %vm1206 = vcmask 64512
      %v1208 = vsel %vm1206, %v1182, 0
      %v1211 = vsel %vm1206, %v1183, 0
      %v1214 = vsel %vm1206, %v1184, 0
      %v1217 = vsel %vm1206, %v1185, 0
      %v1220 = vsel %vm1206, %v1186, 0
      %v1223 = vsel %vm1206, %v1187, 0
      %v1226 = vsel %vm1206, %v1188, 0
      %v1229 = vsel %vm1206, %v1189, 0
      %v1232 = vsel %vm1206, %v1190, 0
      %v1235 = vsel %vm1206, %v1191, 0
      %v1238 = vsel %vm1206, %v1192, 0
      %v1241 = vsel %vm1206, %v1193, 0
      %v1244 = vsel %vm1206, %v1194, 0
      %v1247 = vsel %vm1206, %v1195, 0
      %v1250 = vsel %vm1206, %v1196, 0
      %v1253 = vsel %vm1206, %v1197, 0
      %v1256 = vsel %vm1206, %v1198, 0
      %v1259 = vsel %vm1206, %v1199, 0
      %v1262 = vsel %vm1206, %v1200, 0
      %v1265 = vsel %vm1206, %v1201, 0
      %v1268 = vsel %vm1206, %v1202, 0
      %v1271 = vsel %vm1206, %v1203, 0
      %v1274 = vsel %vm1206, %v1204, 0
      %v1277 = vsel %vm1206, %v1205, 0
      %vm1279 = vcmask 1043456
      %v1281 = vsel %vm1279, %v659, 0
      %1283 = vmatprep.subr.bf16.mxu0 0
      %1284 = vmatpush1.bf16.msra.mxu0 %v1281
      %1285 = vmatprep.subr.bf16.mxu0 0
      %1286 = vmatpush1.bf16.msra.mxu0 0
      %1287 = vmatprep.subr.bf16.mxu0 0
      %1288 = vmatpush1.bf16.msra.mxu0 0
      %1289 = vmatprep.subr.bf16.mxu0 0
      %1290 = vmatpush1.bf16.msra.mxu0 0
      %1291 = vmatprep.subr.bf16.mxu0 0
      %1292 = vmatpush1.bf16.msra.mxu0 0
      %1293 = vmatprep.subr.bf16.mxu0 0
      %1294 = vmatpush1.bf16.msra.mxu0 0
      %1295 = vmatprep.subr.bf16.mxu0 0
      %1296 = vmatpush1.bf16.msra.mxu0 0
      %1297 = vmatprep.subr.bf16.mxu0 0
      %1298 = vmatpush1.bf16.msra.mxu0 0
      %1299 = vmatprep.subr.bf16.mxu0 0
      %1300 = vmatpush1.bf16.msra.mxu0 0
      %1301 = vmatprep.subr.bf16.mxu0 0
      %1302 = vmatpush1.bf16.msra.mxu0 0
      %1303 = vmatprep.subr.bf16.mxu0 0
      %1304 = vmatpush1.bf16.msra.mxu0 0
      %1305 = vmatprep.subr.bf16.mxu0 0
      %1306 = vmatpush1.bf16.msra.mxu0 0
      %1307 = vmatprep.subr.bf16.mxu0 0
      %1308 = vmatpush1.bf16.msra.mxu0 0
      %1309 = vmatprep.subr.bf16.mxu0 0
      %1310 = vmatpush1.bf16.msra.mxu0 0
      %1311 = vmatprep.subr.bf16.mxu0 0
      %1312 = vmatpush1.bf16.msra.mxu0 0
      %1313 = vmatprep.subr.bf16.mxu0 0
      %1314 = vmatpush1.bf16.msra.mxu0 0
      %1315 = vmatprep.mubr.bf16.mxu0 0
      %1316 = vmatmul.mubr.bf16.gmra.mrb[0].mxu0 %v1208
      %v1317 = vpop.f32.mrb[0].mxu0
      %v1318 = vadd.f32 %v896, %v1317
      %v1319 = vpop.f32.mrb[0].mxu0
      %v1320 = vpop.f32.mrb[0].mxu0
      %v1321 = vadd.f32 %v899, %v1320
      %v1322 = vpop.f32.mrb[0].mxu0
      %1323 = vmatprep.mubr.bf16.mxu0 0
      %1324 = vmatmul.mubr.bf16.gmra.mrb[0].mxu0 %v1211
      %v1325 = vpop.f32.mrb[0].mxu0
      %v1326 = vadd.f32 %v904, %v1325
      %v1327 = vpop.f32.mrb[0].mxu0
      %v1328 = vpop.f32.mrb[0].mxu0
      %v1329 = vadd.f32 %v907, %v1328
      %v1330 = vpop.f32.mrb[0].mxu0
      %1331 = vmatprep.mubr.bf16.mxu0 0
      %1332 = vmatmul.mubr.bf16.gmra.mrb[0].mxu0 %v1214
      %v1333 = vpop.f32.mrb[0].mxu0
      %v1334 = vadd.f32 %v912, %v1333
      %v1335 = vpop.f32.mrb[0].mxu0
      %v1336 = vpop.f32.mrb[0].mxu0
      %v1337 = vadd.f32 %v915, %v1336
      %v1338 = vpop.f32.mrb[0].mxu0
      %1339 = vmatprep.mubr.bf16.mxu0 0
      %1340 = vmatmul.mubr.bf16.gmra.mrb[0].mxu0 %v1217
      %v1341 = vpop.f32.mrb[0].mxu0
      %v1342 = vadd.f32 %v920, %v1341
      %v1343 = vpop.f32.mrb[0].mxu0
      %v1344 = vpop.f32.mrb[0].mxu0
      %v1345 = vadd.f32 %v923, %v1344
      %v1346 = vpop.f32.mrb[0].mxu0
      %1347 = vmatprep.mubr.bf16.mxu0 0
      %1348 = vmatmul.mubr.bf16.gmra.mrb[0].mxu0 %v1220
      %v1349 = vpop.f32.mrb[0].mxu0
      %v1350 = vadd.f32 %v928, %v1349
      %v1351 = vpop.f32.mrb[0].mxu0
      %v1352 = vpop.f32.mrb[0].mxu0
      %v1353 = vadd.f32 %v931, %v1352
      %v1354 = vpop.f32.mrb[0].mxu0
      %1355 = vmatprep.mubr.bf16.mxu0 0
      %1356 = vmatmul.mubr.bf16.gmra.mrb[0].mxu0 %v1223
      %v1357 = vpop.f32.mrb[0].mxu0
      %v1358 = vadd.f32 %v936, %v1357
      %v1359 = vpop.f32.mrb[0].mxu0
      %v1360 = vpop.f32.mrb[0].mxu0
      %v1361 = vadd.f32 %v939, %v1360
      %v1362 = vpop.f32.mrb[0].mxu0
      %1363 = vmatprep.mubr.bf16.mxu0 0
      %1364 = vmatmul.mubr.bf16.gmra.mrb[0].mxu0 %v1226
      %v1365 = vpop.f32.mrb[0].mxu0
      %v1366 = vadd.f32 %v944, %v1365
      %v1367 = vpop.f32.mrb[0].mxu0
      %v1368 = vpop.f32.mrb[0].mxu0
      %v1369 = vadd.f32 %v947, %v1368
      %v1370 = vpop.f32.mrb[0].mxu0
      %1371 = vmatprep.mubr.bf16.mxu0 0
      %1372 = vmatmul.mubr.bf16.gmra.mrb[0].mxu0 %v1229
      %v1373 = vpop.f32.mrb[0].mxu0
      %v1374 = vadd.f32 %v952, %v1373
      %v1375 = vpop.f32.mrb[0].mxu0
      %v1376 = vpop.f32.mrb[0].mxu0
      %v1377 = vadd.f32 %v955, %v1376
      %v1378 = vpop.f32.mrb[0].mxu0
      %1379 = vmatprep.mubr.bf16.mxu0 0
      %1380 = vmatmul.mubr.bf16.gmra.mrb[0].mxu0 %v1232
      %v1381 = vpop.f32.mrb[0].mxu0
      %v1382 = vadd.f32 %v960, %v1381
      %v1383 = vpop.f32.mrb[0].mxu0
      %v1384 = vpop.f32.mrb[0].mxu0
      %v1385 = vadd.f32 %v963, %v1384
      %v1386 = vpop.f32.mrb[0].mxu0
      %1387 = vmatprep.mubr.bf16.mxu0 0
      %1388 = vmatmul.mubr.bf16.gmra.mrb[0].mxu0 %v1235
      %v1389 = vpop.f32.mrb[0].mxu0
      %v1390 = vadd.f32 %v968, %v1389
      %v1391 = vpop.f32.mrb[0].mxu0
      %v1392 = vpop.f32.mrb[0].mxu0
      %v1393 = vadd.f32 %v971, %v1392
      %v1394 = vpop.f32.mrb[0].mxu0
      %1395 = vmatprep.mubr.bf16.mxu0 0
      %1396 = vmatmul.mubr.bf16.gmra.mrb[0].mxu0 %v1238
      %v1397 = vpop.f32.mrb[0].mxu0
      %v1398 = vadd.f32 %v976, %v1397
      %v1399 = vpop.f32.mrb[0].mxu0
      %v1400 = vpop.f32.mrb[0].mxu0
      %v1401 = vadd.f32 %v979, %v1400
      %v1402 = vpop.f32.mrb[0].mxu0
      %1403 = vmatprep.mubr.bf16.mxu0 0
      %1404 = vmatmul.mubr.bf16.gmra.mrb[0].mxu0 %v1241
      %v1405 = vpop.f32.mrb[0].mxu0
      %v1406 = vadd.f32 %v984, %v1405
      %v1407 = vpop.f32.mrb[0].mxu0
      %v1408 = vpop.f32.mrb[0].mxu0
      %v1409 = vadd.f32 %v987, %v1408
      %v1410 = vpop.f32.mrb[0].mxu0
      %1411 = vmatprep.mubr.bf16.mxu0 0
      %1412 = vmatmul.mubr.bf16.gmra.mrb[0].mxu0 %v1244
      %v1413 = vpop.f32.mrb[0].mxu0
      %v1414 = vadd.f32 %v992, %v1413
      %v1415 = vpop.f32.mrb[0].mxu0
      %v1416 = vpop.f32.mrb[0].mxu0
      %v1417 = vadd.f32 %v995, %v1416
      %v1418 = vpop.f32.mrb[0].mxu0
      %1419 = vmatprep.mubr.bf16.mxu0 0
      %1420 = vmatmul.mubr.bf16.gmra.mrb[0].mxu0 %v1247
      %v1421 = vpop.f32.mrb[0].mxu0
      %v1422 = vadd.f32 %v1000, %v1421
      %v1423 = vpop.f32.mrb[0].mxu0
      %v1424 = vpop.f32.mrb[0].mxu0
      %v1425 = vadd.f32 %v1003, %v1424
      %v1426 = vpop.f32.mrb[0].mxu0
      %1427 = vmatprep.mubr.bf16.mxu0 0
      %1428 = vmatmul.mubr.bf16.gmra.mrb[0].mxu0 %v1250
      %v1429 = vpop.f32.mrb[0].mxu0
      %v1430 = vadd.f32 %v1008, %v1429
      %v1431 = vpop.f32.mrb[0].mxu0
      %v1432 = vpop.f32.mrb[0].mxu0
      %v1433 = vadd.f32 %v1011, %v1432
      %v1434 = vpop.f32.mrb[0].mxu0
      %1435 = vmatprep.mubr.bf16.mxu0 0
      %1436 = vmatmul.mubr.bf16.gmra.mrb[0].mxu0 %v1253
      %v1437 = vpop.f32.mrb[0].mxu0
      %v1438 = vadd.f32 %v1016, %v1437
      %v1439 = vpop.f32.mrb[0].mxu0
      %v1440 = vpop.f32.mrb[0].mxu0
      %v1441 = vadd.f32 %v1019, %v1440
      %v1442 = vpop.f32.mrb[0].mxu0
      %1443 = vmatprep.mubr.bf16.mxu0 0
      %1444 = vmatmul.mubr.bf16.gmra.mrb[0].mxu0 %v1256
      %v1445 = vpop.f32.mrb[0].mxu0
      %v1446 = vadd.f32 %v1024, %v1445
      %v1447 = vpop.f32.mrb[0].mxu0
      %v1448 = vpop.f32.mrb[0].mxu0
      %v1449 = vadd.f32 %v1027, %v1448
      %v1450 = vpop.f32.mrb[0].mxu0
      %1451 = vmatprep.mubr.bf16.mxu0 0
      %1452 = vmatmul.mubr.bf16.gmra.mrb[0].mxu0 %v1259
      %v1453 = vpop.f32.mrb[0].mxu0
      %v1454 = vadd.f32 %v1032, %v1453
      %v1455 = vpop.f32.mrb[0].mxu0
      %v1456 = vpop.f32.mrb[0].mxu0
      %v1457 = vadd.f32 %v1035, %v1456
      %v1458 = vpop.f32.mrb[0].mxu0
      %1459 = vmatprep.mubr.bf16.mxu0 0
      %1460 = vmatmul.mubr.bf16.gmra.mrb[0].mxu0 %v1262
      %v1461 = vpop.f32.mrb[0].mxu0
      %v1462 = vadd.f32 %v1040, %v1461
      %v1463 = vpop.f32.mrb[0].mxu0
      %v1464 = vpop.f32.mrb[0].mxu0
      %v1465 = vadd.f32 %v1043, %v1464
      %v1466 = vpop.f32.mrb[0].mxu0
      %1467 = vmatprep.mubr.bf16.mxu0 0
      %1468 = vmatmul.mubr.bf16.gmra.mrb[0].mxu0 %v1265
      %v1469 = vpop.f32.mrb[0].mxu0
      %v1470 = vadd.f32 %v1048, %v1469
      %v1471 = vpop.f32.mrb[0].mxu0
      %v1472 = vpop.f32.mrb[0].mxu0
      %v1473 = vadd.f32 %v1051, %v1472
      %v1474 = vpop.f32.mrb[0].mxu0
      %1475 = vmatprep.mubr.bf16.mxu0 0
      %1476 = vmatmul.mubr.bf16.gmra.mrb[0].mxu0 %v1268
      %v1477 = vpop.f32.mrb[0].mxu0
      %v1478 = vadd.f32 %v1056, %v1477
      %v1479 = vpop.f32.mrb[0].mxu0
      %v1480 = vpop.f32.mrb[0].mxu0
      %v1481 = vadd.f32 %v1059, %v1480
      %v1482 = vpop.f32.mrb[0].mxu0
      %1483 = vmatprep.mubr.bf16.mxu0 0
      %1484 = vmatmul.mubr.bf16.gmra.mrb[0].mxu0 %v1271
      %v1485 = vpop.f32.mrb[0].mxu0
      %v1486 = vadd.f32 %v1064, %v1485
      %v1487 = vpop.f32.mrb[0].mxu0
      %v1488 = vpop.f32.mrb[0].mxu0
      %v1489 = vadd.f32 %v1067, %v1488
      %v1490 = vpop.f32.mrb[0].mxu0
      %1491 = vmatprep.mubr.bf16.mxu0 0
      %1492 = vmatmul.mubr.bf16.gmra.mrb[0].mxu0 %v1274
      %v1493 = vpop.f32.mrb[0].mxu0
      %v1494 = vadd.f32 %v1072, %v1493
      %v1495 = vpop.f32.mrb[0].mxu0
      %v1496 = vpop.f32.mrb[0].mxu0
      %v1497 = vadd.f32 %v1075, %v1496
      %v1498 = vpop.f32.mrb[0].mxu0
      %1499 = vmatprep.mubr.bf16.mxu0 0
      %1500 = vmatmul.mubr.bf16.gmra.mrb[0].mxu0 %v1277
      %v1501 = vpop.f32.mrb[0].mxu0
      %v1502 = vadd.f32 %v1080, %v1501
      %v1503 = vpop.f32.mrb[0].mxu0
      %v1504 = vpop.f32.mrb[0].mxu0
      %v1505 = vadd.f32 %v1083, %v1504
      %v1506 = vpop.f32.mrb[0].mxu0
      %1507 = vdwg.mxu0
      %s1508 = scalar_lea.vmem %s2, 4
      %v1509 = vld [vmem:[%s1508] sm:$0xf]
      %v1511 = vsel %vm1279, %v1509, 0
      %1513 = vmatprep.subr.bf16.mxu0 0
      %1514 = vmatpush1.bf16.msra.mxu0 %v1511
      %1515 = vmatprep.subr.bf16.mxu0 0
      %1516 = vmatpush1.bf16.msra.mxu0 0
      %1517 = vmatprep.subr.bf16.mxu0 0
      %1518 = vmatpush1.bf16.msra.mxu0 0
      %1519 = vmatprep.subr.bf16.mxu0 0
      %1520 = vmatpush1.bf16.msra.mxu0 0
      %1521 = vmatprep.subr.bf16.mxu0 0
      %1522 = vmatpush1.bf16.msra.mxu0 0
      %1523 = vmatprep.subr.bf16.mxu0 0
      %1524 = vmatpush1.bf16.msra.mxu0 0
      %1525 = vmatprep.subr.bf16.mxu0 0
      %1526 = vmatpush1.bf16.msra.mxu0 0
      %1527 = vmatprep.subr.bf16.mxu0 0
      %1528 = vmatpush1.bf16.msra.mxu0 0
      %1529 = vmatprep.subr.bf16.mxu0 0
      %1530 = vmatpush1.bf16.msra.mxu0 0
      %1531 = vmatprep.subr.bf16.mxu0 0
      %1532 = vmatpush1.bf16.msra.mxu0 0
      %1533 = vmatprep.subr.bf16.mxu0 0
      %1534 = vmatpush1.bf16.msra.mxu0 0
      %1535 = vmatprep.subr.bf16.mxu0 0
      %1536 = vmatpush1.bf16.msra.mxu0 0
      %1537 = vmatprep.subr.bf16.mxu0 0
      %1538 = vmatpush1.bf16.msra.mxu0 0
      %1539 = vmatprep.subr.bf16.mxu0 0
      %1540 = vmatpush1.bf16.msra.mxu0 0
      %1541 = vmatprep.subr.bf16.mxu0 0
      %1542 = vmatpush1.bf16.msra.mxu0 0
      %1543 = vmatprep.subr.bf16.mxu0 0
      %1544 = vmatpush1.bf16.msra.mxu0 0
      %1545 = vmatprep.mubr.bf16.mxu0 0
      %1546 = vmatmul.mubr.bf16.gmra.mrb[0].mxu0 %v1208
      %v1547 = vpop.f32.mrb[0].mxu0
      %v1548 = vadd.f32 0.0, %v1547
      %v1549 = vpop.f32.mrb[0].mxu0
      %v1550 = vpop.f32.mrb[0].mxu0
      %v1551 = vadd.f32 0.0, %v1550
      %v1552 = vpop.f32.mrb[0].mxu0
      %1553 = vmatprep.mubr.bf16.mxu0 0
      %1554 = vmatmul.mubr.bf16.gmra.mrb[0].mxu0 %v1211
      %v1555 = vpop.f32.mrb[0].mxu0
      %v1556 = vpop.f32.mrb[0].mxu0
      %v1557 = vpop.f32.mrb[0].mxu0
      %v1558 = vadd.f32 0.0, %v1557
      %v1559 = vpop.f32.mrb[0].mxu0
      %1560 = vmatprep.mubr.bf16.mxu0 0
      %1561 = vmatmul.mubr.bf16.gmra.mrb[0].mxu0 %v1214
      %v1562 = vpop.f32.mrb[0].mxu0
      %v1563 = vadd.f32 0.0, %v1562
      %v1564 = vpop.f32.mrb[0].mxu0
      %v1565 = vpop.f32.mrb[0].mxu0
      %v1566 = vpop.f32.mrb[0].mxu0
      %1567 = vmatprep.mubr.bf16.mxu0 0
      %1568 = vmatmul.mubr.bf16.gmra.mrb[0].mxu0 %v1217
      %v1569 = vpop.f32.mrb[0].mxu0
      %v1570 = vadd.f32 0.0, %v1569
      %v1571 = vpop.f32.mrb[0].mxu0
      %v1572 = vpop.f32.mrb[0].mxu0
      %v1573 = vadd.f32 0.0, %v1572
      %v1574 = vpop.f32.mrb[0].mxu0
      %1575 = vmatprep.mubr.bf16.mxu0 0
      %1576 = vmatmul.mubr.bf16.gmra.mrb[0].mxu0 %v1220
      %v1577 = vpop.f32.mrb[0].mxu0
      %v1578 = vpop.f32.mrb[0].mxu0
      %v1579 = vpop.f32.mrb[0].mxu0
      %v1580 = vadd.f32 0.0, %v1579
      %v1581 = vpop.f32.mrb[0].mxu0
      %1582 = vmatprep.mubr.bf16.mxu0 0
      %1583 = vmatmul.mubr.bf16.gmra.mrb[0].mxu0 %v1223
      %v1584 = vpop.f32.mrb[0].mxu0
      %v1585 = vadd.f32 0.0, %v1584
      %v1586 = vpop.f32.mrb[0].mxu0
      %v1587 = vpop.f32.mrb[0].mxu0
      %v1588 = vpop.f32.mrb[0].mxu0
      %1589 = vmatprep.mubr.bf16.mxu0 0
      %1590 = vmatmul.mubr.bf16.gmra.mrb[0].mxu0 %v1226
      %v1591 = vpop.f32.mrb[0].mxu0
      %v1592 = vadd.f32 0.0, %v1591
      %v1593 = vpop.f32.mrb[0].mxu0
      %v1594 = vpop.f32.mrb[0].mxu0
      %v1595 = vadd.f32 0.0, %v1594
      %v1596 = vpop.f32.mrb[0].mxu0
      %1597 = vmatprep.mubr.bf16.mxu0 0
      %1598 = vmatmul.mubr.bf16.gmra.mrb[0].mxu0 %v1229
      %v1599 = vpop.f32.mrb[0].mxu0
      %v1600 = vpop.f32.mrb[0].mxu0
      %v1601 = vpop.f32.mrb[0].mxu0
      %v1602 = vadd.f32 0.0, %v1601
      %v1603 = vpop.f32.mrb[0].mxu0
      %1604 = vmatprep.mubr.bf16.mxu0 0
      %1605 = vmatmul.mubr.bf16.gmra.mrb[0].mxu0 %v1232
      %v1606 = vpop.f32.mrb[0].mxu0
      %v1607 = vadd.f32 0.0, %v1606
      %v1608 = vpop.f32.mrb[0].mxu0
      %v1609 = vpop.f32.mrb[0].mxu0
      %v1610 = vpop.f32.mrb[0].mxu0
      %1611 = vmatprep.mubr.bf16.mxu0 0
      %1612 = vmatmul.mubr.bf16.gmra.mrb[0].mxu0 %v1235
      %v1613 = vpop.f32.mrb[0].mxu0
      %v1614 = vadd.f32 0.0, %v1613
      %v1615 = vpop.f32.mrb[0].mxu0
      %v1616 = vpop.f32.mrb[0].mxu0
      %v1617 = vadd.f32 0.0, %v1616
      %v1618 = vpop.f32.mrb[0].mxu0
      %1619 = vmatprep.mubr.bf16.mxu0 0
      %1620 = vmatmul.mubr.bf16.gmra.mrb[0].mxu0 %v1238
      %v1621 = vpop.f32.mrb[0].mxu0
      %v1622 = vpop.f32.mrb[0].mxu0
      %v1623 = vpop.f32.mrb[0].mxu0
      %v1624 = vadd.f32 0.0, %v1623
      %v1625 = vpop.f32.mrb[0].mxu0
      %1626 = vmatprep.mubr.bf16.mxu0 0
      %1627 = vmatmul.mubr.bf16.gmra.mrb[0].mxu0 %v1241
      %v1628 = vpop.f32.mrb[0].mxu0
      %v1629 = vadd.f32 0.0, %v1628
      %v1630 = vpop.f32.mrb[0].mxu0
      %v1631 = vpop.f32.mrb[0].mxu0
      %v1632 = vpop.f32.mrb[0].mxu0
      %1633 = vmatprep.mubr.bf16.mxu0 0
      %1634 = vmatmul.mubr.bf16.gmra.mrb[0].mxu0 %v1244
      %v1635 = vpop.f32.mrb[0].mxu0
      %v1636 = vadd.f32 0.0, %v1635
      %v1637 = vpop.f32.mrb[0].mxu0
      %v1638 = vpop.f32.mrb[0].mxu0
      %v1639 = vadd.f32 0.0, %v1638
      %v1640 = vpop.f32.mrb[0].mxu0
      %1641 = vmatprep.mubr.bf16.mxu0 0
      %1642 = vmatmul.mubr.bf16.gmra.mrb[0].mxu0 %v1247
      %v1643 = vpop.f32.mrb[0].mxu0
      %v1644 = vpop.f32.mrb[0].mxu0
      %v1645 = vpop.f32.mrb[0].mxu0
      %v1646 = vadd.f32 0.0, %v1645
      %v1647 = vpop.f32.mrb[0].mxu0
      %1648 = vmatprep.mubr.bf16.mxu0 0
      %1649 = vmatmul.mubr.bf16.gmra.mrb[0].mxu0 %v1250
      %v1650 = vpop.f32.mrb[0].mxu0
      %v1651 = vadd.f32 0.0, %v1650
      %v1652 = vpop.f32.mrb[0].mxu0
      %v1653 = vpop.f32.mrb[0].mxu0
      %v1654 = vpop.f32.mrb[0].mxu0
      %1655 = vmatprep.mubr.bf16.mxu0 0
      %1656 = vmatmul.mubr.bf16.gmra.mrb[0].mxu0 %v1253
      %v1657 = vpop.f32.mrb[0].mxu0
      %v1658 = vadd.f32 0.0, %v1657
      %v1659 = vpop.f32.mrb[0].mxu0
      %v1660 = vpop.f32.mrb[0].mxu0
      %v1661 = vadd.f32 0.0, %v1660
      %v1662 = vpop.f32.mrb[0].mxu0
      %1663 = vmatprep.mubr.bf16.mxu0 0
      %1664 = vmatmul.mubr.bf16.gmra.mrb[0].mxu0 %v1256
      %v1665 = vpop.f32.mrb[0].mxu0
      %v1666 = vpop.f32.mrb[0].mxu0
      %v1667 = vpop.f32.mrb[0].mxu0
      %v1668 = vadd.f32 0.0, %v1667
      %v1669 = vpop.f32.mrb[0].mxu0
      %1670 = vmatprep.mubr.bf16.mxu0 0
      %1671 = vmatmul.mubr.bf16.gmra.mrb[0].mxu0 %v1259
      %v1672 = vpop.f32.mrb[0].mxu0
      %v1673 = vadd.f32 0.0, %v1672
      %v1674 = vpop.f32.mrb[0].mxu0
      %v1675 = vpop.f32.mrb[0].mxu0
      %v1676 = vpop.f32.mrb[0].mxu0
      %1677 = vmatprep.mubr.bf16.mxu0 0
      %1678 = vmatmul.mubr.bf16.gmra.mrb[0].mxu0 %v1262
      %v1679 = vpop.f32.mrb[0].mxu0
      %v1680 = vadd.f32 0.0, %v1679
      %v1681 = vpop.f32.mrb[0].mxu0
      %v1682 = vpop.f32.mrb[0].mxu0
      %v1683 = vadd.f32 0.0, %v1682
      %v1684 = vpop.f32.mrb[0].mxu0
      %1685 = vmatprep.mubr.bf16.mxu0 0
      %1686 = vmatmul.mubr.bf16.gmra.mrb[0].mxu0 %v1265
      %v1687 = vpop.f32.mrb[0].mxu0
      %v1688 = vpop.f32.mrb[0].mxu0
      %v1689 = vpop.f32.mrb[0].mxu0
      %v1690 = vadd.f32 0.0, %v1689
      %v1691 = vpop.f32.mrb[0].mxu0
      %1692 = vmatprep.mubr.bf16.mxu0 0
      %1693 = vmatmul.mubr.bf16.gmra.mrb[0].mxu0 %v1268
      %v1694 = vpop.f32.mrb[0].mxu0
      %v1695 = vadd.f32 0.0, %v1694
      %v1696 = vpop.f32.mrb[0].mxu0
      %v1697 = vpop.f32.mrb[0].mxu0
      %v1698 = vpop.f32.mrb[0].mxu0
      %1699 = vmatprep.mubr.bf16.mxu0 0
      %1700 = vmatmul.mubr.bf16.gmra.mrb[0].mxu0 %v1271
      %v1701 = vpop.f32.mrb[0].mxu0
      %v1702 = vadd.f32 0.0, %v1701
      %v1703 = vpop.f32.mrb[0].mxu0
      %v1704 = vpop.f32.mrb[0].mxu0
      %v1705 = vadd.f32 0.0, %v1704
      %v1706 = vpop.f32.mrb[0].mxu0
      %1707 = vmatprep.mubr.bf16.mxu0 0
      %1708 = vmatmul.mubr.bf16.gmra.mrb[0].mxu0 %v1274
      %v1709 = vpop.f32.mrb[0].mxu0
      %v1710 = vpop.f32.mrb[0].mxu0
      %v1711 = vpop.f32.mrb[0].mxu0
      %v1712 = vadd.f32 0.0, %v1711
      %v1713 = vpop.f32.mrb[0].mxu0
      %1714 = vmatprep.mubr.bf16.mxu0 0
      %1715 = vmatmul.mubr.bf16.gmra.mrb[0].mxu0 %v1277
      %v1716 = vpop.f32.mrb[0].mxu0
      %v1717 = vadd.f32 0.0, %v1716
      %v1718 = vpop.f32.mrb[0].mxu0
      %v1719 = vpop.f32.mrb[0].mxu0
      %v1720 = vpop.f32.mrb[0].mxu0
      %1721 = vdwg.mxu0
      %v1722 = vadd.f32 %v561, %v1548
      %v1723 = vadd.f32 %v561, %v1551
      %v1724 = vadd.f32 %v561, %v1558
      %v1725 = vadd.f32 %v561, %v1563
      %v1726 = vadd.f32 %v561, %v1570
      %v1727 = vadd.f32 %v561, %v1573
      %v1728 = vadd.f32 %v561, %v1580
      %v1729 = vadd.f32 %v561, %v1585
      %v1730 = vadd.f32 %v561, %v1592
      %v1731 = vadd.f32 %v561, %v1595
      %v1732 = vadd.f32 %v561, %v1602
      %v1733 = vadd.f32 %v561, %v1607
      %v1734 = vadd.f32 %v561, %v1614
      %v1735 = vadd.f32 %v561, %v1617
      %v1736 = vadd.f32 %v561, %v1624
      %v1737 = vadd.f32 %v561, %v1629
      %v1738 = vadd.f32 %v561, %v1636
      %v1739 = vadd.f32 %v561, %v1639
      %v1740 = vadd.f32 %v561, %v1646
      %v1741 = vadd.f32 %v561, %v1651
      %v1742 = vadd.f32 %v561, %v1658
      %v1743 = vadd.f32 %v561, %v1661
      %v1744 = vadd.f32 %v561, %v1668
      %v1745 = vadd.f32 %v561, %v1673
      %v1746 = vadd.f32 %v561, %v1680
      %v1747 = vadd.f32 %v561, %v1683
      %v1748 = vadd.f32 %v561, %v1690
      %v1749 = vadd.f32 %v561, %v1695
      %v1750 = vadd.f32 %v561, %v1702
      %v1751 = vadd.f32 %v561, %v1705
      %v1752 = vadd.f32 %v561, %v1712
      %v1753 = vadd.f32 %v561, %v1717
      %s1754 = scalar_lea.vmem %s3, 8
      %v1755 = vld [vmem:[%s1754] sm:$0xf]
      %v1756 = vld [vmem:[%s1754 + $0x4] sm:$0xf]
      %v1759 = vunpack.c.l.b16 %v1755
      %v1760 = vunpack.c.l.b16 %v1756
      %v1761 = vpack.c.b16 %v1760, %v1759
      %1763 = vmatprep.subr.bf16.mxu0 0
      %1764 = vmatpush1.bf16.msra.mxu0 %v1761
      %1765 = vmatprep.subr.bf16.mxu0 0
      %1766 = vmatpush1.bf16.msra.mxu0 0
      %1767 = vmatprep.subr.bf16.mxu0 0
      %1768 = vmatpush1.bf16.msra.mxu0 0
      %1769 = vmatprep.subr.bf16.mxu0 0
      %1770 = vmatpush1.bf16.msra.mxu0 0
      %1771 = vmatprep.subr.bf16.mxu0 0
      %1772 = vmatpush1.bf16.msra.mxu0 0
      %1773 = vmatprep.subr.bf16.mxu0 0
      %1774 = vmatpush1.bf16.msra.mxu0 0
      %1775 = vmatprep.subr.bf16.mxu0 0
      %1776 = vmatpush1.bf16.msra.mxu0 0
      %1777 = vmatprep.subr.bf16.mxu0 0
      %1778 = vmatpush1.bf16.msra.mxu0 0
      %1779 = vmatprep.subr.bf16.mxu0 0
      %1780 = vmatpush1.bf16.msra.mxu0 0
      %1781 = vmatprep.subr.bf16.mxu0 0
      %1782 = vmatpush1.bf16.msra.mxu0 0
      %1783 = vmatprep.subr.bf16.mxu0 0
      %1784 = vmatpush1.bf16.msra.mxu0 0
      %1785 = vmatprep.subr.bf16.mxu0 0
      %1786 = vmatpush1.bf16.msra.mxu0 0
      %1787 = vmatprep.subr.bf16.mxu0 0
      %1788 = vmatpush1.bf16.msra.mxu0 0
      %1789 = vmatprep.subr.bf16.mxu0 0
      %1790 = vmatpush1.bf16.msra.mxu0 0
      %1791 = vmatprep.subr.bf16.mxu0 0
      %1792 = vmatpush1.bf16.msra.mxu0 0
      %1793 = vmatprep.subr.bf16.mxu0 0
      %1794 = vmatpush1.bf16.msra.mxu0 0
      %1795 = vmatprep.mubr.bf16.mxu0 0
      %1796 = vmatmul.mubr.bf16.gmra.mrb[0].mxu0 %v790
      %v1797 = vpop.f32.mrb[0].mxu0
      %v1798 = vadd.f32 0.0, %v1797
      %v1799 = vpop.f32.mrb[0].mxu0
      %v1800 = vpop.f32.mrb[0].mxu0
      %v1801 = vadd.f32 0.0, %v1800
      %v1802 = vpop.f32.mrb[0].mxu0
      %1803 = vmatprep.mubr.bf16.mxu0 0
      %1804 = vmatmul.mubr.bf16.gmra.mrb[0].mxu0 %v793
      %v1805 = vpop.f32.mrb[0].mxu0
      %v1806 = vpop.f32.mrb[0].mxu0
      %v1807 = vpop.f32.mrb[0].mxu0
      %v1808 = vadd.f32 0.0, %v1807
      %v1809 = vpop.f32.mrb[0].mxu0
      %1810 = vmatprep.mubr.bf16.mxu0 0
      %1811 = vmatmul.mubr.bf16.gmra.mrb[0].mxu0 %v796
      %v1812 = vpop.f32.mrb[0].mxu0
      %v1813 = vadd.f32 0.0, %v1812
      %v1814 = vpop.f32.mrb[0].mxu0
      %v1815 = vpop.f32.mrb[0].mxu0
      %v1816 = vpop.f32.mrb[0].mxu0
      %1817 = vmatprep.mubr.bf16.mxu0 0
      %1818 = vmatmul.mubr.bf16.gmra.mrb[0].mxu0 %v799
      %v1819 = vpop.f32.mrb[0].mxu0
      %v1820 = vadd.f32 0.0, %v1819
      %v1821 = vpop.f32.mrb[0].mxu0
      %v1822 = vpop.f32.mrb[0].mxu0
      %v1823 = vadd.f32 0.0, %v1822
      %v1824 = vpop.f32.mrb[0].mxu0
      %1825 = vmatprep.mubr.bf16.mxu0 0
      %1826 = vmatmul.mubr.bf16.gmra.mrb[0].mxu0 %v802
      %v1827 = vpop.f32.mrb[0].mxu0
      %v1828 = vpop.f32.mrb[0].mxu0
      %v1829 = vpop.f32.mrb[0].mxu0
      %v1830 = vadd.f32 0.0, %v1829
      %v1831 = vpop.f32.mrb[0].mxu0
      %1832 = vmatprep.mubr.bf16.mxu0 0
      %1833 = vmatmul.mubr.bf16.gmra.mrb[0].mxu0 %v805
      %v1834 = vpop.f32.mrb[0].mxu0
      %v1835 = vadd.f32 0.0, %v1834
      %v1836 = vpop.f32.mrb[0].mxu0
      %v1837 = vpop.f32.mrb[0].mxu0
      %v1838 = vpop.f32.mrb[0].mxu0
      %1839 = vmatprep.mubr.bf16.mxu0 0
      %1840 = vmatmul.mubr.bf16.gmra.mrb[0].mxu0 %v808
      %v1841 = vpop.f32.mrb[0].mxu0
      %v1842 = vadd.f32 0.0, %v1841
      %v1843 = vpop.f32.mrb[0].mxu0
      %v1844 = vpop.f32.mrb[0].mxu0
      %v1845 = vadd.f32 0.0, %v1844
      %v1846 = vpop.f32.mrb[0].mxu0
      %1847 = vmatprep.mubr.bf16.mxu0 0
      %1848 = vmatmul.mubr.bf16.gmra.mrb[0].mxu0 %v811
      %v1849 = vpop.f32.mrb[0].mxu0
      %v1850 = vpop.f32.mrb[0].mxu0
      %v1851 = vpop.f32.mrb[0].mxu0
      %v1852 = vadd.f32 0.0, %v1851
      %v1853 = vpop.f32.mrb[0].mxu0
      %1854 = vmatprep.mubr.bf16.mxu0 0
      %1855 = vmatmul.mubr.bf16.gmra.mrb[0].mxu0 %v814
      %v1856 = vpop.f32.mrb[0].mxu0
      %v1857 = vadd.f32 0.0, %v1856
      %v1858 = vpop.f32.mrb[0].mxu0
      %v1859 = vpop.f32.mrb[0].mxu0
      %v1860 = vpop.f32.mrb[0].mxu0
      %1861 = vmatprep.mubr.bf16.mxu0 0
      %1862 = vmatmul.mubr.bf16.gmra.mrb[0].mxu0 %v817
      %v1863 = vpop.f32.mrb[0].mxu0
      %v1864 = vadd.f32 0.0, %v1863
      %v1865 = vpop.f32.mrb[0].mxu0
      %v1866 = vpop.f32.mrb[0].mxu0
      %v1867 = vadd.f32 0.0, %v1866
      %v1868 = vpop.f32.mrb[0].mxu0
      %1869 = vmatprep.mubr.bf16.mxu0 0
      %1870 = vmatmul.mubr.bf16.gmra.mrb[0].mxu0 %v820
      %v1871 = vpop.f32.mrb[0].mxu0
      %v1872 = vpop.f32.mrb[0].mxu0
      %v1873 = vpop.f32.mrb[0].mxu0
      %v1874 = vadd.f32 0.0, %v1873
      %v1875 = vpop.f32.mrb[0].mxu0
      %1876 = vmatprep.mubr.bf16.mxu0 0
      %1877 = vmatmul.mubr.bf16.gmra.mrb[0].mxu0 %v823
      %v1878 = vpop.f32.mrb[0].mxu0
      %v1879 = vadd.f32 0.0, %v1878
      %v1880 = vpop.f32.mrb[0].mxu0
      %v1881 = vpop.f32.mrb[0].mxu0
      %v1882 = vpop.f32.mrb[0].mxu0
      %1883 = vmatprep.mubr.bf16.mxu0 0
      %1884 = vmatmul.mubr.bf16.gmra.mrb[0].mxu0 %v826
      %v1885 = vpop.f32.mrb[0].mxu0
      %v1886 = vadd.f32 0.0, %v1885
      %v1887 = vpop.f32.mrb[0].mxu0
      %v1888 = vpop.f32.mrb[0].mxu0
      %v1889 = vadd.f32 0.0, %v1888
      %v1890 = vpop.f32.mrb[0].mxu0
      %1891 = vmatprep.mubr.bf16.mxu0 0
      %1892 = vmatmul.mubr.bf16.gmra.mrb[0].mxu0 %v829
      %v1893 = vpop.f32.mrb[0].mxu0
      %v1894 = vpop.f32.mrb[0].mxu0
      %v1895 = vpop.f32.mrb[0].mxu0
      %v1896 = vadd.f32 0.0, %v1895
      %v1897 = vpop.f32.mrb[0].mxu0
      %1898 = vmatprep.mubr.bf16.mxu0 0
      %1899 = vmatmul.mubr.bf16.gmra.mrb[0].mxu0 %v832
      %v1900 = vpop.f32.mrb[0].mxu0
      %v1901 = vadd.f32 0.0, %v1900
      %v1902 = vpop.f32.mrb[0].mxu0
      %v1903 = vpop.f32.mrb[0].mxu0
      %v1904 = vpop.f32.mrb[0].mxu0
      %1905 = vmatprep.mubr.bf16.mxu0 0
      %1906 = vmatmul.mubr.bf16.gmra.mrb[0].mxu0 %v835
      %v1907 = vpop.f32.mrb[0].mxu0
      %v1908 = vadd.f32 0.0, %v1907
      %v1909 = vpop.f32.mrb[0].mxu0
      %v1910 = vpop.f32.mrb[0].mxu0
      %v1911 = vadd.f32 0.0, %v1910
      %v1912 = vpop.f32.mrb[0].mxu0
      %1913 = vmatprep.mubr.bf16.mxu0 0
      %1914 = vmatmul.mubr.bf16.gmra.mrb[0].mxu0 %v838
      %v1915 = vpop.f32.mrb[0].mxu0
      %v1916 = vpop.f32.mrb[0].mxu0
      %v1917 = vpop.f32.mrb[0].mxu0
      %v1918 = vadd.f32 0.0, %v1917
      %v1919 = vpop.f32.mrb[0].mxu0
      %1920 = vmatprep.mubr.bf16.mxu0 0
      %1921 = vmatmul.mubr.bf16.gmra.mrb[0].mxu0 %v841
      %v1922 = vpop.f32.mrb[0].mxu0
      %v1923 = vadd.f32 0.0, %v1922
      %v1924 = vpop.f32.mrb[0].mxu0
      %v1925 = vpop.f32.mrb[0].mxu0
      %v1926 = vpop.f32.mrb[0].mxu0
      %1927 = vmatprep.mubr.bf16.mxu0 0
      %1928 = vmatmul.mubr.bf16.gmra.mrb[0].mxu0 %v844
      %v1929 = vpop.f32.mrb[0].mxu0
      %v1930 = vadd.f32 0.0, %v1929
      %v1931 = vpop.f32.mrb[0].mxu0
      %v1932 = vpop.f32.mrb[0].mxu0
      %v1933 = vadd.f32 0.0, %v1932
      %v1934 = vpop.f32.mrb[0].mxu0
      %1935 = vmatprep.mubr.bf16.mxu0 0
      %1936 = vmatmul.mubr.bf16.gmra.mrb[0].mxu0 %v847
      %v1937 = vpop.f32.mrb[0].mxu0
      %v1938 = vpop.f32.mrb[0].mxu0
      %v1939 = vpop.f32.mrb[0].mxu0
      %v1940 = vadd.f32 0.0, %v1939
      %v1941 = vpop.f32.mrb[0].mxu0
      %1942 = vmatprep.mubr.bf16.mxu0 0
      %1943 = vmatmul.mubr.bf16.gmra.mrb[0].mxu0 %v850
      %v1944 = vpop.f32.mrb[0].mxu0
      %v1945 = vadd.f32 0.0, %v1944
      %v1946 = vpop.f32.mrb[0].mxu0
      %v1947 = vpop.f32.mrb[0].mxu0
      %v1948 = vpop.f32.mrb[0].mxu0
      %1949 = vmatprep.mubr.bf16.mxu0 0
      %1950 = vmatmul.mubr.bf16.gmra.mrb[0].mxu0 %v853
      %v1951 = vpop.f32.mrb[0].mxu0
      %v1952 = vadd.f32 0.0, %v1951
      %v1953 = vpop.f32.mrb[0].mxu0
      %v1954 = vpop.f32.mrb[0].mxu0
      %v1955 = vadd.f32 0.0, %v1954
      %v1956 = vpop.f32.mrb[0].mxu0
      %1957 = vmatprep.mubr.bf16.mxu0 0
      %1958 = vmatmul.mubr.bf16.gmra.mrb[0].mxu0 %v856
      %v1959 = vpop.f32.mrb[0].mxu0
      %v1960 = vpop.f32.mrb[0].mxu0
      %v1961 = vpop.f32.mrb[0].mxu0
      %v1962 = vadd.f32 0.0, %v1961
      %v1963 = vpop.f32.mrb[0].mxu0
      %1964 = vmatprep.mubr.bf16.mxu0 0
      %1965 = vmatmul.mubr.bf16.gmra.mrb[0].mxu0 %v859
      %v1966 = vpop.f32.mrb[0].mxu0
      %v1967 = vadd.f32 0.0, %v1966
      %v1968 = vpop.f32.mrb[0].mxu0
      %v1969 = vpop.f32.mrb[0].mxu0
      %v1970 = vpop.f32.mrb[0].mxu0
      %1971 = vdwg.mxu0
      %v1972 = vadd.f32 %v1722, %v1798
      %v1973 = vadd.f32 %v1723, %v1801
      %v1974 = vadd.f32 %v1724, %v1808
      %v1975 = vadd.f32 %v1725, %v1813
      %v1976 = vadd.f32 %v1726, %v1820
      %v1977 = vadd.f32 %v1727, %v1823
      %v1978 = vadd.f32 %v1728, %v1830
      %v1979 = vadd.f32 %v1729, %v1835
      %v1980 = vadd.f32 %v1730, %v1842
      %v1981 = vadd.f32 %v1731, %v1845
      %v1982 = vadd.f32 %v1732, %v1852
      %v1983 = vadd.f32 %v1733, %v1857
      %v1984 = vadd.f32 %v1734, %v1864
      %v1985 = vadd.f32 %v1735, %v1867
      %v1986 = vadd.f32 %v1736, %v1874
      %v1987 = vadd.f32 %v1737, %v1879
      %v1988 = vadd.f32 %v1738, %v1886
      %v1989 = vadd.f32 %v1739, %v1889
      %v1990 = vadd.f32 %v1740, %v1896
      %v1991 = vadd.f32 %v1741, %v1901
      %v1992 = vadd.f32 %v1742, %v1908
      %v1993 = vadd.f32 %v1743, %v1911
      %v1994 = vadd.f32 %v1744, %v1918
      %v1995 = vadd.f32 %v1745, %v1923
      %v1996 = vadd.f32 %v1746, %v1930
      %v1997 = vadd.f32 %v1747, %v1933
      %v1998 = vadd.f32 %v1748, %v1940
      %v1999 = vadd.f32 %v1749, %v1945
      %v2000 = vadd.f32 %v1750, %v1952
      %v2001 = vadd.f32 %v1751, %v1955
      %v2002 = vadd.f32 %v1752, %v1962
      %v2003 = vadd.f32 %v1753, %v1967
      %s2004 = scalar_lea.vmem %s2, 8
      %v2005 = vld [vmem:[%s2004] sm:$0xf]
      %s2006 = scalar_lea.vmem %s3, 16
      %v2007 = vld [vmem:[%s2006] sm:$0xf]
      %v2008 = vld [vmem:[%s2006 + $0x4] sm:$0xf]
      %v2011 = vunpack.c.l.b16 %v2007
      %v2012 = vunpack.c.l.b16 %v2008
      %v2013 = vpack.c.b16 %v2012, %v2011
      %2015 = vmatprep.subr.bf16.mxu0 0
      %2016 = vmatpush1.bf16.msra.mxu0 %v2013
      %2017 = vmatprep.subr.bf16.mxu0 0
      %2018 = vmatpush1.bf16.msra.mxu0 0
      %2019 = vmatprep.subr.bf16.mxu0 0
      %2020 = vmatpush1.bf16.msra.mxu0 0
      %2021 = vmatprep.subr.bf16.mxu0 0
      %2022 = vmatpush1.bf16.msra.mxu0 0
      %2023 = vmatprep.subr.bf16.mxu0 0
      %2024 = vmatpush1.bf16.msra.mxu0 0
      %2025 = vmatprep.subr.bf16.mxu0 0
      %2026 = vmatpush1.bf16.msra.mxu0 0
      %2027 = vmatprep.subr.bf16.mxu0 0
      %2028 = vmatpush1.bf16.msra.mxu0 0
      %2029 = vmatprep.subr.bf16.mxu0 0
      %2030 = vmatpush1.bf16.msra.mxu0 0
      %2031 = vmatprep.subr.bf16.mxu0 0
      %2032 = vmatpush1.bf16.msra.mxu0 0
      %2033 = vmatprep.subr.bf16.mxu0 0
      %2034 = vmatpush1.bf16.msra.mxu0 0
      %2035 = vmatprep.subr.bf16.mxu0 0
      %2036 = vmatpush1.bf16.msra.mxu0 0
      %2037 = vmatprep.subr.bf16.mxu0 0
      %2038 = vmatpush1.bf16.msra.mxu0 0
      %2039 = vmatprep.subr.bf16.mxu0 0
      %2040 = vmatpush1.bf16.msra.mxu0 0
      %2041 = vmatprep.subr.bf16.mxu0 0
      %2042 = vmatpush1.bf16.msra.mxu0 0
      %2043 = vmatprep.subr.bf16.mxu0 0
      %2044 = vmatpush1.bf16.msra.mxu0 0
      %2045 = vmatprep.subr.bf16.mxu0 0
      %2046 = vmatpush1.bf16.msra.mxu0 0
      %2047 = vmatprep.mubr.bf16.mxu0 0
      %2048 = vmatmul.mubr.bf16.gmra.mrb[0].mxu0 %v790
      %v2049 = vpop.f32.mrb[0].mxu0
      %v2050 = vadd.f32 0.0, %v2049
      %v2051 = vpop.f32.mrb[0].mxu0
      %v2052 = vpop.f32.mrb[0].mxu0
      %v2053 = vadd.f32 0.0, %v2052
      %v2054 = vpop.f32.mrb[0].mxu0
      %2055 = vmatprep.mubr.bf16.mxu0 0
      %2056 = vmatmul.mubr.bf16.gmra.mrb[0].mxu0 %v793
      %v2057 = vpop.f32.mrb[0].mxu0
      %v2058 = vadd.f32 0.0, %v2057
      %v2059 = vpop.f32.mrb[0].mxu0
      %v2060 = vpop.f32.mrb[0].mxu0
      %v2061 = vadd.f32 0.0, %v2060
      %v2062 = vpop.f32.mrb[0].mxu0
      %2063 = vmatprep.mubr.bf16.mxu0 0
      %2064 = vmatmul.mubr.bf16.gmra.mrb[0].mxu0 %v796
      %v2065 = vpop.f32.mrb[0].mxu0
      %v2066 = vadd.f32 0.0, %v2065
      %v2067 = vpop.f32.mrb[0].mxu0
      %v2068 = vpop.f32.mrb[0].mxu0
      %v2069 = vadd.f32 0.0, %v2068
      %v2070 = vpop.f32.mrb[0].mxu0
      %2071 = vmatprep.mubr.bf16.mxu0 0
      %2072 = vmatmul.mubr.bf16.gmra.mrb[0].mxu0 %v799
      %v2073 = vpop.f32.mrb[0].mxu0
      %v2074 = vadd.f32 0.0, %v2073
      %v2075 = vpop.f32.mrb[0].mxu0
      %v2076 = vpop.f32.mrb[0].mxu0
      %v2077 = vadd.f32 0.0, %v2076
      %v2078 = vpop.f32.mrb[0].mxu0
      %2079 = vmatprep.mubr.bf16.mxu0 0
      %2080 = vmatmul.mubr.bf16.gmra.mrb[0].mxu0 %v802
      %v2081 = vpop.f32.mrb[0].mxu0
      %v2082 = vadd.f32 0.0, %v2081
      %v2083 = vpop.f32.mrb[0].mxu0
      %v2084 = vpop.f32.mrb[0].mxu0
      %v2085 = vadd.f32 0.0, %v2084
      %v2086 = vpop.f32.mrb[0].mxu0
      %2087 = vmatprep.mubr.bf16.mxu0 0
      %2088 = vmatmul.mubr.bf16.gmra.mrb[0].mxu0 %v805
      %v2089 = vpop.f32.mrb[0].mxu0
      %v2090 = vadd.f32 0.0, %v2089
      %v2091 = vpop.f32.mrb[0].mxu0
      %v2092 = vpop.f32.mrb[0].mxu0
      %v2093 = vadd.f32 0.0, %v2092
      %v2094 = vpop.f32.mrb[0].mxu0
      %2095 = vmatprep.mubr.bf16.mxu0 0
      %2096 = vmatmul.mubr.bf16.gmra.mrb[0].mxu0 %v808
      %v2097 = vpop.f32.mrb[0].mxu0
      %v2098 = vadd.f32 0.0, %v2097
      %v2099 = vpop.f32.mrb[0].mxu0
      %v2100 = vpop.f32.mrb[0].mxu0
      %v2101 = vadd.f32 0.0, %v2100
      %v2102 = vpop.f32.mrb[0].mxu0
      %2103 = vmatprep.mubr.bf16.mxu0 0
      %2104 = vmatmul.mubr.bf16.gmra.mrb[0].mxu0 %v811
      %v2105 = vpop.f32.mrb[0].mxu0
      %v2106 = vadd.f32 0.0, %v2105
      %v2107 = vpop.f32.mrb[0].mxu0
      %v2108 = vpop.f32.mrb[0].mxu0
      %v2109 = vadd.f32 0.0, %v2108
      %v2110 = vpop.f32.mrb[0].mxu0
      %2111 = vmatprep.mubr.bf16.mxu0 0
      %2112 = vmatmul.mubr.bf16.gmra.mrb[0].mxu0 %v814
      %v2113 = vpop.f32.mrb[0].mxu0
      %v2114 = vadd.f32 0.0, %v2113
      %v2115 = vpop.f32.mrb[0].mxu0
      %v2116 = vpop.f32.mrb[0].mxu0
      %v2117 = vadd.f32 0.0, %v2116
      %v2118 = vpop.f32.mrb[0].mxu0
      %2119 = vmatprep.mubr.bf16.mxu0 0
      %2120 = vmatmul.mubr.bf16.gmra.mrb[0].mxu0 %v817
      %v2121 = vpop.f32.mrb[0].mxu0
      %v2122 = vadd.f32 0.0, %v2121
      %v2123 = vpop.f32.mrb[0].mxu0
      %v2124 = vpop.f32.mrb[0].mxu0
      %v2125 = vadd.f32 0.0, %v2124
      %v2126 = vpop.f32.mrb[0].mxu0
      %2127 = vmatprep.mubr.bf16.mxu0 0
      %2128 = vmatmul.mubr.bf16.gmra.mrb[0].mxu0 %v820
      %v2129 = vpop.f32.mrb[0].mxu0
      %v2130 = vadd.f32 0.0, %v2129
      %v2131 = vpop.f32.mrb[0].mxu0
      %v2132 = vpop.f32.mrb[0].mxu0
      %v2133 = vadd.f32 0.0, %v2132
      %v2134 = vpop.f32.mrb[0].mxu0
      %2135 = vmatprep.mubr.bf16.mxu0 0
      %2136 = vmatmul.mubr.bf16.gmra.mrb[0].mxu0 %v823
      %v2137 = vpop.f32.mrb[0].mxu0
      %v2138 = vadd.f32 0.0, %v2137
      %v2139 = vpop.f32.mrb[0].mxu0
      %v2140 = vpop.f32.mrb[0].mxu0
      %v2141 = vadd.f32 0.0, %v2140
      %v2142 = vpop.f32.mrb[0].mxu0
      %2143 = vmatprep.mubr.bf16.mxu0 0
      %2144 = vmatmul.mubr.bf16.gmra.mrb[0].mxu0 %v826
      %v2145 = vpop.f32.mrb[0].mxu0
      %v2146 = vadd.f32 0.0, %v2145
      %v2147 = vpop.f32.mrb[0].mxu0
      %v2148 = vpop.f32.mrb[0].mxu0
      %v2149 = vadd.f32 0.0, %v2148
      %v2150 = vpop.f32.mrb[0].mxu0
      %2151 = vmatprep.mubr.bf16.mxu0 0
      %2152 = vmatmul.mubr.bf16.gmra.mrb[0].mxu0 %v829
      %v2153 = vpop.f32.mrb[0].mxu0
      %v2154 = vadd.f32 0.0, %v2153
      %v2155 = vpop.f32.mrb[0].mxu0
      %v2156 = vpop.f32.mrb[0].mxu0
      %v2157 = vadd.f32 0.0, %v2156
      %v2158 = vpop.f32.mrb[0].mxu0
      %2159 = vmatprep.mubr.bf16.mxu0 0
      %2160 = vmatmul.mubr.bf16.gmra.mrb[0].mxu0 %v832
      %v2161 = vpop.f32.mrb[0].mxu0
      %v2162 = vadd.f32 0.0, %v2161
      %v2163 = vpop.f32.mrb[0].mxu0
      %v2164 = vpop.f32.mrb[0].mxu0
      %v2165 = vadd.f32 0.0, %v2164
      %v2166 = vpop.f32.mrb[0].mxu0
      %2167 = vmatprep.mubr.bf16.mxu0 0
      %2168 = vmatmul.mubr.bf16.gmra.mrb[0].mxu0 %v835
      %v2169 = vpop.f32.mrb[0].mxu0
      %v2170 = vadd.f32 0.0, %v2169
      %v2171 = vpop.f32.mrb[0].mxu0
      %v2172 = vpop.f32.mrb[0].mxu0
      %v2173 = vadd.f32 0.0, %v2172
      %v2174 = vpop.f32.mrb[0].mxu0
      %2175 = vmatprep.mubr.bf16.mxu0 0
      %2176 = vmatmul.mubr.bf16.gmra.mrb[0].mxu0 %v838
      %v2177 = vpop.f32.mrb[0].mxu0
      %v2178 = vadd.f32 0.0, %v2177
      %v2179 = vpop.f32.mrb[0].mxu0
      %v2180 = vpop.f32.mrb[0].mxu0
      %v2181 = vadd.f32 0.0, %v2180
      %v2182 = vpop.f32.mrb[0].mxu0
      %2183 = vmatprep.mubr.bf16.mxu0 0
      %2184 = vmatmul.mubr.bf16.gmra.mrb[0].mxu0 %v841
      %v2185 = vpop.f32.mrb[0].mxu0
      %v2186 = vadd.f32 0.0, %v2185
      %v2187 = vpop.f32.mrb[0].mxu0
      %v2188 = vpop.f32.mrb[0].mxu0
      %v2189 = vadd.f32 0.0, %v2188
      %v2190 = vpop.f32.mrb[0].mxu0
      %2191 = vmatprep.mubr.bf16.mxu0 0
      %2192 = vmatmul.mubr.bf16.gmra.mrb[0].mxu0 %v844
      %v2193 = vpop.f32.mrb[0].mxu0
      %v2194 = vadd.f32 0.0, %v2193
      %v2195 = vpop.f32.mrb[0].mxu0
      %v2196 = vpop.f32.mrb[0].mxu0
      %v2197 = vadd.f32 0.0, %v2196
      %v2198 = vpop.f32.mrb[0].mxu0
      %2199 = vmatprep.mubr.bf16.mxu0 0
      %2200 = vmatmul.mubr.bf16.gmra.mrb[0].mxu0 %v847
      %v2201 = vpop.f32.mrb[0].mxu0
      %v2202 = vadd.f32 0.0, %v2201
      %v2203 = vpop.f32.mrb[0].mxu0
      %v2204 = vpop.f32.mrb[0].mxu0
      %v2205 = vadd.f32 0.0, %v2204
      %v2206 = vpop.f32.mrb[0].mxu0
      %2207 = vmatprep.mubr.bf16.mxu0 0
      %2208 = vmatmul.mubr.bf16.gmra.mrb[0].mxu0 %v850
      %v2209 = vpop.f32.mrb[0].mxu0
      %v2210 = vadd.f32 0.0, %v2209
      %v2211 = vpop.f32.mrb[0].mxu0
      %v2212 = vpop.f32.mrb[0].mxu0
      %v2213 = vadd.f32 0.0, %v2212
      %v2214 = vpop.f32.mrb[0].mxu0
      %2215 = vmatprep.mubr.bf16.mxu0 0
      %2216 = vmatmul.mubr.bf16.gmra.mrb[0].mxu0 %v853
      %v2217 = vpop.f32.mrb[0].mxu0
      %v2218 = vadd.f32 0.0, %v2217
      %v2219 = vpop.f32.mrb[0].mxu0
      %v2220 = vpop.f32.mrb[0].mxu0
      %v2221 = vadd.f32 0.0, %v2220
      %v2222 = vpop.f32.mrb[0].mxu0
      %2223 = vmatprep.mubr.bf16.mxu0 0
      %2224 = vmatmul.mubr.bf16.gmra.mrb[0].mxu0 %v856
      %v2225 = vpop.f32.mrb[0].mxu0
      %v2226 = vadd.f32 0.0, %v2225
      %v2227 = vpop.f32.mrb[0].mxu0
      %v2228 = vpop.f32.mrb[0].mxu0
      %v2229 = vadd.f32 0.0, %v2228
      %v2230 = vpop.f32.mrb[0].mxu0
      %2231 = vmatprep.mubr.bf16.mxu0 0
      %2232 = vmatmul.mubr.bf16.gmra.mrb[0].mxu0 %v859
      %v2233 = vpop.f32.mrb[0].mxu0
      %v2234 = vadd.f32 0.0, %v2233
      %v2235 = vpop.f32.mrb[0].mxu0
      %v2236 = vpop.f32.mrb[0].mxu0
      %v2237 = vadd.f32 0.0, %v2236
      %v2238 = vpop.f32.mrb[0].mxu0
      %2239 = vdwg.mxu0
      %v2241 = vsel %vm1279, %v2005, 0
      %2243 = vmatprep.subr.bf16.mxu0 0
      %2244 = vmatpush1.bf16.msra.mxu0 %v2241
      %2245 = vmatprep.subr.bf16.mxu0 0
      %2246 = vmatpush1.bf16.msra.mxu0 0
      %2247 = vmatprep.subr.bf16.mxu0 0
      %2248 = vmatpush1.bf16.msra.mxu0 0
      %2249 = vmatprep.subr.bf16.mxu0 0
      %2250 = vmatpush1.bf16.msra.mxu0 0
      %2251 = vmatprep.subr.bf16.mxu0 0
      %2252 = vmatpush1.bf16.msra.mxu0 0
      %2253 = vmatprep.subr.bf16.mxu0 0
      %2254 = vmatpush1.bf16.msra.mxu0 0
      %2255 = vmatprep.subr.bf16.mxu0 0
      %2256 = vmatpush1.bf16.msra.mxu0 0
      %2257 = vmatprep.subr.bf16.mxu0 0
      %2258 = vmatpush1.bf16.msra.mxu0 0
      %2259 = vmatprep.subr.bf16.mxu0 0
      %2260 = vmatpush1.bf16.msra.mxu0 0
      %2261 = vmatprep.subr.bf16.mxu0 0
      %2262 = vmatpush1.bf16.msra.mxu0 0
      %2263 = vmatprep.subr.bf16.mxu0 0
      %2264 = vmatpush1.bf16.msra.mxu0 0
      %2265 = vmatprep.subr.bf16.mxu0 0
      %2266 = vmatpush1.bf16.msra.mxu0 0
      %2267 = vmatprep.subr.bf16.mxu0 0
      %2268 = vmatpush1.bf16.msra.mxu0 0
      %2269 = vmatprep.subr.bf16.mxu0 0
      %2270 = vmatpush1.bf16.msra.mxu0 0
      %2271 = vmatprep.subr.bf16.mxu0 0
      %2272 = vmatpush1.bf16.msra.mxu0 0
      %2273 = vmatprep.subr.bf16.mxu0 0
      %2274 = vmatpush1.bf16.msra.mxu0 0
      %2275 = vmatprep.mubr.bf16.mxu0 0
      %2276 = vmatmul.mubr.bf16.gmra.mrb[0].mxu0 %v1208
      %v2277 = vpop.f32.mrb[0].mxu0
      %v2278 = vadd.f32 %v2050, %v2277
      %v2279 = vpop.f32.mrb[0].mxu0
      %v2280 = vpop.f32.mrb[0].mxu0
      %v2281 = vadd.f32 %v2053, %v2280
      %v2282 = vpop.f32.mrb[0].mxu0
      %2283 = vmatprep.mubr.bf16.mxu0 0
      %2284 = vmatmul.mubr.bf16.gmra.mrb[0].mxu0 %v1211
      %v2285 = vpop.f32.mrb[0].mxu0
      %v2286 = vadd.f32 %v2058, %v2285
      %v2287 = vpop.f32.mrb[0].mxu0
      %v2288 = vpop.f32.mrb[0].mxu0
      %v2289 = vadd.f32 %v2061, %v2288
      %v2290 = vpop.f32.mrb[0].mxu0
      %2291 = vmatprep.mubr.bf16.mxu0 0
      %2292 = vmatmul.mubr.bf16.gmra.mrb[0].mxu0 %v1214
      %v2293 = vpop.f32.mrb[0].mxu0
      %v2294 = vadd.f32 %v2066, %v2293
      %v2295 = vpop.f32.mrb[0].mxu0
      %v2296 = vpop.f32.mrb[0].mxu0
      %v2297 = vadd.f32 %v2069, %v2296
      %v2298 = vpop.f32.mrb[0].mxu0
      %2299 = vmatprep.mubr.bf16.mxu0 0
      %2300 = vmatmul.mubr.bf16.gmra.mrb[0].mxu0 %v1217
      %v2301 = vpop.f32.mrb[0].mxu0
      %v2302 = vadd.f32 %v2074, %v2301
      %v2303 = vpop.f32.mrb[0].mxu0
      %v2304 = vpop.f32.mrb[0].mxu0
      %v2305 = vadd.f32 %v2077, %v2304
      %v2306 = vpop.f32.mrb[0].mxu0
      %2307 = vmatprep.mubr.bf16.mxu0 0
      %2308 = vmatmul.mubr.bf16.gmra.mrb[0].mxu0 %v1220
      %v2309 = vpop.f32.mrb[0].mxu0
      %v2310 = vadd.f32 %v2082, %v2309
      %v2311 = vpop.f32.mrb[0].mxu0
      %v2312 = vpop.f32.mrb[0].mxu0
      %v2313 = vadd.f32 %v2085, %v2312
      %v2314 = vpop.f32.mrb[0].mxu0
      %2315 = vmatprep.mubr.bf16.mxu0 0
      %2316 = vmatmul.mubr.bf16.gmra.mrb[0].mxu0 %v1223
      %v2317 = vpop.f32.mrb[0].mxu0
      %v2318 = vadd.f32 %v2090, %v2317
      %v2319 = vpop.f32.mrb[0].mxu0
      %v2320 = vpop.f32.mrb[0].mxu0
      %v2321 = vadd.f32 %v2093, %v2320
      %v2322 = vpop.f32.mrb[0].mxu0
      %2323 = vmatprep.mubr.bf16.mxu0 0
      %2324 = vmatmul.mubr.bf16.gmra.mrb[0].mxu0 %v1226
      %v2325 = vpop.f32.mrb[0].mxu0
      %v2326 = vadd.f32 %v2098, %v2325
      %v2327 = vpop.f32.mrb[0].mxu0
      %v2328 = vpop.f32.mrb[0].mxu0
      %v2329 = vadd.f32 %v2101, %v2328
      %v2330 = vpop.f32.mrb[0].mxu0
      %2331 = vmatprep.mubr.bf16.mxu0 0
      %2332 = vmatmul.mubr.bf16.gmra.mrb[0].mxu0 %v1229
      %v2333 = vpop.f32.mrb[0].mxu0
      %v2334 = vadd.f32 %v2106, %v2333
      %v2335 = vpop.f32.mrb[0].mxu0
      %v2336 = vpop.f32.mrb[0].mxu0
      %v2337 = vadd.f32 %v2109, %v2336
      %v2338 = vpop.f32.mrb[0].mxu0
      %2339 = vmatprep.mubr.bf16.mxu0 0
      %2340 = vmatmul.mubr.bf16.gmra.mrb[0].mxu0 %v1232
      %v2341 = vpop.f32.mrb[0].mxu0
      %v2342 = vadd.f32 %v2114, %v2341
      %v2343 = vpop.f32.mrb[0].mxu0
      %v2344 = vpop.f32.mrb[0].mxu0
      %v2345 = vadd.f32 %v2117, %v2344
      %v2346 = vpop.f32.mrb[0].mxu0
      %2347 = vmatprep.mubr.bf16.mxu0 0
      %2348 = vmatmul.mubr.bf16.gmra.mrb[0].mxu0 %v1235
      %v2349 = vpop.f32.mrb[0].mxu0
      %v2350 = vadd.f32 %v2122, %v2349
      %v2351 = vpop.f32.mrb[0].mxu0
      %v2352 = vpop.f32.mrb[0].mxu0
      %v2353 = vadd.f32 %v2125, %v2352
      %v2354 = vpop.f32.mrb[0].mxu0
      %2355 = vmatprep.mubr.bf16.mxu0 0
      %2356 = vmatmul.mubr.bf16.gmra.mrb[0].mxu0 %v1238
      %v2357 = vpop.f32.mrb[0].mxu0
      %v2358 = vadd.f32 %v2130, %v2357
      %v2359 = vpop.f32.mrb[0].mxu0
      %v2360 = vpop.f32.mrb[0].mxu0
      %v2361 = vadd.f32 %v2133, %v2360
      %v2362 = vpop.f32.mrb[0].mxu0
      %2363 = vmatprep.mubr.bf16.mxu0 0
      %2364 = vmatmul.mubr.bf16.gmra.mrb[0].mxu0 %v1241
      %v2365 = vpop.f32.mrb[0].mxu0
      %v2366 = vadd.f32 %v2138, %v2365
      %v2367 = vpop.f32.mrb[0].mxu0
      %v2368 = vpop.f32.mrb[0].mxu0
      %v2369 = vadd.f32 %v2141, %v2368
      %v2370 = vpop.f32.mrb[0].mxu0
      %2371 = vmatprep.mubr.bf16.mxu0 0
      %2372 = vmatmul.mubr.bf16.gmra.mrb[0].mxu0 %v1244
      %v2373 = vpop.f32.mrb[0].mxu0
      %v2374 = vadd.f32 %v2146, %v2373
      %v2375 = vpop.f32.mrb[0].mxu0
      %v2376 = vpop.f32.mrb[0].mxu0
      %v2377 = vadd.f32 %v2149, %v2376
      %v2378 = vpop.f32.mrb[0].mxu0
      %2379 = vmatprep.mubr.bf16.mxu0 0
      %2380 = vmatmul.mubr.bf16.gmra.mrb[0].mxu0 %v1247
      %v2381 = vpop.f32.mrb[0].mxu0
      %v2382 = vadd.f32 %v2154, %v2381
      %v2383 = vpop.f32.mrb[0].mxu0
      %v2384 = vpop.f32.mrb[0].mxu0
      %v2385 = vadd.f32 %v2157, %v2384
      %v2386 = vpop.f32.mrb[0].mxu0
      %2387 = vmatprep.mubr.bf16.mxu0 0
      %2388 = vmatmul.mubr.bf16.gmra.mrb[0].mxu0 %v1250
      %v2389 = vpop.f32.mrb[0].mxu0
      %v2390 = vadd.f32 %v2162, %v2389
      %v2391 = vpop.f32.mrb[0].mxu0
      %v2392 = vpop.f32.mrb[0].mxu0
      %v2393 = vadd.f32 %v2165, %v2392
      %v2394 = vpop.f32.mrb[0].mxu0
      %2395 = vmatprep.mubr.bf16.mxu0 0
      %2396 = vmatmul.mubr.bf16.gmra.mrb[0].mxu0 %v1253
      %v2397 = vpop.f32.mrb[0].mxu0
      %v2398 = vadd.f32 %v2170, %v2397
      %v2399 = vpop.f32.mrb[0].mxu0
      %v2400 = vpop.f32.mrb[0].mxu0
      %v2401 = vadd.f32 %v2173, %v2400
      %v2402 = vpop.f32.mrb[0].mxu0
      %2403 = vmatprep.mubr.bf16.mxu0 0
      %2404 = vmatmul.mubr.bf16.gmra.mrb[0].mxu0 %v1256
      %v2405 = vpop.f32.mrb[0].mxu0
      %v2406 = vadd.f32 %v2178, %v2405
      %v2407 = vpop.f32.mrb[0].mxu0
      %v2408 = vpop.f32.mrb[0].mxu0
      %v2409 = vadd.f32 %v2181, %v2408
      %v2410 = vpop.f32.mrb[0].mxu0
      %2411 = vmatprep.mubr.bf16.mxu0 0
      %2412 = vmatmul.mubr.bf16.gmra.mrb[0].mxu0 %v1259
      %v2413 = vpop.f32.mrb[0].mxu0
      %v2414 = vadd.f32 %v2186, %v2413
      %v2415 = vpop.f32.mrb[0].mxu0
      %v2416 = vpop.f32.mrb[0].mxu0
      %v2417 = vadd.f32 %v2189, %v2416
      %v2418 = vpop.f32.mrb[0].mxu0
      %2419 = vmatprep.mubr.bf16.mxu0 0
      %2420 = vmatmul.mubr.bf16.gmra.mrb[0].mxu0 %v1262
      %v2421 = vpop.f32.mrb[0].mxu0
      %v2422 = vadd.f32 %v2194, %v2421
      %v2423 = vpop.f32.mrb[0].mxu0
      %v2424 = vpop.f32.mrb[0].mxu0
      %v2425 = vadd.f32 %v2197, %v2424
      %v2426 = vpop.f32.mrb[0].mxu0
      %2427 = vmatprep.mubr.bf16.mxu0 0
      %2428 = vmatmul.mubr.bf16.gmra.mrb[0].mxu0 %v1265
      %v2429 = vpop.f32.mrb[0].mxu0
      %v2430 = vadd.f32 %v2202, %v2429
      %v2431 = vpop.f32.mrb[0].mxu0
      %v2432 = vpop.f32.mrb[0].mxu0
      %v2433 = vadd.f32 %v2205, %v2432
      %v2434 = vpop.f32.mrb[0].mxu0
      %2435 = vmatprep.mubr.bf16.mxu0 0
      %2436 = vmatmul.mubr.bf16.gmra.mrb[0].mxu0 %v1268
      %v2437 = vpop.f32.mrb[0].mxu0
      %v2438 = vadd.f32 %v2210, %v2437
      %v2439 = vpop.f32.mrb[0].mxu0
      %v2440 = vpop.f32.mrb[0].mxu0
      %v2441 = vadd.f32 %v2213, %v2440
      %v2442 = vpop.f32.mrb[0].mxu0
      %2443 = vmatprep.mubr.bf16.mxu0 0
      %2444 = vmatmul.mubr.bf16.gmra.mrb[0].mxu0 %v1271
      %v2445 = vpop.f32.mrb[0].mxu0
      %v2446 = vadd.f32 %v2218, %v2445
      %v2447 = vpop.f32.mrb[0].mxu0
      %v2448 = vpop.f32.mrb[0].mxu0
      %v2449 = vadd.f32 %v2221, %v2448
      %v2450 = vpop.f32.mrb[0].mxu0
      %2451 = vmatprep.mubr.bf16.mxu0 0
      %2452 = vmatmul.mubr.bf16.gmra.mrb[0].mxu0 %v1274
      %v2453 = vpop.f32.mrb[0].mxu0
      %v2454 = vadd.f32 %v2226, %v2453
      %v2455 = vpop.f32.mrb[0].mxu0
      %v2456 = vpop.f32.mrb[0].mxu0
      %v2457 = vadd.f32 %v2229, %v2456
      %v2458 = vpop.f32.mrb[0].mxu0
      %2459 = vmatprep.mubr.bf16.mxu0 0
      %2460 = vmatmul.mubr.bf16.gmra.mrb[0].mxu0 %v1277
      %v2461 = vpop.f32.mrb[0].mxu0
      %v2462 = vadd.f32 %v2234, %v2461
      %v2463 = vpop.f32.mrb[0].mxu0
      %v2464 = vpop.f32.mrb[0].mxu0
      %v2465 = vadd.f32 %v2237, %v2464
      %v2466 = vpop.f32.mrb[0].mxu0
      %2467 = vdwg.mxu0
      %v2468 = vld [vmem:[%s336] sm:$0xf]
      %v2469 = vld [vmem:[%s336 + $0x4] sm:$0xf]
      %v2470 = vld [vmem:[%s336 + $0x8] sm:$0xf]
      %v2471 = vld [vmem:[%s336 + $0xc] sm:$0xf]
      %v2472 = vld [vmem:[%s336 + $0x10] sm:$0xf]
      %v2473 = vld [vmem:[%s336 + $0x14] sm:$0xf]
      %v2474 = vld [vmem:[%s336 + $0x18] sm:$0xf]
      %v2475 = vld [vmem:[%s336 + $0x1c] sm:$0xf]
      %v2476 = vld [vmem:[%s336 + $0x20] sm:$0xf]
      %v2477 = vld [vmem:[%s336 + $0x24] sm:$0xf]
      %v2478 = vld [vmem:[%s336 + $0x28] sm:$0xf]
      %v2479 = vld [vmem:[%s336 + $0x2c] sm:$0xf]
      %v2480 = vld [vmem:[%s336 + $0x30] sm:$0xf]
      %v2481 = vld [vmem:[%s336 + $0x34] sm:$0xf]
      %v2482 = vld [vmem:[%s336 + $0x38] sm:$0xf]
      %v2483 = vld [vmem:[%s336 + $0x3c] sm:$0xf]
      %v2484 = vld [vmem:[%s336 + $0x40] sm:$0xf]
      %v2485 = vld [vmem:[%s336 + $0x44] sm:$0xf]
      %v2486 = vld [vmem:[%s336 + $0x48] sm:$0xf]
      %v2487 = vld [vmem:[%s336 + $0x4c] sm:$0xf]
      %v2488 = vld [vmem:[%s336 + $0x50] sm:$0xf]
      %v2489 = vld [vmem:[%s336 + $0x54] sm:$0xf]
      %v2490 = vld [vmem:[%s336 + $0x58] sm:$0xf]
      %v2491 = vld [vmem:[%s336 + $0x5c] sm:$0xf]
      %v2492 = vld [vmem:[%s336 + $0x60] sm:$0xf]
      %v2493 = vld [vmem:[%s336 + $0x64] sm:$0xf]
      %v2494 = vld [vmem:[%s336 + $0x68] sm:$0xf]
      %v2495 = vld [vmem:[%s336 + $0x6c] sm:$0xf]
      %v2496 = vld [vmem:[%s336 + $0x70] sm:$0xf]
      %v2497 = vld [vmem:[%s336 + $0x74] sm:$0xf]
      %v2498 = vld [vmem:[%s336 + $0x78] sm:$0xf]
      %v2499 = vld [vmem:[%s336 + $0x7c] sm:$0xf]
      %v2500 = vld [vmem:[%s336 + $0x80] sm:$0xf]
      %v2501 = vld [vmem:[%s336 + $0x84] sm:$0xf]
      %v2502 = vld [vmem:[%s336 + $0x88] sm:$0xf]
      %v2503 = vld [vmem:[%s336 + $0x8c] sm:$0xf]
      %v2504 = vld [vmem:[%s336 + $0x90] sm:$0xf]
      %v2505 = vld [vmem:[%s336 + $0x94] sm:$0xf]
      %v2506 = vld [vmem:[%s336 + $0x98] sm:$0xf]
      %v2507 = vld [vmem:[%s336 + $0x9c] sm:$0xf]
      %v2508 = vld [vmem:[%s336 + $0xa0] sm:$0xf]
      %v2509 = vld [vmem:[%s336 + $0xa4] sm:$0xf]
      %v2510 = vld [vmem:[%s336 + $0xa8] sm:$0xf]
      %v2511 = vld [vmem:[%s336 + $0xac] sm:$0xf]
      %v2512 = vld [vmem:[%s336 + $0xb0] sm:$0xf]
      %v2513 = vld [vmem:[%s336 + $0xb4] sm:$0xf]
      %v2514 = vld [vmem:[%s336 + $0xb8] sm:$0xf]
      %v2515 = vld [vmem:[%s336 + $0xbc] sm:$0xf]
      %v2516 = vld [vmem:[%s523] sm:$0xf]
      %v2517 = vld [vmem:[%s523 + $0x4] sm:$0xf]
      %v2518 = vld [vmem:[%s523 + $0x8] sm:$0xf]
      %v2519 = vld [vmem:[%s523 + $0xc] sm:$0xf]
      %v2520 = vld [vmem:[%s523 + $0x10] sm:$0xf]
      %v2521 = vld [vmem:[%s523 + $0x14] sm:$0xf]
      %v2522 = vld [vmem:[%s523 + $0x18] sm:$0xf]
      %v2523 = vld [vmem:[%s523 + $0x1c] sm:$0xf]
      %v2524 = vld [vmem:[%s523 + $0x20] sm:$0xf]
      %v2525 = vld [vmem:[%s523 + $0x24] sm:$0xf]
      %v2526 = vld [vmem:[%s523 + $0x28] sm:$0xf]
      %v2527 = vld [vmem:[%s523 + $0x2c] sm:$0xf]
      %v2528 = vld [vmem:[%s523 + $0x30] sm:$0xf]
      %v2529 = vld [vmem:[%s523 + $0x34] sm:$0xf]
      %v2530 = vld [vmem:[%s523 + $0x38] sm:$0xf]
      %v2531 = vld [vmem:[%s523 + $0x3c] sm:$0xf]
      %v2532 = vld [vmem:[%s523 + $0x40] sm:$0xf]
      %v2533 = vld [vmem:[%s523 + $0x44] sm:$0xf]
      %v2534 = vld [vmem:[%s523 + $0x48] sm:$0xf]
      %v2535 = vld [vmem:[%s523 + $0x4c] sm:$0xf]
      %v2536 = vld [vmem:[%s523 + $0x50] sm:$0xf]
      %v2537 = vld [vmem:[%s523 + $0x54] sm:$0xf]
      %v2538 = vld [vmem:[%s523 + $0x58] sm:$0xf]
      %v2539 = vld [vmem:[%s523 + $0x5c] sm:$0xf]
      %v2540 = vld [vmem:[%s523 + $0x60] sm:$0xf]
      %v2541 = vld [vmem:[%s523 + $0x64] sm:$0xf]
      %v2542 = vld [vmem:[%s523 + $0x68] sm:$0xf]
      %v2543 = vld [vmem:[%s523 + $0x6c] sm:$0xf]
      %v2544 = vld [vmem:[%s523 + $0x70] sm:$0xf]
      %v2545 = vld [vmem:[%s523 + $0x74] sm:$0xf]
      %v2546 = vld [vmem:[%s523 + $0x78] sm:$0xf]
      %v2547 = vld [vmem:[%s523 + $0x7c] sm:$0xf]
      %v2548 = vld [vmem:[%s523 + $0x80] sm:$0xf]
      %v2549 = vld [vmem:[%s523 + $0x84] sm:$0xf]
      %v2550 = vld [vmem:[%s523 + $0x88] sm:$0xf]
      %v2551 = vld [vmem:[%s523 + $0x8c] sm:$0xf]
      %v2552 = vld [vmem:[%s523 + $0x90] sm:$0xf]
      %v2553 = vld [vmem:[%s523 + $0x94] sm:$0xf]
      %v2554 = vld [vmem:[%s523 + $0x98] sm:$0xf]
      %v2555 = vld [vmem:[%s523 + $0x9c] sm:$0xf]
      %v2556 = vld [vmem:[%s523 + $0xa0] sm:$0xf]
      %v2557 = vld [vmem:[%s523 + $0xa4] sm:$0xf]
      %v2558 = vld [vmem:[%s523 + $0xa8] sm:$0xf]
      %v2559 = vld [vmem:[%s523 + $0xac] sm:$0xf]
      %v2560 = vld [vmem:[%s523 + $0xb0] sm:$0xf]
      %v2561 = vld [vmem:[%s523 + $0xb4] sm:$0xf]
      %v2562 = vld [vmem:[%s523 + $0xb8] sm:$0xf]
      %v2563 = vld [vmem:[%s523 + $0xbc] sm:$0xf]
      %s2564 = scalar_lea.vmem %s2, 12
      %v2565 = vld [vmem:[%s2564] sm:$0xf]
      %v2614 = vunpack.c.l.b16 %v2468
      %v2615 = vunpack.c.l.b16 %v2469
      %v2616 = vunpack.c.l.b16 %v2470
      %v2617 = vunpack.c.l.b16 %v2471
      %v2618 = vunpack.c.l.b16 %v2472
      %v2619 = vunpack.c.l.b16 %v2473
      %v2620 = vunpack.c.l.b16 %v2474
      %v2621 = vunpack.c.l.b16 %v2475
      %v2622 = vunpack.c.l.b16 %v2476
      %v2623 = vunpack.c.l.b16 %v2477
      %v2624 = vunpack.c.l.b16 %v2478
      %v2625 = vunpack.c.l.b16 %v2479
      %v2626 = vunpack.c.l.b16 %v2480
      %v2627 = vunpack.c.l.b16 %v2481
      %v2628 = vunpack.c.l.b16 %v2482
      %v2629 = vunpack.c.l.b16 %v2483
      %v2630 = vunpack.c.l.b16 %v2484
      %v2631 = vunpack.c.l.b16 %v2485
      %v2632 = vunpack.c.l.b16 %v2486
      %v2633 = vunpack.c.l.b16 %v2487
      %v2634 = vunpack.c.l.b16 %v2488
      %v2635 = vunpack.c.l.b16 %v2489
      %v2636 = vunpack.c.l.b16 %v2490
      %v2637 = vunpack.c.l.b16 %v2491
      %v2638 = vunpack.c.l.b16 %v2492
      %v2639 = vunpack.c.l.b16 %v2493
      %v2640 = vunpack.c.l.b16 %v2494
      %v2641 = vunpack.c.l.b16 %v2495
      %v2642 = vunpack.c.l.b16 %v2496
      %v2643 = vunpack.c.l.b16 %v2497
      %v2644 = vunpack.c.l.b16 %v2498
      %v2645 = vunpack.c.l.b16 %v2499
      %v2646 = vunpack.c.l.b16 %v2500
      %v2647 = vunpack.c.l.b16 %v2501
      %v2648 = vunpack.c.l.b16 %v2502
      %v2649 = vunpack.c.l.b16 %v2503
      %v2650 = vunpack.c.l.b16 %v2504
      %v2651 = vunpack.c.l.b16 %v2505
      %v2652 = vunpack.c.l.b16 %v2506
      %v2653 = vunpack.c.l.b16 %v2507
      %v2654 = vunpack.c.l.b16 %v2508
      %v2655 = vunpack.c.l.b16 %v2509
      %v2656 = vunpack.c.l.b16 %v2510
      %v2657 = vunpack.c.l.b16 %v2511
      %v2658 = vunpack.c.l.b16 %v2512
      %v2659 = vunpack.c.l.b16 %v2513
      %v2660 = vunpack.c.l.b16 %v2514
      %v2661 = vunpack.c.l.b16 %v2515
      %v2662 = vpack.c.b16 %v2615, %v2614
      %v2663 = vpack.c.b16 %v2617, %v2616
      %v2664 = vpack.c.b16 %v2619, %v2618
      %v2665 = vpack.c.b16 %v2621, %v2620
      %v2666 = vpack.c.b16 %v2623, %v2622
      %v2667 = vpack.c.b16 %v2625, %v2624
      %v2668 = vpack.c.b16 %v2627, %v2626
      %v2669 = vpack.c.b16 %v2629, %v2628
      %v2670 = vpack.c.b16 %v2631, %v2630
      %v2671 = vpack.c.b16 %v2633, %v2632
      %v2672 = vpack.c.b16 %v2635, %v2634
      %v2673 = vpack.c.b16 %v2637, %v2636
      %v2674 = vpack.c.b16 %v2639, %v2638
      %v2675 = vpack.c.b16 %v2641, %v2640
      %v2676 = vpack.c.b16 %v2643, %v2642
      %v2677 = vpack.c.b16 %v2645, %v2644
      %v2678 = vpack.c.b16 %v2647, %v2646
      %v2679 = vpack.c.b16 %v2649, %v2648
      %v2680 = vpack.c.b16 %v2651, %v2650
      %v2681 = vpack.c.b16 %v2653, %v2652
      %v2682 = vpack.c.b16 %v2655, %v2654
      %v2683 = vpack.c.b16 %v2657, %v2656
      %v2684 = vpack.c.b16 %v2659, %v2658
      %v2685 = vpack.c.b16 %v2661, %v2660
      %v2687 = vsel %vm1206, %v2662, 0
      %v2690 = vsel %vm1206, %v2663, 0
      %v2693 = vsel %vm1206, %v2664, 0
      %v2696 = vsel %vm1206, %v2665, 0
      %v2699 = vsel %vm1206, %v2666, 0
      %v2702 = vsel %vm1206, %v2667, 0
      %v2705 = vsel %vm1206, %v2668, 0
      %v2708 = vsel %vm1206, %v2669, 0
      %v2711 = vsel %vm1206, %v2670, 0
      %v2714 = vsel %vm1206, %v2671, 0
      %v2717 = vsel %vm1206, %v2672, 0
      %v2720 = vsel %vm1206, %v2673, 0
      %v2723 = vsel %vm1206, %v2674, 0
      %v2726 = vsel %vm1206, %v2675, 0
      %v2729 = vsel %vm1206, %v2676, 0
      %v2732 = vsel %vm1206, %v2677, 0
      %v2735 = vsel %vm1206, %v2678, 0
      %v2738 = vsel %vm1206, %v2679, 0
      %v2741 = vsel %vm1206, %v2680, 0
      %v2744 = vsel %vm1206, %v2681, 0
      %v2747 = vsel %vm1206, %v2682, 0
      %v2750 = vsel %vm1206, %v2683, 0
      %v2753 = vsel %vm1206, %v2684, 0
      %v2756 = vsel %vm1206, %v2685, 0
      %v2759 = vsel %vm1279, %v2565, 0
      %2761 = vmatprep.subr.bf16.mxu0 0
      %2762 = vmatpush1.bf16.msra.mxu0 %v2759
      %2763 = vmatprep.subr.bf16.mxu0 0
      %2764 = vmatpush1.bf16.msra.mxu0 0
      %2765 = vmatprep.subr.bf16.mxu0 0
      %2766 = vmatpush1.bf16.msra.mxu0 0
      %2767 = vmatprep.subr.bf16.mxu0 0
      %2768 = vmatpush1.bf16.msra.mxu0 0
      %2769 = vmatprep.subr.bf16.mxu0 0
      %2770 = vmatpush1.bf16.msra.mxu0 0
      %2771 = vmatprep.subr.bf16.mxu0 0
      %2772 = vmatpush1.bf16.msra.mxu0 0
      %2773 = vmatprep.subr.bf16.mxu0 0
      %2774 = vmatpush1.bf16.msra.mxu0 0
      %2775 = vmatprep.subr.bf16.mxu0 0
      %2776 = vmatpush1.bf16.msra.mxu0 0
      %2777 = vmatprep.subr.bf16.mxu0 0
      %2778 = vmatpush1.bf16.msra.mxu0 0
      %2779 = vmatprep.subr.bf16.mxu0 0
      %2780 = vmatpush1.bf16.msra.mxu0 0
      %2781 = vmatprep.subr.bf16.mxu0 0
      %2782 = vmatpush1.bf16.msra.mxu0 0
      %2783 = vmatprep.subr.bf16.mxu0 0
      %2784 = vmatpush1.bf16.msra.mxu0 0
      %2785 = vmatprep.subr.bf16.mxu0 0
      %2786 = vmatpush1.bf16.msra.mxu0 0
      %2787 = vmatprep.subr.bf16.mxu0 0
      %2788 = vmatpush1.bf16.msra.mxu0 0
      %2789 = vmatprep.subr.bf16.mxu0 0
      %2790 = vmatpush1.bf16.msra.mxu0 0
      %2791 = vmatprep.subr.bf16.mxu0 0
      %2792 = vmatpush1.bf16.msra.mxu0 0
      %2793 = vmatprep.mubr.bf16.mxu0 0
      %2794 = vmatmul.mubr.bf16.gmra.mrb[0].mxu0 %v2687
      %v2795 = vpop.f32.mrb[0].mxu0
      %v2796 = vadd.f32 0.0, %v2795
      %v2797 = vpop.f32.mrb[0].mxu0
      %v2798 = vpop.f32.mrb[0].mxu0
      %v2799 = vadd.f32 0.0, %v2798
      %v2800 = vpop.f32.mrb[0].mxu0
      %2801 = vmatprep.mubr.bf16.mxu0 0
      %2802 = vmatmul.mubr.bf16.gmra.mrb[0].mxu0 %v2690
      %v2803 = vpop.f32.mrb[0].mxu0
      %v2804 = vadd.f32 0.0, %v2803
      %v2805 = vpop.f32.mrb[0].mxu0
      %v2806 = vpop.f32.mrb[0].mxu0
      %v2807 = vadd.f32 0.0, %v2806
      %v2808 = vpop.f32.mrb[0].mxu0
      %2809 = vmatprep.mubr.bf16.mxu0 0
      %2810 = vmatmul.mubr.bf16.gmra.mrb[0].mxu0 %v2693
      %v2811 = vpop.f32.mrb[0].mxu0
      %v2812 = vadd.f32 0.0, %v2811
      %v2813 = vpop.f32.mrb[0].mxu0
      %v2814 = vpop.f32.mrb[0].mxu0
      %v2815 = vadd.f32 0.0, %v2814
      %v2816 = vpop.f32.mrb[0].mxu0
      %2817 = vmatprep.mubr.bf16.mxu0 0
      %2818 = vmatmul.mubr.bf16.gmra.mrb[0].mxu0 %v2696
      %v2819 = vpop.f32.mrb[0].mxu0
      %v2820 = vadd.f32 0.0, %v2819
      %v2821 = vpop.f32.mrb[0].mxu0
      %v2822 = vpop.f32.mrb[0].mxu0
      %v2823 = vadd.f32 0.0, %v2822
      %v2824 = vpop.f32.mrb[0].mxu0
      %2825 = vmatprep.mubr.bf16.mxu0 0
      %2826 = vmatmul.mubr.bf16.gmra.mrb[0].mxu0 %v2699
      %v2827 = vpop.f32.mrb[0].mxu0
      %v2828 = vadd.f32 0.0, %v2827
      %v2829 = vpop.f32.mrb[0].mxu0
      %v2830 = vpop.f32.mrb[0].mxu0
      %v2831 = vadd.f32 0.0, %v2830
      %v2832 = vpop.f32.mrb[0].mxu0
      %2833 = vmatprep.mubr.bf16.mxu0 0
      %2834 = vmatmul.mubr.bf16.gmra.mrb[0].mxu0 %v2702
      %v2835 = vpop.f32.mrb[0].mxu0
      %v2836 = vadd.f32 0.0, %v2835
      %v2837 = vpop.f32.mrb[0].mxu0
      %v2838 = vpop.f32.mrb[0].mxu0
      %v2839 = vadd.f32 0.0, %v2838
      %v2840 = vpop.f32.mrb[0].mxu0
      %2841 = vmatprep.mubr.bf16.mxu0 0
      %2842 = vmatmul.mubr.bf16.gmra.mrb[0].mxu0 %v2705
      %v2843 = vpop.f32.mrb[0].mxu0
      %v2844 = vadd.f32 0.0, %v2843
      %v2845 = vpop.f32.mrb[0].mxu0
      %v2846 = vpop.f32.mrb[0].mxu0
      %v2847 = vadd.f32 0.0, %v2846
      %v2848 = vpop.f32.mrb[0].mxu0
      %2849 = vmatprep.mubr.bf16.mxu0 0
      %2850 = vmatmul.mubr.bf16.gmra.mrb[0].mxu0 %v2708
      %v2851 = vpop.f32.mrb[0].mxu0
      %v2852 = vadd.f32 0.0, %v2851
      %v2853 = vpop.f32.mrb[0].mxu0
      %v2854 = vpop.f32.mrb[0].mxu0
      %v2855 = vadd.f32 0.0, %v2854
      %v2856 = vpop.f32.mrb[0].mxu0
      %2857 = vmatprep.mubr.bf16.mxu0 0
      %2858 = vmatmul.mubr.bf16.gmra.mrb[0].mxu0 %v2711
      %v2859 = vpop.f32.mrb[0].mxu0
      %v2860 = vadd.f32 0.0, %v2859
      %v2861 = vpop.f32.mrb[0].mxu0
      %v2862 = vpop.f32.mrb[0].mxu0
      %v2863 = vadd.f32 0.0, %v2862
      %v2864 = vpop.f32.mrb[0].mxu0
      %2865 = vmatprep.mubr.bf16.mxu0 0
      %2866 = vmatmul.mubr.bf16.gmra.mrb[0].mxu0 %v2714
      %v2867 = vpop.f32.mrb[0].mxu0
      %v2868 = vadd.f32 0.0, %v2867
      %v2869 = vpop.f32.mrb[0].mxu0
      %v2870 = vpop.f32.mrb[0].mxu0
      %v2871 = vadd.f32 0.0, %v2870
      %v2872 = vpop.f32.mrb[0].mxu0
      %2873 = vmatprep.mubr.bf16.mxu0 0
      %2874 = vmatmul.mubr.bf16.gmra.mrb[0].mxu0 %v2717
      %v2875 = vpop.f32.mrb[0].mxu0
      %v2876 = vadd.f32 0.0, %v2875
      %v2877 = vpop.f32.mrb[0].mxu0
      %v2878 = vpop.f32.mrb[0].mxu0
      %v2879 = vadd.f32 0.0, %v2878
      %v2880 = vpop.f32.mrb[0].mxu0
      %2881 = vmatprep.mubr.bf16.mxu0 0
      %2882 = vmatmul.mubr.bf16.gmra.mrb[0].mxu0 %v2720
      %v2883 = vpop.f32.mrb[0].mxu0
      %v2884 = vadd.f32 0.0, %v2883
      %v2885 = vpop.f32.mrb[0].mxu0
      %v2886 = vpop.f32.mrb[0].mxu0
      %v2887 = vadd.f32 0.0, %v2886
      %v2888 = vpop.f32.mrb[0].mxu0
      %2889 = vmatprep.mubr.bf16.mxu0 0
      %2890 = vmatmul.mubr.bf16.gmra.mrb[0].mxu0 %v2723
      %v2891 = vpop.f32.mrb[0].mxu0
      %v2892 = vadd.f32 0.0, %v2891
      %v2893 = vpop.f32.mrb[0].mxu0
      %v2894 = vpop.f32.mrb[0].mxu0
      %v2895 = vadd.f32 0.0, %v2894
      %v2896 = vpop.f32.mrb[0].mxu0
      %2897 = vmatprep.mubr.bf16.mxu0 0
      %2898 = vmatmul.mubr.bf16.gmra.mrb[0].mxu0 %v2726
      %v2899 = vpop.f32.mrb[0].mxu0
      %v2900 = vadd.f32 0.0, %v2899
      %v2901 = vpop.f32.mrb[0].mxu0
      %v2902 = vpop.f32.mrb[0].mxu0
      %v2903 = vadd.f32 0.0, %v2902
      %v2904 = vpop.f32.mrb[0].mxu0
      %2905 = vmatprep.mubr.bf16.mxu0 0
      %2906 = vmatmul.mubr.bf16.gmra.mrb[0].mxu0 %v2729
      %v2907 = vpop.f32.mrb[0].mxu0
      %v2908 = vadd.f32 0.0, %v2907
      %v2909 = vpop.f32.mrb[0].mxu0
      %v2910 = vpop.f32.mrb[0].mxu0
      %v2911 = vadd.f32 0.0, %v2910
      %v2912 = vpop.f32.mrb[0].mxu0
      %2913 = vmatprep.mubr.bf16.mxu0 0
      %2914 = vmatmul.mubr.bf16.gmra.mrb[0].mxu0 %v2732
      %v2915 = vpop.f32.mrb[0].mxu0
      %v2916 = vadd.f32 0.0, %v2915
      %v2917 = vpop.f32.mrb[0].mxu0
      %v2918 = vpop.f32.mrb[0].mxu0
      %v2919 = vadd.f32 0.0, %v2918
      %v2920 = vpop.f32.mrb[0].mxu0
      %2921 = vmatprep.mubr.bf16.mxu0 0
      %2922 = vmatmul.mubr.bf16.gmra.mrb[0].mxu0 %v2735
      %v2923 = vpop.f32.mrb[0].mxu0
      %v2924 = vadd.f32 0.0, %v2923
      %v2925 = vpop.f32.mrb[0].mxu0
      %v2926 = vpop.f32.mrb[0].mxu0
      %v2927 = vadd.f32 0.0, %v2926
      %v2928 = vpop.f32.mrb[0].mxu0
      %2929 = vmatprep.mubr.bf16.mxu0 0
      %2930 = vmatmul.mubr.bf16.gmra.mrb[0].mxu0 %v2738
      %v2931 = vpop.f32.mrb[0].mxu0
      %v2932 = vadd.f32 0.0, %v2931
      %v2933 = vpop.f32.mrb[0].mxu0
      %v2934 = vpop.f32.mrb[0].mxu0
      %v2935 = vadd.f32 0.0, %v2934
      %v2936 = vpop.f32.mrb[0].mxu0
      %2937 = vmatprep.mubr.bf16.mxu0 0
      %2938 = vmatmul.mubr.bf16.gmra.mrb[0].mxu0 %v2741
      %v2939 = vpop.f32.mrb[0].mxu0
      %v2940 = vadd.f32 0.0, %v2939
      %v2941 = vpop.f32.mrb[0].mxu0
      %v2942 = vpop.f32.mrb[0].mxu0
      %v2943 = vadd.f32 0.0, %v2942
      %v2944 = vpop.f32.mrb[0].mxu0
      %2945 = vmatprep.mubr.bf16.mxu0 0
      %2946 = vmatmul.mubr.bf16.gmra.mrb[0].mxu0 %v2744
      %v2947 = vpop.f32.mrb[0].mxu0
      %v2948 = vadd.f32 0.0, %v2947
      %v2949 = vpop.f32.mrb[0].mxu0
      %v2950 = vpop.f32.mrb[0].mxu0
      %v2951 = vadd.f32 0.0, %v2950
      %v2952 = vpop.f32.mrb[0].mxu0
      %2953 = vmatprep.mubr.bf16.mxu0 0
      %2954 = vmatmul.mubr.bf16.gmra.mrb[0].mxu0 %v2747
      %v2955 = vpop.f32.mrb[0].mxu0
      %v2956 = vadd.f32 0.0, %v2955
      %v2957 = vpop.f32.mrb[0].mxu0
      %v2958 = vpop.f32.mrb[0].mxu0
      %v2959 = vadd.f32 0.0, %v2958
      %v2960 = vpop.f32.mrb[0].mxu0
      %2961 = vmatprep.mubr.bf16.mxu0 0
      %2962 = vmatmul.mubr.bf16.gmra.mrb[0].mxu0 %v2750
      %v2963 = vpop.f32.mrb[0].mxu0
      %v2964 = vadd.f32 0.0, %v2963
      %v2965 = vpop.f32.mrb[0].mxu0
      %v2966 = vpop.f32.mrb[0].mxu0
      %v2967 = vadd.f32 0.0, %v2966
      %v2968 = vpop.f32.mrb[0].mxu0
      %2969 = vmatprep.mubr.bf16.mxu0 0
      %2970 = vmatmul.mubr.bf16.gmra.mrb[0].mxu0 %v2753
      %v2971 = vpop.f32.mrb[0].mxu0
      %v2972 = vadd.f32 0.0, %v2971
      %v2973 = vpop.f32.mrb[0].mxu0
      %v2974 = vpop.f32.mrb[0].mxu0
      %v2975 = vadd.f32 0.0, %v2974
      %v2976 = vpop.f32.mrb[0].mxu0
      %2977 = vmatprep.mubr.bf16.mxu0 0
      %2978 = vmatmul.mubr.bf16.gmra.mrb[0].mxu0 %v2756
      %v2979 = vpop.f32.mrb[0].mxu0
      %v2980 = vadd.f32 0.0, %v2979
      %v2981 = vpop.f32.mrb[0].mxu0
      %v2982 = vpop.f32.mrb[0].mxu0
      %v2983 = vadd.f32 0.0, %v2982
      %v2984 = vpop.f32.mrb[0].mxu0
      %2985 = vdwg.mxu0
      %v2986 = vadd.f32 %v1318, %v2796
      %v2987 = vadd.f32 %v1321, %v2799
      %v2988 = vadd.f32 %v1326, %v2804
      %v2989 = vadd.f32 %v1329, %v2807
      %v2990 = vadd.f32 %v1334, %v2812
      %v2991 = vadd.f32 %v1337, %v2815
      %v2992 = vadd.f32 %v1342, %v2820
      %v2993 = vadd.f32 %v1345, %v2823
      %v2994 = vadd.f32 %v1350, %v2828
      %v2995 = vadd.f32 %v1353, %v2831
      %v2996 = vadd.f32 %v1358, %v2836
      %v2997 = vadd.f32 %v1361, %v2839
      %v2998 = vadd.f32 %v1366, %v2844
      %v2999 = vadd.f32 %v1369, %v2847
      %v3000 = vadd.f32 %v1374, %v2852
      %v3001 = vadd.f32 %v1377, %v2855
      %v3002 = vadd.f32 %v1382, %v2860
      %v3003 = vadd.f32 %v1385, %v2863
      %v3004 = vadd.f32 %v1390, %v2868
      %v3005 = vadd.f32 %v1393, %v2871
      %v3006 = vadd.f32 %v1398, %v2876
      %v3007 = vadd.f32 %v1401, %v2879
      %v3008 = vadd.f32 %v1406, %v2884
      %v3009 = vadd.f32 %v1409, %v2887
      %v3010 = vadd.f32 %v1414, %v2892
      %v3011 = vadd.f32 %v1417, %v2895
      %v3012 = vadd.f32 %v1422, %v2900
      %v3013 = vadd.f32 %v1425, %v2903
      %v3014 = vadd.f32 %v1430, %v2908
      %v3015 = vadd.f32 %v1433, %v2911
      %v3016 = vadd.f32 %v1438, %v2916
      %v3017 = vadd.f32 %v1441, %v2919
      %v3018 = vadd.f32 %v1446, %v2924
      %v3019 = vadd.f32 %v1449, %v2927
      %v3020 = vadd.f32 %v1454, %v2932
      %v3021 = vadd.f32 %v1457, %v2935
      %v3022 = vadd.f32 %v1462, %v2940
      %v3023 = vadd.f32 %v1465, %v2943
      %v3024 = vadd.f32 %v1470, %v2948
      %v3025 = vadd.f32 %v1473, %v2951
      %v3026 = vadd.f32 %v1478, %v2956
      %v3027 = vadd.f32 %v1481, %v2959
      %v3028 = vadd.f32 %v1486, %v2964
      %v3029 = vadd.f32 %v1489, %v2967
      %v3030 = vadd.f32 %v1494, %v2972
      %v3031 = vadd.f32 %v1497, %v2975
      %v3032 = vadd.f32 %v1502, %v2980
      %v3033 = vadd.f32 %v1505, %v2983
      %s3034 = scalar_lea.vmem %s3, 24
      %v3035 = vld [vmem:[%s3034] sm:$0xf]
      %v3036 = vld [vmem:[%s3034 + $0x4] sm:$0xf]
      %v3085 = vunpack.c.l.b16 %v2516
      %v3086 = vunpack.c.l.b16 %v2517
      %v3087 = vunpack.c.l.b16 %v2518
      %v3088 = vunpack.c.l.b16 %v2519
      %v3089 = vunpack.c.l.b16 %v2520
      %v3090 = vunpack.c.l.b16 %v2521
      %v3091 = vunpack.c.l.b16 %v2522
      %v3092 = vunpack.c.l.b16 %v2523
      %v3093 = vunpack.c.l.b16 %v2524
      %v3094 = vunpack.c.l.b16 %v2525
      %v3095 = vunpack.c.l.b16 %v2526
      %v3096 = vunpack.c.l.b16 %v2527
      %v3097 = vunpack.c.l.b16 %v2528
      %v3098 = vunpack.c.l.b16 %v2529
      %v3099 = vunpack.c.l.b16 %v2530
      %v3100 = vunpack.c.l.b16 %v2531
      %v3101 = vunpack.c.l.b16 %v2532
      %v3102 = vunpack.c.l.b16 %v2533
      %v3103 = vunpack.c.l.b16 %v2534
      %v3104 = vunpack.c.l.b16 %v2535
      %v3105 = vunpack.c.l.b16 %v2536
      %v3106 = vunpack.c.l.b16 %v2537
      %v3107 = vunpack.c.l.b16 %v2538
      %v3108 = vunpack.c.l.b16 %v2539
      %v3109 = vunpack.c.l.b16 %v2540
      %v3110 = vunpack.c.l.b16 %v2541
      %v3111 = vunpack.c.l.b16 %v2542
      %v3112 = vunpack.c.l.b16 %v2543
      %v3113 = vunpack.c.l.b16 %v2544
      %v3114 = vunpack.c.l.b16 %v2545
      %v3115 = vunpack.c.l.b16 %v2546
      %v3116 = vunpack.c.l.b16 %v2547
      %v3117 = vunpack.c.l.b16 %v2548
      %v3118 = vunpack.c.l.b16 %v2549
      %v3119 = vunpack.c.l.b16 %v2550
      %v3120 = vunpack.c.l.b16 %v2551
      %v3121 = vunpack.c.l.b16 %v2552
      %v3122 = vunpack.c.l.b16 %v2553
      %v3123 = vunpack.c.l.b16 %v2554
      %v3124 = vunpack.c.l.b16 %v2555
      %v3125 = vunpack.c.l.b16 %v2556
      %v3126 = vunpack.c.l.b16 %v2557
      %v3127 = vunpack.c.l.b16 %v2558
      %v3128 = vunpack.c.l.b16 %v2559
      %v3129 = vunpack.c.l.b16 %v2560
      %v3130 = vunpack.c.l.b16 %v2561
      %v3131 = vunpack.c.l.b16 %v2562
      %v3132 = vunpack.c.l.b16 %v2563
      %v3133 = vpack.c.b16 %v3086, %v3085
      %v3134 = vpack.c.b16 %v3088, %v3087
      %v3135 = vpack.c.b16 %v3090, %v3089
      %v3136 = vpack.c.b16 %v3092, %v3091
      %v3137 = vpack.c.b16 %v3094, %v3093
      %v3138 = vpack.c.b16 %v3096, %v3095
      %v3139 = vpack.c.b16 %v3098, %v3097
      %v3140 = vpack.c.b16 %v3100, %v3099
      %v3141 = vpack.c.b16 %v3102, %v3101
      %v3142 = vpack.c.b16 %v3104, %v3103
      %v3143 = vpack.c.b16 %v3106, %v3105
      %v3144 = vpack.c.b16 %v3108, %v3107
      %v3145 = vpack.c.b16 %v3110, %v3109
      %v3146 = vpack.c.b16 %v3112, %v3111
      %v3147 = vpack.c.b16 %v3114, %v3113
      %v3148 = vpack.c.b16 %v3116, %v3115
      %v3149 = vpack.c.b16 %v3118, %v3117
      %v3150 = vpack.c.b16 %v3120, %v3119
      %v3151 = vpack.c.b16 %v3122, %v3121
      %v3152 = vpack.c.b16 %v3124, %v3123
      %v3153 = vpack.c.b16 %v3126, %v3125
      %v3154 = vpack.c.b16 %v3128, %v3127
      %v3155 = vpack.c.b16 %v3130, %v3129
      %v3156 = vpack.c.b16 %v3132, %v3131
      %v3159 = vunpack.c.l.b16 %v3035
      %v3160 = vunpack.c.l.b16 %v3036
      %v3161 = vpack.c.b16 %v3160, %v3159
      %v3164 = vsel %vm788, %v3133, 0
      %v3167 = vsel %vm788, %v3134, 0
      %v3170 = vsel %vm788, %v3135, 0
      %v3173 = vsel %vm788, %v3136, 0
      %v3176 = vsel %vm788, %v3137, 0
      %v3179 = vsel %vm788, %v3138, 0
      %v3182 = vsel %vm788, %v3139, 0
      %v3185 = vsel %vm788, %v3140, 0
      %v3188 = vsel %vm788, %v3141, 0
      %v3191 = vsel %vm788, %v3142, 0
      %v3194 = vsel %vm788, %v3143, 0
      %v3197 = vsel %vm788, %v3144, 0
      %v3200 = vsel %vm788, %v3145, 0
      %v3203 = vsel %vm788, %v3146, 0
      %v3206 = vsel %vm788, %v3147, 0
      %v3209 = vsel %vm788, %v3148, 0
      %v3212 = vsel %vm788, %v3149, 0
      %v3215 = vsel %vm788, %v3150, 0
      %v3218 = vsel %vm788, %v3151, 0
      %v3221 = vsel %vm788, %v3152, 0
      %v3224 = vsel %vm788, %v3153, 0
      %v3227 = vsel %vm788, %v3154, 0
      %v3230 = vsel %vm788, %v3155, 0
      %v3233 = vsel %vm788, %v3156, 0
      %3235 = vmatprep.subr.bf16.mxu0 0
      %3236 = vmatpush1.bf16.msra.mxu0 %v3161
      %3237 = vmatprep.subr.bf16.mxu0 0
      %3238 = vmatpush1.bf16.msra.mxu0 0
      %3239 = vmatprep.subr.bf16.mxu0 0
      %3240 = vmatpush1.bf16.msra.mxu0 0
      %3241 = vmatprep.subr.bf16.mxu0 0
      %3242 = vmatpush1.bf16.msra.mxu0 0
      %3243 = vmatprep.subr.bf16.mxu0 0
      %3244 = vmatpush1.bf16.msra.mxu0 0
      %3245 = vmatprep.subr.bf16.mxu0 0
      %3246 = vmatpush1.bf16.msra.mxu0 0
      %3247 = vmatprep.subr.bf16.mxu0 0
      %3248 = vmatpush1.bf16.msra.mxu0 0
      %3249 = vmatprep.subr.bf16.mxu0 0
      %3250 = vmatpush1.bf16.msra.mxu0 0
      %3251 = vmatprep.subr.bf16.mxu0 0
      %3252 = vmatpush1.bf16.msra.mxu0 0
      %3253 = vmatprep.subr.bf16.mxu0 0
      %3254 = vmatpush1.bf16.msra.mxu0 0
      %3255 = vmatprep.subr.bf16.mxu0 0
      %3256 = vmatpush1.bf16.msra.mxu0 0
      %3257 = vmatprep.subr.bf16.mxu0 0
      %3258 = vmatpush1.bf16.msra.mxu0 0
      %3259 = vmatprep.subr.bf16.mxu0 0
      %3260 = vmatpush1.bf16.msra.mxu0 0
      %3261 = vmatprep.subr.bf16.mxu0 0
      %3262 = vmatpush1.bf16.msra.mxu0 0
      %3263 = vmatprep.subr.bf16.mxu0 0
      %3264 = vmatpush1.bf16.msra.mxu0 0
      %3265 = vmatprep.subr.bf16.mxu0 0
      %3266 = vmatpush1.bf16.msra.mxu0 0
      %3267 = vmatprep.mubr.bf16.mxu0 0
      %3268 = vmatmul.mubr.bf16.gmra.mrb[0].mxu0 %v3164
      %v3269 = vpop.f32.mrb[0].mxu0
      %v3270 = vadd.f32 0.0, %v3269
      %v3271 = vpop.f32.mrb[0].mxu0
      %v3272 = vpop.f32.mrb[0].mxu0
      %v3273 = vadd.f32 0.0, %v3272
      %v3274 = vpop.f32.mrb[0].mxu0
      %3275 = vmatprep.mubr.bf16.mxu0 0
      %3276 = vmatmul.mubr.bf16.gmra.mrb[0].mxu0 %v3167
      %v3277 = vpop.f32.mrb[0].mxu0
      %v3278 = vadd.f32 0.0, %v3277
      %v3279 = vpop.f32.mrb[0].mxu0
      %v3280 = vpop.f32.mrb[0].mxu0
      %v3281 = vadd.f32 0.0, %v3280
      %v3282 = vpop.f32.mrb[0].mxu0
      %3283 = vmatprep.mubr.bf16.mxu0 0
      %3284 = vmatmul.mubr.bf16.gmra.mrb[0].mxu0 %v3170
      %v3285 = vpop.f32.mrb[0].mxu0
      %v3286 = vadd.f32 0.0, %v3285
      %v3287 = vpop.f32.mrb[0].mxu0
      %v3288 = vpop.f32.mrb[0].mxu0
      %v3289 = vadd.f32 0.0, %v3288
      %v3290 = vpop.f32.mrb[0].mxu0
      %3291 = vmatprep.mubr.bf16.mxu0 0
      %3292 = vmatmul.mubr.bf16.gmra.mrb[0].mxu0 %v3173
      %v3293 = vpop.f32.mrb[0].mxu0
      %v3294 = vadd.f32 0.0, %v3293
      %v3295 = vpop.f32.mrb[0].mxu0
      %v3296 = vpop.f32.mrb[0].mxu0
      %v3297 = vadd.f32 0.0, %v3296
      %v3298 = vpop.f32.mrb[0].mxu0
      %3299 = vmatprep.mubr.bf16.mxu0 0
      %3300 = vmatmul.mubr.bf16.gmra.mrb[0].mxu0 %v3176
      %v3301 = vpop.f32.mrb[0].mxu0
      %v3302 = vadd.f32 0.0, %v3301
      %v3303 = vpop.f32.mrb[0].mxu0
      %v3304 = vpop.f32.mrb[0].mxu0
      %v3305 = vadd.f32 0.0, %v3304
      %v3306 = vpop.f32.mrb[0].mxu0
      %3307 = vmatprep.mubr.bf16.mxu0 0
      %3308 = vmatmul.mubr.bf16.gmra.mrb[0].mxu0 %v3179
      %v3309 = vpop.f32.mrb[0].mxu0
      %v3310 = vadd.f32 0.0, %v3309
      %v3311 = vpop.f32.mrb[0].mxu0
      %v3312 = vpop.f32.mrb[0].mxu0
      %v3313 = vadd.f32 0.0, %v3312
      %v3314 = vpop.f32.mrb[0].mxu0
      %3315 = vmatprep.mubr.bf16.mxu0 0
      %3316 = vmatmul.mubr.bf16.gmra.mrb[0].mxu0 %v3182
      %v3317 = vpop.f32.mrb[0].mxu0
      %v3318 = vadd.f32 0.0, %v3317
      %v3319 = vpop.f32.mrb[0].mxu0
      %v3320 = vpop.f32.mrb[0].mxu0
      %v3321 = vadd.f32 0.0, %v3320
      %v3322 = vpop.f32.mrb[0].mxu0
      %3323 = vmatprep.mubr.bf16.mxu0 0
      %3324 = vmatmul.mubr.bf16.gmra.mrb[0].mxu0 %v3185
      %v3325 = vpop.f32.mrb[0].mxu0
      %v3326 = vadd.f32 0.0, %v3325
      %v3327 = vpop.f32.mrb[0].mxu0
      %v3328 = vpop.f32.mrb[0].mxu0
      %v3329 = vadd.f32 0.0, %v3328
      %v3330 = vpop.f32.mrb[0].mxu0
      %3331 = vmatprep.mubr.bf16.mxu0 0
      %3332 = vmatmul.mubr.bf16.gmra.mrb[0].mxu0 %v3188
      %v3333 = vpop.f32.mrb[0].mxu0
      %v3334 = vadd.f32 0.0, %v3333
      %v3335 = vpop.f32.mrb[0].mxu0
      %v3336 = vpop.f32.mrb[0].mxu0
      %v3337 = vadd.f32 0.0, %v3336
      %v3338 = vpop.f32.mrb[0].mxu0
      %3339 = vmatprep.mubr.bf16.mxu0 0
      %3340 = vmatmul.mubr.bf16.gmra.mrb[0].mxu0 %v3191
      %v3341 = vpop.f32.mrb[0].mxu0
      %v3342 = vadd.f32 0.0, %v3341
      %v3343 = vpop.f32.mrb[0].mxu0
      %v3344 = vpop.f32.mrb[0].mxu0
      %v3345 = vadd.f32 0.0, %v3344
      %v3346 = vpop.f32.mrb[0].mxu0
      %3347 = vmatprep.mubr.bf16.mxu0 0
      %3348 = vmatmul.mubr.bf16.gmra.mrb[0].mxu0 %v3194
      %v3349 = vpop.f32.mrb[0].mxu0
      %v3350 = vadd.f32 0.0, %v3349
      %v3351 = vpop.f32.mrb[0].mxu0
      %v3352 = vpop.f32.mrb[0].mxu0
      %v3353 = vadd.f32 0.0, %v3352
      %v3354 = vpop.f32.mrb[0].mxu0
      %3355 = vmatprep.mubr.bf16.mxu0 0
      %3356 = vmatmul.mubr.bf16.gmra.mrb[0].mxu0 %v3197
      %v3357 = vpop.f32.mrb[0].mxu0
      %v3358 = vadd.f32 0.0, %v3357
      %v3359 = vpop.f32.mrb[0].mxu0
      %v3360 = vpop.f32.mrb[0].mxu0
      %v3361 = vadd.f32 0.0, %v3360
      %v3362 = vpop.f32.mrb[0].mxu0
      %3363 = vmatprep.mubr.bf16.mxu0 0
      %3364 = vmatmul.mubr.bf16.gmra.mrb[0].mxu0 %v3200
      %v3365 = vpop.f32.mrb[0].mxu0
      %v3366 = vadd.f32 0.0, %v3365
      %v3367 = vpop.f32.mrb[0].mxu0
      %v3368 = vpop.f32.mrb[0].mxu0
      %v3369 = vadd.f32 0.0, %v3368
      %v3370 = vpop.f32.mrb[0].mxu0
      %3371 = vmatprep.mubr.bf16.mxu0 0
      %3372 = vmatmul.mubr.bf16.gmra.mrb[0].mxu0 %v3203
      %v3373 = vpop.f32.mrb[0].mxu0
      %v3374 = vadd.f32 0.0, %v3373
      %v3375 = vpop.f32.mrb[0].mxu0
      %v3376 = vpop.f32.mrb[0].mxu0
      %v3377 = vadd.f32 0.0, %v3376
      %v3378 = vpop.f32.mrb[0].mxu0
      %3379 = vmatprep.mubr.bf16.mxu0 0
      %3380 = vmatmul.mubr.bf16.gmra.mrb[0].mxu0 %v3206
      %v3381 = vpop.f32.mrb[0].mxu0
      %v3382 = vadd.f32 0.0, %v3381
      %v3383 = vpop.f32.mrb[0].mxu0
      %v3384 = vpop.f32.mrb[0].mxu0
      %v3385 = vadd.f32 0.0, %v3384
      %v3386 = vpop.f32.mrb[0].mxu0
      %3387 = vmatprep.mubr.bf16.mxu0 0
      %3388 = vmatmul.mubr.bf16.gmra.mrb[0].mxu0 %v3209
      %v3389 = vpop.f32.mrb[0].mxu0
      %v3390 = vadd.f32 0.0, %v3389
      %v3391 = vpop.f32.mrb[0].mxu0
      %v3392 = vpop.f32.mrb[0].mxu0
      %v3393 = vadd.f32 0.0, %v3392
      %v3394 = vpop.f32.mrb[0].mxu0
      %3395 = vmatprep.mubr.bf16.mxu0 0
      %3396 = vmatmul.mubr.bf16.gmra.mrb[0].mxu0 %v3212
      %v3397 = vpop.f32.mrb[0].mxu0
      %v3398 = vadd.f32 0.0, %v3397
      %v3399 = vpop.f32.mrb[0].mxu0
      %v3400 = vpop.f32.mrb[0].mxu0
      %v3401 = vadd.f32 0.0, %v3400
      %v3402 = vpop.f32.mrb[0].mxu0
      %3403 = vmatprep.mubr.bf16.mxu0 0
      %3404 = vmatmul.mubr.bf16.gmra.mrb[0].mxu0 %v3215
      %v3405 = vpop.f32.mrb[0].mxu0
      %v3406 = vadd.f32 0.0, %v3405
      %v3407 = vpop.f32.mrb[0].mxu0
      %v3408 = vpop.f32.mrb[0].mxu0
      %v3409 = vadd.f32 0.0, %v3408
      %v3410 = vpop.f32.mrb[0].mxu0
      %3411 = vmatprep.mubr.bf16.mxu0 0
      %3412 = vmatmul.mubr.bf16.gmra.mrb[0].mxu0 %v3218
      %v3413 = vpop.f32.mrb[0].mxu0
      %v3414 = vadd.f32 0.0, %v3413
      %v3415 = vpop.f32.mrb[0].mxu0
      %v3416 = vpop.f32.mrb[0].mxu0
      %v3417 = vadd.f32 0.0, %v3416
      %v3418 = vpop.f32.mrb[0].mxu0
      %3419 = vmatprep.mubr.bf16.mxu0 0
      %3420 = vmatmul.mubr.bf16.gmra.mrb[0].mxu0 %v3221
      %v3421 = vpop.f32.mrb[0].mxu0
      %v3422 = vadd.f32 0.0, %v3421
      %v3423 = vpop.f32.mrb[0].mxu0
      %v3424 = vpop.f32.mrb[0].mxu0
      %v3425 = vadd.f32 0.0, %v3424
      %v3426 = vpop.f32.mrb[0].mxu0
      %3427 = vmatprep.mubr.bf16.mxu0 0
      %3428 = vmatmul.mubr.bf16.gmra.mrb[0].mxu0 %v3224
      %v3429 = vpop.f32.mrb[0].mxu0
      %v3430 = vadd.f32 0.0, %v3429
      %v3431 = vpop.f32.mrb[0].mxu0
      %v3432 = vpop.f32.mrb[0].mxu0
      %v3433 = vadd.f32 0.0, %v3432
      %v3434 = vpop.f32.mrb[0].mxu0
      %3435 = vmatprep.mubr.bf16.mxu0 0
      %3436 = vmatmul.mubr.bf16.gmra.mrb[0].mxu0 %v3227
      %v3437 = vpop.f32.mrb[0].mxu0
      %v3438 = vadd.f32 0.0, %v3437
      %v3439 = vpop.f32.mrb[0].mxu0
      %v3440 = vpop.f32.mrb[0].mxu0
      %v3441 = vadd.f32 0.0, %v3440
      %v3442 = vpop.f32.mrb[0].mxu0
      %3443 = vmatprep.mubr.bf16.mxu0 0
      %3444 = vmatmul.mubr.bf16.gmra.mrb[0].mxu0 %v3230
      %v3445 = vpop.f32.mrb[0].mxu0
      %v3446 = vadd.f32 0.0, %v3445
      %v3447 = vpop.f32.mrb[0].mxu0
      %v3448 = vpop.f32.mrb[0].mxu0
      %v3449 = vadd.f32 0.0, %v3448
      %v3450 = vpop.f32.mrb[0].mxu0
      %3451 = vmatprep.mubr.bf16.mxu0 0
      %3452 = vmatmul.mubr.bf16.gmra.mrb[0].mxu0 %v3233
      %v3453 = vpop.f32.mrb[0].mxu0
      %v3454 = vadd.f32 0.0, %v3453
      %v3455 = vpop.f32.mrb[0].mxu0
      %v3456 = vpop.f32.mrb[0].mxu0
      %v3457 = vadd.f32 0.0, %v3456
      %v3458 = vpop.f32.mrb[0].mxu0
      %3459 = vdwg.mxu0
      %v3460 = vadd.f32 %v2986, %v3270
      %v3461 = vadd.f32 %v2987, %v3273
      %v3462 = vadd.f32 %v2988, %v3278
      %v3463 = vadd.f32 %v2989, %v3281
      %v3464 = vadd.f32 %v2990, %v3286
      %v3465 = vadd.f32 %v2991, %v3289
      %v3466 = vadd.f32 %v2992, %v3294
      %v3467 = vadd.f32 %v2993, %v3297
      %v3468 = vadd.f32 %v2994, %v3302
      %v3469 = vadd.f32 %v2995, %v3305
      %v3470 = vadd.f32 %v2996, %v3310
      %v3471 = vadd.f32 %v2997, %v3313
      %v3472 = vadd.f32 %v2998, %v3318
      %v3473 = vadd.f32 %v2999, %v3321
      %v3474 = vadd.f32 %v3000, %v3326
      %v3475 = vadd.f32 %v3001, %v3329
      %v3476 = vadd.f32 %v3002, %v3334
      %v3477 = vadd.f32 %v3003, %v3337
      %v3478 = vadd.f32 %v3004, %v3342
      %v3479 = vadd.f32 %v3005, %v3345
      %v3480 = vadd.f32 %v3006, %v3350
      %v3481 = vadd.f32 %v3007, %v3353
      %v3482 = vadd.f32 %v3008, %v3358
      %v3483 = vadd.f32 %v3009, %v3361
      %v3484 = vadd.f32 %v3010, %v3366
      %v3485 = vadd.f32 %v3011, %v3369
      %v3486 = vadd.f32 %v3012, %v3374
      %v3487 = vadd.f32 %v3013, %v3377
      %v3488 = vadd.f32 %v3014, %v3382
      %v3489 = vadd.f32 %v3015, %v3385
      %v3490 = vadd.f32 %v3016, %v3390
      %v3491 = vadd.f32 %v3017, %v3393
      %v3492 = vadd.f32 %v3018, %v3398
      %v3493 = vadd.f32 %v3019, %v3401
      %v3494 = vadd.f32 %v3020, %v3406
      %v3495 = vadd.f32 %v3021, %v3409
      %v3496 = vadd.f32 %v3022, %v3414
      %v3497 = vadd.f32 %v3023, %v3417
      %v3498 = vadd.f32 %v3024, %v3422
      %v3499 = vadd.f32 %v3025, %v3425
      %v3500 = vadd.f32 %v3026, %v3430
      %v3501 = vadd.f32 %v3027, %v3433
      %v3502 = vadd.f32 %v3028, %v3438
      %v3503 = vadd.f32 %v3029, %v3441
      %v3504 = vadd.f32 %v3030, %v3446
      %v3505 = vadd.f32 %v3031, %v3449
      %v3506 = vadd.f32 %v3032, %v3454
      %v3507 = vadd.f32 %v3033, %v3457
      %s3508 = scalar_lea.vmem %s2, 16
      %v3509 = vld [vmem:[%s3508] sm:$0xf]
      %v3511 = vsel %vm1279, %v3509, 0
      %3513 = vmatprep.subr.bf16.mxu0 0
      %3514 = vmatpush1.bf16.msra.mxu0 %v3511
      %3515 = vmatprep.subr.bf16.mxu0 0
      %3516 = vmatpush1.bf16.msra.mxu0 0
      %3517 = vmatprep.subr.bf16.mxu0 0
      %3518 = vmatpush1.bf16.msra.mxu0 0
      %3519 = vmatprep.subr.bf16.mxu0 0
      %3520 = vmatpush1.bf16.msra.mxu0 0
      %3521 = vmatprep.subr.bf16.mxu0 0
      %3522 = vmatpush1.bf16.msra.mxu0 0
      %3523 = vmatprep.subr.bf16.mxu0 0
      %3524 = vmatpush1.bf16.msra.mxu0 0
      %3525 = vmatprep.subr.bf16.mxu0 0
      %3526 = vmatpush1.bf16.msra.mxu0 0
      %3527 = vmatprep.subr.bf16.mxu0 0
      %3528 = vmatpush1.bf16.msra.mxu0 0
      %3529 = vmatprep.subr.bf16.mxu0 0
      %3530 = vmatpush1.bf16.msra.mxu0 0
      %3531 = vmatprep.subr.bf16.mxu0 0
      %3532 = vmatpush1.bf16.msra.mxu0 0
      %3533 = vmatprep.subr.bf16.mxu0 0
      %3534 = vmatpush1.bf16.msra.mxu0 0
      %3535 = vmatprep.subr.bf16.mxu0 0
      %3536 = vmatpush1.bf16.msra.mxu0 0
      %3537 = vmatprep.subr.bf16.mxu0 0
      %3538 = vmatpush1.bf16.msra.mxu0 0
      %3539 = vmatprep.subr.bf16.mxu0 0
      %3540 = vmatpush1.bf16.msra.mxu0 0
      %3541 = vmatprep.subr.bf16.mxu0 0
      %3542 = vmatpush1.bf16.msra.mxu0 0
      %3543 = vmatprep.subr.bf16.mxu0 0
      %3544 = vmatpush1.bf16.msra.mxu0 0
      %3545 = vmatprep.mubr.bf16.mxu0 0
      %3546 = vmatmul.mubr.bf16.gmra.mrb[0].mxu0 %v2687
      %v3547 = vpop.f32.mrb[0].mxu0
      %v3548 = vadd.f32 0.0, %v3547
      %v3549 = vpop.f32.mrb[0].mxu0
      %v3550 = vpop.f32.mrb[0].mxu0
      %v3551 = vadd.f32 0.0, %v3550
      %v3552 = vpop.f32.mrb[0].mxu0
      %3553 = vmatprep.mubr.bf16.mxu0 0
      %3554 = vmatmul.mubr.bf16.gmra.mrb[0].mxu0 %v2690
      %v3555 = vpop.f32.mrb[0].mxu0
      %v3556 = vpop.f32.mrb[0].mxu0
      %v3557 = vpop.f32.mrb[0].mxu0
      %v3558 = vadd.f32 0.0, %v3557
      %v3559 = vpop.f32.mrb[0].mxu0
      %3560 = vmatprep.mubr.bf16.mxu0 0
      %3561 = vmatmul.mubr.bf16.gmra.mrb[0].mxu0 %v2693
      %v3562 = vpop.f32.mrb[0].mxu0
      %v3563 = vadd.f32 0.0, %v3562
      %v3564 = vpop.f32.mrb[0].mxu0
      %v3565 = vpop.f32.mrb[0].mxu0
      %v3566 = vpop.f32.mrb[0].mxu0
      %3567 = vmatprep.mubr.bf16.mxu0 0
      %3568 = vmatmul.mubr.bf16.gmra.mrb[0].mxu0 %v2696
      %v3569 = vpop.f32.mrb[0].mxu0
      %v3570 = vadd.f32 0.0, %v3569
      %v3571 = vpop.f32.mrb[0].mxu0
      %v3572 = vpop.f32.mrb[0].mxu0
      %v3573 = vadd.f32 0.0, %v3572
      %v3574 = vpop.f32.mrb[0].mxu0
      %3575 = vmatprep.mubr.bf16.mxu0 0
      %3576 = vmatmul.mubr.bf16.gmra.mrb[0].mxu0 %v2699
      %v3577 = vpop.f32.mrb[0].mxu0
      %v3578 = vpop.f32.mrb[0].mxu0
      %v3579 = vpop.f32.mrb[0].mxu0
      %v3580 = vadd.f32 0.0, %v3579
      %v3581 = vpop.f32.mrb[0].mxu0
      %3582 = vmatprep.mubr.bf16.mxu0 0
      %3583 = vmatmul.mubr.bf16.gmra.mrb[0].mxu0 %v2702
      %v3584 = vpop.f32.mrb[0].mxu0
      %v3585 = vadd.f32 0.0, %v3584
      %v3586 = vpop.f32.mrb[0].mxu0
      %v3587 = vpop.f32.mrb[0].mxu0
      %v3588 = vpop.f32.mrb[0].mxu0
      %3589 = vmatprep.mubr.bf16.mxu0 0
      %3590 = vmatmul.mubr.bf16.gmra.mrb[0].mxu0 %v2705
      %v3591 = vpop.f32.mrb[0].mxu0
      %v3592 = vadd.f32 0.0, %v3591
      %v3593 = vpop.f32.mrb[0].mxu0
      %v3594 = vpop.f32.mrb[0].mxu0
      %v3595 = vadd.f32 0.0, %v3594
      %v3596 = vpop.f32.mrb[0].mxu0
      %3597 = vmatprep.mubr.bf16.mxu0 0
      %3598 = vmatmul.mubr.bf16.gmra.mrb[0].mxu0 %v2708
      %v3599 = vpop.f32.mrb[0].mxu0
      %v3600 = vpop.f32.mrb[0].mxu0
      %v3601 = vpop.f32.mrb[0].mxu0
      %v3602 = vadd.f32 0.0, %v3601
      %v3603 = vpop.f32.mrb[0].mxu0
      %3604 = vmatprep.mubr.bf16.mxu0 0
      %3605 = vmatmul.mubr.bf16.gmra.mrb[0].mxu0 %v2711
      %v3606 = vpop.f32.mrb[0].mxu0
      %v3607 = vadd.f32 0.0, %v3606
      %v3608 = vpop.f32.mrb[0].mxu0
      %v3609 = vpop.f32.mrb[0].mxu0
      %v3610 = vpop.f32.mrb[0].mxu0
      %3611 = vmatprep.mubr.bf16.mxu0 0
      %3612 = vmatmul.mubr.bf16.gmra.mrb[0].mxu0 %v2714
      %v3613 = vpop.f32.mrb[0].mxu0
      %v3614 = vadd.f32 0.0, %v3613
      %v3615 = vpop.f32.mrb[0].mxu0
      %v3616 = vpop.f32.mrb[0].mxu0
      %v3617 = vadd.f32 0.0, %v3616
      %v3618 = vpop.f32.mrb[0].mxu0
      %3619 = vmatprep.mubr.bf16.mxu0 0
      %3620 = vmatmul.mubr.bf16.gmra.mrb[0].mxu0 %v2717
      %v3621 = vpop.f32.mrb[0].mxu0
      %v3622 = vpop.f32.mrb[0].mxu0
      %v3623 = vpop.f32.mrb[0].mxu0
      %v3624 = vadd.f32 0.0, %v3623
      %v3625 = vpop.f32.mrb[0].mxu0
      %3626 = vmatprep.mubr.bf16.mxu0 0
      %3627 = vmatmul.mubr.bf16.gmra.mrb[0].mxu0 %v2720
      %v3628 = vpop.f32.mrb[0].mxu0
      %v3629 = vadd.f32 0.0, %v3628
      %v3630 = vpop.f32.mrb[0].mxu0
      %v3631 = vpop.f32.mrb[0].mxu0
      %v3632 = vpop.f32.mrb[0].mxu0
      %3633 = vmatprep.mubr.bf16.mxu0 0
      %3634 = vmatmul.mubr.bf16.gmra.mrb[0].mxu0 %v2723
      %v3635 = vpop.f32.mrb[0].mxu0
      %v3636 = vadd.f32 0.0, %v3635
      %v3637 = vpop.f32.mrb[0].mxu0
      %v3638 = vpop.f32.mrb[0].mxu0
      %v3639 = vadd.f32 0.0, %v3638
      %v3640 = vpop.f32.mrb[0].mxu0
      %3641 = vmatprep.mubr.bf16.mxu0 0
      %3642 = vmatmul.mubr.bf16.gmra.mrb[0].mxu0 %v2726
      %v3643 = vpop.f32.mrb[0].mxu0
      %v3644 = vpop.f32.mrb[0].mxu0
      %v3645 = vpop.f32.mrb[0].mxu0
      %v3646 = vadd.f32 0.0, %v3645
      %v3647 = vpop.f32.mrb[0].mxu0
      %3648 = vmatprep.mubr.bf16.mxu0 0
      %3649 = vmatmul.mubr.bf16.gmra.mrb[0].mxu0 %v2729
      %v3650 = vpop.f32.mrb[0].mxu0
      %v3651 = vadd.f32 0.0, %v3650
      %v3652 = vpop.f32.mrb[0].mxu0
      %v3653 = vpop.f32.mrb[0].mxu0
      %v3654 = vpop.f32.mrb[0].mxu0
      %3655 = vmatprep.mubr.bf16.mxu0 0
      %3656 = vmatmul.mubr.bf16.gmra.mrb[0].mxu0 %v2732
      %v3657 = vpop.f32.mrb[0].mxu0
      %v3658 = vadd.f32 0.0, %v3657
      %v3659 = vpop.f32.mrb[0].mxu0
      %v3660 = vpop.f32.mrb[0].mxu0
      %v3661 = vadd.f32 0.0, %v3660
      %v3662 = vpop.f32.mrb[0].mxu0
      %3663 = vmatprep.mubr.bf16.mxu0 0
      %3664 = vmatmul.mubr.bf16.gmra.mrb[0].mxu0 %v2735
      %v3665 = vpop.f32.mrb[0].mxu0
      %v3666 = vpop.f32.mrb[0].mxu0
      %v3667 = vpop.f32.mrb[0].mxu0
      %v3668 = vadd.f32 0.0, %v3667
      %v3669 = vpop.f32.mrb[0].mxu0
      %3670 = vmatprep.mubr.bf16.mxu0 0
      %3671 = vmatmul.mubr.bf16.gmra.mrb[0].mxu0 %v2738
      %v3672 = vpop.f32.mrb[0].mxu0
      %v3673 = vadd.f32 0.0, %v3672
      %v3674 = vpop.f32.mrb[0].mxu0
      %v3675 = vpop.f32.mrb[0].mxu0
      %v3676 = vpop.f32.mrb[0].mxu0
      %3677 = vmatprep.mubr.bf16.mxu0 0
      %3678 = vmatmul.mubr.bf16.gmra.mrb[0].mxu0 %v2741
      %v3679 = vpop.f32.mrb[0].mxu0
      %v3680 = vadd.f32 0.0, %v3679
      %v3681 = vpop.f32.mrb[0].mxu0
      %v3682 = vpop.f32.mrb[0].mxu0
      %v3683 = vadd.f32 0.0, %v3682
      %v3684 = vpop.f32.mrb[0].mxu0
      %3685 = vmatprep.mubr.bf16.mxu0 0
      %3686 = vmatmul.mubr.bf16.gmra.mrb[0].mxu0 %v2744
      %v3687 = vpop.f32.mrb[0].mxu0
      %v3688 = vpop.f32.mrb[0].mxu0
      %v3689 = vpop.f32.mrb[0].mxu0
      %v3690 = vadd.f32 0.0, %v3689
      %v3691 = vpop.f32.mrb[0].mxu0
      %3692 = vmatprep.mubr.bf16.mxu0 0
      %3693 = vmatmul.mubr.bf16.gmra.mrb[0].mxu0 %v2747
      %v3694 = vpop.f32.mrb[0].mxu0
      %v3695 = vadd.f32 0.0, %v3694
      %v3696 = vpop.f32.mrb[0].mxu0
      %v3697 = vpop.f32.mrb[0].mxu0
      %v3698 = vpop.f32.mrb[0].mxu0
      %3699 = vmatprep.mubr.bf16.mxu0 0
      %3700 = vmatmul.mubr.bf16.gmra.mrb[0].mxu0 %v2750
      %v3701 = vpop.f32.mrb[0].mxu0
      %v3702 = vadd.f32 0.0, %v3701
      %v3703 = vpop.f32.mrb[0].mxu0
      %v3704 = vpop.f32.mrb[0].mxu0
      %v3705 = vadd.f32 0.0, %v3704
      %v3706 = vpop.f32.mrb[0].mxu0
      %3707 = vmatprep.mubr.bf16.mxu0 0
      %3708 = vmatmul.mubr.bf16.gmra.mrb[0].mxu0 %v2753
      %v3709 = vpop.f32.mrb[0].mxu0
      %v3710 = vpop.f32.mrb[0].mxu0
      %v3711 = vpop.f32.mrb[0].mxu0
      %v3712 = vadd.f32 0.0, %v3711
      %v3713 = vpop.f32.mrb[0].mxu0
      %3714 = vmatprep.mubr.bf16.mxu0 0
      %3715 = vmatmul.mubr.bf16.gmra.mrb[0].mxu0 %v2756
      %v3716 = vpop.f32.mrb[0].mxu0
      %v3717 = vadd.f32 0.0, %v3716
      %v3718 = vpop.f32.mrb[0].mxu0
      %v3719 = vpop.f32.mrb[0].mxu0
      %v3720 = vpop.f32.mrb[0].mxu0
      %3721 = vdwg.mxu0
      %v3722 = vadd.f32 %v1972, %v3548
      %v3723 = vadd.f32 %v1973, %v3551
      %v3724 = vadd.f32 %v1974, %v3558
      %v3725 = vadd.f32 %v1975, %v3563
      %v3726 = vadd.f32 %v1976, %v3570
      %v3727 = vadd.f32 %v1977, %v3573
      %v3728 = vadd.f32 %v1978, %v3580
      %v3729 = vadd.f32 %v1979, %v3585
      %v3730 = vadd.f32 %v1980, %v3592
      %v3731 = vadd.f32 %v1981, %v3595
      %v3732 = vadd.f32 %v1982, %v3602
      %v3733 = vadd.f32 %v1983, %v3607
      %v3734 = vadd.f32 %v1984, %v3614
      %v3735 = vadd.f32 %v1985, %v3617
      %v3736 = vadd.f32 %v1986, %v3624
      %v3737 = vadd.f32 %v1987, %v3629
      %v3738 = vadd.f32 %v1988, %v3636
      %v3739 = vadd.f32 %v1989, %v3639
      %v3740 = vadd.f32 %v1990, %v3646
      %v3741 = vadd.f32 %v1991, %v3651
      %v3742 = vadd.f32 %v1992, %v3658
      %v3743 = vadd.f32 %v1993, %v3661
      %v3744 = vadd.f32 %v1994, %v3668
      %v3745 = vadd.f32 %v1995, %v3673
      %v3746 = vadd.f32 %v1996, %v3680
      %v3747 = vadd.f32 %v1997, %v3683
      %v3748 = vadd.f32 %v1998, %v3690
      %v3749 = vadd.f32 %v1999, %v3695
      %v3750 = vadd.f32 %v2000, %v3702
      %v3751 = vadd.f32 %v2001, %v3705
      %v3752 = vadd.f32 %v2002, %v3712
      %v3753 = vadd.f32 %v2003, %v3717
      %s3754 = scalar_lea.vmem %s3, 32
      %v3755 = vld [vmem:[%s3754] sm:$0xf]
      %v3756 = vld [vmem:[%s3754 + $0x4] sm:$0xf]
      %v3759 = vunpack.c.l.b16 %v3755
      %v3760 = vunpack.c.l.b16 %v3756
      %v3761 = vpack.c.b16 %v3760, %v3759
      %3763 = vmatprep.subr.bf16.mxu0 0
      %3764 = vmatpush1.bf16.msra.mxu0 %v3761
      %3765 = vmatprep.subr.bf16.mxu0 0
      %3766 = vmatpush1.bf16.msra.mxu0 0
      %3767 = vmatprep.subr.bf16.mxu0 0
      %3768 = vmatpush1.bf16.msra.mxu0 0
      %3769 = vmatprep.subr.bf16.mxu0 0
      %3770 = vmatpush1.bf16.msra.mxu0 0
      %3771 = vmatprep.subr.bf16.mxu0 0
      %3772 = vmatpush1.bf16.msra.mxu0 0
      %3773 = vmatprep.subr.bf16.mxu0 0
      %3774 = vmatpush1.bf16.msra.mxu0 0
      %3775 = vmatprep.subr.bf16.mxu0 0
      %3776 = vmatpush1.bf16.msra.mxu0 0
      %3777 = vmatprep.subr.bf16.mxu0 0
      %3778 = vmatpush1.bf16.msra.mxu0 0
      %3779 = vmatprep.subr.bf16.mxu0 0
      %3780 = vmatpush1.bf16.msra.mxu0 0
      %3781 = vmatprep.subr.bf16.mxu0 0
      %3782 = vmatpush1.bf16.msra.mxu0 0
      %3783 = vmatprep.subr.bf16.mxu0 0
      %3784 = vmatpush1.bf16.msra.mxu0 0
      %3785 = vmatprep.subr.bf16.mxu0 0
      %3786 = vmatpush1.bf16.msra.mxu0 0
      %3787 = vmatprep.subr.bf16.mxu0 0
      %3788 = vmatpush1.bf16.msra.mxu0 0
      %3789 = vmatprep.subr.bf16.mxu0 0
      %3790 = vmatpush1.bf16.msra.mxu0 0
      %3791 = vmatprep.subr.bf16.mxu0 0
      %3792 = vmatpush1.bf16.msra.mxu0 0
      %3793 = vmatprep.subr.bf16.mxu0 0
      %3794 = vmatpush1.bf16.msra.mxu0 0
      %3795 = vmatprep.mubr.bf16.mxu0 0
      %3796 = vmatmul.mubr.bf16.gmra.mrb[0].mxu0 %v3164
      %v3797 = vpop.f32.mrb[0].mxu0
      %v3798 = vadd.f32 0.0, %v3797
      %v3799 = vpop.f32.mrb[0].mxu0
      %v3800 = vpop.f32.mrb[0].mxu0
      %v3801 = vadd.f32 0.0, %v3800
      %v3802 = vpop.f32.mrb[0].mxu0
      %3803 = vmatprep.mubr.bf16.mxu0 0
      %3804 = vmatmul.mubr.bf16.gmra.mrb[0].mxu0 %v3167
      %v3805 = vpop.f32.mrb[0].mxu0
      %v3806 = vpop.f32.mrb[0].mxu0
      %v3807 = vpop.f32.mrb[0].mxu0
      %v3808 = vadd.f32 0.0, %v3807
      %v3809 = vpop.f32.mrb[0].mxu0
      %3810 = vmatprep.mubr.bf16.mxu0 0
      %3811 = vmatmul.mubr.bf16.gmra.mrb[0].mxu0 %v3170
      %v3812 = vpop.f32.mrb[0].mxu0
      %v3813 = vadd.f32 0.0, %v3812
      %v3814 = vpop.f32.mrb[0].mxu0
      %v3815 = vpop.f32.mrb[0].mxu0
      %v3816 = vpop.f32.mrb[0].mxu0
      %3817 = vmatprep.mubr.bf16.mxu0 0
      %3818 = vmatmul.mubr.bf16.gmra.mrb[0].mxu0 %v3173
      %v3819 = vpop.f32.mrb[0].mxu0
      %v3820 = vadd.f32 0.0, %v3819
      %v3821 = vpop.f32.mrb[0].mxu0
      %v3822 = vpop.f32.mrb[0].mxu0
      %v3823 = vadd.f32 0.0, %v3822
      %v3824 = vpop.f32.mrb[0].mxu0
      %3825 = vmatprep.mubr.bf16.mxu0 0
      %3826 = vmatmul.mubr.bf16.gmra.mrb[0].mxu0 %v3176
      %v3827 = vpop.f32.mrb[0].mxu0
      %v3828 = vpop.f32.mrb[0].mxu0
      %v3829 = vpop.f32.mrb[0].mxu0
      %v3830 = vadd.f32 0.0, %v3829
      %v3831 = vpop.f32.mrb[0].mxu0
      %3832 = vmatprep.mubr.bf16.mxu0 0
      %3833 = vmatmul.mubr.bf16.gmra.mrb[0].mxu0 %v3179
      %v3834 = vpop.f32.mrb[0].mxu0
      %v3835 = vadd.f32 0.0, %v3834
      %v3836 = vpop.f32.mrb[0].mxu0
      %v3837 = vpop.f32.mrb[0].mxu0
      %v3838 = vpop.f32.mrb[0].mxu0
      %3839 = vmatprep.mubr.bf16.mxu0 0
      %3840 = vmatmul.mubr.bf16.gmra.mrb[0].mxu0 %v3182
      %v3841 = vpop.f32.mrb[0].mxu0
      %v3842 = vadd.f32 0.0, %v3841
      %v3843 = vpop.f32.mrb[0].mxu0
      %v3844 = vpop.f32.mrb[0].mxu0
      %v3845 = vadd.f32 0.0, %v3844
      %v3846 = vpop.f32.mrb[0].mxu0
      %3847 = vmatprep.mubr.bf16.mxu0 0
      %3848 = vmatmul.mubr.bf16.gmra.mrb[0].mxu0 %v3185
      %v3849 = vpop.f32.mrb[0].mxu0
      %v3850 = vpop.f32.mrb[0].mxu0
      %v3851 = vpop.f32.mrb[0].mxu0
      %v3852 = vadd.f32 0.0, %v3851
      %v3853 = vpop.f32.mrb[0].mxu0
      %3854 = vmatprep.mubr.bf16.mxu0 0
      %3855 = vmatmul.mubr.bf16.gmra.mrb[0].mxu0 %v3188
      %v3856 = vpop.f32.mrb[0].mxu0
      %v3857 = vadd.f32 0.0, %v3856
      %v3858 = vpop.f32.mrb[0].mxu0
      %v3859 = vpop.f32.mrb[0].mxu0
      %v3860 = vpop.f32.mrb[0].mxu0
      %3861 = vmatprep.mubr.bf16.mxu0 0
      %3862 = vmatmul.mubr.bf16.gmra.mrb[0].mxu0 %v3191
      %v3863 = vpop.f32.mrb[0].mxu0
      %v3864 = vadd.f32 0.0, %v3863
      %v3865 = vpop.f32.mrb[0].mxu0
      %v3866 = vpop.f32.mrb[0].mxu0
      %v3867 = vadd.f32 0.0, %v3866
      %v3868 = vpop.f32.mrb[0].mxu0
      %3869 = vmatprep.mubr.bf16.mxu0 0
      %3870 = vmatmul.mubr.bf16.gmra.mrb[0].mxu0 %v3194
      %v3871 = vpop.f32.mrb[0].mxu0
      %v3872 = vpop.f32.mrb[0].mxu0
      %v3873 = vpop.f32.mrb[0].mxu0
      %v3874 = vadd.f32 0.0, %v3873
      %v3875 = vpop.f32.mrb[0].mxu0
      %3876 = vmatprep.mubr.bf16.mxu0 0
      %3877 = vmatmul.mubr.bf16.gmra.mrb[0].mxu0 %v3197
      %v3878 = vpop.f32.mrb[0].mxu0
      %v3879 = vadd.f32 0.0, %v3878
      %v3880 = vpop.f32.mrb[0].mxu0
      %v3881 = vpop.f32.mrb[0].mxu0
      %v3882 = vpop.f32.mrb[0].mxu0
      %3883 = vmatprep.mubr.bf16.mxu0 0
      %3884 = vmatmul.mubr.bf16.gmra.mrb[0].mxu0 %v3200
      %v3885 = vpop.f32.mrb[0].mxu0
      %v3886 = vadd.f32 0.0, %v3885
      %v3887 = vpop.f32.mrb[0].mxu0
      %v3888 = vpop.f32.mrb[0].mxu0
      %v3889 = vadd.f32 0.0, %v3888
      %v3890 = vpop.f32.mrb[0].mxu0
      %3891 = vmatprep.mubr.bf16.mxu0 0
      %3892 = vmatmul.mubr.bf16.gmra.mrb[0].mxu0 %v3203
      %v3893 = vpop.f32.mrb[0].mxu0
      %v3894 = vpop.f32.mrb[0].mxu0
      %v3895 = vpop.f32.mrb[0].mxu0
      %v3896 = vadd.f32 0.0, %v3895
      %v3897 = vpop.f32.mrb[0].mxu0
      %3898 = vmatprep.mubr.bf16.mxu0 0
      %3899 = vmatmul.mubr.bf16.gmra.mrb[0].mxu0 %v3206
      %v3900 = vpop.f32.mrb[0].mxu0
      %v3901 = vadd.f32 0.0, %v3900
      %v3902 = vpop.f32.mrb[0].mxu0
      %v3903 = vpop.f32.mrb[0].mxu0
      %v3904 = vpop.f32.mrb[0].mxu0
      %3905 = vmatprep.mubr.bf16.mxu0 0
      %3906 = vmatmul.mubr.bf16.gmra.mrb[0].mxu0 %v3209
      %v3907 = vpop.f32.mrb[0].mxu0
      %v3908 = vadd.f32 0.0, %v3907
      %v3909 = vpop.f32.mrb[0].mxu0
      %v3910 = vpop.f32.mrb[0].mxu0
      %v3911 = vadd.f32 0.0, %v3910
      %v3912 = vpop.f32.mrb[0].mxu0
      %3913 = vmatprep.mubr.bf16.mxu0 0
      %3914 = vmatmul.mubr.bf16.gmra.mrb[0].mxu0 %v3212
      %v3915 = vpop.f32.mrb[0].mxu0
      %v3916 = vpop.f32.mrb[0].mxu0
      %v3917 = vpop.f32.mrb[0].mxu0
      %v3918 = vadd.f32 0.0, %v3917
      %v3919 = vpop.f32.mrb[0].mxu0
      %3920 = vmatprep.mubr.bf16.mxu0 0
      %3921 = vmatmul.mubr.bf16.gmra.mrb[0].mxu0 %v3215
      %v3922 = vpop.f32.mrb[0].mxu0
      %v3923 = vadd.f32 0.0, %v3922
      %v3924 = vpop.f32.mrb[0].mxu0
      %v3925 = vpop.f32.mrb[0].mxu0
      %v3926 = vpop.f32.mrb[0].mxu0
      %3927 = vmatprep.mubr.bf16.mxu0 0
      %3928 = vmatmul.mubr.bf16.gmra.mrb[0].mxu0 %v3218
      %v3929 = vpop.f32.mrb[0].mxu0
      %v3930 = vadd.f32 0.0, %v3929
      %v3931 = vpop.f32.mrb[0].mxu0
      %v3932 = vpop.f32.mrb[0].mxu0
      %v3933 = vadd.f32 0.0, %v3932
      %v3934 = vpop.f32.mrb[0].mxu0
      %3935 = vmatprep.mubr.bf16.mxu0 0
      %3936 = vmatmul.mubr.bf16.gmra.mrb[0].mxu0 %v3221
      %v3937 = vpop.f32.mrb[0].mxu0
      %v3938 = vpop.f32.mrb[0].mxu0
      %v3939 = vpop.f32.mrb[0].mxu0
      %v3940 = vadd.f32 0.0, %v3939
      %v3941 = vpop.f32.mrb[0].mxu0
      %3942 = vmatprep.mubr.bf16.mxu0 0
      %3943 = vmatmul.mubr.bf16.gmra.mrb[0].mxu0 %v3224
      %v3944 = vpop.f32.mrb[0].mxu0
      %v3945 = vadd.f32 0.0, %v3944
      %v3946 = vpop.f32.mrb[0].mxu0
      %v3947 = vpop.f32.mrb[0].mxu0
      %v3948 = vpop.f32.mrb[0].mxu0
      %3949 = vmatprep.mubr.bf16.mxu0 0
      %3950 = vmatmul.mubr.bf16.gmra.mrb[0].mxu0 %v3227
      %v3951 = vpop.f32.mrb[0].mxu0
      %v3952 = vadd.f32 0.0, %v3951
      %v3953 = vpop.f32.mrb[0].mxu0
      %v3954 = vpop.f32.mrb[0].mxu0
      %v3955 = vadd.f32 0.0, %v3954
      %v3956 = vpop.f32.mrb[0].mxu0
      %3957 = vmatprep.mubr.bf16.mxu0 0
      %3958 = vmatmul.mubr.bf16.gmra.mrb[0].mxu0 %v3230
      %v3959 = vpop.f32.mrb[0].mxu0
      %v3960 = vpop.f32.mrb[0].mxu0
      %v3961 = vpop.f32.mrb[0].mxu0
      %v3962 = vadd.f32 0.0, %v3961
      %v3963 = vpop.f32.mrb[0].mxu0
      %3964 = vmatprep.mubr.bf16.mxu0 0
      %3965 = vmatmul.mubr.bf16.gmra.mrb[0].mxu0 %v3233
      %v3966 = vpop.f32.mrb[0].mxu0
      %v3967 = vadd.f32 0.0, %v3966
      %v3968 = vpop.f32.mrb[0].mxu0
      %v3969 = vpop.f32.mrb[0].mxu0
      %v3970 = vpop.f32.mrb[0].mxu0
      %3971 = vdwg.mxu0
      %v3972 = vadd.f32 %v3722, %v3798
      %v3973 = vadd.f32 %v3723, %v3801
      %v3974 = vadd.f32 %v3724, %v3808
      %v3975 = vadd.f32 %v3725, %v3813
      %v3976 = vadd.f32 %v3726, %v3820
      %v3977 = vadd.f32 %v3727, %v3823
      %v3978 = vadd.f32 %v3728, %v3830
      %v3979 = vadd.f32 %v3729, %v3835
      %v3980 = vadd.f32 %v3730, %v3842
      %v3981 = vadd.f32 %v3731, %v3845
      %v3982 = vadd.f32 %v3732, %v3852
      %v3983 = vadd.f32 %v3733, %v3857
      %v3984 = vadd.f32 %v3734, %v3864
      %v3985 = vadd.f32 %v3735, %v3867
      %v3986 = vadd.f32 %v3736, %v3874
      %v3987 = vadd.f32 %v3737, %v3879
      %v3988 = vadd.f32 %v3738, %v3886
      %v3989 = vadd.f32 %v3739, %v3889
      %v3990 = vadd.f32 %v3740, %v3896
      %v3991 = vadd.f32 %v3741, %v3901
      %v3992 = vadd.f32 %v3742, %v3908
      %v3993 = vadd.f32 %v3743, %v3911
      %v3994 = vadd.f32 %v3744, %v3918
      %v3995 = vadd.f32 %v3745, %v3923
      %v3996 = vadd.f32 %v3746, %v3930
      %v3997 = vadd.f32 %v3747, %v3933
      %v3998 = vadd.f32 %v3748, %v3940
      %v3999 = vadd.f32 %v3749, %v3945
      %v4000 = vadd.f32 %v3750, %v3952
      %v4001 = vadd.f32 %v3751, %v3955
      %v4002 = vadd.f32 %v3752, %v3962
      %v4003 = vadd.f32 %v3753, %v3967
      %s4004 = scalar_lea.vmem %s2, 20
      %v4005 = vld [vmem:[%s4004] sm:$0xf]
      %v4007 = vsel %vm1279, %v4005, 0
      %4009 = vmatprep.subr.bf16.mxu0 0
      %4010 = vmatpush1.bf16.msra.mxu0 %v4007
      %4011 = vmatprep.subr.bf16.mxu0 0
      %4012 = vmatpush1.bf16.msra.mxu0 0
      %4013 = vmatprep.subr.bf16.mxu0 0
      %4014 = vmatpush1.bf16.msra.mxu0 0
      %4015 = vmatprep.subr.bf16.mxu0 0
      %4016 = vmatpush1.bf16.msra.mxu0 0
      %4017 = vmatprep.subr.bf16.mxu0 0
      %4018 = vmatpush1.bf16.msra.mxu0 0
      %4019 = vmatprep.subr.bf16.mxu0 0
      %4020 = vmatpush1.bf16.msra.mxu0 0
      %4021 = vmatprep.subr.bf16.mxu0 0
      %4022 = vmatpush1.bf16.msra.mxu0 0
      %4023 = vmatprep.subr.bf16.mxu0 0
      %4024 = vmatpush1.bf16.msra.mxu0 0
      %4025 = vmatprep.subr.bf16.mxu0 0
      %4026 = vmatpush1.bf16.msra.mxu0 0
      %4027 = vmatprep.subr.bf16.mxu0 0
      %4028 = vmatpush1.bf16.msra.mxu0 0
      %4029 = vmatprep.subr.bf16.mxu0 0
      %4030 = vmatpush1.bf16.msra.mxu0 0
      %4031 = vmatprep.subr.bf16.mxu0 0
      %4032 = vmatpush1.bf16.msra.mxu0 0
      %4033 = vmatprep.subr.bf16.mxu0 0
      %4034 = vmatpush1.bf16.msra.mxu0 0
      %4035 = vmatprep.subr.bf16.mxu0 0
      %4036 = vmatpush1.bf16.msra.mxu0 0
      %4037 = vmatprep.subr.bf16.mxu0 0
      %4038 = vmatpush1.bf16.msra.mxu0 0
      %4039 = vmatprep.subr.bf16.mxu0 0
      %4040 = vmatpush1.bf16.msra.mxu0 0
      %4041 = vmatprep.mubr.bf16.mxu0 0
      %4042 = vmatmul.mubr.bf16.gmra.mrb[0].mxu0 %v2687
      %v4043 = vpop.f32.mrb[0].mxu0
      %v4044 = vadd.f32 0.0, %v4043
      %v4045 = vpop.f32.mrb[0].mxu0
      %v4046 = vpop.f32.mrb[0].mxu0
      %v4047 = vadd.f32 0.0, %v4046
      %v4048 = vpop.f32.mrb[0].mxu0
      %4049 = vmatprep.mubr.bf16.mxu0 0
      %4050 = vmatmul.mubr.bf16.gmra.mrb[0].mxu0 %v2690
      %v4051 = vpop.f32.mrb[0].mxu0
      %v4052 = vadd.f32 0.0, %v4051
      %v4053 = vpop.f32.mrb[0].mxu0
      %v4054 = vpop.f32.mrb[0].mxu0
      %v4055 = vadd.f32 0.0, %v4054
      %v4056 = vpop.f32.mrb[0].mxu0
      %4057 = vmatprep.mubr.bf16.mxu0 0
      %4058 = vmatmul.mubr.bf16.gmra.mrb[0].mxu0 %v2693
      %v4059 = vpop.f32.mrb[0].mxu0
      %v4060 = vadd.f32 0.0, %v4059
      %v4061 = vpop.f32.mrb[0].mxu0
      %v4062 = vpop.f32.mrb[0].mxu0
      %v4063 = vadd.f32 0.0, %v4062
      %v4064 = vpop.f32.mrb[0].mxu0
      %4065 = vmatprep.mubr.bf16.mxu0 0
      %4066 = vmatmul.mubr.bf16.gmra.mrb[0].mxu0 %v2696
      %v4067 = vpop.f32.mrb[0].mxu0
      %v4068 = vadd.f32 0.0, %v4067
      %v4069 = vpop.f32.mrb[0].mxu0
      %v4070 = vpop.f32.mrb[0].mxu0
      %v4071 = vadd.f32 0.0, %v4070
      %v4072 = vpop.f32.mrb[0].mxu0
      %4073 = vmatprep.mubr.bf16.mxu0 0
      %4074 = vmatmul.mubr.bf16.gmra.mrb[0].mxu0 %v2699
      %v4075 = vpop.f32.mrb[0].mxu0
      %v4076 = vadd.f32 0.0, %v4075
      %v4077 = vpop.f32.mrb[0].mxu0
      %v4078 = vpop.f32.mrb[0].mxu0
      %v4079 = vadd.f32 0.0, %v4078
      %v4080 = vpop.f32.mrb[0].mxu0
      %4081 = vmatprep.mubr.bf16.mxu0 0
      %4082 = vmatmul.mubr.bf16.gmra.mrb[0].mxu0 %v2702
      %v4083 = vpop.f32.mrb[0].mxu0
      %v4084 = vadd.f32 0.0, %v4083
      %v4085 = vpop.f32.mrb[0].mxu0
      %v4086 = vpop.f32.mrb[0].mxu0
      %v4087 = vadd.f32 0.0, %v4086
      %v4088 = vpop.f32.mrb[0].mxu0
      %4089 = vmatprep.mubr.bf16.mxu0 0
      %4090 = vmatmul.mubr.bf16.gmra.mrb[0].mxu0 %v2705
      %v4091 = vpop.f32.mrb[0].mxu0
      %v4092 = vadd.f32 0.0, %v4091
      %v4093 = vpop.f32.mrb[0].mxu0
      %v4094 = vpop.f32.mrb[0].mxu0
      %v4095 = vadd.f32 0.0, %v4094
      %v4096 = vpop.f32.mrb[0].mxu0
      %4097 = vmatprep.mubr.bf16.mxu0 0
      %4098 = vmatmul.mubr.bf16.gmra.mrb[0].mxu0 %v2708
      %v4099 = vpop.f32.mrb[0].mxu0
      %v4100 = vadd.f32 0.0, %v4099
      %v4101 = vpop.f32.mrb[0].mxu0
      %v4102 = vpop.f32.mrb[0].mxu0
      %v4103 = vadd.f32 0.0, %v4102
      %v4104 = vpop.f32.mrb[0].mxu0
      %4105 = vmatprep.mubr.bf16.mxu0 0
      %4106 = vmatmul.mubr.bf16.gmra.mrb[0].mxu0 %v2711
      %v4107 = vpop.f32.mrb[0].mxu0
      %v4108 = vadd.f32 0.0, %v4107
      %v4109 = vpop.f32.mrb[0].mxu0
      %v4110 = vpop.f32.mrb[0].mxu0
      %v4111 = vadd.f32 0.0, %v4110
      %v4112 = vpop.f32.mrb[0].mxu0
      %4113 = vmatprep.mubr.bf16.mxu0 0
      %4114 = vmatmul.mubr.bf16.gmra.mrb[0].mxu0 %v2714
      %v4115 = vpop.f32.mrb[0].mxu0
      %v4116 = vadd.f32 0.0, %v4115
      %v4117 = vpop.f32.mrb[0].mxu0
      %v4118 = vpop.f32.mrb[0].mxu0
      %v4119 = vadd.f32 0.0, %v4118
      %v4120 = vpop.f32.mrb[0].mxu0
      %4121 = vmatprep.mubr.bf16.mxu0 0
      %4122 = vmatmul.mubr.bf16.gmra.mrb[0].mxu0 %v2717
      %v4123 = vpop.f32.mrb[0].mxu0
      %v4124 = vadd.f32 0.0, %v4123
      %v4125 = vpop.f32.mrb[0].mxu0
      %v4126 = vpop.f32.mrb[0].mxu0
      %v4127 = vadd.f32 0.0, %v4126
      %v4128 = vpop.f32.mrb[0].mxu0
      %4129 = vmatprep.mubr.bf16.mxu0 0
      %4130 = vmatmul.mubr.bf16.gmra.mrb[0].mxu0 %v2720
      %v4131 = vpop.f32.mrb[0].mxu0
      %v4132 = vadd.f32 0.0, %v4131
      %v4133 = vpop.f32.mrb[0].mxu0
      %v4134 = vpop.f32.mrb[0].mxu0
      %v4135 = vadd.f32 0.0, %v4134
      %v4136 = vpop.f32.mrb[0].mxu0
      %4137 = vmatprep.mubr.bf16.mxu0 0
      %4138 = vmatmul.mubr.bf16.gmra.mrb[0].mxu0 %v2723
      %v4139 = vpop.f32.mrb[0].mxu0
      %v4140 = vadd.f32 0.0, %v4139
      %v4141 = vpop.f32.mrb[0].mxu0
      %v4142 = vpop.f32.mrb[0].mxu0
      %v4143 = vadd.f32 0.0, %v4142
      %v4144 = vpop.f32.mrb[0].mxu0
      %4145 = vmatprep.mubr.bf16.mxu0 0
      %4146 = vmatmul.mubr.bf16.gmra.mrb[0].mxu0 %v2726
      %v4147 = vpop.f32.mrb[0].mxu0
      %v4148 = vadd.f32 0.0, %v4147
      %v4149 = vpop.f32.mrb[0].mxu0
      %v4150 = vpop.f32.mrb[0].mxu0
      %v4151 = vadd.f32 0.0, %v4150
      %v4152 = vpop.f32.mrb[0].mxu0
      %4153 = vmatprep.mubr.bf16.mxu0 0
      %4154 = vmatmul.mubr.bf16.gmra.mrb[0].mxu0 %v2729
      %v4155 = vpop.f32.mrb[0].mxu0
      %v4156 = vadd.f32 0.0, %v4155
      %v4157 = vpop.f32.mrb[0].mxu0
      %v4158 = vpop.f32.mrb[0].mxu0
      %v4159 = vadd.f32 0.0, %v4158
      %v4160 = vpop.f32.mrb[0].mxu0
      %4161 = vmatprep.mubr.bf16.mxu0 0
      %4162 = vmatmul.mubr.bf16.gmra.mrb[0].mxu0 %v2732
      %v4163 = vpop.f32.mrb[0].mxu0
      %v4164 = vadd.f32 0.0, %v4163
      %v4165 = vpop.f32.mrb[0].mxu0
      %v4166 = vpop.f32.mrb[0].mxu0
      %v4167 = vadd.f32 0.0, %v4166
      %v4168 = vpop.f32.mrb[0].mxu0
      %4169 = vmatprep.mubr.bf16.mxu0 0
      %4170 = vmatmul.mubr.bf16.gmra.mrb[0].mxu0 %v2735
      %v4171 = vpop.f32.mrb[0].mxu0
      %v4172 = vadd.f32 0.0, %v4171
      %v4173 = vpop.f32.mrb[0].mxu0
      %v4174 = vpop.f32.mrb[0].mxu0
      %v4175 = vadd.f32 0.0, %v4174
      %v4176 = vpop.f32.mrb[0].mxu0
      %4177 = vmatprep.mubr.bf16.mxu0 0
      %4178 = vmatmul.mubr.bf16.gmra.mrb[0].mxu0 %v2738
      %v4179 = vpop.f32.mrb[0].mxu0
      %v4180 = vadd.f32 0.0, %v4179
      %v4181 = vpop.f32.mrb[0].mxu0
      %v4182 = vpop.f32.mrb[0].mxu0
      %v4183 = vadd.f32 0.0, %v4182
      %v4184 = vpop.f32.mrb[0].mxu0
      %4185 = vmatprep.mubr.bf16.mxu0 0
      %4186 = vmatmul.mubr.bf16.gmra.mrb[0].mxu0 %v2741
      %v4187 = vpop.f32.mrb[0].mxu0
      %v4188 = vadd.f32 0.0, %v4187
      %v4189 = vpop.f32.mrb[0].mxu0
      %v4190 = vpop.f32.mrb[0].mxu0
      %v4191 = vadd.f32 0.0, %v4190
      %v4192 = vpop.f32.mrb[0].mxu0
      %4193 = vmatprep.mubr.bf16.mxu0 0
      %4194 = vmatmul.mubr.bf16.gmra.mrb[0].mxu0 %v2744
      %v4195 = vpop.f32.mrb[0].mxu0
      %v4196 = vadd.f32 0.0, %v4195
      %v4197 = vpop.f32.mrb[0].mxu0
      %v4198 = vpop.f32.mrb[0].mxu0
      %v4199 = vadd.f32 0.0, %v4198
      %v4200 = vpop.f32.mrb[0].mxu0
      %4201 = vmatprep.mubr.bf16.mxu0 0
      %4202 = vmatmul.mubr.bf16.gmra.mrb[0].mxu0 %v2747
      %v4203 = vpop.f32.mrb[0].mxu0
      %v4204 = vadd.f32 0.0, %v4203
      %v4205 = vpop.f32.mrb[0].mxu0
      %v4206 = vpop.f32.mrb[0].mxu0
      %v4207 = vadd.f32 0.0, %v4206
      %v4208 = vpop.f32.mrb[0].mxu0
      %4209 = vmatprep.mubr.bf16.mxu0 0
      %4210 = vmatmul.mubr.bf16.gmra.mrb[0].mxu0 %v2750
      %v4211 = vpop.f32.mrb[0].mxu0
      %v4212 = vadd.f32 0.0, %v4211
      %v4213 = vpop.f32.mrb[0].mxu0
      %v4214 = vpop.f32.mrb[0].mxu0
      %v4215 = vadd.f32 0.0, %v4214
      %v4216 = vpop.f32.mrb[0].mxu0
      %4217 = vmatprep.mubr.bf16.mxu0 0
      %4218 = vmatmul.mubr.bf16.gmra.mrb[0].mxu0 %v2753
      %v4219 = vpop.f32.mrb[0].mxu0
      %v4220 = vadd.f32 0.0, %v4219
      %v4221 = vpop.f32.mrb[0].mxu0
      %v4222 = vpop.f32.mrb[0].mxu0
      %v4223 = vadd.f32 0.0, %v4222
      %v4224 = vpop.f32.mrb[0].mxu0
      %4225 = vmatprep.mubr.bf16.mxu0 0
      %4226 = vmatmul.mubr.bf16.gmra.mrb[0].mxu0 %v2756
      %v4227 = vpop.f32.mrb[0].mxu0
      %v4228 = vadd.f32 0.0, %v4227
      %v4229 = vpop.f32.mrb[0].mxu0
      %v4230 = vpop.f32.mrb[0].mxu0
      %v4231 = vadd.f32 0.0, %v4230
      %v4232 = vpop.f32.mrb[0].mxu0
      %4233 = vdwg.mxu0
      %v4234 = vadd.f32 %v2278, %v4044
      %v4235 = vadd.f32 %v2281, %v4047
      %v4236 = vadd.f32 %v2286, %v4052
      %v4237 = vadd.f32 %v2289, %v4055
      %v4238 = vadd.f32 %v2294, %v4060
      %v4239 = vadd.f32 %v2297, %v4063
      %v4240 = vadd.f32 %v2302, %v4068
      %v4241 = vadd.f32 %v2305, %v4071
      %v4242 = vadd.f32 %v2310, %v4076
      %v4243 = vadd.f32 %v2313, %v4079
      %v4244 = vadd.f32 %v2318, %v4084
      %v4245 = vadd.f32 %v2321, %v4087
      %v4246 = vadd.f32 %v2326, %v4092
      %v4247 = vadd.f32 %v2329, %v4095
      %v4248 = vadd.f32 %v2334, %v4100
      %v4249 = vadd.f32 %v2337, %v4103
      %v4250 = vadd.f32 %v2342, %v4108
      %v4251 = vadd.f32 %v2345, %v4111
      %v4252 = vadd.f32 %v2350, %v4116
      %v4253 = vadd.f32 %v2353, %v4119
      %v4254 = vadd.f32 %v2358, %v4124
      %v4255 = vadd.f32 %v2361, %v4127
      %v4256 = vadd.f32 %v2366, %v4132
      %v4257 = vadd.f32 %v2369, %v4135
      %v4258 = vadd.f32 %v2374, %v4140
      %v4259 = vadd.f32 %v2377, %v4143
      %v4260 = vadd.f32 %v2382, %v4148
      %v4261 = vadd.f32 %v2385, %v4151
      %v4262 = vadd.f32 %v2390, %v4156
      %v4263 = vadd.f32 %v2393, %v4159
      %v4264 = vadd.f32 %v2398, %v4164
      %v4265 = vadd.f32 %v2401, %v4167
      %v4266 = vadd.f32 %v2406, %v4172
      %v4267 = vadd.f32 %v2409, %v4175
      %v4268 = vadd.f32 %v2414, %v4180
      %v4269 = vadd.f32 %v2417, %v4183
      %v4270 = vadd.f32 %v2422, %v4188
      %v4271 = vadd.f32 %v2425, %v4191
      %v4272 = vadd.f32 %v2430, %v4196
      %v4273 = vadd.f32 %v2433, %v4199
      %v4274 = vadd.f32 %v2438, %v4204
      %v4275 = vadd.f32 %v2441, %v4207
      %v4276 = vadd.f32 %v2446, %v4212
      %v4277 = vadd.f32 %v2449, %v4215
      %v4278 = vadd.f32 %v2454, %v4220
      %v4279 = vadd.f32 %v2457, %v4223
      %v4280 = vadd.f32 %v2462, %v4228
      %v4281 = vadd.f32 %v2465, %v4231
      %s4282 = scalar_lea.vmem %s3, 40
      %v4283 = vld [vmem:[%s4282] sm:$0xf]
      %v4284 = vld [vmem:[%s4282 + $0x4] sm:$0xf]
      %v4287 = vunpack.c.l.b16 %v4283
      %v4288 = vunpack.c.l.b16 %v4284
      %v4289 = vpack.c.b16 %v4288, %v4287
      %4291 = vmatprep.subr.bf16.mxu0 0
      %4292 = vmatpush1.bf16.msra.mxu0 %v4289
      %4293 = vmatprep.subr.bf16.mxu0 0
      %4294 = vmatpush1.bf16.msra.mxu0 0
      %4295 = vmatprep.subr.bf16.mxu0 0
      %4296 = vmatpush1.bf16.msra.mxu0 0
      %4297 = vmatprep.subr.bf16.mxu0 0
      %4298 = vmatpush1.bf16.msra.mxu0 0
      %4299 = vmatprep.subr.bf16.mxu0 0
      %4300 = vmatpush1.bf16.msra.mxu0 0
      %4301 = vmatprep.subr.bf16.mxu0 0
      %4302 = vmatpush1.bf16.msra.mxu0 0
      %4303 = vmatprep.subr.bf16.mxu0 0
      %4304 = vmatpush1.bf16.msra.mxu0 0
      %4305 = vmatprep.subr.bf16.mxu0 0
      %4306 = vmatpush1.bf16.msra.mxu0 0
      %4307 = vmatprep.subr.bf16.mxu0 0
      %4308 = vmatpush1.bf16.msra.mxu0 0
      %4309 = vmatprep.subr.bf16.mxu0 0
      %4310 = vmatpush1.bf16.msra.mxu0 0
      %4311 = vmatprep.subr.bf16.mxu0 0
      %4312 = vmatpush1.bf16.msra.mxu0 0
      %4313 = vmatprep.subr.bf16.mxu0 0
      %4314 = vmatpush1.bf16.msra.mxu0 0
      %4315 = vmatprep.subr.bf16.mxu0 0
      %4316 = vmatpush1.bf16.msra.mxu0 0
      %4317 = vmatprep.subr.bf16.mxu0 0
      %4318 = vmatpush1.bf16.msra.mxu0 0
      %4319 = vmatprep.subr.bf16.mxu0 0
      %4320 = vmatpush1.bf16.msra.mxu0 0
      %4321 = vmatprep.subr.bf16.mxu0 0
      %4322 = vmatpush1.bf16.msra.mxu0 0
      %4323 = vmatprep.mubr.bf16.mxu0 0
      %4324 = vmatmul.mubr.bf16.gmra.mrb[0].mxu0 %v3164
      %v4325 = vpop.f32.mrb[0].mxu0
      %v4326 = vadd.f32 0.0, %v4325
      %v4327 = vpop.f32.mrb[0].mxu0
      %v4328 = vpop.f32.mrb[0].mxu0
      %v4329 = vadd.f32 0.0, %v4328
      %v4330 = vpop.f32.mrb[0].mxu0
      %4331 = vmatprep.mubr.bf16.mxu0 0
      %4332 = vmatmul.mubr.bf16.gmra.mrb[0].mxu0 %v3167
      %v4333 = vpop.f32.mrb[0].mxu0
      %v4334 = vadd.f32 0.0, %v4333
      %v4335 = vpop.f32.mrb[0].mxu0
      %v4336 = vpop.f32.mrb[0].mxu0
      %v4337 = vadd.f32 0.0, %v4336
      %v4338 = vpop.f32.mrb[0].mxu0
      %4339 = vmatprep.mubr.bf16.mxu0 0
      %4340 = vmatmul.mubr.bf16.gmra.mrb[0].mxu0 %v3170
      %v4341 = vpop.f32.mrb[0].mxu0
      %v4342 = vadd.f32 0.0, %v4341
      %v4343 = vpop.f32.mrb[0].mxu0
      %v4344 = vpop.f32.mrb[0].mxu0
      %v4345 = vadd.f32 0.0, %v4344
      %v4346 = vpop.f32.mrb[0].mxu0
      %4347 = vmatprep.mubr.bf16.mxu0 0
      %4348 = vmatmul.mubr.bf16.gmra.mrb[0].mxu0 %v3173
      %v4349 = vpop.f32.mrb[0].mxu0
      %v4350 = vadd.f32 0.0, %v4349
      %v4351 = vpop.f32.mrb[0].mxu0
      %v4352 = vpop.f32.mrb[0].mxu0
      %v4353 = vadd.f32 0.0, %v4352
      %v4354 = vpop.f32.mrb[0].mxu0
      %4355 = vmatprep.mubr.bf16.mxu0 0
      %4356 = vmatmul.mubr.bf16.gmra.mrb[0].mxu0 %v3176
      %v4357 = vpop.f32.mrb[0].mxu0
      %v4358 = vadd.f32 0.0, %v4357
      %v4359 = vpop.f32.mrb[0].mxu0
      %v4360 = vpop.f32.mrb[0].mxu0
      %v4361 = vadd.f32 0.0, %v4360
      %v4362 = vpop.f32.mrb[0].mxu0
      %4363 = vmatprep.mubr.bf16.mxu0 0
      %4364 = vmatmul.mubr.bf16.gmra.mrb[0].mxu0 %v3179
      %v4365 = vpop.f32.mrb[0].mxu0
      %v4366 = vadd.f32 0.0, %v4365
      %v4367 = vpop.f32.mrb[0].mxu0
      %v4368 = vpop.f32.mrb[0].mxu0
      %v4369 = vadd.f32 0.0, %v4368
      %v4370 = vpop.f32.mrb[0].mxu0
      %4371 = vmatprep.mubr.bf16.mxu0 0
      %4372 = vmatmul.mubr.bf16.gmra.mrb[0].mxu0 %v3182
      %v4373 = vpop.f32.mrb[0].mxu0
      %v4374 = vadd.f32 0.0, %v4373
      %v4375 = vpop.f32.mrb[0].mxu0
      %v4376 = vpop.f32.mrb[0].mxu0
      %v4377 = vadd.f32 0.0, %v4376
      %v4378 = vpop.f32.mrb[0].mxu0
      %4379 = vmatprep.mubr.bf16.mxu0 0
      %4380 = vmatmul.mubr.bf16.gmra.mrb[0].mxu0 %v3185
      %v4381 = vpop.f32.mrb[0].mxu0
      %v4382 = vadd.f32 0.0, %v4381
      %v4383 = vpop.f32.mrb[0].mxu0
      %v4384 = vpop.f32.mrb[0].mxu0
      %v4385 = vadd.f32 0.0, %v4384
      %v4386 = vpop.f32.mrb[0].mxu0
      %4387 = vmatprep.mubr.bf16.mxu0 0
      %4388 = vmatmul.mubr.bf16.gmra.mrb[0].mxu0 %v3188
      %v4389 = vpop.f32.mrb[0].mxu0
      %v4390 = vadd.f32 0.0, %v4389
      %v4391 = vpop.f32.mrb[0].mxu0
      %v4392 = vpop.f32.mrb[0].mxu0
      %v4393 = vadd.f32 0.0, %v4392
      %v4394 = vpop.f32.mrb[0].mxu0
      %4395 = vmatprep.mubr.bf16.mxu0 0
      %4396 = vmatmul.mubr.bf16.gmra.mrb[0].mxu0 %v3191
      %v4397 = vpop.f32.mrb[0].mxu0
      %v4398 = vadd.f32 0.0, %v4397
      %v4399 = vpop.f32.mrb[0].mxu0
      %v4400 = vpop.f32.mrb[0].mxu0
      %v4401 = vadd.f32 0.0, %v4400
      %v4402 = vpop.f32.mrb[0].mxu0
      %4403 = vmatprep.mubr.bf16.mxu0 0
      %4404 = vmatmul.mubr.bf16.gmra.mrb[0].mxu0 %v3194
      %v4405 = vpop.f32.mrb[0].mxu0
      %v4406 = vadd.f32 0.0, %v4405
      %v4407 = vpop.f32.mrb[0].mxu0
      %v4408 = vpop.f32.mrb[0].mxu0
      %v4409 = vadd.f32 0.0, %v4408
      %v4410 = vpop.f32.mrb[0].mxu0
      %4411 = vmatprep.mubr.bf16.mxu0 0
      %4412 = vmatmul.mubr.bf16.gmra.mrb[0].mxu0 %v3197
      %v4413 = vpop.f32.mrb[0].mxu0
      %v4414 = vadd.f32 0.0, %v4413
      %v4415 = vpop.f32.mrb[0].mxu0
      %v4416 = vpop.f32.mrb[0].mxu0
      %v4417 = vadd.f32 0.0, %v4416
      %v4418 = vpop.f32.mrb[0].mxu0
      %4419 = vmatprep.mubr.bf16.mxu0 0
      %4420 = vmatmul.mubr.bf16.gmra.mrb[0].mxu0 %v3200
      %v4421 = vpop.f32.mrb[0].mxu0
      %v4422 = vadd.f32 0.0, %v4421
      %v4423 = vpop.f32.mrb[0].mxu0
      %v4424 = vpop.f32.mrb[0].mxu0
      %v4425 = vadd.f32 0.0, %v4424
      %v4426 = vpop.f32.mrb[0].mxu0
      %4427 = vmatprep.mubr.bf16.mxu0 0
      %4428 = vmatmul.mubr.bf16.gmra.mrb[0].mxu0 %v3203
      %v4429 = vpop.f32.mrb[0].mxu0
      %v4430 = vadd.f32 0.0, %v4429
      %v4431 = vpop.f32.mrb[0].mxu0
      %v4432 = vpop.f32.mrb[0].mxu0
      %v4433 = vadd.f32 0.0, %v4432
      %v4434 = vpop.f32.mrb[0].mxu0
      %4435 = vmatprep.mubr.bf16.mxu0 0
      %4436 = vmatmul.mubr.bf16.gmra.mrb[0].mxu0 %v3206
      %v4437 = vpop.f32.mrb[0].mxu0
      %v4438 = vadd.f32 0.0, %v4437
      %v4439 = vpop.f32.mrb[0].mxu0
      %v4440 = vpop.f32.mrb[0].mxu0
      %v4441 = vadd.f32 0.0, %v4440
      %v4442 = vpop.f32.mrb[0].mxu0
      %4443 = vmatprep.mubr.bf16.mxu0 0
      %4444 = vmatmul.mubr.bf16.gmra.mrb[0].mxu0 %v3209
      %v4445 = vpop.f32.mrb[0].mxu0
      %v4446 = vadd.f32 0.0, %v4445
      %v4447 = vpop.f32.mrb[0].mxu0
      %v4448 = vpop.f32.mrb[0].mxu0
      %v4449 = vadd.f32 0.0, %v4448
      %v4450 = vpop.f32.mrb[0].mxu0
      %4451 = vmatprep.mubr.bf16.mxu0 0
      %4452 = vmatmul.mubr.bf16.gmra.mrb[0].mxu0 %v3212
      %v4453 = vpop.f32.mrb[0].mxu0
      %v4454 = vadd.f32 0.0, %v4453
      %v4455 = vpop.f32.mrb[0].mxu0
      %v4456 = vpop.f32.mrb[0].mxu0
      %v4457 = vadd.f32 0.0, %v4456
      %v4458 = vpop.f32.mrb[0].mxu0
      %4459 = vmatprep.mubr.bf16.mxu0 0
      %4460 = vmatmul.mubr.bf16.gmra.mrb[0].mxu0 %v3215
      %v4461 = vpop.f32.mrb[0].mxu0
      %v4462 = vadd.f32 0.0, %v4461
      %v4463 = vpop.f32.mrb[0].mxu0
      %v4464 = vpop.f32.mrb[0].mxu0
      %v4465 = vadd.f32 0.0, %v4464
      %v4466 = vpop.f32.mrb[0].mxu0
      %4467 = vmatprep.mubr.bf16.mxu0 0
      %4468 = vmatmul.mubr.bf16.gmra.mrb[0].mxu0 %v3218
      %v4469 = vpop.f32.mrb[0].mxu0
      %v4470 = vadd.f32 0.0, %v4469
      %v4471 = vpop.f32.mrb[0].mxu0
      %v4472 = vpop.f32.mrb[0].mxu0
      %v4473 = vadd.f32 0.0, %v4472
      %v4474 = vpop.f32.mrb[0].mxu0
      %4475 = vmatprep.mubr.bf16.mxu0 0
      %4476 = vmatmul.mubr.bf16.gmra.mrb[0].mxu0 %v3221
      %v4477 = vpop.f32.mrb[0].mxu0
      %v4478 = vadd.f32 0.0, %v4477
      %v4479 = vpop.f32.mrb[0].mxu0
      %v4480 = vpop.f32.mrb[0].mxu0
      %v4481 = vadd.f32 0.0, %v4480
      %v4482 = vpop.f32.mrb[0].mxu0
      %4483 = vmatprep.mubr.bf16.mxu0 0
      %4484 = vmatmul.mubr.bf16.gmra.mrb[0].mxu0 %v3224
      %v4485 = vpop.f32.mrb[0].mxu0
      %v4486 = vadd.f32 0.0, %v4485
      %v4487 = vpop.f32.mrb[0].mxu0
      %v4488 = vpop.f32.mrb[0].mxu0
      %v4489 = vadd.f32 0.0, %v4488
      %v4490 = vpop.f32.mrb[0].mxu0
      %4491 = vmatprep.mubr.bf16.mxu0 0
      %4492 = vmatmul.mubr.bf16.gmra.mrb[0].mxu0 %v3227
      %v4493 = vpop.f32.mrb[0].mxu0
      %v4494 = vadd.f32 0.0, %v4493
      %v4495 = vpop.f32.mrb[0].mxu0
      %v4496 = vpop.f32.mrb[0].mxu0
      %v4497 = vadd.f32 0.0, %v4496
      %v4498 = vpop.f32.mrb[0].mxu0
      %4499 = vmatprep.mubr.bf16.mxu0 0
      %4500 = vmatmul.mubr.bf16.gmra.mrb[0].mxu0 %v3230
      %v4501 = vpop.f32.mrb[0].mxu0
      %v4502 = vadd.f32 0.0, %v4501
      %v4503 = vpop.f32.mrb[0].mxu0
      %v4504 = vpop.f32.mrb[0].mxu0
      %v4505 = vadd.f32 0.0, %v4504
      %v4506 = vpop.f32.mrb[0].mxu0
      %4507 = vmatprep.mubr.bf16.mxu0 0
      %4508 = vmatmul.mubr.bf16.gmra.mrb[0].mxu0 %v3233
      %v4509 = vpop.f32.mrb[0].mxu0
      %v4510 = vadd.f32 0.0, %v4509
      %v4511 = vpop.f32.mrb[0].mxu0
      %v4512 = vpop.f32.mrb[0].mxu0
      %v4513 = vadd.f32 0.0, %v4512
      %v4514 = vpop.f32.mrb[0].mxu0
      %4515 = vdwg.mxu0
      %v4516 = vadd.f32 %v4234, %v4326
      %v4517 = vadd.f32 %v4235, %v4329
      %v4518 = vadd.f32 %v4236, %v4334
      %v4519 = vadd.f32 %v4237, %v4337
      %v4520 = vadd.f32 %v4238, %v4342
      %v4521 = vadd.f32 %v4239, %v4345
      %v4522 = vadd.f32 %v4240, %v4350
      %v4523 = vadd.f32 %v4241, %v4353
      %v4524 = vadd.f32 %v4242, %v4358
      %v4525 = vadd.f32 %v4243, %v4361
      %v4526 = vadd.f32 %v4244, %v4366
      %v4527 = vadd.f32 %v4245, %v4369
      %v4528 = vadd.f32 %v4246, %v4374
      %v4529 = vadd.f32 %v4247, %v4377
      %v4530 = vadd.f32 %v4248, %v4382
      %v4531 = vadd.f32 %v4249, %v4385
      %v4532 = vadd.f32 %v4250, %v4390
      %v4533 = vadd.f32 %v4251, %v4393
      %v4534 = vadd.f32 %v4252, %v4398
      %v4535 = vadd.f32 %v4253, %v4401
      %v4536 = vadd.f32 %v4254, %v4406
      %v4537 = vadd.f32 %v4255, %v4409
      %v4538 = vadd.f32 %v4256, %v4414
      %v4539 = vadd.f32 %v4257, %v4417
      %v4540 = vadd.f32 %v4258, %v4422
      %v4541 = vadd.f32 %v4259, %v4425
      %v4542 = vadd.f32 %v4260, %v4430
      %v4543 = vadd.f32 %v4261, %v4433
      %v4544 = vadd.f32 %v4262, %v4438
      %v4545 = vadd.f32 %v4263, %v4441
      %v4546 = vadd.f32 %v4264, %v4446
      %v4547 = vadd.f32 %v4265, %v4449
      %v4548 = vadd.f32 %v4266, %v4454
      %v4549 = vadd.f32 %v4267, %v4457
      %v4550 = vadd.f32 %v4268, %v4462
      %v4551 = vadd.f32 %v4269, %v4465
      %v4552 = vadd.f32 %v4270, %v4470
      %v4553 = vadd.f32 %v4271, %v4473
      %v4554 = vadd.f32 %v4272, %v4478
      %v4555 = vadd.f32 %v4273, %v4481
      %v4556 = vadd.f32 %v4274, %v4486
      %v4557 = vadd.f32 %v4275, %v4489
      %v4558 = vadd.f32 %v4276, %v4494
      %v4559 = vadd.f32 %v4277, %v4497
      %v4560 = vadd.f32 %v4278, %v4502
      %v4561 = vadd.f32 %v4279, %v4505
      %v4562 = vadd.f32 %v4280, %v4510
      %v4563 = vadd.f32 %v4281, %v4513
      %s4564 = scalar_lea.vmem [#allocation2], 24
      %v4565 = vld [vmem:[%s4564] sm:$0xf]
      %v4566 = vld [vmem:[%s4564 + $0x4] sm:$0xf]
      %v4567 = vld [vmem:[%s4564 + $0x8] sm:$0xf]
      %v4568 = vld [vmem:[%s4564 + $0xc] sm:$0xf]
      %v4569 = vld [vmem:[%s4564 + $0x10] sm:$0xf]
      %v4570 = vld [vmem:[%s4564 + $0x14] sm:$0xf]
      %v4571 = vld [vmem:[%s4564 + $0x18] sm:$0xf]
      %v4572 = vld [vmem:[%s4564 + $0x1c] sm:$0xf]
      %v4573 = vld [vmem:[%s4564 + $0x20] sm:$0xf]
      %v4574 = vld [vmem:[%s4564 + $0x24] sm:$0xf]
      %v4575 = vld [vmem:[%s4564 + $0x28] sm:$0xf]
      %v4576 = vld [vmem:[%s4564 + $0x2c] sm:$0xf]
      %v4577 = vld [vmem:[%s4564 + $0x30] sm:$0xf]
      %v4578 = vld [vmem:[%s4564 + $0x34] sm:$0xf]
      %v4579 = vld [vmem:[%s4564 + $0x38] sm:$0xf]
      %v4580 = vld [vmem:[%s4564 + $0x3c] sm:$0xf]
      %v4581 = vld [vmem:[%s4564 + $0x40] sm:$0xf]
      %v4582 = vld [vmem:[%s4564 + $0x44] sm:$0xf]
      %v4583 = vld [vmem:[%s4564 + $0x48] sm:$0xf]
      %v4584 = vld [vmem:[%s4564 + $0x4c] sm:$0xf]
      %v4585 = vld [vmem:[%s4564 + $0x50] sm:$0xf]
      %v4586 = vld [vmem:[%s4564 + $0x54] sm:$0xf]
      %v4587 = vld [vmem:[%s4564 + $0x58] sm:$0xf]
      %v4588 = vld [vmem:[%s4564 + $0x5c] sm:$0xf]
      %v4589 = vld [vmem:[%s4564 + $0x60] sm:$0xf]
      %v4590 = vld [vmem:[%s4564 + $0x64] sm:$0xf]
      %v4591 = vld [vmem:[%s4564 + $0x68] sm:$0xf]
      %v4592 = vld [vmem:[%s4564 + $0x6c] sm:$0xf]
      %v4593 = vld [vmem:[%s4564 + $0x70] sm:$0xf]
      %v4594 = vld [vmem:[%s4564 + $0x74] sm:$0xf]
      %v4595 = vld [vmem:[%s4564 + $0x78] sm:$0xf]
      %v4596 = vld [vmem:[%s4564 + $0x7c] sm:$0xf]
      %v4597 = vld [vmem:[%s4564 + $0x80] sm:$0xf]
      %v4598 = vld [vmem:[%s4564 + $0x84] sm:$0xf]
      %v4599 = vld [vmem:[%s4564 + $0x88] sm:$0xf]
      %v4600 = vld [vmem:[%s4564 + $0x8c] sm:$0xf]
      %v4601 = vld [vmem:[%s4564 + $0x90] sm:$0xf]
      %v4602 = vld [vmem:[%s4564 + $0x94] sm:$0xf]
      %v4603 = vld [vmem:[%s4564 + $0x98] sm:$0xf]
      %v4604 = vld [vmem:[%s4564 + $0x9c] sm:$0xf]
      %v4605 = vld [vmem:[%s4564 + $0xa0] sm:$0xf]
      %v4606 = vld [vmem:[%s4564 + $0xa4] sm:$0xf]
      %v4607 = vld [vmem:[%s4564 + $0xa8] sm:$0xf]
      %v4608 = vld [vmem:[%s4564 + $0xac] sm:$0xf]
      %v4609 = vld [vmem:[%s4564 + $0xb0] sm:$0xf]
      %v4610 = vld [vmem:[%s4564 + $0xb4] sm:$0xf]
      %v4611 = vld [vmem:[%s4564 + $0xb8] sm:$0xf]
      %v4612 = vld [vmem:[%s4564 + $0xbc] sm:$0xf]
      %s4613 = scalar_lea.vmem [#allocation3], 24
      %v4614 = vld [vmem:[%s4613] sm:$0xf]
      %v4615 = vld [vmem:[%s4613 + $0x4] sm:$0xf]
      %v4616 = vld [vmem:[%s4613 + $0x8] sm:$0xf]
      %v4617 = vld [vmem:[%s4613 + $0xc] sm:$0xf]
      %v4618 = vld [vmem:[%s4613 + $0x10] sm:$0xf]
      %v4619 = vld [vmem:[%s4613 + $0x14] sm:$0xf]
      %v4620 = vld [vmem:[%s4613 + $0x18] sm:$0xf]
      %v4621 = vld [vmem:[%s4613 + $0x1c] sm:$0xf]
      %v4622 = vld [vmem:[%s4613 + $0x20] sm:$0xf]
      %v4623 = vld [vmem:[%s4613 + $0x24] sm:$0xf]
      %v4624 = vld [vmem:[%s4613 + $0x28] sm:$0xf]
      %v4625 = vld [vmem:[%s4613 + $0x2c] sm:$0xf]
      %v4626 = vld [vmem:[%s4613 + $0x30] sm:$0xf]
      %v4627 = vld [vmem:[%s4613 + $0x34] sm:$0xf]
      %v4628 = vld [vmem:[%s4613 + $0x38] sm:$0xf]
      %v4629 = vld [vmem:[%s4613 + $0x3c] sm:$0xf]
      %v4630 = vld [vmem:[%s4613 + $0x40] sm:$0xf]
      %v4631 = vld [vmem:[%s4613 + $0x44] sm:$0xf]
      %v4632 = vld [vmem:[%s4613 + $0x48] sm:$0xf]
      %v4633 = vld [vmem:[%s4613 + $0x4c] sm:$0xf]
      %v4634 = vld [vmem:[%s4613 + $0x50] sm:$0xf]
      %v4635 = vld [vmem:[%s4613 + $0x54] sm:$0xf]
      %v4636 = vld [vmem:[%s4613 + $0x58] sm:$0xf]
      %v4637 = vld [vmem:[%s4613 + $0x5c] sm:$0xf]
      %v4638 = vld [vmem:[%s4613 + $0x60] sm:$0xf]
      %v4639 = vld [vmem:[%s4613 + $0x64] sm:$0xf]
      %v4640 = vld [vmem:[%s4613 + $0x68] sm:$0xf]
      %v4641 = vld [vmem:[%s4613 + $0x6c] sm:$0xf]
      %v4642 = vld [vmem:[%s4613 + $0x70] sm:$0xf]
      %v4643 = vld [vmem:[%s4613 + $0x74] sm:$0xf]
      %v4644 = vld [vmem:[%s4613 + $0x78] sm:$0xf]
      %v4645 = vld [vmem:[%s4613 + $0x7c] sm:$0xf]
      %v4646 = vld [vmem:[%s4613 + $0x80] sm:$0xf]
      %v4647 = vld [vmem:[%s4613 + $0x84] sm:$0xf]
      %v4648 = vld [vmem:[%s4613 + $0x88] sm:$0xf]
      %v4649 = vld [vmem:[%s4613 + $0x8c] sm:$0xf]
      %v4650 = vld [vmem:[%s4613 + $0x90] sm:$0xf]
      %v4651 = vld [vmem:[%s4613 + $0x94] sm:$0xf]
      %v4652 = vld [vmem:[%s4613 + $0x98] sm:$0xf]
      %v4653 = vld [vmem:[%s4613 + $0x9c] sm:$0xf]
      %v4654 = vld [vmem:[%s4613 + $0xa0] sm:$0xf]
      %v4655 = vld [vmem:[%s4613 + $0xa4] sm:$0xf]
      %v4656 = vld [vmem:[%s4613 + $0xa8] sm:$0xf]
      %v4657 = vld [vmem:[%s4613 + $0xac] sm:$0xf]
      %v4658 = vld [vmem:[%s4613 + $0xb0] sm:$0xf]
      %v4659 = vld [vmem:[%s4613 + $0xb4] sm:$0xf]
      %v4660 = vld [vmem:[%s4613 + $0xb8] sm:$0xf]
      %v4661 = vld [vmem:[%s4613 + $0xbc] sm:$0xf]
      %s4662 = scalar_lea.vmem %s2, 24
      %v4663 = vld [vmem:[%s4662] sm:$0xf]
      %v4712 = vunpack.c.l.b16 %v4565
      %v4713 = vunpack.c.l.b16 %v4566
      %v4714 = vunpack.c.l.b16 %v4567
      %v4715 = vunpack.c.l.b16 %v4568
      %v4716 = vunpack.c.l.b16 %v4569
      %v4717 = vunpack.c.l.b16 %v4570
      %v4718 = vunpack.c.l.b16 %v4571
      %v4719 = vunpack.c.l.b16 %v4572
      %v4720 = vunpack.c.l.b16 %v4573
      %v4721 = vunpack.c.l.b16 %v4574
      %v4722 = vunpack.c.l.b16 %v4575
      %v4723 = vunpack.c.l.b16 %v4576
      %v4724 = vunpack.c.l.b16 %v4577
      %v4725 = vunpack.c.l.b16 %v4578
      %v4726 = vunpack.c.l.b16 %v4579
      %v4727 = vunpack.c.l.b16 %v4580
      %v4728 = vunpack.c.l.b16 %v4581
      %v4729 = vunpack.c.l.b16 %v4582
      %v4730 = vunpack.c.l.b16 %v4583
      %v4731 = vunpack.c.l.b16 %v4584
      %v4732 = vunpack.c.l.b16 %v4585
      %v4733 = vunpack.c.l.b16 %v4586
      %v4734 = vunpack.c.l.b16 %v4587
      %v4735 = vunpack.c.l.b16 %v4588
      %v4736 = vunpack.c.l.b16 %v4589
      %v4737 = vunpack.c.l.b16 %v4590
      %v4738 = vunpack.c.l.b16 %v4591
      %v4739 = vunpack.c.l.b16 %v4592
      %v4740 = vunpack.c.l.b16 %v4593
      %v4741 = vunpack.c.l.b16 %v4594
      %v4742 = vunpack.c.l.b16 %v4595
      %v4743 = vunpack.c.l.b16 %v4596
      %v4744 = vunpack.c.l.b16 %v4597
      %v4745 = vunpack.c.l.b16 %v4598
      %v4746 = vunpack.c.l.b16 %v4599
      %v4747 = vunpack.c.l.b16 %v4600
      %v4748 = vunpack.c.l.b16 %v4601
      %v4749 = vunpack.c.l.b16 %v4602
      %v4750 = vunpack.c.l.b16 %v4603
      %v4751 = vunpack.c.l.b16 %v4604
      %v4752 = vunpack.c.l.b16 %v4605
      %v4753 = vunpack.c.l.b16 %v4606
      %v4754 = vunpack.c.l.b16 %v4607
      %v4755 = vunpack.c.l.b16 %v4608
      %v4756 = vunpack.c.l.b16 %v4609
      %v4757 = vunpack.c.l.b16 %v4610
      %v4758 = vunpack.c.l.b16 %v4611
      %v4759 = vunpack.c.l.b16 %v4612
      %v4760 = vpack.c.b16 %v4713, %v4712
      %v4761 = vpack.c.b16 %v4715, %v4714
      %v4762 = vpack.c.b16 %v4717, %v4716
      %v4763 = vpack.c.b16 %v4719, %v4718
      %v4764 = vpack.c.b16 %v4721, %v4720
      %v4765 = vpack.c.b16 %v4723, %v4722
      %v4766 = vpack.c.b16 %v4725, %v4724
      %v4767 = vpack.c.b16 %v4727, %v4726
      %v4768 = vpack.c.b16 %v4729, %v4728
      %v4769 = vpack.c.b16 %v4731, %v4730
      %v4770 = vpack.c.b16 %v4733, %v4732
      %v4771 = vpack.c.b16 %v4735, %v4734
      %v4772 = vpack.c.b16 %v4737, %v4736
      %v4773 = vpack.c.b16 %v4739, %v4738
      %v4774 = vpack.c.b16 %v4741, %v4740
      %v4775 = vpack.c.b16 %v4743, %v4742
      %v4776 = vpack.c.b16 %v4745, %v4744
      %v4777 = vpack.c.b16 %v4747, %v4746
      %v4778 = vpack.c.b16 %v4749, %v4748
      %v4779 = vpack.c.b16 %v4751, %v4750
      %v4780 = vpack.c.b16 %v4753, %v4752
      %v4781 = vpack.c.b16 %v4755, %v4754
      %v4782 = vpack.c.b16 %v4757, %v4756
      %v4783 = vpack.c.b16 %v4759, %v4758
      %v4785 = vsel %vm1206, %v4760, 0
      %v4788 = vsel %vm1206, %v4761, 0
      %v4791 = vsel %vm1206, %v4762, 0
      %v4794 = vsel %vm1206, %v4763, 0
      %v4797 = vsel %vm1206, %v4764, 0
      %v4800 = vsel %vm1206, %v4765, 0
      %v4803 = vsel %vm1206, %v4766, 0
      %v4806 = vsel %vm1206, %v4767, 0
      %v4809 = vsel %vm1206, %v4768, 0
      %v4812 = vsel %vm1206, %v4769, 0
      %v4815 = vsel %vm1206, %v4770, 0
      %v4818 = vsel %vm1206, %v4771, 0
      %v4821 = vsel %vm1206, %v4772, 0
      %v4824 = vsel %vm1206, %v4773, 0
      %v4827 = vsel %vm1206, %v4774, 0
      %v4830 = vsel %vm1206, %v4775, 0
      %v4833 = vsel %vm1206, %v4776, 0
      %v4836 = vsel %vm1206, %v4777, 0
      %v4839 = vsel %vm1206, %v4778, 0
      %v4842 = vsel %vm1206, %v4779, 0
      %v4845 = vsel %vm1206, %v4780, 0
      %v4848 = vsel %vm1206, %v4781, 0
      %v4851 = vsel %vm1206, %v4782, 0
      %v4854 = vsel %vm1206, %v4783, 0
      %v4857 = vsel %vm1279, %v4663, 0
      %4859 = vmatprep.subr.bf16.mxu0 0
      %4860 = vmatpush1.bf16.msra.mxu0 %v4857
      %4861 = vmatprep.subr.bf16.mxu0 0
      %4862 = vmatpush1.bf16.msra.mxu0 0
      %4863 = vmatprep.subr.bf16.mxu0 0
      %4864 = vmatpush1.bf16.msra.mxu0 0
      %4865 = vmatprep.subr.bf16.mxu0 0
      %4866 = vmatpush1.bf16.msra.mxu0 0
      %4867 = vmatprep.subr.bf16.mxu0 0
      %4868 = vmatpush1.bf16.msra.mxu0 0
      %4869 = vmatprep.subr.bf16.mxu0 0
      %4870 = vmatpush1.bf16.msra.mxu0 0
      %4871 = vmatprep.subr.bf16.mxu0 0
      %4872 = vmatpush1.bf16.msra.mxu0 0
      %4873 = vmatprep.subr.bf16.mxu0 0
      %4874 = vmatpush1.bf16.msra.mxu0 0
      %4875 = vmatprep.subr.bf16.mxu0 0
      %4876 = vmatpush1.bf16.msra.mxu0 0
      %4877 = vmatprep.subr.bf16.mxu0 0
      %4878 = vmatpush1.bf16.msra.mxu0 0
      %4879 = vmatprep.subr.bf16.mxu0 0
      %4880 = vmatpush1.bf16.msra.mxu0 0
      %4881 = vmatprep.subr.bf16.mxu0 0
      %4882 = vmatpush1.bf16.msra.mxu0 0
      %4883 = vmatprep.subr.bf16.mxu0 0
      %4884 = vmatpush1.bf16.msra.mxu0 0
      %4885 = vmatprep.subr.bf16.mxu0 0
      %4886 = vmatpush1.bf16.msra.mxu0 0
      %4887 = vmatprep.subr.bf16.mxu0 0
      %4888 = vmatpush1.bf16.msra.mxu0 0
      %4889 = vmatprep.subr.bf16.mxu0 0
      %4890 = vmatpush1.bf16.msra.mxu0 0
      %4891 = vmatprep.mubr.bf16.mxu0 0
      %4892 = vmatmul.mubr.bf16.gmra.mrb[0].mxu0 %v4785
      %v4893 = vpop.f32.mrb[0].mxu0
      %v4894 = vadd.f32 0.0, %v4893
      %v4895 = vpop.f32.mrb[0].mxu0
      %v4896 = vpop.f32.mrb[0].mxu0
      %v4897 = vadd.f32 0.0, %v4896
      %v4898 = vpop.f32.mrb[0].mxu0
      %4899 = vmatprep.mubr.bf16.mxu0 0
      %4900 = vmatmul.mubr.bf16.gmra.mrb[0].mxu0 %v4788
      %v4901 = vpop.f32.mrb[0].mxu0
      %v4902 = vadd.f32 0.0, %v4901
      %v4903 = vpop.f32.mrb[0].mxu0
      %v4904 = vpop.f32.mrb[0].mxu0
      %v4905 = vadd.f32 0.0, %v4904
      %v4906 = vpop.f32.mrb[0].mxu0
      %4907 = vmatprep.mubr.bf16.mxu0 0
      %4908 = vmatmul.mubr.bf16.gmra.mrb[0].mxu0 %v4791
      %v4909 = vpop.f32.mrb[0].mxu0
      %v4910 = vadd.f32 0.0, %v4909
      %v4911 = vpop.f32.mrb[0].mxu0
      %v4912 = vpop.f32.mrb[0].mxu0
      %v4913 = vadd.f32 0.0, %v4912
      %v4914 = vpop.f32.mrb[0].mxu0
      %4915 = vmatprep.mubr.bf16.mxu0 0
      %4916 = vmatmul.mubr.bf16.gmra.mrb[0].mxu0 %v4794
      %v4917 = vpop.f32.mrb[0].mxu0
      %v4918 = vadd.f32 0.0, %v4917
      %v4919 = vpop.f32.mrb[0].mxu0
      %v4920 = vpop.f32.mrb[0].mxu0
      %v4921 = vadd.f32 0.0, %v4920
      %v4922 = vpop.f32.mrb[0].mxu0
      %4923 = vmatprep.mubr.bf16.mxu0 0
      %4924 = vmatmul.mubr.bf16.gmra.mrb[0].mxu0 %v4797
      %v4925 = vpop.f32.mrb[0].mxu0
      %v4926 = vadd.f32 0.0, %v4925
      %v4927 = vpop.f32.mrb[0].mxu0
      %v4928 = vpop.f32.mrb[0].mxu0
      %v4929 = vadd.f32 0.0, %v4928
      %v4930 = vpop.f32.mrb[0].mxu0
      %4931 = vmatprep.mubr.bf16.mxu0 0
      %4932 = vmatmul.mubr.bf16.gmra.mrb[0].mxu0 %v4800
      %v4933 = vpop.f32.mrb[0].mxu0
      %v4934 = vadd.f32 0.0, %v4933
      %v4935 = vpop.f32.mrb[0].mxu0
      %v4936 = vpop.f32.mrb[0].mxu0
      %v4937 = vadd.f32 0.0, %v4936
      %v4938 = vpop.f32.mrb[0].mxu0
      %4939 = vmatprep.mubr.bf16.mxu0 0
      %4940 = vmatmul.mubr.bf16.gmra.mrb[0].mxu0 %v4803
      %v4941 = vpop.f32.mrb[0].mxu0
      %v4942 = vadd.f32 0.0, %v4941
      %v4943 = vpop.f32.mrb[0].mxu0
      %v4944 = vpop.f32.mrb[0].mxu0
      %v4945 = vadd.f32 0.0, %v4944
      %v4946 = vpop.f32.mrb[0].mxu0
      %4947 = vmatprep.mubr.bf16.mxu0 0
      %4948 = vmatmul.mubr.bf16.gmra.mrb[0].mxu0 %v4806
      %v4949 = vpop.f32.mrb[0].mxu0
      %v4950 = vadd.f32 0.0, %v4949
      %v4951 = vpop.f32.mrb[0].mxu0
      %v4952 = vpop.f32.mrb[0].mxu0
      %v4953 = vadd.f32 0.0, %v4952
      %v4954 = vpop.f32.mrb[0].mxu0
      %4955 = vmatprep.mubr.bf16.mxu0 0
      %4956 = vmatmul.mubr.bf16.gmra.mrb[0].mxu0 %v4809
      %v4957 = vpop.f32.mrb[0].mxu0
      %v4958 = vadd.f32 0.0, %v4957
      %v4959 = vpop.f32.mrb[0].mxu0
      %v4960 = vpop.f32.mrb[0].mxu0
      %v4961 = vadd.f32 0.0, %v4960
      %v4962 = vpop.f32.mrb[0].mxu0
      %4963 = vmatprep.mubr.bf16.mxu0 0
      %4964 = vmatmul.mubr.bf16.gmra.mrb[0].mxu0 %v4812
      %v4965 = vpop.f32.mrb[0].mxu0
      %v4966 = vadd.f32 0.0, %v4965
      %v4967 = vpop.f32.mrb[0].mxu0
      %v4968 = vpop.f32.mrb[0].mxu0
      %v4969 = vadd.f32 0.0, %v4968
      %v4970 = vpop.f32.mrb[0].mxu0
      %4971 = vmatprep.mubr.bf16.mxu0 0
      %4972 = vmatmul.mubr.bf16.gmra.mrb[0].mxu0 %v4815
      %v4973 = vpop.f32.mrb[0].mxu0
      %v4974 = vadd.f32 0.0, %v4973
      %v4975 = vpop.f32.mrb[0].mxu0
      %v4976 = vpop.f32.mrb[0].mxu0
      %v4977 = vadd.f32 0.0, %v4976
      %v4978 = vpop.f32.mrb[0].mxu0
      %4979 = vmatprep.mubr.bf16.mxu0 0
      %4980 = vmatmul.mubr.bf16.gmra.mrb[0].mxu0 %v4818
      %v4981 = vpop.f32.mrb[0].mxu0
      %v4982 = vadd.f32 0.0, %v4981
      %v4983 = vpop.f32.mrb[0].mxu0
      %v4984 = vpop.f32.mrb[0].mxu0
      %v4985 = vadd.f32 0.0, %v4984
      %v4986 = vpop.f32.mrb[0].mxu0
      %4987 = vmatprep.mubr.bf16.mxu0 0
      %4988 = vmatmul.mubr.bf16.gmra.mrb[0].mxu0 %v4821
      %v4989 = vpop.f32.mrb[0].mxu0
      %v4990 = vadd.f32 0.0, %v4989
      %v4991 = vpop.f32.mrb[0].mxu0
      %v4992 = vpop.f32.mrb[0].mxu0
      %v4993 = vadd.f32 0.0, %v4992
      %v4994 = vpop.f32.mrb[0].mxu0
      %4995 = vmatprep.mubr.bf16.mxu0 0
      %4996 = vmatmul.mubr.bf16.gmra.mrb[0].mxu0 %v4824
      %v4997 = vpop.f32.mrb[0].mxu0
      %v4998 = vadd.f32 0.0, %v4997
      %v4999 = vpop.f32.mrb[0].mxu0
      %v5000 = vpop.f32.mrb[0].mxu0
      %v5001 = vadd.f32 0.0, %v5000
      %v5002 = vpop.f32.mrb[0].mxu0
      %5003 = vmatprep.mubr.bf16.mxu0 0
      %5004 = vmatmul.mubr.bf16.gmra.mrb[0].mxu0 %v4827
      %v5005 = vpop.f32.mrb[0].mxu0
      %v5006 = vadd.f32 0.0, %v5005
      %v5007 = vpop.f32.mrb[0].mxu0
      %v5008 = vpop.f32.mrb[0].mxu0
      %v5009 = vadd.f32 0.0, %v5008
      %v5010 = vpop.f32.mrb[0].mxu0
      %5011 = vmatprep.mubr.bf16.mxu0 0
      %5012 = vmatmul.mubr.bf16.gmra.mrb[0].mxu0 %v4830
      %v5013 = vpop.f32.mrb[0].mxu0
      %v5014 = vadd.f32 0.0, %v5013
      %v5015 = vpop.f32.mrb[0].mxu0
      %v5016 = vpop.f32.mrb[0].mxu0
      %v5017 = vadd.f32 0.0, %v5016
      %v5018 = vpop.f32.mrb[0].mxu0
      %5019 = vmatprep.mubr.bf16.mxu0 0
      %5020 = vmatmul.mubr.bf16.gmra.mrb[0].mxu0 %v4833
      %v5021 = vpop.f32.mrb[0].mxu0
      %v5022 = vadd.f32 0.0, %v5021
      %v5023 = vpop.f32.mrb[0].mxu0
      %v5024 = vpop.f32.mrb[0].mxu0
      %v5025 = vadd.f32 0.0, %v5024
      %v5026 = vpop.f32.mrb[0].mxu0
      %5027 = vmatprep.mubr.bf16.mxu0 0
      %5028 = vmatmul.mubr.bf16.gmra.mrb[0].mxu0 %v4836
      %v5029 = vpop.f32.mrb[0].mxu0
      %v5030 = vadd.f32 0.0, %v5029
      %v5031 = vpop.f32.mrb[0].mxu0
      %v5032 = vpop.f32.mrb[0].mxu0
      %v5033 = vadd.f32 0.0, %v5032
      %v5034 = vpop.f32.mrb[0].mxu0
      %5035 = vmatprep.mubr.bf16.mxu0 0
      %5036 = vmatmul.mubr.bf16.gmra.mrb[0].mxu0 %v4839
      %v5037 = vpop.f32.mrb[0].mxu0
      %v5038 = vadd.f32 0.0, %v5037
      %v5039 = vpop.f32.mrb[0].mxu0
      %v5040 = vpop.f32.mrb[0].mxu0
      %v5041 = vadd.f32 0.0, %v5040
      %v5042 = vpop.f32.mrb[0].mxu0
      %5043 = vmatprep.mubr.bf16.mxu0 0
      %5044 = vmatmul.mubr.bf16.gmra.mrb[0].mxu0 %v4842
      %v5045 = vpop.f32.mrb[0].mxu0
      %v5046 = vadd.f32 0.0, %v5045
      %v5047 = vpop.f32.mrb[0].mxu0
      %v5048 = vpop.f32.mrb[0].mxu0
      %v5049 = vadd.f32 0.0, %v5048
      %v5050 = vpop.f32.mrb[0].mxu0
      %5051 = vmatprep.mubr.bf16.mxu0 0
      %5052 = vmatmul.mubr.bf16.gmra.mrb[0].mxu0 %v4845
      %v5053 = vpop.f32.mrb[0].mxu0
      %v5054 = vadd.f32 0.0, %v5053
      %v5055 = vpop.f32.mrb[0].mxu0
      %v5056 = vpop.f32.mrb[0].mxu0
      %v5057 = vadd.f32 0.0, %v5056
      %v5058 = vpop.f32.mrb[0].mxu0
      %5059 = vmatprep.mubr.bf16.mxu0 0
      %5060 = vmatmul.mubr.bf16.gmra.mrb[0].mxu0 %v4848
      %v5061 = vpop.f32.mrb[0].mxu0
      %v5062 = vadd.f32 0.0, %v5061
      %v5063 = vpop.f32.mrb[0].mxu0
      %v5064 = vpop.f32.mrb[0].mxu0
      %v5065 = vadd.f32 0.0, %v5064
      %v5066 = vpop.f32.mrb[0].mxu0
      %5067 = vmatprep.mubr.bf16.mxu0 0
      %5068 = vmatmul.mubr.bf16.gmra.mrb[0].mxu0 %v4851
      %v5069 = vpop.f32.mrb[0].mxu0
      %v5070 = vadd.f32 0.0, %v5069
      %v5071 = vpop.f32.mrb[0].mxu0
      %v5072 = vpop.f32.mrb[0].mxu0
      %v5073 = vadd.f32 0.0, %v5072
      %v5074 = vpop.f32.mrb[0].mxu0
      %5075 = vmatprep.mubr.bf16.mxu0 0
      %5076 = vmatmul.mubr.bf16.gmra.mrb[0].mxu0 %v4854
      %v5077 = vpop.f32.mrb[0].mxu0
      %v5078 = vadd.f32 0.0, %v5077
      %v5079 = vpop.f32.mrb[0].mxu0
      %v5080 = vpop.f32.mrb[0].mxu0
      %v5081 = vadd.f32 0.0, %v5080
      %v5082 = vpop.f32.mrb[0].mxu0
      %5083 = vdwg.mxu0
      %v5084 = vadd.f32 %v3460, %v4894
      %v5085 = vadd.f32 %v3461, %v4897
      %v5086 = vadd.f32 %v3462, %v4902
      %v5087 = vadd.f32 %v3463, %v4905
      %v5088 = vadd.f32 %v3464, %v4910
      %v5089 = vadd.f32 %v3465, %v4913
      %v5090 = vadd.f32 %v3466, %v4918
      %v5091 = vadd.f32 %v3467, %v4921
      %v5092 = vadd.f32 %v3468, %v4926
      %v5093 = vadd.f32 %v3469, %v4929
      %v5094 = vadd.f32 %v3470, %v4934
      %v5095 = vadd.f32 %v3471, %v4937
      %v5096 = vadd.f32 %v3472, %v4942
      %v5097 = vadd.f32 %v3473, %v4945
      %v5098 = vadd.f32 %v3474, %v4950
      %v5099 = vadd.f32 %v3475, %v4953
      %v5100 = vadd.f32 %v3476, %v4958
      %v5101 = vadd.f32 %v3477, %v4961
      %v5102 = vadd.f32 %v3478, %v4966
      %v5103 = vadd.f32 %v3479, %v4969
      %v5104 = vadd.f32 %v3480, %v4974
      %v5105 = vadd.f32 %v3481, %v4977
      %v5106 = vadd.f32 %v3482, %v4982
      %v5107 = vadd.f32 %v3483, %v4985
      %v5108 = vadd.f32 %v3484, %v4990
      %v5109 = vadd.f32 %v3485, %v4993
      %v5110 = vadd.f32 %v3486, %v4998
      %v5111 = vadd.f32 %v3487, %v5001
      %v5112 = vadd.f32 %v3488, %v5006
      %v5113 = vadd.f32 %v3489, %v5009
      %v5114 = vadd.f32 %v3490, %v5014
      %v5115 = vadd.f32 %v3491, %v5017
      %v5116 = vadd.f32 %v3492, %v5022
      %v5117 = vadd.f32 %v3493, %v5025
      %v5118 = vadd.f32 %v3494, %v5030
      %v5119 = vadd.f32 %v3495, %v5033
      %v5120 = vadd.f32 %v3496, %v5038
      %v5121 = vadd.f32 %v3497, %v5041
      %v5122 = vadd.f32 %v3498, %v5046
      %v5123 = vadd.f32 %v3499, %v5049
      %v5124 = vadd.f32 %v3500, %v5054
      %v5125 = vadd.f32 %v3501, %v5057
      %v5126 = vadd.f32 %v3502, %v5062
      %v5127 = vadd.f32 %v3503, %v5065
      %v5128 = vadd.f32 %v3504, %v5070
      %v5129 = vadd.f32 %v3505, %v5073
      %v5130 = vadd.f32 %v3506, %v5078
      %v5131 = vadd.f32 %v3507, %v5081
      %s5132 = scalar_lea.vmem %s3, 48
      %v5133 = vld [vmem:[%s5132] sm:$0xf]
      %v5134 = vld [vmem:[%s5132 + $0x4] sm:$0xf]
      %v5183 = vunpack.c.l.b16 %v4614
      %v5184 = vunpack.c.l.b16 %v4615
      %v5185 = vunpack.c.l.b16 %v4616
      %v5186 = vunpack.c.l.b16 %v4617
      %v5187 = vunpack.c.l.b16 %v4618
      %v5188 = vunpack.c.l.b16 %v4619
      %v5189 = vunpack.c.l.b16 %v4620
      %v5190 = vunpack.c.l.b16 %v4621
      %v5191 = vunpack.c.l.b16 %v4622
      %v5192 = vunpack.c.l.b16 %v4623
      %v5193 = vunpack.c.l.b16 %v4624
      %v5194 = vunpack.c.l.b16 %v4625
      %v5195 = vunpack.c.l.b16 %v4626
      %v5196 = vunpack.c.l.b16 %v4627
      %v5197 = vunpack.c.l.b16 %v4628
      %v5198 = vunpack.c.l.b16 %v4629
      %v5199 = vunpack.c.l.b16 %v4630
      %v5200 = vunpack.c.l.b16 %v4631
      %v5201 = vunpack.c.l.b16 %v4632
      %v5202 = vunpack.c.l.b16 %v4633
      %v5203 = vunpack.c.l.b16 %v4634
      %v5204 = vunpack.c.l.b16 %v4635
      %v5205 = vunpack.c.l.b16 %v4636
      %v5206 = vunpack.c.l.b16 %v4637
      %v5207 = vunpack.c.l.b16 %v4638
      %v5208 = vunpack.c.l.b16 %v4639
      %v5209 = vunpack.c.l.b16 %v4640
      %v5210 = vunpack.c.l.b16 %v4641
      %v5211 = vunpack.c.l.b16 %v4642
      %v5212 = vunpack.c.l.b16 %v4643
      %v5213 = vunpack.c.l.b16 %v4644
      %v5214 = vunpack.c.l.b16 %v4645
      %v5215 = vunpack.c.l.b16 %v4646
      %v5216 = vunpack.c.l.b16 %v4647
      %v5217 = vunpack.c.l.b16 %v4648
      %v5218 = vunpack.c.l.b16 %v4649
      %v5219 = vunpack.c.l.b16 %v4650
      %v5220 = vunpack.c.l.b16 %v4651
      %v5221 = vunpack.c.l.b16 %v4652
      %v5222 = vunpack.c.l.b16 %v4653
      %v5223 = vunpack.c.l.b16 %v4654
      %v5224 = vunpack.c.l.b16 %v4655
      %v5225 = vunpack.c.l.b16 %v4656
      %v5226 = vunpack.c.l.b16 %v4657
      %v5227 = vunpack.c.l.b16 %v4658
      %v5228 = vunpack.c.l.b16 %v4659
      %v5229 = vunpack.c.l.b16 %v4660
      %v5230 = vunpack.c.l.b16 %v4661
      %v5231 = vpack.c.b16 %v5184, %v5183
      %v5232 = vpack.c.b16 %v5186, %v5185
      %v5233 = vpack.c.b16 %v5188, %v5187
      %v5234 = vpack.c.b16 %v5190, %v5189
      %v5235 = vpack.c.b16 %v5192, %v5191
      %v5236 = vpack.c.b16 %v5194, %v5193
      %v5237 = vpack.c.b16 %v5196, %v5195
      %v5238 = vpack.c.b16 %v5198, %v5197
      %v5239 = vpack.c.b16 %v5200, %v5199
      %v5240 = vpack.c.b16 %v5202, %v5201
      %v5241 = vpack.c.b16 %v5204, %v5203
      %v5242 = vpack.c.b16 %v5206, %v5205
      %v5243 = vpack.c.b16 %v5208, %v5207
      %v5244 = vpack.c.b16 %v5210, %v5209
      %v5245 = vpack.c.b16 %v5212, %v5211
      %v5246 = vpack.c.b16 %v5214, %v5213
      %v5247 = vpack.c.b16 %v5216, %v5215
      %v5248 = vpack.c.b16 %v5218, %v5217
      %v5249 = vpack.c.b16 %v5220, %v5219
      %v5250 = vpack.c.b16 %v5222, %v5221
      %v5251 = vpack.c.b16 %v5224, %v5223
      %v5252 = vpack.c.b16 %v5226, %v5225
      %v5253 = vpack.c.b16 %v5228, %v5227
      %v5254 = vpack.c.b16 %v5230, %v5229
      %v5257 = vunpack.c.l.b16 %v5133
      %v5258 = vunpack.c.l.b16 %v5134
      %v5259 = vpack.c.b16 %v5258, %v5257
      %v5262 = vsel %vm788, %v5231, 0
      %v5265 = vsel %vm788, %v5232, 0
      %v5268 = vsel %vm788, %v5233, 0
      %v5271 = vsel %vm788, %v5234, 0
      %v5274 = vsel %vm788, %v5235, 0
      %v5277 = vsel %vm788, %v5236, 0
      %v5280 = vsel %vm788, %v5237, 0
      %v5283 = vsel %vm788, %v5238, 0
      %v5286 = vsel %vm788, %v5239, 0
      %v5289 = vsel %vm788, %v5240, 0
      %v5292 = vsel %vm788, %v5241, 0
      %v5295 = vsel %vm788, %v5242, 0
      %v5298 = vsel %vm788, %v5243, 0
      %v5301 = vsel %vm788, %v5244, 0
      %v5304 = vsel %vm788, %v5245, 0
      %v5307 = vsel %vm788, %v5246, 0
      %v5310 = vsel %vm788, %v5247, 0
      %v5313 = vsel %vm788, %v5248, 0
      %v5316 = vsel %vm788, %v5249, 0
      %v5319 = vsel %vm788, %v5250, 0
      %v5322 = vsel %vm788, %v5251, 0
      %v5325 = vsel %vm788, %v5252, 0
      %v5328 = vsel %vm788, %v5253, 0
      %v5331 = vsel %vm788, %v5254, 0
      %5333 = vmatprep.subr.bf16.mxu0 0
      %5334 = vmatpush1.bf16.msra.mxu0 %v5259
      %5335 = vmatprep.subr.bf16.mxu0 0
      %5336 = vmatpush1.bf16.msra.mxu0 0
      %5337 = vmatprep.subr.bf16.mxu0 0
      %5338 = vmatpush1.bf16.msra.mxu0 0
      %5339 = vmatprep.subr.bf16.mxu0 0
      %5340 = vmatpush1.bf16.msra.mxu0 0
      %5341 = vmatprep.subr.bf16.mxu0 0
      %5342 = vmatpush1.bf16.msra.mxu0 0
      %5343 = vmatprep.subr.bf16.mxu0 0
      %5344 = vmatpush1.bf16.msra.mxu0 0
      %5345 = vmatprep.subr.bf16.mxu0 0
      %5346 = vmatpush1.bf16.msra.mxu0 0
      %5347 = vmatprep.subr.bf16.mxu0 0
      %5348 = vmatpush1.bf16.msra.mxu0 0
      %5349 = vmatprep.subr.bf16.mxu0 0
      %5350 = vmatpush1.bf16.msra.mxu0 0
      %5351 = vmatprep.subr.bf16.mxu0 0
      %5352 = vmatpush1.bf16.msra.mxu0 0
      %5353 = vmatprep.subr.bf16.mxu0 0
      %5354 = vmatpush1.bf16.msra.mxu0 0
      %5355 = vmatprep.subr.bf16.mxu0 0
      %5356 = vmatpush1.bf16.msra.mxu0 0
      %5357 = vmatprep.subr.bf16.mxu0 0
      %5358 = vmatpush1.bf16.msra.mxu0 0
      %5359 = vmatprep.subr.bf16.mxu0 0
      %5360 = vmatpush1.bf16.msra.mxu0 0
      %5361 = vmatprep.subr.bf16.mxu0 0
      %5362 = vmatpush1.bf16.msra.mxu0 0
      %5363 = vmatprep.subr.bf16.mxu0 0
      %5364 = vmatpush1.bf16.msra.mxu0 0
      %5365 = vmatprep.mubr.bf16.mxu0 0
      %5366 = vmatmul.mubr.bf16.gmra.mrb[0].mxu0 %v5262
      %v5367 = vpop.f32.mrb[0].mxu0
      %v5368 = vadd.f32 0.0, %v5367
      %v5369 = vpop.f32.mrb[0].mxu0
      %v5370 = vpop.f32.mrb[0].mxu0
      %v5371 = vadd.f32 0.0, %v5370
      %v5372 = vpop.f32.mrb[0].mxu0
      %5373 = vmatprep.mubr.bf16.mxu0 0
      %5374 = vmatmul.mubr.bf16.gmra.mrb[0].mxu0 %v5265
      %v5375 = vpop.f32.mrb[0].mxu0
      %v5376 = vadd.f32 0.0, %v5375
      %v5377 = vpop.f32.mrb[0].mxu0
      %v5378 = vpop.f32.mrb[0].mxu0
      %v5379 = vadd.f32 0.0, %v5378
      %v5380 = vpop.f32.mrb[0].mxu0
      %5381 = vmatprep.mubr.bf16.mxu0 0
      %5382 = vmatmul.mubr.bf16.gmra.mrb[0].mxu0 %v5268
      %v5383 = vpop.f32.mrb[0].mxu0
      %v5384 = vadd.f32 0.0, %v5383
      %v5385 = vpop.f32.mrb[0].mxu0
      %v5386 = vpop.f32.mrb[0].mxu0
      %v5387 = vadd.f32 0.0, %v5386
      %v5388 = vpop.f32.mrb[0].mxu0
      %5389 = vmatprep.mubr.bf16.mxu0 0
      %5390 = vmatmul.mubr.bf16.gmra.mrb[0].mxu0 %v5271
      %v5391 = vpop.f32.mrb[0].mxu0
      %v5392 = vadd.f32 0.0, %v5391
      %v5393 = vpop.f32.mrb[0].mxu0
      %v5394 = vpop.f32.mrb[0].mxu0
      %v5395 = vadd.f32 0.0, %v5394
      %v5396 = vpop.f32.mrb[0].mxu0
      %5397 = vmatprep.mubr.bf16.mxu0 0
      %5398 = vmatmul.mubr.bf16.gmra.mrb[0].mxu0 %v5274
      %v5399 = vpop.f32.mrb[0].mxu0
      %v5400 = vadd.f32 0.0, %v5399
      %v5401 = vpop.f32.mrb[0].mxu0
      %v5402 = vpop.f32.mrb[0].mxu0
      %v5403 = vadd.f32 0.0, %v5402
      %v5404 = vpop.f32.mrb[0].mxu0
      %5405 = vmatprep.mubr.bf16.mxu0 0
      %5406 = vmatmul.mubr.bf16.gmra.mrb[0].mxu0 %v5277
      %v5407 = vpop.f32.mrb[0].mxu0
      %v5408 = vadd.f32 0.0, %v5407
      %v5409 = vpop.f32.mrb[0].mxu0
      %v5410 = vpop.f32.mrb[0].mxu0
      %v5411 = vadd.f32 0.0, %v5410
      %v5412 = vpop.f32.mrb[0].mxu0
      %5413 = vmatprep.mubr.bf16.mxu0 0
      %5414 = vmatmul.mubr.bf16.gmra.mrb[0].mxu0 %v5280
      %v5415 = vpop.f32.mrb[0].mxu0
      %v5416 = vadd.f32 0.0, %v5415
      %v5417 = vpop.f32.mrb[0].mxu0
      %v5418 = vpop.f32.mrb[0].mxu0
      %v5419 = vadd.f32 0.0, %v5418
      %v5420 = vpop.f32.mrb[0].mxu0
      %5421 = vmatprep.mubr.bf16.mxu0 0
      %5422 = vmatmul.mubr.bf16.gmra.mrb[0].mxu0 %v5283
      %v5423 = vpop.f32.mrb[0].mxu0
      %v5424 = vadd.f32 0.0, %v5423
      %v5425 = vpop.f32.mrb[0].mxu0
      %v5426 = vpop.f32.mrb[0].mxu0
      %v5427 = vadd.f32 0.0, %v5426
      %v5428 = vpop.f32.mrb[0].mxu0
      %5429 = vmatprep.mubr.bf16.mxu0 0
      %5430 = vmatmul.mubr.bf16.gmra.mrb[0].mxu0 %v5286
      %v5431 = vpop.f32.mrb[0].mxu0
      %v5432 = vadd.f32 0.0, %v5431
      %v5433 = vpop.f32.mrb[0].mxu0
      %v5434 = vpop.f32.mrb[0].mxu0
      %v5435 = vadd.f32 0.0, %v5434
      %v5436 = vpop.f32.mrb[0].mxu0
      %5437 = vmatprep.mubr.bf16.mxu0 0
      %5438 = vmatmul.mubr.bf16.gmra.mrb[0].mxu0 %v5289
      %v5439 = vpop.f32.mrb[0].mxu0
      %v5440 = vadd.f32 0.0, %v5439
      %v5441 = vpop.f32.mrb[0].mxu0
      %v5442 = vpop.f32.mrb[0].mxu0
      %v5443 = vadd.f32 0.0, %v5442
      %v5444 = vpop.f32.mrb[0].mxu0
      %5445 = vmatprep.mubr.bf16.mxu0 0
      %5446 = vmatmul.mubr.bf16.gmra.mrb[0].mxu0 %v5292
      %v5447 = vpop.f32.mrb[0].mxu0
      %v5448 = vadd.f32 0.0, %v5447
      %v5449 = vpop.f32.mrb[0].mxu0
      %v5450 = vpop.f32.mrb[0].mxu0
      %v5451 = vadd.f32 0.0, %v5450
      %v5452 = vpop.f32.mrb[0].mxu0
      %5453 = vmatprep.mubr.bf16.mxu0 0
      %5454 = vmatmul.mubr.bf16.gmra.mrb[0].mxu0 %v5295
      %v5455 = vpop.f32.mrb[0].mxu0
      %v5456 = vadd.f32 0.0, %v5455
      %v5457 = vpop.f32.mrb[0].mxu0
      %v5458 = vpop.f32.mrb[0].mxu0
      %v5459 = vadd.f32 0.0, %v5458
      %v5460 = vpop.f32.mrb[0].mxu0
      %5461 = vmatprep.mubr.bf16.mxu0 0
      %5462 = vmatmul.mubr.bf16.gmra.mrb[0].mxu0 %v5298
      %v5463 = vpop.f32.mrb[0].mxu0
      %v5464 = vadd.f32 0.0, %v5463
      %v5465 = vpop.f32.mrb[0].mxu0
      %v5466 = vpop.f32.mrb[0].mxu0
      %v5467 = vadd.f32 0.0, %v5466
      %v5468 = vpop.f32.mrb[0].mxu0
      %5469 = vmatprep.mubr.bf16.mxu0 0
      %5470 = vmatmul.mubr.bf16.gmra.mrb[0].mxu0 %v5301
      %v5471 = vpop.f32.mrb[0].mxu0
      %v5472 = vadd.f32 0.0, %v5471
      %v5473 = vpop.f32.mrb[0].mxu0
      %v5474 = vpop.f32.mrb[0].mxu0
      %v5475 = vadd.f32 0.0, %v5474
      %v5476 = vpop.f32.mrb[0].mxu0
      %5477 = vmatprep.mubr.bf16.mxu0 0
      %5478 = vmatmul.mubr.bf16.gmra.mrb[0].mxu0 %v5304
      %v5479 = vpop.f32.mrb[0].mxu0
      %v5480 = vadd.f32 0.0, %v5479
      %v5481 = vpop.f32.mrb[0].mxu0
      %v5482 = vpop.f32.mrb[0].mxu0
      %v5483 = vadd.f32 0.0, %v5482
      %v5484 = vpop.f32.mrb[0].mxu0
      %5485 = vmatprep.mubr.bf16.mxu0 0
      %5486 = vmatmul.mubr.bf16.gmra.mrb[0].mxu0 %v5307
      %v5487 = vpop.f32.mrb[0].mxu0
      %v5488 = vadd.f32 0.0, %v5487
      %v5489 = vpop.f32.mrb[0].mxu0
      %v5490 = vpop.f32.mrb[0].mxu0
      %v5491 = vadd.f32 0.0, %v5490
      %v5492 = vpop.f32.mrb[0].mxu0
      %5493 = vmatprep.mubr.bf16.mxu0 0
      %5494 = vmatmul.mubr.bf16.gmra.mrb[0].mxu0 %v5310
      %v5495 = vpop.f32.mrb[0].mxu0
      %v5496 = vadd.f32 0.0, %v5495
      %v5497 = vpop.f32.mrb[0].mxu0
      %v5498 = vpop.f32.mrb[0].mxu0
      %v5499 = vadd.f32 0.0, %v5498
      %v5500 = vpop.f32.mrb[0].mxu0
      %5501 = vmatprep.mubr.bf16.mxu0 0
      %5502 = vmatmul.mubr.bf16.gmra.mrb[0].mxu0 %v5313
      %v5503 = vpop.f32.mrb[0].mxu0
      %v5504 = vadd.f32 0.0, %v5503
      %v5505 = vpop.f32.mrb[0].mxu0
      %v5506 = vpop.f32.mrb[0].mxu0
      %v5507 = vadd.f32 0.0, %v5506
      %v5508 = vpop.f32.mrb[0].mxu0
      %5509 = vmatprep.mubr.bf16.mxu0 0
      %5510 = vmatmul.mubr.bf16.gmra.mrb[0].mxu0 %v5316
      %v5511 = vpop.f32.mrb[0].mxu0
      %v5512 = vadd.f32 0.0, %v5511
      %v5513 = vpop.f32.mrb[0].mxu0
      %v5514 = vpop.f32.mrb[0].mxu0
      %v5515 = vadd.f32 0.0, %v5514
      %v5516 = vpop.f32.mrb[0].mxu0
      %5517 = vmatprep.mubr.bf16.mxu0 0
      %5518 = vmatmul.mubr.bf16.gmra.mrb[0].mxu0 %v5319
      %v5519 = vpop.f32.mrb[0].mxu0
      %v5520 = vadd.f32 0.0, %v5519
      %v5521 = vpop.f32.mrb[0].mxu0
      %v5522 = vpop.f32.mrb[0].mxu0
      %v5523 = vadd.f32 0.0, %v5522
      %v5524 = vpop.f32.mrb[0].mxu0
      %5525 = vmatprep.mubr.bf16.mxu0 0
      %5526 = vmatmul.mubr.bf16.gmra.mrb[0].mxu0 %v5322
      %v5527 = vpop.f32.mrb[0].mxu0
      %v5528 = vadd.f32 0.0, %v5527
      %v5529 = vpop.f32.mrb[0].mxu0
      %v5530 = vpop.f32.mrb[0].mxu0
      %v5531 = vadd.f32 0.0, %v5530
      %v5532 = vpop.f32.mrb[0].mxu0
      %5533 = vmatprep.mubr.bf16.mxu0 0
      %5534 = vmatmul.mubr.bf16.gmra.mrb[0].mxu0 %v5325
      %v5535 = vpop.f32.mrb[0].mxu0
      %v5536 = vadd.f32 0.0, %v5535
      %v5537 = vpop.f32.mrb[0].mxu0
      %v5538 = vpop.f32.mrb[0].mxu0
      %v5539 = vadd.f32 0.0, %v5538
      %v5540 = vpop.f32.mrb[0].mxu0
      %5541 = vmatprep.mubr.bf16.mxu0 0
      %5542 = vmatmul.mubr.bf16.gmra.mrb[0].mxu0 %v5328
      %v5543 = vpop.f32.mrb[0].mxu0
      %v5544 = vadd.f32 0.0, %v5543
      %v5545 = vpop.f32.mrb[0].mxu0
      %v5546 = vpop.f32.mrb[0].mxu0
      %v5547 = vadd.f32 0.0, %v5546
      %v5548 = vpop.f32.mrb[0].mxu0
      %5549 = vmatprep.mubr.bf16.mxu0 0
      %5550 = vmatmul.mubr.bf16.gmra.mrb[0].mxu0 %v5331
      %v5551 = vpop.f32.mrb[0].mxu0
      %v5552 = vadd.f32 0.0, %v5551
      %v5553 = vpop.f32.mrb[0].mxu0
      %v5554 = vpop.f32.mrb[0].mxu0
      %v5555 = vadd.f32 0.0, %v5554
      %v5556 = vpop.f32.mrb[0].mxu0
      %5557 = vdwg.mxu0
      %v5558 = vadd.f32 %v5084, %v5368
      %v5559 = vadd.f32 %v5085, %v5371
      %v5560 = vadd.f32 %v5086, %v5376
      %v5561 = vadd.f32 %v5087, %v5379
      %v5562 = vadd.f32 %v5088, %v5384
      %v5563 = vadd.f32 %v5089, %v5387
      %v5564 = vadd.f32 %v5090, %v5392
      %v5565 = vadd.f32 %v5091, %v5395
      %v5566 = vadd.f32 %v5092, %v5400
      %v5567 = vadd.f32 %v5093, %v5403
      %v5568 = vadd.f32 %v5094, %v5408
      %v5569 = vadd.f32 %v5095, %v5411
      %v5570 = vadd.f32 %v5096, %v5416
      %v5571 = vadd.f32 %v5097, %v5419
      %v5572 = vadd.f32 %v5098, %v5424
      %v5573 = vadd.f32 %v5099, %v5427
      %v5574 = vadd.f32 %v5100, %v5432
      %v5575 = vadd.f32 %v5101, %v5435
      %v5576 = vadd.f32 %v5102, %v5440
      %v5577 = vadd.f32 %v5103, %v5443
      %v5578 = vadd.f32 %v5104, %v5448
      %v5579 = vadd.f32 %v5105, %v5451
      %v5580 = vadd.f32 %v5106, %v5456
      %v5581 = vadd.f32 %v5107, %v5459
      %v5582 = vadd.f32 %v5108, %v5464
      %v5583 = vadd.f32 %v5109, %v5467
      %v5584 = vadd.f32 %v5110, %v5472
      %v5585 = vadd.f32 %v5111, %v5475
      %v5586 = vadd.f32 %v5112, %v5480
      %v5587 = vadd.f32 %v5113, %v5483
      %v5588 = vadd.f32 %v5114, %v5488
      %v5589 = vadd.f32 %v5115, %v5491
      %v5590 = vadd.f32 %v5116, %v5496
      %v5591 = vadd.f32 %v5117, %v5499
      %v5592 = vadd.f32 %v5118, %v5504
      %v5593 = vadd.f32 %v5119, %v5507
      %v5594 = vadd.f32 %v5120, %v5512
      %v5595 = vadd.f32 %v5121, %v5515
      %v5596 = vadd.f32 %v5122, %v5520
      %v5597 = vadd.f32 %v5123, %v5523
      %v5598 = vadd.f32 %v5124, %v5528
      %v5599 = vadd.f32 %v5125, %v5531
      %v5600 = vadd.f32 %v5126, %v5536
      %v5601 = vadd.f32 %v5127, %v5539
      %v5602 = vadd.f32 %v5128, %v5544
      %v5603 = vadd.f32 %v5129, %v5547
      %v5604 = vadd.f32 %v5130, %v5552
      %v5605 = vadd.f32 %v5131, %v5555
      %s5606 = scalar_lea.vmem %s2, 28
      %v5607 = vld [vmem:[%s5606] sm:$0xf]
      %v5609 = vsel %vm1279, %v5607, 0
      %5611 = vmatprep.subr.bf16.mxu0 0
      %5612 = vmatpush1.bf16.msra.mxu0 %v5609
      %5613 = vmatprep.subr.bf16.mxu0 0
      %5614 = vmatpush1.bf16.msra.mxu0 0
      %5615 = vmatprep.subr.bf16.mxu0 0
      %5616 = vmatpush1.bf16.msra.mxu0 0
      %5617 = vmatprep.subr.bf16.mxu0 0
      %5618 = vmatpush1.bf16.msra.mxu0 0
      %5619 = vmatprep.subr.bf16.mxu0 0
      %5620 = vmatpush1.bf16.msra.mxu0 0
      %5621 = vmatprep.subr.bf16.mxu0 0
      %5622 = vmatpush1.bf16.msra.mxu0 0
      %5623 = vmatprep.subr.bf16.mxu0 0
      %5624 = vmatpush1.bf16.msra.mxu0 0
      %5625 = vmatprep.subr.bf16.mxu0 0
      %5626 = vmatpush1.bf16.msra.mxu0 0
      %5627 = vmatprep.subr.bf16.mxu0 0
      %5628 = vmatpush1.bf16.msra.mxu0 0
      %5629 = vmatprep.subr.bf16.mxu0 0
      %5630 = vmatpush1.bf16.msra.mxu0 0
      %5631 = vmatprep.subr.bf16.mxu0 0
      %5632 = vmatpush1.bf16.msra.mxu0 0
      %5633 = vmatprep.subr.bf16.mxu0 0
      %5634 = vmatpush1.bf16.msra.mxu0 0
      %5635 = vmatprep.subr.bf16.mxu0 0
      %5636 = vmatpush1.bf16.msra.mxu0 0
      %5637 = vmatprep.subr.bf16.mxu0 0
      %5638 = vmatpush1.bf16.msra.mxu0 0
      %5639 = vmatprep.subr.bf16.mxu0 0
      %5640 = vmatpush1.bf16.msra.mxu0 0
      %5641 = vmatprep.subr.bf16.mxu0 0
      %5642 = vmatpush1.bf16.msra.mxu0 0
      %5643 = vmatprep.mubr.bf16.mxu0 0
      %5644 = vmatmul.mubr.bf16.gmra.mrb[0].mxu0 %v4785
      %v5645 = vpop.f32.mrb[0].mxu0
      %v5646 = vadd.f32 0.0, %v5645
      %v5647 = vpop.f32.mrb[0].mxu0
      %v5648 = vpop.f32.mrb[0].mxu0
      %v5649 = vadd.f32 0.0, %v5648
      %v5650 = vpop.f32.mrb[0].mxu0
      %5651 = vmatprep.mubr.bf16.mxu0 0
      %5652 = vmatmul.mubr.bf16.gmra.mrb[0].mxu0 %v4788
      %v5653 = vpop.f32.mrb[0].mxu0
      %v5654 = vpop.f32.mrb[0].mxu0
      %v5655 = vpop.f32.mrb[0].mxu0
      %v5656 = vadd.f32 0.0, %v5655
      %v5657 = vpop.f32.mrb[0].mxu0
      %5658 = vmatprep.mubr.bf16.mxu0 0
      %5659 = vmatmul.mubr.bf16.gmra.mrb[0].mxu0 %v4791
      %v5660 = vpop.f32.mrb[0].mxu0
      %v5661 = vadd.f32 0.0, %v5660
      %v5662 = vpop.f32.mrb[0].mxu0
      %v5663 = vpop.f32.mrb[0].mxu0
      %v5664 = vpop.f32.mrb[0].mxu0
      %5665 = vmatprep.mubr.bf16.mxu0 0
      %5666 = vmatmul.mubr.bf16.gmra.mrb[0].mxu0 %v4794
      %v5667 = vpop.f32.mrb[0].mxu0
      %v5668 = vadd.f32 0.0, %v5667
      %v5669 = vpop.f32.mrb[0].mxu0
      %v5670 = vpop.f32.mrb[0].mxu0
      %v5671 = vadd.f32 0.0, %v5670
      %v5672 = vpop.f32.mrb[0].mxu0
      %5673 = vmatprep.mubr.bf16.mxu0 0
      %5674 = vmatmul.mubr.bf16.gmra.mrb[0].mxu0 %v4797
      %v5675 = vpop.f32.mrb[0].mxu0
      %v5676 = vpop.f32.mrb[0].mxu0
      %v5677 = vpop.f32.mrb[0].mxu0
      %v5678 = vadd.f32 0.0, %v5677
      %v5679 = vpop.f32.mrb[0].mxu0
      %5680 = vmatprep.mubr.bf16.mxu0 0
      %5681 = vmatmul.mubr.bf16.gmra.mrb[0].mxu0 %v4800
      %v5682 = vpop.f32.mrb[0].mxu0
      %v5683 = vadd.f32 0.0, %v5682
      %v5684 = vpop.f32.mrb[0].mxu0
      %v5685 = vpop.f32.mrb[0].mxu0
      %v5686 = vpop.f32.mrb[0].mxu0
      %5687 = vmatprep.mubr.bf16.mxu0 0
      %5688 = vmatmul.mubr.bf16.gmra.mrb[0].mxu0 %v4803
      %v5689 = vpop.f32.mrb[0].mxu0
      %v5690 = vadd.f32 0.0, %v5689
      %v5691 = vpop.f32.mrb[0].mxu0
      %v5692 = vpop.f32.mrb[0].mxu0
      %v5693 = vadd.f32 0.0, %v5692
      %v5694 = vpop.f32.mrb[0].mxu0
      %5695 = vmatprep.mubr.bf16.mxu0 0
      %5696 = vmatmul.mubr.bf16.gmra.mrb[0].mxu0 %v4806
      %v5697 = vpop.f32.mrb[0].mxu0
      %v5698 = vpop.f32.mrb[0].mxu0
      %v5699 = vpop.f32.mrb[0].mxu0
      %v5700 = vadd.f32 0.0, %v5699
      %v5701 = vpop.f32.mrb[0].mxu0
      %5702 = vmatprep.mubr.bf16.mxu0 0
      %5703 = vmatmul.mubr.bf16.gmra.mrb[0].mxu0 %v4809
      %v5704 = vpop.f32.mrb[0].mxu0
      %v5705 = vadd.f32 0.0, %v5704
      %v5706 = vpop.f32.mrb[0].mxu0
      %v5707 = vpop.f32.mrb[0].mxu0
      %v5708 = vpop.f32.mrb[0].mxu0
      %5709 = vmatprep.mubr.bf16.mxu0 0
      %5710 = vmatmul.mubr.bf16.gmra.mrb[0].mxu0 %v4812
      %v5711 = vpop.f32.mrb[0].mxu0
      %v5712 = vadd.f32 0.0, %v5711
      %v5713 = vpop.f32.mrb[0].mxu0
      %v5714 = vpop.f32.mrb[0].mxu0
      %v5715 = vadd.f32 0.0, %v5714
      %v5716 = vpop.f32.mrb[0].mxu0
      %5717 = vmatprep.mubr.bf16.mxu0 0
      %5718 = vmatmul.mubr.bf16.gmra.mrb[0].mxu0 %v4815
      %v5719 = vpop.f32.mrb[0].mxu0
      %v5720 = vpop.f32.mrb[0].mxu0
      %v5721 = vpop.f32.mrb[0].mxu0
      %v5722 = vadd.f32 0.0, %v5721
      %v5723 = vpop.f32.mrb[0].mxu0
      %5724 = vmatprep.mubr.bf16.mxu0 0
      %5725 = vmatmul.mubr.bf16.gmra.mrb[0].mxu0 %v4818
      %v5726 = vpop.f32.mrb[0].mxu0
      %v5727 = vadd.f32 0.0, %v5726
      %v5728 = vpop.f32.mrb[0].mxu0
      %v5729 = vpop.f32.mrb[0].mxu0
      %v5730 = vpop.f32.mrb[0].mxu0
      %5731 = vmatprep.mubr.bf16.mxu0 0
      %5732 = vmatmul.mubr.bf16.gmra.mrb[0].mxu0 %v4821
      %v5733 = vpop.f32.mrb[0].mxu0
      %v5734 = vadd.f32 0.0, %v5733
      %v5735 = vpop.f32.mrb[0].mxu0
      %v5736 = vpop.f32.mrb[0].mxu0
      %v5737 = vadd.f32 0.0, %v5736
      %v5738 = vpop.f32.mrb[0].mxu0
      %5739 = vmatprep.mubr.bf16.mxu0 0
      %5740 = vmatmul.mubr.bf16.gmra.mrb[0].mxu0 %v4824
      %v5741 = vpop.f32.mrb[0].mxu0
      %v5742 = vpop.f32.mrb[0].mxu0
      %v5743 = vpop.f32.mrb[0].mxu0
      %v5744 = vadd.f32 0.0, %v5743
      %v5745 = vpop.f32.mrb[0].mxu0
      %5746 = vmatprep.mubr.bf16.mxu0 0
      %5747 = vmatmul.mubr.bf16.gmra.mrb[0].mxu0 %v4827
      %v5748 = vpop.f32.mrb[0].mxu0
      %v5749 = vadd.f32 0.0, %v5748
      %v5750 = vpop.f32.mrb[0].mxu0
      %v5751 = vpop.f32.mrb[0].mxu0
      %v5752 = vpop.f32.mrb[0].mxu0
      %5753 = vmatprep.mubr.bf16.mxu0 0
      %5754 = vmatmul.mubr.bf16.gmra.mrb[0].mxu0 %v4830
      %v5755 = vpop.f32.mrb[0].mxu0
      %v5756 = vadd.f32 0.0, %v5755
      %v5757 = vpop.f32.mrb[0].mxu0
      %v5758 = vpop.f32.mrb[0].mxu0
      %v5759 = vadd.f32 0.0, %v5758
      %v5760 = vpop.f32.mrb[0].mxu0
      %5761 = vmatprep.mubr.bf16.mxu0 0
      %5762 = vmatmul.mubr.bf16.gmra.mrb[0].mxu0 %v4833
      %v5763 = vpop.f32.mrb[0].mxu0
      %v5764 = vpop.f32.mrb[0].mxu0
      %v5765 = vpop.f32.mrb[0].mxu0
      %v5766 = vadd.f32 0.0, %v5765
      %v5767 = vpop.f32.mrb[0].mxu0
      %5768 = vmatprep.mubr.bf16.mxu0 0
      %5769 = vmatmul.mubr.bf16.gmra.mrb[0].mxu0 %v4836
      %v5770 = vpop.f32.mrb[0].mxu0
      %v5771 = vadd.f32 0.0, %v5770
      %v5772 = vpop.f32.mrb[0].mxu0
      %v5773 = vpop.f32.mrb[0].mxu0
      %v5774 = vpop.f32.mrb[0].mxu0
      %5775 = vmatprep.mubr.bf16.mxu0 0
      %5776 = vmatmul.mubr.bf16.gmra.mrb[0].mxu0 %v4839
      %v5777 = vpop.f32.mrb[0].mxu0
      %v5778 = vadd.f32 0.0, %v5777
      %v5779 = vpop.f32.mrb[0].mxu0
      %v5780 = vpop.f32.mrb[0].mxu0
      %v5781 = vadd.f32 0.0, %v5780
      %v5782 = vpop.f32.mrb[0].mxu0
      %5783 = vmatprep.mubr.bf16.mxu0 0
      %5784 = vmatmul.mubr.bf16.gmra.mrb[0].mxu0 %v4842
      %v5785 = vpop.f32.mrb[0].mxu0
      %v5786 = vpop.f32.mrb[0].mxu0
      %v5787 = vpop.f32.mrb[0].mxu0
      %v5788 = vadd.f32 0.0, %v5787
      %v5789 = vpop.f32.mrb[0].mxu0
      %5790 = vmatprep.mubr.bf16.mxu0 0
      %5791 = vmatmul.mubr.bf16.gmra.mrb[0].mxu0 %v4845
      %v5792 = vpop.f32.mrb[0].mxu0
      %v5793 = vadd.f32 0.0, %v5792
      %v5794 = vpop.f32.mrb[0].mxu0
      %v5795 = vpop.f32.mrb[0].mxu0
      %v5796 = vpop.f32.mrb[0].mxu0
      %5797 = vmatprep.mubr.bf16.mxu0 0
      %5798 = vmatmul.mubr.bf16.gmra.mrb[0].mxu0 %v4848
      %v5799 = vpop.f32.mrb[0].mxu0
      %v5800 = vadd.f32 0.0, %v5799
      %v5801 = vpop.f32.mrb[0].mxu0
      %v5802 = vpop.f32.mrb[0].mxu0
      %v5803 = vadd.f32 0.0, %v5802
      %v5804 = vpop.f32.mrb[0].mxu0
      %5805 = vmatprep.mubr.bf16.mxu0 0
      %5806 = vmatmul.mubr.bf16.gmra.mrb[0].mxu0 %v4851
      %v5807 = vpop.f32.mrb[0].mxu0
      %v5808 = vpop.f32.mrb[0].mxu0
      %v5809 = vpop.f32.mrb[0].mxu0
      %v5810 = vadd.f32 0.0, %v5809
      %v5811 = vpop.f32.mrb[0].mxu0
      %5812 = vmatprep.mubr.bf16.mxu0 0
      %5813 = vmatmul.mubr.bf16.gmra.mrb[0].mxu0 %v4854
      %v5814 = vpop.f32.mrb[0].mxu0
      %v5815 = vadd.f32 0.0, %v5814
      %v5816 = vpop.f32.mrb[0].mxu0
      %v5817 = vpop.f32.mrb[0].mxu0
      %v5818 = vpop.f32.mrb[0].mxu0
      %5819 = vdwg.mxu0
      %v5820 = vadd.f32 %v3972, %v5646
      %v5821 = vadd.f32 %v3973, %v5649
      %v5822 = vadd.f32 %v3974, %v5656
      %v5823 = vadd.f32 %v3975, %v5661
      %v5824 = vadd.f32 %v3976, %v5668
      %v5825 = vadd.f32 %v3977, %v5671
      %v5826 = vadd.f32 %v3978, %v5678
      %v5827 = vadd.f32 %v3979, %v5683
      %v5828 = vadd.f32 %v3980, %v5690
      %v5829 = vadd.f32 %v3981, %v5693
      %v5830 = vadd.f32 %v3982, %v5700
      %v5831 = vadd.f32 %v3983, %v5705
      %v5832 = vadd.f32 %v3984, %v5712
      %v5833 = vadd.f32 %v3985, %v5715
      %v5834 = vadd.f32 %v3986, %v5722
      %v5835 = vadd.f32 %v3987, %v5727
      %v5836 = vadd.f32 %v3988, %v5734
      %v5837 = vadd.f32 %v3989, %v5737
      %v5838 = vadd.f32 %v3990, %v5744
      %v5839 = vadd.f32 %v3991, %v5749
      %v5840 = vadd.f32 %v3992, %v5756
      %v5841 = vadd.f32 %v3993, %v5759
      %v5842 = vadd.f32 %v3994, %v5766
      %v5843 = vadd.f32 %v3995, %v5771
      %v5844 = vadd.f32 %v3996, %v5778
      %v5845 = vadd.f32 %v3997, %v5781
      %v5846 = vadd.f32 %v3998, %v5788
      %v5847 = vadd.f32 %v3999, %v5793
      %v5848 = vadd.f32 %v4000, %v5800
      %v5849 = vadd.f32 %v4001, %v5803
      %v5850 = vadd.f32 %v4002, %v5810
      %v5851 = vadd.f32 %v4003, %v5815
      %s5852 = scalar_lea.vmem %s3, 56
      %v5853 = vld [vmem:[%s5852] sm:$0xf]
      %v5854 = vld [vmem:[%s5852 + $0x4] sm:$0xf]
      %v5857 = vunpack.c.l.b16 %v5853
      %v5858 = vunpack.c.l.b16 %v5854
      %v5859 = vpack.c.b16 %v5858, %v5857
      %5861 = vmatprep.subr.bf16.mxu0 0
      %5862 = vmatpush1.bf16.msra.mxu0 %v5859
      %5863 = vmatprep.subr.bf16.mxu0 0
      %5864 = vmatpush1.bf16.msra.mxu0 0
      %5865 = vmatprep.subr.bf16.mxu0 0
      %5866 = vmatpush1.bf16.msra.mxu0 0
      %5867 = vmatprep.subr.bf16.mxu0 0
      %5868 = vmatpush1.bf16.msra.mxu0 0
      %5869 = vmatprep.subr.bf16.mxu0 0
      %5870 = vmatpush1.bf16.msra.mxu0 0
      %5871 = vmatprep.subr.bf16.mxu0 0
      %5872 = vmatpush1.bf16.msra.mxu0 0
      %5873 = vmatprep.subr.bf16.mxu0 0
      %5874 = vmatpush1.bf16.msra.mxu0 0
      %5875 = vmatprep.subr.bf16.mxu0 0
      %5876 = vmatpush1.bf16.msra.mxu0 0
      %5877 = vmatprep.subr.bf16.mxu0 0
      %5878 = vmatpush1.bf16.msra.mxu0 0
      %5879 = vmatprep.subr.bf16.mxu0 0
      %5880 = vmatpush1.bf16.msra.mxu0 0
      %5881 = vmatprep.subr.bf16.mxu0 0
      %5882 = vmatpush1.bf16.msra.mxu0 0
      %5883 = vmatprep.subr.bf16.mxu0 0
      %5884 = vmatpush1.bf16.msra.mxu0 0
      %5885 = vmatprep.subr.bf16.mxu0 0
      %5886 = vmatpush1.bf16.msra.mxu0 0
      %5887 = vmatprep.subr.bf16.mxu0 0
      %5888 = vmatpush1.bf16.msra.mxu0 0
      %5889 = vmatprep.subr.bf16.mxu0 0
      %5890 = vmatpush1.bf16.msra.mxu0 0
      %5891 = vmatprep.subr.bf16.mxu0 0
      %5892 = vmatpush1.bf16.msra.mxu0 0
      %5893 = vmatprep.mubr.bf16.mxu0 0
      %5894 = vmatmul.mubr.bf16.gmra.mrb[0].mxu0 %v5262
      %v5895 = vpop.f32.mrb[0].mxu0
      %v5896 = vadd.f32 0.0, %v5895
      %v5897 = vpop.f32.mrb[0].mxu0
      %v5898 = vpop.f32.mrb[0].mxu0
      %v5899 = vadd.f32 0.0, %v5898
      %v5900 = vpop.f32.mrb[0].mxu0
      %5901 = vmatprep.mubr.bf16.mxu0 0
      %5902 = vmatmul.mubr.bf16.gmra.mrb[0].mxu0 %v5265
      %v5903 = vpop.f32.mrb[0].mxu0
      %v5904 = vpop.f32.mrb[0].mxu0
      %v5905 = vpop.f32.mrb[0].mxu0
      %v5906 = vadd.f32 0.0, %v5905
      %v5907 = vpop.f32.mrb[0].mxu0
      %5908 = vmatprep.mubr.bf16.mxu0 0
      %5909 = vmatmul.mubr.bf16.gmra.mrb[0].mxu0 %v5268
      %v5910 = vpop.f32.mrb[0].mxu0
      %v5911 = vadd.f32 0.0, %v5910
      %v5912 = vpop.f32.mrb[0].mxu0
      %v5913 = vpop.f32.mrb[0].mxu0
      %v5914 = vpop.f32.mrb[0].mxu0
      %5915 = vmatprep.mubr.bf16.mxu0 0
      %5916 = vmatmul.mubr.bf16.gmra.mrb[0].mxu0 %v5271
      %v5917 = vpop.f32.mrb[0].mxu0
      %v5918 = vadd.f32 0.0, %v5917
      %v5919 = vpop.f32.mrb[0].mxu0
      %v5920 = vpop.f32.mrb[0].mxu0
      %v5921 = vadd.f32 0.0, %v5920
      %v5922 = vpop.f32.mrb[0].mxu0
      %5923 = vmatprep.mubr.bf16.mxu0 0
      %5924 = vmatmul.mubr.bf16.gmra.mrb[0].mxu0 %v5274
      %v5925 = vpop.f32.mrb[0].mxu0
      %v5926 = vpop.f32.mrb[0].mxu0
      %v5927 = vpop.f32.mrb[0].mxu0
      %v5928 = vadd.f32 0.0, %v5927
      %v5929 = vpop.f32.mrb[0].mxu0
      %5930 = vmatprep.mubr.bf16.mxu0 0
      %5931 = vmatmul.mubr.bf16.gmra.mrb[0].mxu0 %v5277
      %v5932 = vpop.f32.mrb[0].mxu0
      %v5933 = vadd.f32 0.0, %v5932
      %v5934 = vpop.f32.mrb[0].mxu0
      %v5935 = vpop.f32.mrb[0].mxu0
      %v5936 = vpop.f32.mrb[0].mxu0
      %5937 = vmatprep.mubr.bf16.mxu0 0
      %5938 = vmatmul.mubr.bf16.gmra.mrb[0].mxu0 %v5280
      %v5939 = vpop.f32.mrb[0].mxu0
      %v5940 = vadd.f32 0.0, %v5939
      %v5941 = vpop.f32.mrb[0].mxu0
      %v5942 = vpop.f32.mrb[0].mxu0
      %v5943 = vadd.f32 0.0, %v5942
      %v5944 = vpop.f32.mrb[0].mxu0
      %5945 = vmatprep.mubr.bf16.mxu0 0
      %5946 = vmatmul.mubr.bf16.gmra.mrb[0].mxu0 %v5283
      %v5947 = vpop.f32.mrb[0].mxu0
      %v5948 = vpop.f32.mrb[0].mxu0
      %v5949 = vpop.f32.mrb[0].mxu0
      %v5950 = vadd.f32 0.0, %v5949
      %v5951 = vpop.f32.mrb[0].mxu0
      %5952 = vmatprep.mubr.bf16.mxu0 0
      %5953 = vmatmul.mubr.bf16.gmra.mrb[0].mxu0 %v5286
      %v5954 = vpop.f32.mrb[0].mxu0
      %v5955 = vadd.f32 0.0, %v5954
      %v5956 = vpop.f32.mrb[0].mxu0
      %v5957 = vpop.f32.mrb[0].mxu0
      %v5958 = vpop.f32.mrb[0].mxu0
      %5959 = vmatprep.mubr.bf16.mxu0 0
      %5960 = vmatmul.mubr.bf16.gmra.mrb[0].mxu0 %v5289
      %v5961 = vpop.f32.mrb[0].mxu0
      %v5962 = vadd.f32 0.0, %v5961
      %v5963 = vpop.f32.mrb[0].mxu0
      %v5964 = vpop.f32.mrb[0].mxu0
      %v5965 = vadd.f32 0.0, %v5964
      %v5966 = vpop.f32.mrb[0].mxu0
      %5967 = vmatprep.mubr.bf16.mxu0 0
      %5968 = vmatmul.mubr.bf16.gmra.mrb[0].mxu0 %v5292
      %v5969 = vpop.f32.mrb[0].mxu0
      %v5970 = vpop.f32.mrb[0].mxu0
      %v5971 = vpop.f32.mrb[0].mxu0
      %v5972 = vadd.f32 0.0, %v5971
      %v5973 = vpop.f32.mrb[0].mxu0
      %5974 = vmatprep.mubr.bf16.mxu0 0
      %5975 = vmatmul.mubr.bf16.gmra.mrb[0].mxu0 %v5295
      %v5976 = vpop.f32.mrb[0].mxu0
      %v5977 = vadd.f32 0.0, %v5976
      %v5978 = vpop.f32.mrb[0].mxu0
      %v5979 = vpop.f32.mrb[0].mxu0
      %v5980 = vpop.f32.mrb[0].mxu0
      %5981 = vmatprep.mubr.bf16.mxu0 0
      %5982 = vmatmul.mubr.bf16.gmra.mrb[0].mxu0 %v5298
      %v5983 = vpop.f32.mrb[0].mxu0
      %v5984 = vadd.f32 0.0, %v5983
      %v5985 = vpop.f32.mrb[0].mxu0
      %v5986 = vpop.f32.mrb[0].mxu0
      %v5987 = vadd.f32 0.0, %v5986
      %v5988 = vpop.f32.mrb[0].mxu0
      %5989 = vmatprep.mubr.bf16.mxu0 0
      %5990 = vmatmul.mubr.bf16.gmra.mrb[0].mxu0 %v5301
      %v5991 = vpop.f32.mrb[0].mxu0
      %v5992 = vpop.f32.mrb[0].mxu0
      %v5993 = vpop.f32.mrb[0].mxu0
      %v5994 = vadd.f32 0.0, %v5993
      %v5995 = vpop.f32.mrb[0].mxu0
      %5996 = vmatprep.mubr.bf16.mxu0 0
      %5997 = vmatmul.mubr.bf16.gmra.mrb[0].mxu0 %v5304
      %v5998 = vpop.f32.mrb[0].mxu0
      %v5999 = vadd.f32 0.0, %v5998
      %v6000 = vpop.f32.mrb[0].mxu0
      %v6001 = vpop.f32.mrb[0].mxu0
      %v6002 = vpop.f32.mrb[0].mxu0
      %6003 = vmatprep.mubr.bf16.mxu0 0
      %6004 = vmatmul.mubr.bf16.gmra.mrb[0].mxu0 %v5307
      %v6005 = vpop.f32.mrb[0].mxu0
      %v6006 = vadd.f32 0.0, %v6005
      %v6007 = vpop.f32.mrb[0].mxu0
      %v6008 = vpop.f32.mrb[0].mxu0
      %v6009 = vadd.f32 0.0, %v6008
      %v6010 = vpop.f32.mrb[0].mxu0
      %6011 = vmatprep.mubr.bf16.mxu0 0
      %6012 = vmatmul.mubr.bf16.gmra.mrb[0].mxu0 %v5310
      %v6013 = vpop.f32.mrb[0].mxu0
      %v6014 = vpop.f32.mrb[0].mxu0
      %v6015 = vpop.f32.mrb[0].mxu0
      %v6016 = vadd.f32 0.0, %v6015
      %v6017 = vpop.f32.mrb[0].mxu0
      %6018 = vmatprep.mubr.bf16.mxu0 0
      %6019 = vmatmul.mubr.bf16.gmra.mrb[0].mxu0 %v5313
      %v6020 = vpop.f32.mrb[0].mxu0
      %v6021 = vadd.f32 0.0, %v6020
      %v6022 = vpop.f32.mrb[0].mxu0
      %v6023 = vpop.f32.mrb[0].mxu0
      %v6024 = vpop.f32.mrb[0].mxu0
      %6025 = vmatprep.mubr.bf16.mxu0 0
      %6026 = vmatmul.mubr.bf16.gmra.mrb[0].mxu0 %v5316
      %v6027 = vpop.f32.mrb[0].mxu0
      %v6028 = vadd.f32 0.0, %v6027
      %v6029 = vpop.f32.mrb[0].mxu0
      %v6030 = vpop.f32.mrb[0].mxu0
      %v6031 = vadd.f32 0.0, %v6030
      %v6032 = vpop.f32.mrb[0].mxu0
      %6033 = vmatprep.mubr.bf16.mxu0 0
      %6034 = vmatmul.mubr.bf16.gmra.mrb[0].mxu0 %v5319
      %v6035 = vpop.f32.mrb[0].mxu0
      %v6036 = vpop.f32.mrb[0].mxu0
      %v6037 = vpop.f32.mrb[0].mxu0
      %v6038 = vadd.f32 0.0, %v6037
      %v6039 = vpop.f32.mrb[0].mxu0
      %6040 = vmatprep.mubr.bf16.mxu0 0
      %6041 = vmatmul.mubr.bf16.gmra.mrb[0].mxu0 %v5322
      %v6042 = vpop.f32.mrb[0].mxu0
      %v6043 = vadd.f32 0.0, %v6042
      %v6044 = vpop.f32.mrb[0].mxu0
      %v6045 = vpop.f32.mrb[0].mxu0
      %v6046 = vpop.f32.mrb[0].mxu0
      %6047 = vmatprep.mubr.bf16.mxu0 0
      %6048 = vmatmul.mubr.bf16.gmra.mrb[0].mxu0 %v5325
      %v6049 = vpop.f32.mrb[0].mxu0
      %v6050 = vadd.f32 0.0, %v6049
      %v6051 = vpop.f32.mrb[0].mxu0
      %v6052 = vpop.f32.mrb[0].mxu0
      %v6053 = vadd.f32 0.0, %v6052
      %v6054 = vpop.f32.mrb[0].mxu0
      %6055 = vmatprep.mubr.bf16.mxu0 0
      %6056 = vmatmul.mubr.bf16.gmra.mrb[0].mxu0 %v5328
      %v6057 = vpop.f32.mrb[0].mxu0
      %v6058 = vpop.f32.mrb[0].mxu0
      %v6059 = vpop.f32.mrb[0].mxu0
      %v6060 = vadd.f32 0.0, %v6059
      %v6061 = vpop.f32.mrb[0].mxu0
      %6062 = vmatprep.mubr.bf16.mxu0 0
      %6063 = vmatmul.mubr.bf16.gmra.mrb[0].mxu0 %v5331
      %v6064 = vpop.f32.mrb[0].mxu0
      %v6065 = vadd.f32 0.0, %v6064
      %v6066 = vpop.f32.mrb[0].mxu0
      %v6067 = vpop.f32.mrb[0].mxu0
      %v6068 = vpop.f32.mrb[0].mxu0
      %6069 = vdwg.mxu0
      %v6070 = vadd.f32 %v5820, %v5896
      %v6071 = vadd.f32 %v5821, %v5899
      %v6072 = vadd.f32 %v5822, %v5906
      %v6073 = vadd.f32 %v5823, %v5911
      %v6074 = vadd.f32 %v5824, %v5918
      %v6075 = vadd.f32 %v5825, %v5921
      %v6076 = vadd.f32 %v5826, %v5928
      %v6077 = vadd.f32 %v5827, %v5933
      %v6078 = vadd.f32 %v5828, %v5940
      %v6079 = vadd.f32 %v5829, %v5943
      %v6080 = vadd.f32 %v5830, %v5950
      %v6081 = vadd.f32 %v5831, %v5955
      %v6082 = vadd.f32 %v5832, %v5962
      %v6083 = vadd.f32 %v5833, %v5965
      %v6084 = vadd.f32 %v5834, %v5972
      %v6085 = vadd.f32 %v5835, %v5977
      %v6086 = vadd.f32 %v5836, %v5984
      %v6087 = vadd.f32 %v5837, %v5987
      %v6088 = vadd.f32 %v5838, %v5994
      %v6089 = vadd.f32 %v5839, %v5999
      %v6090 = vadd.f32 %v5840, %v6006
      %v6091 = vadd.f32 %v5841, %v6009
      %v6092 = vadd.f32 %v5842, %v6016
      %v6093 = vadd.f32 %v5843, %v6021
      %v6094 = vadd.f32 %v5844, %v6028
      %v6095 = vadd.f32 %v5845, %v6031
      %v6096 = vadd.f32 %v5846, %v6038
      %v6097 = vadd.f32 %v5847, %v6043
      %v6098 = vadd.f32 %v5848, %v6050
      %v6099 = vadd.f32 %v5849, %v6053
      %v6100 = vadd.f32 %v5850, %v6060
      %v6101 = vadd.f32 %v5851, %v6065
      %s6102 = scalar_lea.vmem %s2, 32
      %v6103 = vld [vmem:[%s6102] sm:$0xf]
      %v6105 = vsel %vm1279, %v6103, 0
      %6107 = vmatprep.subr.bf16.mxu0 0
      %6108 = vmatpush1.bf16.msra.mxu0 %v6105
      %6109 = vmatprep.subr.bf16.mxu0 0
      %6110 = vmatpush1.bf16.msra.mxu0 0
      %6111 = vmatprep.subr.bf16.mxu0 0
      %6112 = vmatpush1.bf16.msra.mxu0 0
      %6113 = vmatprep.subr.bf16.mxu0 0
      %6114 = vmatpush1.bf16.msra.mxu0 0
      %6115 = vmatprep.subr.bf16.mxu0 0
      %6116 = vmatpush1.bf16.msra.mxu0 0
      %6117 = vmatprep.subr.bf16.mxu0 0
      %6118 = vmatpush1.bf16.msra.mxu0 0
      %6119 = vmatprep.subr.bf16.mxu0 0
      %6120 = vmatpush1.bf16.msra.mxu0 0
      %6121 = vmatprep.subr.bf16.mxu0 0
      %6122 = vmatpush1.bf16.msra.mxu0 0
      %6123 = vmatprep.subr.bf16.mxu0 0
      %6124 = vmatpush1.bf16.msra.mxu0 0
      %6125 = vmatprep.subr.bf16.mxu0 0
      %6126 = vmatpush1.bf16.msra.mxu0 0
      %6127 = vmatprep.subr.bf16.mxu0 0
      %6128 = vmatpush1.bf16.msra.mxu0 0
      %6129 = vmatprep.subr.bf16.mxu0 0
      %6130 = vmatpush1.bf16.msra.mxu0 0
      %6131 = vmatprep.subr.bf16.mxu0 0
      %6132 = vmatpush1.bf16.msra.mxu0 0
      %6133 = vmatprep.subr.bf16.mxu0 0
      %6134 = vmatpush1.bf16.msra.mxu0 0
      %6135 = vmatprep.subr.bf16.mxu0 0
      %6136 = vmatpush1.bf16.msra.mxu0 0
      %6137 = vmatprep.subr.bf16.mxu0 0
      %6138 = vmatpush1.bf16.msra.mxu0 0
      %6139 = vmatprep.mubr.bf16.mxu0 0
      %6140 = vmatmul.mubr.bf16.gmra.mrb[0].mxu0 %v4785
      %v6141 = vpop.f32.mrb[0].mxu0
      %v6142 = vadd.f32 0.0, %v6141
      %v6143 = vpop.f32.mrb[0].mxu0
      %v6144 = vpop.f32.mrb[0].mxu0
      %v6145 = vadd.f32 0.0, %v6144
      %v6146 = vpop.f32.mrb[0].mxu0
      %6147 = vmatprep.mubr.bf16.mxu0 0
      %6148 = vmatmul.mubr.bf16.gmra.mrb[0].mxu0 %v4788
      %v6149 = vpop.f32.mrb[0].mxu0
      %v6150 = vadd.f32 0.0, %v6149
      %v6151 = vpop.f32.mrb[0].mxu0
      %v6152 = vpop.f32.mrb[0].mxu0
      %v6153 = vadd.f32 0.0, %v6152
      %v6154 = vpop.f32.mrb[0].mxu0
      %6155 = vmatprep.mubr.bf16.mxu0 0
      %6156 = vmatmul.mubr.bf16.gmra.mrb[0].mxu0 %v4791
      %v6157 = vpop.f32.mrb[0].mxu0
      %v6158 = vadd.f32 0.0, %v6157
      %v6159 = vpop.f32.mrb[0].mxu0
      %v6160 = vpop.f32.mrb[0].mxu0
      %v6161 = vadd.f32 0.0, %v6160
      %v6162 = vpop.f32.mrb[0].mxu0
      %6163 = vmatprep.mubr.bf16.mxu0 0
      %6164 = vmatmul.mubr.bf16.gmra.mrb[0].mxu0 %v4794
      %v6165 = vpop.f32.mrb[0].mxu0
      %v6166 = vadd.f32 0.0, %v6165
      %v6167 = vpop.f32.mrb[0].mxu0
      %v6168 = vpop.f32.mrb[0].mxu0
      %v6169 = vadd.f32 0.0, %v6168
      %v6170 = vpop.f32.mrb[0].mxu0
      %6171 = vmatprep.mubr.bf16.mxu0 0
      %6172 = vmatmul.mubr.bf16.gmra.mrb[0].mxu0 %v4797
      %v6173 = vpop.f32.mrb[0].mxu0
      %v6174 = vadd.f32 0.0, %v6173
      %v6175 = vpop.f32.mrb[0].mxu0
      %v6176 = vpop.f32.mrb[0].mxu0
      %v6177 = vadd.f32 0.0, %v6176
      %v6178 = vpop.f32.mrb[0].mxu0
      %6179 = vmatprep.mubr.bf16.mxu0 0
      %6180 = vmatmul.mubr.bf16.gmra.mrb[0].mxu0 %v4800
      %v6181 = vpop.f32.mrb[0].mxu0
      %v6182 = vadd.f32 0.0, %v6181
      %v6183 = vpop.f32.mrb[0].mxu0
      %v6184 = vpop.f32.mrb[0].mxu0
      %v6185 = vadd.f32 0.0, %v6184
      %v6186 = vpop.f32.mrb[0].mxu0
      %6187 = vmatprep.mubr.bf16.mxu0 0
      %6188 = vmatmul.mubr.bf16.gmra.mrb[0].mxu0 %v4803
      %v6189 = vpop.f32.mrb[0].mxu0
      %v6190 = vadd.f32 0.0, %v6189
      %v6191 = vpop.f32.mrb[0].mxu0
      %v6192 = vpop.f32.mrb[0].mxu0
      %v6193 = vadd.f32 0.0, %v6192
      %v6194 = vpop.f32.mrb[0].mxu0
      %6195 = vmatprep.mubr.bf16.mxu0 0
      %6196 = vmatmul.mubr.bf16.gmra.mrb[0].mxu0 %v4806
      %v6197 = vpop.f32.mrb[0].mxu0
      %v6198 = vadd.f32 0.0, %v6197
      %v6199 = vpop.f32.mrb[0].mxu0
      %v6200 = vpop.f32.mrb[0].mxu0
      %v6201 = vadd.f32 0.0, %v6200
      %v6202 = vpop.f32.mrb[0].mxu0
      %6203 = vmatprep.mubr.bf16.mxu0 0
      %6204 = vmatmul.mubr.bf16.gmra.mrb[0].mxu0 %v4809
      %v6205 = vpop.f32.mrb[0].mxu0
      %v6206 = vadd.f32 0.0, %v6205
      %v6207 = vpop.f32.mrb[0].mxu0
      %v6208 = vpop.f32.mrb[0].mxu0
      %v6209 = vadd.f32 0.0, %v6208
      %v6210 = vpop.f32.mrb[0].mxu0
      %6211 = vmatprep.mubr.bf16.mxu0 0
      %6212 = vmatmul.mubr.bf16.gmra.mrb[0].mxu0 %v4812
      %v6213 = vpop.f32.mrb[0].mxu0
      %v6214 = vadd.f32 0.0, %v6213
      %v6215 = vpop.f32.mrb[0].mxu0
      %v6216 = vpop.f32.mrb[0].mxu0
      %v6217 = vadd.f32 0.0, %v6216
      %v6218 = vpop.f32.mrb[0].mxu0
      %6219 = vmatprep.mubr.bf16.mxu0 0
      %6220 = vmatmul.mubr.bf16.gmra.mrb[0].mxu0 %v4815
      %v6221 = vpop.f32.mrb[0].mxu0
      %v6222 = vadd.f32 0.0, %v6221
      %v6223 = vpop.f32.mrb[0].mxu0
      %v6224 = vpop.f32.mrb[0].mxu0
      %v6225 = vadd.f32 0.0, %v6224
      %v6226 = vpop.f32.mrb[0].mxu0
      %6227 = vmatprep.mubr.bf16.mxu0 0
      %6228 = vmatmul.mubr.bf16.gmra.mrb[0].mxu0 %v4818
      %v6229 = vpop.f32.mrb[0].mxu0
      %v6230 = vadd.f32 0.0, %v6229
      %v6231 = vpop.f32.mrb[0].mxu0
      %v6232 = vpop.f32.mrb[0].mxu0
      %v6233 = vadd.f32 0.0, %v6232
      %v6234 = vpop.f32.mrb[0].mxu0
      %6235 = vmatprep.mubr.bf16.mxu0 0
      %6236 = vmatmul.mubr.bf16.gmra.mrb[0].mxu0 %v4821
      %v6237 = vpop.f32.mrb[0].mxu0
      %v6238 = vadd.f32 0.0, %v6237
      %v6239 = vpop.f32.mrb[0].mxu0
      %v6240 = vpop.f32.mrb[0].mxu0
      %v6241 = vadd.f32 0.0, %v6240
      %v6242 = vpop.f32.mrb[0].mxu0
      %6243 = vmatprep.mubr.bf16.mxu0 0
      %6244 = vmatmul.mubr.bf16.gmra.mrb[0].mxu0 %v4824
      %v6245 = vpop.f32.mrb[0].mxu0
      %v6246 = vadd.f32 0.0, %v6245
      %v6247 = vpop.f32.mrb[0].mxu0
      %v6248 = vpop.f32.mrb[0].mxu0
      %v6249 = vadd.f32 0.0, %v6248
      %v6250 = vpop.f32.mrb[0].mxu0
      %6251 = vmatprep.mubr.bf16.mxu0 0
      %6252 = vmatmul.mubr.bf16.gmra.mrb[0].mxu0 %v4827
      %v6253 = vpop.f32.mrb[0].mxu0
      %v6254 = vadd.f32 0.0, %v6253
      %v6255 = vpop.f32.mrb[0].mxu0
      %v6256 = vpop.f32.mrb[0].mxu0
      %v6257 = vadd.f32 0.0, %v6256
      %v6258 = vpop.f32.mrb[0].mxu0
      %6259 = vmatprep.mubr.bf16.mxu0 0
      %6260 = vmatmul.mubr.bf16.gmra.mrb[0].mxu0 %v4830
      %v6261 = vpop.f32.mrb[0].mxu0
      %v6262 = vadd.f32 0.0, %v6261
      %v6263 = vpop.f32.mrb[0].mxu0
      %v6264 = vpop.f32.mrb[0].mxu0
      %v6265 = vadd.f32 0.0, %v6264
      %v6266 = vpop.f32.mrb[0].mxu0
      %6267 = vmatprep.mubr.bf16.mxu0 0
      %6268 = vmatmul.mubr.bf16.gmra.mrb[0].mxu0 %v4833
      %v6269 = vpop.f32.mrb[0].mxu0
      %v6270 = vadd.f32 0.0, %v6269
      %v6271 = vpop.f32.mrb[0].mxu0
      %v6272 = vpop.f32.mrb[0].mxu0
      %v6273 = vadd.f32 0.0, %v6272
      %v6274 = vpop.f32.mrb[0].mxu0
      %6275 = vmatprep.mubr.bf16.mxu0 0
      %6276 = vmatmul.mubr.bf16.gmra.mrb[0].mxu0 %v4836
      %v6277 = vpop.f32.mrb[0].mxu0
      %v6278 = vadd.f32 0.0, %v6277
      %v6279 = vpop.f32.mrb[0].mxu0
      %v6280 = vpop.f32.mrb[0].mxu0
      %v6281 = vadd.f32 0.0, %v6280
      %v6282 = vpop.f32.mrb[0].mxu0
      %6283 = vmatprep.mubr.bf16.mxu0 0
      %6284 = vmatmul.mubr.bf16.gmra.mrb[0].mxu0 %v4839
      %v6285 = vpop.f32.mrb[0].mxu0
      %v6286 = vadd.f32 0.0, %v6285
      %v6287 = vpop.f32.mrb[0].mxu0
      %v6288 = vpop.f32.mrb[0].mxu0
      %v6289 = vadd.f32 0.0, %v6288
      %v6290 = vpop.f32.mrb[0].mxu0
      %6291 = vmatprep.mubr.bf16.mxu0 0
      %6292 = vmatmul.mubr.bf16.gmra.mrb[0].mxu0 %v4842
      %v6293 = vpop.f32.mrb[0].mxu0
      %v6294 = vadd.f32 0.0, %v6293
      %v6295 = vpop.f32.mrb[0].mxu0
      %v6296 = vpop.f32.mrb[0].mxu0
      %v6297 = vadd.f32 0.0, %v6296
      %v6298 = vpop.f32.mrb[0].mxu0
      %6299 = vmatprep.mubr.bf16.mxu0 0
      %6300 = vmatmul.mubr.bf16.gmra.mrb[0].mxu0 %v4845
      %v6301 = vpop.f32.mrb[0].mxu0
      %v6302 = vadd.f32 0.0, %v6301
      %v6303 = vpop.f32.mrb[0].mxu0
      %v6304 = vpop.f32.mrb[0].mxu0
      %v6305 = vadd.f32 0.0, %v6304
      %v6306 = vpop.f32.mrb[0].mxu0
      %6307 = vmatprep.mubr.bf16.mxu0 0
      %6308 = vmatmul.mubr.bf16.gmra.mrb[0].mxu0 %v4848
      %v6309 = vpop.f32.mrb[0].mxu0
      %v6310 = vadd.f32 0.0, %v6309
      %v6311 = vpop.f32.mrb[0].mxu0
      %v6312 = vpop.f32.mrb[0].mxu0
      %v6313 = vadd.f32 0.0, %v6312
      %v6314 = vpop.f32.mrb[0].mxu0
      %6315 = vmatprep.mubr.bf16.mxu0 0
      %6316 = vmatmul.mubr.bf16.gmra.mrb[0].mxu0 %v4851
      %v6317 = vpop.f32.mrb[0].mxu0
      %v6318 = vadd.f32 0.0, %v6317
      %v6319 = vpop.f32.mrb[0].mxu0
      %v6320 = vpop.f32.mrb[0].mxu0
      %v6321 = vadd.f32 0.0, %v6320
      %v6322 = vpop.f32.mrb[0].mxu0
      %6323 = vmatprep.mubr.bf16.mxu0 0
      %6324 = vmatmul.mubr.bf16.gmra.mrb[0].mxu0 %v4854
      %v6325 = vpop.f32.mrb[0].mxu0
      %v6326 = vadd.f32 0.0, %v6325
      %v6327 = vpop.f32.mrb[0].mxu0
      %v6328 = vpop.f32.mrb[0].mxu0
      %v6329 = vadd.f32 0.0, %v6328
      %v6330 = vpop.f32.mrb[0].mxu0
      %6331 = vdwg.mxu0
      %v6332 = vadd.f32 %v4516, %v6142
      %v6333 = vadd.f32 %v4517, %v6145
      %v6334 = vadd.f32 %v4518, %v6150
      %v6335 = vadd.f32 %v4519, %v6153
      %v6336 = vadd.f32 %v4520, %v6158
      %v6337 = vadd.f32 %v4521, %v6161
      %v6338 = vadd.f32 %v4522, %v6166
      %v6339 = vadd.f32 %v4523, %v6169
      %v6340 = vadd.f32 %v4524, %v6174
      %v6341 = vadd.f32 %v4525, %v6177
      %v6342 = vadd.f32 %v4526, %v6182
      %v6343 = vadd.f32 %v4527, %v6185
      %v6344 = vadd.f32 %v4528, %v6190
      %v6345 = vadd.f32 %v4529, %v6193
      %v6346 = vadd.f32 %v4530, %v6198
      %v6347 = vadd.f32 %v4531, %v6201
      %v6348 = vadd.f32 %v4532, %v6206
      %v6349 = vadd.f32 %v4533, %v6209
      %v6350 = vadd.f32 %v4534, %v6214
      %v6351 = vadd.f32 %v4535, %v6217
      %v6352 = vadd.f32 %v4536, %v6222
      %v6353 = vadd.f32 %v4537, %v6225
      %v6354 = vadd.f32 %v4538, %v6230
      %v6355 = vadd.f32 %v4539, %v6233
      %v6356 = vadd.f32 %v4540, %v6238
      %v6357 = vadd.f32 %v4541, %v6241
      %v6358 = vadd.f32 %v4542, %v6246
      %v6359 = vadd.f32 %v4543, %v6249
      %v6360 = vadd.f32 %v4544, %v6254
      %v6361 = vadd.f32 %v4545, %v6257
      %v6362 = vadd.f32 %v4546, %v6262
      %v6363 = vadd.f32 %v4547, %v6265
      %v6364 = vadd.f32 %v4548, %v6270
      %v6365 = vadd.f32 %v4549, %v6273
      %v6366 = vadd.f32 %v4550, %v6278
      %v6367 = vadd.f32 %v4551, %v6281
      %v6368 = vadd.f32 %v4552, %v6286
      %v6369 = vadd.f32 %v4553, %v6289
      %v6370 = vadd.f32 %v4554, %v6294
      %v6371 = vadd.f32 %v4555, %v6297
      %v6372 = vadd.f32 %v4556, %v6302
      %v6373 = vadd.f32 %v4557, %v6305
      %v6374 = vadd.f32 %v4558, %v6310
      %v6375 = vadd.f32 %v4559, %v6313
      %v6376 = vadd.f32 %v4560, %v6318
      %v6377 = vadd.f32 %v4561, %v6321
      %v6378 = vadd.f32 %v4562, %v6326
      %v6379 = vadd.f32 %v4563, %v6329
      %s6380 = scalar_lea.vmem %s3, 64
      %v6381 = vld [vmem:[%s6380] sm:$0xf]
      %v6382 = vld [vmem:[%s6380 + $0x4] sm:$0xf]
      %v6385 = vunpack.c.l.b16 %v6381
      %v6386 = vunpack.c.l.b16 %v6382
      %v6387 = vpack.c.b16 %v6386, %v6385
      %6389 = vmatprep.subr.bf16.mxu0 0
      %6390 = vmatpush1.bf16.msra.mxu0 %v6387
      %6391 = vmatprep.subr.bf16.mxu0 0
      %6392 = vmatpush1.bf16.msra.mxu0 0
      %6393 = vmatprep.subr.bf16.mxu0 0
      %6394 = vmatpush1.bf16.msra.mxu0 0
      %6395 = vmatprep.subr.bf16.mxu0 0
      %6396 = vmatpush1.bf16.msra.mxu0 0
      %6397 = vmatprep.subr.bf16.mxu0 0
      %6398 = vmatpush1.bf16.msra.mxu0 0
      %6399 = vmatprep.subr.bf16.mxu0 0
      %6400 = vmatpush1.bf16.msra.mxu0 0
      %6401 = vmatprep.subr.bf16.mxu0 0
      %6402 = vmatpush1.bf16.msra.mxu0 0
      %6403 = vmatprep.subr.bf16.mxu0 0
      %6404 = vmatpush1.bf16.msra.mxu0 0
      %6405 = vmatprep.subr.bf16.mxu0 0
      %6406 = vmatpush1.bf16.msra.mxu0 0
      %6407 = vmatprep.subr.bf16.mxu0 0
      %6408 = vmatpush1.bf16.msra.mxu0 0
      %6409 = vmatprep.subr.bf16.mxu0 0
      %6410 = vmatpush1.bf16.msra.mxu0 0
      %6411 = vmatprep.subr.bf16.mxu0 0
      %6412 = vmatpush1.bf16.msra.mxu0 0
      %6413 = vmatprep.subr.bf16.mxu0 0
      %6414 = vmatpush1.bf16.msra.mxu0 0
      %6415 = vmatprep.subr.bf16.mxu0 0
      %6416 = vmatpush1.bf16.msra.mxu0 0
      %6417 = vmatprep.subr.bf16.mxu0 0
      %6418 = vmatpush1.bf16.msra.mxu0 0
      %6419 = vmatprep.subr.bf16.mxu0 0
      %6420 = vmatpush1.bf16.msra.mxu0 0
      %6421 = vmatprep.mubr.bf16.mxu0 0
      %6422 = vmatmul.mubr.bf16.gmra.mrb[0].mxu0 %v5262
      %v6423 = vpop.f32.mrb[0].mxu0
      %v6424 = vadd.f32 0.0, %v6423
      %v6425 = vpop.f32.mrb[0].mxu0
      %v6426 = vpop.f32.mrb[0].mxu0
      %v6427 = vadd.f32 0.0, %v6426
      %v6428 = vpop.f32.mrb[0].mxu0
      %6429 = vmatprep.mubr.bf16.mxu0 0
      %6430 = vmatmul.mubr.bf16.gmra.mrb[0].mxu0 %v5265
      %v6431 = vpop.f32.mrb[0].mxu0
      %v6432 = vadd.f32 0.0, %v6431
      %v6433 = vpop.f32.mrb[0].mxu0
      %v6434 = vpop.f32.mrb[0].mxu0
      %v6435 = vadd.f32 0.0, %v6434
      %v6436 = vpop.f32.mrb[0].mxu0
      %6437 = vmatprep.mubr.bf16.mxu0 0
      %6438 = vmatmul.mubr.bf16.gmra.mrb[0].mxu0 %v5268
      %v6439 = vpop.f32.mrb[0].mxu0
      %v6440 = vadd.f32 0.0, %v6439
      %v6441 = vpop.f32.mrb[0].mxu0
      %v6442 = vpop.f32.mrb[0].mxu0
      %v6443 = vadd.f32 0.0, %v6442
      %v6444 = vpop.f32.mrb[0].mxu0
      %6445 = vmatprep.mubr.bf16.mxu0 0
      %6446 = vmatmul.mubr.bf16.gmra.mrb[0].mxu0 %v5271
      %v6447 = vpop.f32.mrb[0].mxu0
      %v6448 = vadd.f32 0.0, %v6447
      %v6449 = vpop.f32.mrb[0].mxu0
      %v6450 = vpop.f32.mrb[0].mxu0
      %v6451 = vadd.f32 0.0, %v6450
      %v6452 = vpop.f32.mrb[0].mxu0
      %6453 = vmatprep.mubr.bf16.mxu0 0
      %6454 = vmatmul.mubr.bf16.gmra.mrb[0].mxu0 %v5274
      %v6455 = vpop.f32.mrb[0].mxu0
      %v6456 = vadd.f32 0.0, %v6455
      %v6457 = vpop.f32.mrb[0].mxu0
      %v6458 = vpop.f32.mrb[0].mxu0
      %v6459 = vadd.f32 0.0, %v6458
      %v6460 = vpop.f32.mrb[0].mxu0
      %6461 = vmatprep.mubr.bf16.mxu0 0
      %6462 = vmatmul.mubr.bf16.gmra.mrb[0].mxu0 %v5277
      %v6463 = vpop.f32.mrb[0].mxu0
      %v6464 = vadd.f32 0.0, %v6463
      %v6465 = vpop.f32.mrb[0].mxu0
      %v6466 = vpop.f32.mrb[0].mxu0
      %v6467 = vadd.f32 0.0, %v6466
      %v6468 = vpop.f32.mrb[0].mxu0
      %6469 = vmatprep.mubr.bf16.mxu0 0
      %6470 = vmatmul.mubr.bf16.gmra.mrb[0].mxu0 %v5280
      %v6471 = vpop.f32.mrb[0].mxu0
      %v6472 = vadd.f32 0.0, %v6471
      %v6473 = vpop.f32.mrb[0].mxu0
      %v6474 = vpop.f32.mrb[0].mxu0
      %v6475 = vadd.f32 0.0, %v6474
      %v6476 = vpop.f32.mrb[0].mxu0
      %6477 = vmatprep.mubr.bf16.mxu0 0
      %6478 = vmatmul.mubr.bf16.gmra.mrb[0].mxu0 %v5283
      %v6479 = vpop.f32.mrb[0].mxu0
      %v6480 = vadd.f32 0.0, %v6479
      %v6481 = vpop.f32.mrb[0].mxu0
      %v6482 = vpop.f32.mrb[0].mxu0
      %v6483 = vadd.f32 0.0, %v6482
      %v6484 = vpop.f32.mrb[0].mxu0
      %6485 = vmatprep.mubr.bf16.mxu0 0
      %6486 = vmatmul.mubr.bf16.gmra.mrb[0].mxu0 %v5286
      %v6487 = vpop.f32.mrb[0].mxu0
      %v6488 = vadd.f32 0.0, %v6487
      %v6489 = vpop.f32.mrb[0].mxu0
      %v6490 = vpop.f32.mrb[0].mxu0
      %v6491 = vadd.f32 0.0, %v6490
      %v6492 = vpop.f32.mrb[0].mxu0
      %6493 = vmatprep.mubr.bf16.mxu0 0
      %6494 = vmatmul.mubr.bf16.gmra.mrb[0].mxu0 %v5289
      %v6495 = vpop.f32.mrb[0].mxu0
      %v6496 = vadd.f32 0.0, %v6495
      %v6497 = vpop.f32.mrb[0].mxu0
      %v6498 = vpop.f32.mrb[0].mxu0
      %v6499 = vadd.f32 0.0, %v6498
      %v6500 = vpop.f32.mrb[0].mxu0
      %6501 = vmatprep.mubr.bf16.mxu0 0
      %6502 = vmatmul.mubr.bf16.gmra.mrb[0].mxu0 %v5292
      %v6503 = vpop.f32.mrb[0].mxu0
      %v6504 = vadd.f32 0.0, %v6503
      %v6505 = vpop.f32.mrb[0].mxu0
      %v6506 = vpop.f32.mrb[0].mxu0
      %v6507 = vadd.f32 0.0, %v6506
      %v6508 = vpop.f32.mrb[0].mxu0
      %6509 = vmatprep.mubr.bf16.mxu0 0
      %6510 = vmatmul.mubr.bf16.gmra.mrb[0].mxu0 %v5295
      %v6511 = vpop.f32.mrb[0].mxu0
      %v6512 = vadd.f32 0.0, %v6511
      %v6513 = vpop.f32.mrb[0].mxu0
      %v6514 = vpop.f32.mrb[0].mxu0
      %v6515 = vadd.f32 0.0, %v6514
      %v6516 = vpop.f32.mrb[0].mxu0
      %6517 = vmatprep.mubr.bf16.mxu0 0
      %6518 = vmatmul.mubr.bf16.gmra.mrb[0].mxu0 %v5298
      %v6519 = vpop.f32.mrb[0].mxu0
      %v6520 = vadd.f32 0.0, %v6519
      %v6521 = vpop.f32.mrb[0].mxu0
      %v6522 = vpop.f32.mrb[0].mxu0
      %v6523 = vadd.f32 0.0, %v6522
      %v6524 = vpop.f32.mrb[0].mxu0
      %6525 = vmatprep.mubr.bf16.mxu0 0
      %6526 = vmatmul.mubr.bf16.gmra.mrb[0].mxu0 %v5301
      %v6527 = vpop.f32.mrb[0].mxu0
      %v6528 = vadd.f32 0.0, %v6527
      %v6529 = vpop.f32.mrb[0].mxu0
      %v6530 = vpop.f32.mrb[0].mxu0
      %v6531 = vadd.f32 0.0, %v6530
      %v6532 = vpop.f32.mrb[0].mxu0
      %6533 = vmatprep.mubr.bf16.mxu0 0
      %6534 = vmatmul.mubr.bf16.gmra.mrb[0].mxu0 %v5304
      %v6535 = vpop.f32.mrb[0].mxu0
      %v6536 = vadd.f32 0.0, %v6535
      %v6537 = vpop.f32.mrb[0].mxu0
      %v6538 = vpop.f32.mrb[0].mxu0
      %v6539 = vadd.f32 0.0, %v6538
      %v6540 = vpop.f32.mrb[0].mxu0
      %6541 = vmatprep.mubr.bf16.mxu0 0
      %6542 = vmatmul.mubr.bf16.gmra.mrb[0].mxu0 %v5307
      %v6543 = vpop.f32.mrb[0].mxu0
      %v6544 = vadd.f32 0.0, %v6543
      %v6545 = vpop.f32.mrb[0].mxu0
      %v6546 = vpop.f32.mrb[0].mxu0
      %v6547 = vadd.f32 0.0, %v6546
      %v6548 = vpop.f32.mrb[0].mxu0
      %6549 = vmatprep.mubr.bf16.mxu0 0
      %6550 = vmatmul.mubr.bf16.gmra.mrb[0].mxu0 %v5310
      %v6551 = vpop.f32.mrb[0].mxu0
      %v6552 = vadd.f32 0.0, %v6551
      %v6553 = vpop.f32.mrb[0].mxu0
      %v6554 = vpop.f32.mrb[0].mxu0
      %v6555 = vadd.f32 0.0, %v6554
      %v6556 = vpop.f32.mrb[0].mxu0
      %6557 = vmatprep.mubr.bf16.mxu0 0
      %6558 = vmatmul.mubr.bf16.gmra.mrb[0].mxu0 %v5313
      %v6559 = vpop.f32.mrb[0].mxu0
      %v6560 = vadd.f32 0.0, %v6559
      %v6561 = vpop.f32.mrb[0].mxu0
      %v6562 = vpop.f32.mrb[0].mxu0
      %v6563 = vadd.f32 0.0, %v6562
      %v6564 = vpop.f32.mrb[0].mxu0
      %6565 = vmatprep.mubr.bf16.mxu0 0
      %6566 = vmatmul.mubr.bf16.gmra.mrb[0].mxu0 %v5316
      %v6567 = vpop.f32.mrb[0].mxu0
      %v6568 = vadd.f32 0.0, %v6567
      %v6569 = vpop.f32.mrb[0].mxu0
      %v6570 = vpop.f32.mrb[0].mxu0
      %v6571 = vadd.f32 0.0, %v6570
      %v6572 = vpop.f32.mrb[0].mxu0
      %6573 = vmatprep.mubr.bf16.mxu0 0
      %6574 = vmatmul.mubr.bf16.gmra.mrb[0].mxu0 %v5319
      %v6575 = vpop.f32.mrb[0].mxu0
      %v6576 = vadd.f32 0.0, %v6575
      %v6577 = vpop.f32.mrb[0].mxu0
      %v6578 = vpop.f32.mrb[0].mxu0
      %v6579 = vadd.f32 0.0, %v6578
      %v6580 = vpop.f32.mrb[0].mxu0
      %6581 = vmatprep.mubr.bf16.mxu0 0
      %6582 = vmatmul.mubr.bf16.gmra.mrb[0].mxu0 %v5322
      %v6583 = vpop.f32.mrb[0].mxu0
      %v6584 = vadd.f32 0.0, %v6583
      %v6585 = vpop.f32.mrb[0].mxu0
      %v6586 = vpop.f32.mrb[0].mxu0
      %v6587 = vadd.f32 0.0, %v6586
      %v6588 = vpop.f32.mrb[0].mxu0
      %6589 = vmatprep.mubr.bf16.mxu0 0
      %6590 = vmatmul.mubr.bf16.gmra.mrb[0].mxu0 %v5325
      %v6591 = vpop.f32.mrb[0].mxu0
      %v6592 = vadd.f32 0.0, %v6591
      %v6593 = vpop.f32.mrb[0].mxu0
      %v6594 = vpop.f32.mrb[0].mxu0
      %v6595 = vadd.f32 0.0, %v6594
      %v6596 = vpop.f32.mrb[0].mxu0
      %6597 = vmatprep.mubr.bf16.mxu0 0
      %6598 = vmatmul.mubr.bf16.gmra.mrb[0].mxu0 %v5328
      %v6599 = vpop.f32.mrb[0].mxu0
      %v6600 = vadd.f32 0.0, %v6599
      %v6601 = vpop.f32.mrb[0].mxu0
      %v6602 = vpop.f32.mrb[0].mxu0
      %v6603 = vadd.f32 0.0, %v6602
      %v6604 = vpop.f32.mrb[0].mxu0
      %6605 = vmatprep.mubr.bf16.mxu0 0
      %6606 = vmatmul.mubr.bf16.gmra.mrb[0].mxu0 %v5331
      %v6607 = vpop.f32.mrb[0].mxu0
      %v6608 = vadd.f32 0.0, %v6607
      %v6609 = vpop.f32.mrb[0].mxu0
      %v6610 = vpop.f32.mrb[0].mxu0
      %v6611 = vadd.f32 0.0, %v6610
      %v6612 = vpop.f32.mrb[0].mxu0
      %6613 = vdwg.mxu0
      %v6614 = vadd.f32 %v6332, %v6424
      %v6615 = vadd.f32 %v6333, %v6427
      %v6616 = vadd.f32 %v6334, %v6432
      %v6617 = vadd.f32 %v6335, %v6435
      %v6618 = vadd.f32 %v6336, %v6440
      %v6619 = vadd.f32 %v6337, %v6443
      %v6620 = vadd.f32 %v6338, %v6448
      %v6621 = vadd.f32 %v6339, %v6451
      %v6622 = vadd.f32 %v6340, %v6456
      %v6623 = vadd.f32 %v6341, %v6459
      %v6624 = vadd.f32 %v6342, %v6464
      %v6625 = vadd.f32 %v6343, %v6467
      %v6626 = vadd.f32 %v6344, %v6472
      %v6627 = vadd.f32 %v6345, %v6475
      %v6628 = vadd.f32 %v6346, %v6480
      %v6629 = vadd.f32 %v6347, %v6483
      %v6630 = vadd.f32 %v6348, %v6488
      %v6631 = vadd.f32 %v6349, %v6491
      %v6632 = vadd.f32 %v6350, %v6496
      %v6633 = vadd.f32 %v6351, %v6499
      %v6634 = vadd.f32 %v6352, %v6504
      %v6635 = vadd.f32 %v6353, %v6507
      %v6636 = vadd.f32 %v6354, %v6512
      %v6637 = vadd.f32 %v6355, %v6515
      %v6638 = vadd.f32 %v6356, %v6520
      %v6639 = vadd.f32 %v6357, %v6523
      %v6640 = vadd.f32 %v6358, %v6528
      %v6641 = vadd.f32 %v6359, %v6531
      %v6642 = vadd.f32 %v6360, %v6536
      %v6643 = vadd.f32 %v6361, %v6539
      %v6644 = vadd.f32 %v6362, %v6544
      %v6645 = vadd.f32 %v6363, %v6547
      %v6646 = vadd.f32 %v6364, %v6552
      %v6647 = vadd.f32 %v6365, %v6555
      %v6648 = vadd.f32 %v6366, %v6560
      %v6649 = vadd.f32 %v6367, %v6563
      %v6650 = vadd.f32 %v6368, %v6568
      %v6651 = vadd.f32 %v6369, %v6571
      %v6652 = vadd.f32 %v6370, %v6576
      %v6653 = vadd.f32 %v6371, %v6579
      %v6654 = vadd.f32 %v6372, %v6584
      %v6655 = vadd.f32 %v6373, %v6587
      %v6656 = vadd.f32 %v6374, %v6592
      %v6657 = vadd.f32 %v6375, %v6595
      %v6658 = vadd.f32 %v6376, %v6600
      %v6659 = vadd.f32 %v6377, %v6603
      %v6660 = vadd.f32 %v6378, %v6608
      %v6661 = vadd.f32 %v6379, %v6611
      %v6662 = vrot.slane %v5558, 7
      %v6663 = vrot.slane %v5559, 7
      %v6664 = vrot.slane %v5560, 7
      %v6665 = vrot.slane %v5561, 7
      %v6666 = vrot.slane %v5562, 7
      %v6667 = vrot.slane %v5563, 7
      %v6668 = vrot.slane %v5564, 7
      %v6669 = vrot.slane %v5565, 7
      %v6670 = vrot.slane %v5566, 7
      %v6671 = vrot.slane %v5567, 7
      %v6672 = vrot.slane %v5568, 7
      %v6673 = vrot.slane %v5569, 7
      %v6674 = vrot.slane %v5570, 7
      %v6675 = vrot.slane %v5571, 7
      %v6676 = vrot.slane %v5572, 7
      %v6677 = vrot.slane %v5573, 7
      %v6678 = vrot.slane %v5574, 7
      %v6679 = vrot.slane %v5575, 7
      %v6680 = vrot.slane %v5576, 7
      %v6681 = vrot.slane %v5577, 7
      %v6682 = vrot.slane %v5578, 7
      %v6683 = vrot.slane %v5579, 7
      %v6684 = vrot.slane %v5580, 7
      %v6685 = vrot.slane %v5581, 7
      %v6686 = vrot.slane %v5582, 7
      %v6687 = vrot.slane %v5583, 7
      %v6688 = vrot.slane %v5584, 7
      %v6689 = vrot.slane %v5585, 7
      %v6690 = vrot.slane %v5586, 7
      %v6691 = vrot.slane %v5587, 7
      %v6692 = vrot.slane %v5588, 7
      %v6693 = vrot.slane %v5589, 7
      %v6694 = vrot.slane %v5590, 7
      %v6695 = vrot.slane %v5591, 7
      %v6696 = vrot.slane %v5592, 7
      %v6697 = vrot.slane %v5593, 7
      %v6698 = vrot.slane %v5594, 7
      %v6699 = vrot.slane %v5595, 7
      %v6700 = vrot.slane %v5596, 7
      %v6701 = vrot.slane %v5597, 7
      %v6702 = vrot.slane %v5598, 7
      %v6703 = vrot.slane %v5599, 7
      %v6704 = vrot.slane %v5600, 7
      %v6705 = vrot.slane %v5601, 7
      %v6706 = vrot.slane %v5602, 7
      %v6707 = vrot.slane %v5603, 7
      %v6708 = vrot.slane %v5604, 7
      %v6709 = vrot.slane %v5605, 7
      %v6710 = vlaneseq
      %v6711 = vshrl.u32 %v6710, 7
      %vm6712 = vcmp.lt.s32.totalorder %v6711, 1
      %v6713 = vsel %vm6712, %v6707, %v6708
      %v6714 = vsel %vm6712, %v6706, %v6707
      %v6715 = vsel %vm6712, %v6704, %v6705
      %v6716 = vsel %vm6712, %v6703, %v6704
      %v6717 = vsel %vm6712, %v6701, %v6702
      %v6718 = vsel %vm6712, %v6700, %v6701
      %v6719 = vsel %vm6712, %v6698, %v6699
      %v6720 = vsel %vm6712, %v6697, %v6698
      %v6721 = vsel %vm6712, %v6695, %v6696
      %v6722 = vsel %vm6712, %v6694, %v6695
      %v6723 = vsel %vm6712, %v6692, %v6693
      %v6724 = vsel %vm6712, %v6691, %v6692
      %v6725 = vsel %vm6712, %v6689, %v6690
      %v6726 = vsel %vm6712, %v6688, %v6689
      %v6727 = vsel %vm6712, %v6686, %v6687
      %v6728 = vsel %vm6712, %v6685, %v6686
      %v6729 = vsel %vm6712, %v6683, %v6684
      %v6730 = vsel %vm6712, %v6682, %v6683
      %v6731 = vsel %vm6712, %v6680, %v6681
      %v6732 = vsel %vm6712, %v6679, %v6680
      %v6733 = vsel %vm6712, %v6677, %v6678
      %v6734 = vsel %vm6712, %v6676, %v6677
      %v6735 = vsel %vm6712, %v6674, %v6675
      %v6736 = vsel %vm6712, %v6673, %v6674
      %v6737 = vsel %vm6712, %v6671, %v6672
      %v6738 = vsel %vm6712, %v6670, %v6671
      %v6739 = vsel %vm6712, %v6668, %v6669
      %v6740 = vsel %vm6712, %v6667, %v6668
      %v6741 = vsel %vm6712, %v6665, %v6666
      %v6742 = vsel %vm6712, %v6664, %v6665
      %v6743 = vsel %vm6712, %v6662, %v6663
      %v6744 = vsel %vm6712, %v6709, %v6662
      %v6745 = vadd.f32 %v6070, %v6744
      %v6746 = vadd.f32 %v6071, %v6743
      %v6747 = vadd.f32 %v6072, %v6742
      %v6748 = vadd.f32 %v6073, %v6741
      %v6749 = vadd.f32 %v6074, %v6740
      %v6750 = vadd.f32 %v6075, %v6739
      %v6751 = vadd.f32 %v6076, %v6738
      %v6752 = vadd.f32 %v6077, %v6737
      %v6753 = vadd.f32 %v6078, %v6736
      %v6754 = vadd.f32 %v6079, %v6735
      %v6755 = vadd.f32 %v6080, %v6734
      %v6756 = vadd.f32 %v6081, %v6733
      %v6757 = vadd.f32 %v6082, %v6732
      %v6758 = vadd.f32 %v6083, %v6731
      %v6759 = vadd.f32 %v6084, %v6730
      %v6760 = vadd.f32 %v6085, %v6729
      %v6761 = vadd.f32 %v6086, %v6728
      %v6762 = vadd.f32 %v6087, %v6727
      %v6763 = vadd.f32 %v6088, %v6726
      %v6764 = vadd.f32 %v6089, %v6725
      %v6765 = vadd.f32 %v6090, %v6724
      %v6766 = vadd.f32 %v6091, %v6723
      %v6767 = vadd.f32 %v6092, %v6722
      %v6768 = vadd.f32 %v6093, %v6721
      %v6769 = vadd.f32 %v6094, %v6720
      %v6770 = vadd.f32 %v6095, %v6719
      %v6771 = vadd.f32 %v6096, %v6718
      %v6772 = vadd.f32 %v6097, %v6717
      %v6773 = vadd.f32 %v6098, %v6716
      %v6774 = vadd.f32 %v6099, %v6715
      %v6775 = vadd.f32 %v6100, %v6714
      %v6776 = vadd.f32 %v6101, %v6713
      %v6777 = vrot.slane %v6614, 1
      %v6778 = vrot.slane %v6615, 1
      %v6779 = vrot.slane %v6616, 1
      %v6780 = vrot.slane %v6617, 1
      %v6781 = vrot.slane %v6618, 1
      %v6782 = vrot.slane %v6619, 1
      %v6783 = vrot.slane %v6620, 1
      %v6784 = vrot.slane %v6621, 1
      %v6785 = vrot.slane %v6622, 1
      %v6786 = vrot.slane %v6623, 1
      %v6787 = vrot.slane %v6624, 1
      %v6788 = vrot.slane %v6625, 1
      %v6789 = vrot.slane %v6626, 1
      %v6790 = vrot.slane %v6627, 1
      %v6791 = vrot.slane %v6628, 1
      %v6792 = vrot.slane %v6629, 1
      %v6793 = vrot.slane %v6630, 1
      %v6794 = vrot.slane %v6631, 1
      %v6795 = vrot.slane %v6632, 1
      %v6796 = vrot.slane %v6633, 1
      %v6797 = vrot.slane %v6634, 1
      %v6798 = vrot.slane %v6635, 1
      %v6799 = vrot.slane %v6636, 1
      %v6800 = vrot.slane %v6637, 1
      %v6801 = vrot.slane %v6638, 1
      %v6802 = vrot.slane %v6639, 1
      %v6803 = vrot.slane %v6640, 1
      %v6804 = vrot.slane %v6641, 1
      %v6805 = vrot.slane %v6642, 1
      %v6806 = vrot.slane %v6643, 1
      %v6807 = vrot.slane %v6644, 1
      %v6808 = vrot.slane %v6645, 1
      %v6809 = vrot.slane %v6646, 1
      %v6810 = vrot.slane %v6647, 1
      %v6811 = vrot.slane %v6648, 1
      %v6812 = vrot.slane %v6649, 1
      %v6813 = vrot.slane %v6650, 1
      %v6814 = vrot.slane %v6651, 1
      %v6815 = vrot.slane %v6652, 1
      %v6816 = vrot.slane %v6653, 1
      %v6817 = vrot.slane %v6654, 1
      %v6818 = vrot.slane %v6655, 1
      %v6819 = vrot.slane %v6656, 1
      %v6820 = vrot.slane %v6657, 1
      %v6821 = vrot.slane %v6658, 1
      %v6822 = vrot.slane %v6659, 1
      %v6823 = vrot.slane %v6660, 1
      %v6824 = vrot.slane %v6661, 1
      %vm6825 = vcmp.lt.s32.totalorder %v6711, 7
      %v6826 = vsel %vm6825, %v6823, %v6824
      %v6827 = vsel %vm6825, %v6822, %v6823
      %v6828 = vsel %vm6825, %v6820, %v6821
      %v6829 = vsel %vm6825, %v6819, %v6820
      %v6830 = vsel %vm6825, %v6817, %v6818
      %v6831 = vsel %vm6825, %v6816, %v6817
      %v6832 = vsel %vm6825, %v6814, %v6815
      %v6833 = vsel %vm6825, %v6813, %v6814
      %v6834 = vsel %vm6825, %v6811, %v6812
      %v6835 = vsel %vm6825, %v6810, %v6811
      %v6836 = vsel %vm6825, %v6808, %v6809
      %v6837 = vsel %vm6825, %v6807, %v6808
      %v6838 = vsel %vm6825, %v6805, %v6806
      %v6839 = vsel %vm6825, %v6804, %v6805
      %v6840 = vsel %vm6825, %v6802, %v6803
      %v6841 = vsel %vm6825, %v6801, %v6802
      %v6842 = vsel %vm6825, %v6799, %v6800
      %v6843 = vsel %vm6825, %v6798, %v6799
      %v6844 = vsel %vm6825, %v6796, %v6797
      %v6845 = vsel %vm6825, %v6795, %v6796
      %v6846 = vsel %vm6825, %v6793, %v6794
      %v6847 = vsel %vm6825, %v6792, %v6793
      %v6848 = vsel %vm6825, %v6790, %v6791
      %v6849 = vsel %vm6825, %v6789, %v6790
      %v6850 = vsel %vm6825, %v6787, %v6788
      %v6851 = vsel %vm6825, %v6786, %v6787
      %v6852 = vsel %vm6825, %v6784, %v6785
      %v6853 = vsel %vm6825, %v6783, %v6784
      %v6854 = vsel %vm6825, %v6781, %v6782
      %v6855 = vsel %vm6825, %v6780, %v6781
      %v6856 = vsel %vm6825, %v6778, %v6779
      %v6857 = vsel %vm6825, %v6777, %v6778
      %v6858 = vadd.f32 %v6745, %v6857
      %v6859 = vadd.f32 %v6746, %v6856
      %v6860 = vadd.f32 %v6747, %v6855
      %v6861 = vadd.f32 %v6748, %v6854
      %v6862 = vadd.f32 %v6749, %v6853
      %v6863 = vadd.f32 %v6750, %v6852
      %v6864 = vadd.f32 %v6751, %v6851
      %v6865 = vadd.f32 %v6752, %v6850
      %v6866 = vadd.f32 %v6753, %v6849
      %v6867 = vadd.f32 %v6754, %v6848
      %v6868 = vadd.f32 %v6755, %v6847
      %v6869 = vadd.f32 %v6756, %v6846
      %v6870 = vadd.f32 %v6757, %v6845
      %v6871 = vadd.f32 %v6758, %v6844
      %v6872 = vadd.f32 %v6759, %v6843
      %v6873 = vadd.f32 %v6760, %v6842
      %v6874 = vadd.f32 %v6761, %v6841
      %v6875 = vadd.f32 %v6762, %v6840
      %v6876 = vadd.f32 %v6763, %v6839
      %v6877 = vadd.f32 %v6764, %v6838
      %v6878 = vadd.f32 %v6765, %v6837
      %v6879 = vadd.f32 %v6766, %v6836
      %v6880 = vadd.f32 %v6767, %v6835
      %v6881 = vadd.f32 %v6768, %v6834
      %v6882 = vadd.f32 %v6769, %v6833
      %v6883 = vadd.f32 %v6770, %v6832
      %v6884 = vadd.f32 %v6771, %v6831
      %v6885 = vadd.f32 %v6772, %v6830
      %v6886 = vadd.f32 %v6773, %v6829
      %v6887 = vadd.f32 %v6774, %v6828
      %v6888 = vadd.f32 %v6775, %v6827
      %v6889 = vadd.f32 %v6776, %v6826
      %v6890 = vsub.f32 0.0, %v6858
      %v6891 = vsub.f32 0.0, %v6859
      %v6892 = vsub.f32 0.0, %v6860
      %v6893 = vsub.f32 0.0, %v6861
      %v6894 = vsub.f32 0.0, %v6862
      %v6895 = vsub.f32 0.0, %v6863
      %v6896 = vsub.f32 0.0, %v6864
      %v6897 = vsub.f32 0.0, %v6865
      %v6898 = vsub.f32 0.0, %v6866
      %v6899 = vsub.f32 0.0, %v6867
      %v6900 = vsub.f32 0.0, %v6868
      %v6901 = vsub.f32 0.0, %v6869
      %v6902 = vsub.f32 0.0, %v6870
      %v6903 = vsub.f32 0.0, %v6871
      %v6904 = vsub.f32 0.0, %v6872
      %v6905 = vsub.f32 0.0, %v6873
      %v6906 = vsub.f32 0.0, %v6874
      %v6907 = vsub.f32 0.0, %v6875
      %v6908 = vsub.f32 0.0, %v6876
      %v6909 = vsub.f32 0.0, %v6877
      %v6910 = vsub.f32 0.0, %v6878
      %v6911 = vsub.f32 0.0, %v6879
      %v6912 = vsub.f32 0.0, %v6880
      %v6913 = vsub.f32 0.0, %v6881
      %v6914 = vsub.f32 0.0, %v6882
      %v6915 = vsub.f32 0.0, %v6883
      %v6916 = vsub.f32 0.0, %v6884
      %v6917 = vsub.f32 0.0, %v6885
      %v6918 = vsub.f32 0.0, %v6886
      %v6919 = vsub.f32 0.0, %v6887
      %v6920 = vsub.f32 0.0, %v6888
      %v6921 = vsub.f32 0.0, %v6889
      %v6922 = vmul.f32 %v6890, 1.442695
      %v6923 = vpow.pop %v6922
      %v6924 = vmul.f32 %v6891, 1.442695
      %v6925 = vpow.pop %v6924
      %v6926 = vmul.f32 %v6892, 1.442695
      %v6927 = vpow.pop %v6926
      %v6928 = vmul.f32 %v6893, 1.442695
      %v6929 = vpow.pop %v6928
      %v6930 = vmul.f32 %v6894, 1.442695
      %v6931 = vpow.pop %v6930
      %v6932 = vmul.f32 %v6895, 1.442695
      %v6933 = vpow.pop %v6932
      %v6934 = vmul.f32 %v6896, 1.442695
      %v6935 = vpow.pop %v6934
      %v6936 = vmul.f32 %v6897, 1.442695
      %v6937 = vpow.pop %v6936
      %v6938 = vmul.f32 %v6898, 1.442695
      %v6939 = vpow.pop %v6938
      %v6940 = vmul.f32 %v6899, 1.442695
      %v6941 = vpow.pop %v6940
      %v6942 = vmul.f32 %v6900, 1.442695
      %v6943 = vpow.pop %v6942
      %v6944 = vmul.f32 %v6901, 1.442695
      %v6945 = vpow.pop %v6944
      %v6946 = vmul.f32 %v6902, 1.442695
      %v6947 = vpow.pop %v6946
      %v6948 = vmul.f32 %v6903, 1.442695
      %v6949 = vpow.pop %v6948
      %v6950 = vmul.f32 %v6904, 1.442695
      %v6951 = vpow.pop %v6950
      %v6952 = vmul.f32 %v6905, 1.442695
      %v6953 = vpow.pop %v6952
      %v6954 = vmul.f32 %v6906, 1.442695
      %v6955 = vpow.pop %v6954
      %v6956 = vmul.f32 %v6907, 1.442695
      %v6957 = vpow.pop %v6956
      %v6958 = vmul.f32 %v6908, 1.442695
      %v6959 = vpow.pop %v6958
      %v6960 = vmul.f32 %v6909, 1.442695
      %v6961 = vpow.pop %v6960
      %v6962 = vmul.f32 %v6910, 1.442695
      %v6963 = vpow.pop %v6962
      %v6964 = vmul.f32 %v6911, 1.442695
      %v6965 = vpow.pop %v6964
      %v6966 = vmul.f32 %v6912, 1.442695
      %v6967 = vpow.pop %v6966
      %v6968 = vmul.f32 %v6913, 1.442695
      %v6969 = vpow.pop %v6968
      %v6970 = vmul.f32 %v6914, 1.442695
      %v6971 = vpow.pop %v6970
      %v6972 = vmul.f32 %v6915, 1.442695
      %v6973 = vpow.pop %v6972
      %v6974 = vmul.f32 %v6916, 1.442695
      %v6975 = vpow.pop %v6974
      %v6976 = vmul.f32 %v6917, 1.442695
      %v6977 = vpow.pop %v6976
      %v6978 = vmul.f32 %v6918, 1.442695
      %v6979 = vpow.pop %v6978
      %v6980 = vmul.f32 %v6919, 1.442695
      %v6981 = vpow.pop %v6980
      %v6982 = vmul.f32 %v6920, 1.442695
      %v6983 = vpow.pop %v6982
      %v6984 = vmul.f32 %v6921, 1.442695
      %v6985 = vpow.pop %v6984
      %v6986 = vadd.f32 %v6923, 1.0
      %v6987 = vadd.f32 %v6925, 1.0
      %v6988 = vadd.f32 %v6927, 1.0
      %v6989 = vadd.f32 %v6929, 1.0
      %v6990 = vadd.f32 %v6931, 1.0
      %v6991 = vadd.f32 %v6933, 1.0
      %v6992 = vadd.f32 %v6935, 1.0
      %v6993 = vadd.f32 %v6937, 1.0
      %v6994 = vadd.f32 %v6939, 1.0
      %v6995 = vadd.f32 %v6941, 1.0
      %v6996 = vadd.f32 %v6943, 1.0
      %v6997 = vadd.f32 %v6945, 1.0
      %v6998 = vadd.f32 %v6947, 1.0
      %v6999 = vadd.f32 %v6949, 1.0
      %v7000 = vadd.f32 %v6951, 1.0
      %v7001 = vadd.f32 %v6953, 1.0
      %v7002 = vadd.f32 %v6955, 1.0
      %v7003 = vadd.f32 %v6957, 1.0
      %v7004 = vadd.f32 %v6959, 1.0
      %v7005 = vadd.f32 %v6961, 1.0
      %v7006 = vadd.f32 %v6963, 1.0
      %v7007 = vadd.f32 %v6965, 1.0
      %v7008 = vadd.f32 %v6967, 1.0
      %v7009 = vadd.f32 %v6969, 1.0
      %v7010 = vadd.f32 %v6971, 1.0
      %v7011 = vadd.f32 %v6973, 1.0
      %v7012 = vadd.f32 %v6975, 1.0
      %v7013 = vadd.f32 %v6977, 1.0
      %v7014 = vadd.f32 %v6979, 1.0
      %v7015 = vadd.f32 %v6981, 1.0
      %v7016 = vadd.f32 %v6983, 1.0
      %v7017 = vadd.f32 %v6985, 1.0
      %v7018 = vrcp.pop %v6986
      %v7019 = vmul.f32 1.0, %v7018
      %v7020 = vrcp.pop %v6987
      %v7021 = vmul.f32 1.0, %v7020
      %v7022 = vrcp.pop %v6988
      %v7023 = vmul.f32 1.0, %v7022
      %v7024 = vrcp.pop %v6989
      %v7025 = vmul.f32 1.0, %v7024
      %v7026 = vrcp.pop %v6990
      %v7027 = vmul.f32 1.0, %v7026
      %v7028 = vrcp.pop %v6991
      %v7029 = vmul.f32 1.0, %v7028
      %v7030 = vrcp.pop %v6992
      %v7031 = vmul.f32 1.0, %v7030
      %v7032 = vrcp.pop %v6993
      %v7033 = vmul.f32 1.0, %v7032
      %v7034 = vrcp.pop %v6994
      %v7035 = vmul.f32 1.0, %v7034
      %v7036 = vrcp.pop %v6995
      %v7037 = vmul.f32 1.0, %v7036
      %v7038 = vrcp.pop %v6996
      %v7039 = vmul.f32 1.0, %v7038
      %v7040 = vrcp.pop %v6997
      %v7041 = vmul.f32 1.0, %v7040
      %v7042 = vrcp.pop %v6998
      %v7043 = vmul.f32 1.0, %v7042
      %v7044 = vrcp.pop %v6999
      %v7045 = vmul.f32 1.0, %v7044
      %v7046 = vrcp.pop %v7000
      %v7047 = vmul.f32 1.0, %v7046
      %v7048 = vrcp.pop %v7001
      %v7049 = vmul.f32 1.0, %v7048
      %v7050 = vrcp.pop %v7002
      %v7051 = vmul.f32 1.0, %v7050
      %v7052 = vrcp.pop %v7003
      %v7053 = vmul.f32 1.0, %v7052
      %v7054 = vrcp.pop %v7004
      %v7055 = vmul.f32 1.0, %v7054
      %v7056 = vrcp.pop %v7005
      %v7057 = vmul.f32 1.0, %v7056
      %v7058 = vrcp.pop %v7006
      %v7059 = vmul.f32 1.0, %v7058
      %v7060 = vrcp.pop %v7007
      %v7061 = vmul.f32 1.0, %v7060
      %v7062 = vrcp.pop %v7008
      %v7063 = vmul.f32 1.0, %v7062
      %v7064 = vrcp.pop %v7009
      %v7065 = vmul.f32 1.0, %v7064
      %v7066 = vrcp.pop %v7010
      %v7067 = vmul.f32 1.0, %v7066
      %v7068 = vrcp.pop %v7011
      %v7069 = vmul.f32 1.0, %v7068
      %v7070 = vrcp.pop %v7012
      %v7071 = vmul.f32 1.0, %v7070
      %v7072 = vrcp.pop %v7013
      %v7073 = vmul.f32 1.0, %v7072
      %v7074 = vrcp.pop %v7014
      %v7075 = vmul.f32 1.0, %v7074
      %v7076 = vrcp.pop %v7015
      %v7077 = vmul.f32 1.0, %v7076
      %v7078 = vrcp.pop %v7016
      %v7079 = vmul.f32 1.0, %v7078
      %v7080 = vrcp.pop %v7017
      %v7081 = vmul.f32 1.0, %v7080
      %v7082 = vtanh.pop %v6858
      %v7083 = vtanh.pop %v6859
      %v7084 = vtanh.pop %v6860
      %v7085 = vtanh.pop %v6861
      %v7086 = vtanh.pop %v6862
      %v7087 = vtanh.pop %v6863
      %v7088 = vtanh.pop %v6864
      %v7089 = vtanh.pop %v6865
      %v7090 = vtanh.pop %v6866
      %v7091 = vtanh.pop %v6867
      %v7092 = vtanh.pop %v6868
      %v7093 = vtanh.pop %v6869
      %v7094 = vtanh.pop %v6870
      %v7095 = vtanh.pop %v6871
      %v7096 = vtanh.pop %v6872
      %v7097 = vtanh.pop %v6873
      %v7098 = vtanh.pop %v6874
      %v7099 = vtanh.pop %v6875
      %v7100 = vtanh.pop %v6876
      %v7101 = vtanh.pop %v6877
      %v7102 = vtanh.pop %v6878
      %v7103 = vtanh.pop %v6879
      %v7104 = vtanh.pop %v6880
      %v7105 = vtanh.pop %v6881
      %v7106 = vtanh.pop %v6882
      %v7107 = vtanh.pop %v6883
      %v7108 = vtanh.pop %v6884
      %v7109 = vtanh.pop %v6885
      %v7110 = vtanh.pop %v6886
      %v7111 = vtanh.pop %v6887
      %v7112 = vtanh.pop %v6888
      %v7113 = vtanh.pop %v6889
      %v7114 = vmul.f32 %v7019, %v278
      %v7115 = vmul.f32 %v7021, %v279
      %v7116 = vmul.f32 %v7023, %v280
      %v7117 = vmul.f32 %v7025, %v281
      %v7118 = vmul.f32 %v7027, %v282
      %v7119 = vmul.f32 %v7029, %v283
      %v7120 = vmul.f32 %v7031, %v284
      %v7121 = vmul.f32 %v7033, %v285
      %v7122 = vmul.f32 %v7035, %v286
      %v7123 = vmul.f32 %v7037, %v287
      %v7124 = vmul.f32 %v7039, %v288
      %v7125 = vmul.f32 %v7041, %v289
      %v7126 = vmul.f32 %v7043, %v290
      %v7127 = vmul.f32 %v7045, %v291
      %v7128 = vmul.f32 %v7047, %v292
      %v7129 = vmul.f32 %v7049, %v293
      %v7130 = vmul.f32 %v7051, %v294
      %v7131 = vmul.f32 %v7053, %v295
      %v7132 = vmul.f32 %v7055, %v296
      %v7133 = vmul.f32 %v7057, %v297
      %v7134 = vmul.f32 %v7059, %v298
      %v7135 = vmul.f32 %v7061, %v299
      %v7136 = vmul.f32 %v7063, %v300
      %v7137 = vmul.f32 %v7065, %v301
      %v7138 = vmul.f32 %v7067, %v302
      %v7139 = vmul.f32 %v7069, %v303
      %v7140 = vmul.f32 %v7071, %v304
      %v7141 = vmul.f32 %v7073, %v305
      %v7142 = vmul.f32 %v7075, %v306
      %v7143 = vmul.f32 %v7077, %v307
      %v7144 = vmul.f32 %v7079, %v308
      %v7145 = vmul.f32 %v7081, %v309
      %v7146 = vsub.f32 1.0, %v7019
      %v7147 = vsub.f32 1.0, %v7021
      %v7148 = vsub.f32 1.0, %v7023
      %v7149 = vsub.f32 1.0, %v7025
      %v7150 = vsub.f32 1.0, %v7027
      %v7151 = vsub.f32 1.0, %v7029
      %v7152 = vsub.f32 1.0, %v7031
      %v7153 = vsub.f32 1.0, %v7033
      %v7154 = vsub.f32 1.0, %v7035
      %v7155 = vsub.f32 1.0, %v7037
      %v7156 = vsub.f32 1.0, %v7039
      %v7157 = vsub.f32 1.0, %v7041
      %v7158 = vsub.f32 1.0, %v7043
      %v7159 = vsub.f32 1.0, %v7045
      %v7160 = vsub.f32 1.0, %v7047
      %v7161 = vsub.f32 1.0, %v7049
      %v7162 = vsub.f32 1.0, %v7051
      %v7163 = vsub.f32 1.0, %v7053
      %v7164 = vsub.f32 1.0, %v7055
      %v7165 = vsub.f32 1.0, %v7057
      %v7166 = vsub.f32 1.0, %v7059
      %v7167 = vsub.f32 1.0, %v7061
      %v7168 = vsub.f32 1.0, %v7063
      %v7169 = vsub.f32 1.0, %v7065
      %v7170 = vsub.f32 1.0, %v7067
      %v7171 = vsub.f32 1.0, %v7069
      %v7172 = vsub.f32 1.0, %v7071
      %v7173 = vsub.f32 1.0, %v7073
      %v7174 = vsub.f32 1.0, %v7075
      %v7175 = vsub.f32 1.0, %v7077
      %v7176 = vsub.f32 1.0, %v7079
      %v7177 = vsub.f32 1.0, %v7081
      %7210 = vrot.lane.b32.xlu0 %v7146, 112
      %v7211 = vpop.permute.xlu0 %7210
      %7212 = vrot.lane.b32.xlu0 %v7147, 112
      %v7213 = vpop.permute.xlu0 %7212
      %7214 = vrot.lane.b32.xlu0 %v7148, 112
      %v7215 = vpop.permute.xlu0 %7214
      %7216 = vrot.lane.b32.xlu0 %v7149, 112
      %v7217 = vpop.permute.xlu0 %7216
      %7218 = vrot.lane.b32.xlu0 %v7150, 112
      %v7219 = vpop.permute.xlu0 %7218
      %7220 = vrot.lane.b32.xlu0 %v7151, 112
      %v7221 = vpop.permute.xlu0 %7220
      %7222 = vrot.lane.b32.xlu0 %v7152, 112
      %v7223 = vpop.permute.xlu0 %7222
      %7224 = vrot.lane.b32.xlu0 %v7153, 112
      %v7225 = vpop.permute.xlu0 %7224
      %7226 = vrot.lane.b32.xlu0 %v7154, 112
      %v7227 = vpop.permute.xlu0 %7226
      %7228 = vrot.lane.b32.xlu0 %v7155, 112
      %v7229 = vpop.permute.xlu0 %7228
      %7230 = vrot.lane.b32.xlu0 %v7156, 112
      %v7231 = vpop.permute.xlu0 %7230
      %7232 = vrot.lane.b32.xlu0 %v7157, 112
      %v7233 = vpop.permute.xlu0 %7232
      %7234 = vrot.lane.b32.xlu0 %v7158, 112
      %v7235 = vpop.permute.xlu0 %7234
      %7236 = vrot.lane.b32.xlu0 %v7159, 112
      %v7237 = vpop.permute.xlu0 %7236
      %7238 = vrot.lane.b32.xlu0 %v7160, 112
      %v7239 = vpop.permute.xlu0 %7238
      %7240 = vrot.lane.b32.xlu0 %v7161, 112
      %v7241 = vpop.permute.xlu0 %7240
      %7242 = vrot.lane.b32.xlu0 %v7162, 112
      %v7243 = vpop.permute.xlu0 %7242
      %7244 = vrot.lane.b32.xlu0 %v7163, 112
      %v7245 = vpop.permute.xlu0 %7244
      %7246 = vrot.lane.b32.xlu0 %v7164, 112
      %v7247 = vpop.permute.xlu0 %7246
      %7248 = vrot.lane.b32.xlu0 %v7165, 112
      %v7249 = vpop.permute.xlu0 %7248
      %7250 = vrot.lane.b32.xlu0 %v7166, 112
      %v7251 = vpop.permute.xlu0 %7250
      %7252 = vrot.lane.b32.xlu0 %v7167, 112
      %v7253 = vpop.permute.xlu0 %7252
      %7254 = vrot.lane.b32.xlu0 %v7168, 112
      %v7255 = vpop.permute.xlu0 %7254
      %7256 = vrot.lane.b32.xlu0 %v7169, 112
      %v7257 = vpop.permute.xlu0 %7256
      %7258 = vrot.lane.b32.xlu0 %v7170, 112
      %v7259 = vpop.permute.xlu0 %7258
      %7260 = vrot.lane.b32.xlu0 %v7171, 112
      %v7261 = vpop.permute.xlu0 %7260
      %7262 = vrot.lane.b32.xlu0 %v7172, 112
      %v7263 = vpop.permute.xlu0 %7262
      %7264 = vrot.lane.b32.xlu0 %v7173, 112
      %v7265 = vpop.permute.xlu0 %7264
      %7266 = vrot.lane.b32.xlu0 %v7174, 112
      %v7267 = vpop.permute.xlu0 %7266
      %7268 = vrot.lane.b32.xlu0 %v7175, 112
      %v7269 = vpop.permute.xlu0 %7268
      %7270 = vrot.lane.b32.xlu0 %v7176, 112
      %v7271 = vpop.permute.xlu0 %7270
      %7272 = vrot.lane.b32.xlu0 %v7177, 112
      %v7273 = vpop.permute.xlu0 %7272
      %v7306 = vmul.f32 %v7114, %v7211
      %v7307 = vmul.f32 %v7115, %v7213
      %v7308 = vmul.f32 %v7116, %v7215
      %v7309 = vmul.f32 %v7117, %v7217
      %v7310 = vmul.f32 %v7118, %v7219
      %v7311 = vmul.f32 %v7119, %v7221
      %v7312 = vmul.f32 %v7120, %v7223
      %v7313 = vmul.f32 %v7121, %v7225
      %v7314 = vmul.f32 %v7122, %v7227
      %v7315 = vmul.f32 %v7123, %v7229
      %v7316 = vmul.f32 %v7124, %v7231
      %v7317 = vmul.f32 %v7125, %v7233
      %v7318 = vmul.f32 %v7126, %v7235
      %v7319 = vmul.f32 %v7127, %v7237
      %v7320 = vmul.f32 %v7128, %v7239
      %v7321 = vmul.f32 %v7129, %v7241
      %v7322 = vmul.f32 %v7130, %v7243
      %v7323 = vmul.f32 %v7131, %v7245
      %v7324 = vmul.f32 %v7132, %v7247
      %v7325 = vmul.f32 %v7133, %v7249
      %v7326 = vmul.f32 %v7134, %v7251
      %v7327 = vmul.f32 %v7135, %v7253
      %v7328 = vmul.f32 %v7136, %v7255
      %v7329 = vmul.f32 %v7137, %v7257
      %v7330 = vmul.f32 %v7138, %v7259
      %v7331 = vmul.f32 %v7139, %v7261
      %v7332 = vmul.f32 %v7140, %v7263
      %v7333 = vmul.f32 %v7141, %v7265
      %v7334 = vmul.f32 %v7142, %v7267
      %v7335 = vmul.f32 %v7143, %v7269
      %v7336 = vmul.f32 %v7144, %v7271
      %v7337 = vmul.f32 %v7145, %v7273
      %7370 = vrot.lane.b32.xlu0 %v7082, 112
      %v7371 = vpop.permute.xlu0 %7370
      %7372 = vrot.lane.b32.xlu0 %v7083, 112
      %v7373 = vpop.permute.xlu0 %7372
      %7374 = vrot.lane.b32.xlu0 %v7084, 112
      %v7375 = vpop.permute.xlu0 %7374
      %7376 = vrot.lane.b32.xlu0 %v7085, 112
      %v7377 = vpop.permute.xlu0 %7376
      %7378 = vrot.lane.b32.xlu0 %v7086, 112
      %v7379 = vpop.permute.xlu0 %7378
      %7380 = vrot.lane.b32.xlu0 %v7087, 112
      %v7381 = vpop.permute.xlu0 %7380
      %7382 = vrot.lane.b32.xlu0 %v7088, 112
      %v7383 = vpop.permute.xlu0 %7382
      %7384 = vrot.lane.b32.xlu0 %v7089, 112
      %v7385 = vpop.permute.xlu0 %7384
      %7386 = vrot.lane.b32.xlu0 %v7090, 112
      %v7387 = vpop.permute.xlu0 %7386
      %7388 = vrot.lane.b32.xlu0 %v7091, 112
      %v7389 = vpop.permute.xlu0 %7388
      %7390 = vrot.lane.b32.xlu0 %v7092, 112
      %v7391 = vpop.permute.xlu0 %7390
      %7392 = vrot.lane.b32.xlu0 %v7093, 112
      %v7393 = vpop.permute.xlu0 %7392
      %7394 = vrot.lane.b32.xlu0 %v7094, 112
      %v7395 = vpop.permute.xlu0 %7394
      %7396 = vrot.lane.b32.xlu0 %v7095, 112
      %v7397 = vpop.permute.xlu0 %7396
      %7398 = vrot.lane.b32.xlu0 %v7096, 112
      %v7399 = vpop.permute.xlu0 %7398
      %7400 = vrot.lane.b32.xlu0 %v7097, 112
      %v7401 = vpop.permute.xlu0 %7400
      %7402 = vrot.lane.b32.xlu0 %v7098, 112
      %v7403 = vpop.permute.xlu0 %7402
      %7404 = vrot.lane.b32.xlu0 %v7099, 112
      %v7405 = vpop.permute.xlu0 %7404
      %7406 = vrot.lane.b32.xlu0 %v7100, 112
      %v7407 = vpop.permute.xlu0 %7406
      %7408 = vrot.lane.b32.xlu0 %v7101, 112
      %v7409 = vpop.permute.xlu0 %7408
      %7410 = vrot.lane.b32.xlu0 %v7102, 112
      %v7411 = vpop.permute.xlu0 %7410
      %7412 = vrot.lane.b32.xlu0 %v7103, 112
      %v7413 = vpop.permute.xlu0 %7412
      %7414 = vrot.lane.b32.xlu0 %v7104, 112
      %v7415 = vpop.permute.xlu0 %7414
      %7416 = vrot.lane.b32.xlu0 %v7105, 112
      %v7417 = vpop.permute.xlu0 %7416
      %7418 = vrot.lane.b32.xlu0 %v7106, 112
      %v7419 = vpop.permute.xlu0 %7418
      %7420 = vrot.lane.b32.xlu0 %v7107, 112
      %v7421 = vpop.permute.xlu0 %7420
      %7422 = vrot.lane.b32.xlu0 %v7108, 112
      %v7423 = vpop.permute.xlu0 %7422
      %7424 = vrot.lane.b32.xlu0 %v7109, 112
      %v7425 = vpop.permute.xlu0 %7424
      %7426 = vrot.lane.b32.xlu0 %v7110, 112
      %v7427 = vpop.permute.xlu0 %7426
      %7428 = vrot.lane.b32.xlu0 %v7111, 112
      %v7429 = vpop.permute.xlu0 %7428
      %7430 = vrot.lane.b32.xlu0 %v7112, 112
      %v7431 = vpop.permute.xlu0 %7430
      %7432 = vrot.lane.b32.xlu0 %v7113, 112
      %v7433 = vpop.permute.xlu0 %7432
      %v7466 = vmul.f32 %v7019, %v7371
      %v7467 = vmul.f32 %v7021, %v7373
      %v7468 = vmul.f32 %v7023, %v7375
      %v7469 = vmul.f32 %v7025, %v7377
      %v7470 = vmul.f32 %v7027, %v7379
      %v7471 = vmul.f32 %v7029, %v7381
      %v7472 = vmul.f32 %v7031, %v7383
      %v7473 = vmul.f32 %v7033, %v7385
      %v7474 = vmul.f32 %v7035, %v7387
      %v7475 = vmul.f32 %v7037, %v7389
      %v7476 = vmul.f32 %v7039, %v7391
      %v7477 = vmul.f32 %v7041, %v7393
      %v7478 = vmul.f32 %v7043, %v7395
      %v7479 = vmul.f32 %v7045, %v7397
      %v7480 = vmul.f32 %v7047, %v7399
      %v7481 = vmul.f32 %v7049, %v7401
      %v7482 = vmul.f32 %v7051, %v7403
      %v7483 = vmul.f32 %v7053, %v7405
      %v7484 = vmul.f32 %v7055, %v7407
      %v7485 = vmul.f32 %v7057, %v7409
      %v7486 = vmul.f32 %v7059, %v7411
      %v7487 = vmul.f32 %v7061, %v7413
      %v7488 = vmul.f32 %v7063, %v7415
      %v7489 = vmul.f32 %v7065, %v7417
      %v7490 = vmul.f32 %v7067, %v7419
      %v7491 = vmul.f32 %v7069, %v7421
      %v7492 = vmul.f32 %v7071, %v7423
      %v7493 = vmul.f32 %v7073, %v7425
      %v7494 = vmul.f32 %v7075, %v7427
      %v7495 = vmul.f32 %v7077, %v7429
      %v7496 = vmul.f32 %v7079, %v7431
      %v7497 = vmul.f32 %v7081, %v7433
      %7530 = vrot.lane.b32.xlu0 %v7466, 112
      %v7531 = vpop.permute.xlu0 %7530
      %7532 = vrot.lane.b32.xlu0 %v7467, 112
      %v7533 = vpop.permute.xlu0 %7532
      %7534 = vrot.lane.b32.xlu0 %v7468, 112
      %v7535 = vpop.permute.xlu0 %7534
      %7536 = vrot.lane.b32.xlu0 %v7469, 112
      %v7537 = vpop.permute.xlu0 %7536
      %7538 = vrot.lane.b32.xlu0 %v7470, 112
      %v7539 = vpop.permute.xlu0 %7538
      %7540 = vrot.lane.b32.xlu0 %v7471, 112
      %v7541 = vpop.permute.xlu0 %7540
      %7542 = vrot.lane.b32.xlu0 %v7472, 112
      %v7543 = vpop.permute.xlu0 %7542
      %7544 = vrot.lane.b32.xlu0 %v7473, 112
      %v7545 = vpop.permute.xlu0 %7544
      %7546 = vrot.lane.b32.xlu0 %v7474, 112
      %v7547 = vpop.permute.xlu0 %7546
      %7548 = vrot.lane.b32.xlu0 %v7475, 112
      %v7549 = vpop.permute.xlu0 %7548
      %7550 = vrot.lane.b32.xlu0 %v7476, 112
      %v7551 = vpop.permute.xlu0 %7550
      %7552 = vrot.lane.b32.xlu0 %v7477, 112
      %v7553 = vpop.permute.xlu0 %7552
      %7554 = vrot.lane.b32.xlu0 %v7478, 112
      %v7555 = vpop.permute.xlu0 %7554
      %7556 = vrot.lane.b32.xlu0 %v7479, 112
      %v7557 = vpop.permute.xlu0 %7556
      %7558 = vrot.lane.b32.xlu0 %v7480, 112
      %v7559 = vpop.permute.xlu0 %7558
      %7560 = vrot.lane.b32.xlu0 %v7481, 112
      %v7561 = vpop.permute.xlu0 %7560
      %7562 = vrot.lane.b32.xlu0 %v7482, 112
      %v7563 = vpop.permute.xlu0 %7562
      %7564 = vrot.lane.b32.xlu0 %v7483, 112
      %v7565 = vpop.permute.xlu0 %7564
      %7566 = vrot.lane.b32.xlu0 %v7484, 112
      %v7567 = vpop.permute.xlu0 %7566
      %7568 = vrot.lane.b32.xlu0 %v7485, 112
      %v7569 = vpop.permute.xlu0 %7568
      %7570 = vrot.lane.b32.xlu0 %v7486, 112
      %v7571 = vpop.permute.xlu0 %7570
      %7572 = vrot.lane.b32.xlu0 %v7487, 112
      %v7573 = vpop.permute.xlu0 %7572
      %7574 = vrot.lane.b32.xlu0 %v7488, 112
      %v7575 = vpop.permute.xlu0 %7574
      %7576 = vrot.lane.b32.xlu0 %v7489, 112
      %v7577 = vpop.permute.xlu0 %7576
      %7578 = vrot.lane.b32.xlu0 %v7490, 112
      %v7579 = vpop.permute.xlu0 %7578
      %7580 = vrot.lane.b32.xlu0 %v7491, 112
      %v7581 = vpop.permute.xlu0 %7580
      %7582 = vrot.lane.b32.xlu0 %v7492, 112
      %v7583 = vpop.permute.xlu0 %7582
      %7584 = vrot.lane.b32.xlu0 %v7493, 112
      %v7585 = vpop.permute.xlu0 %7584
      %7586 = vrot.lane.b32.xlu0 %v7494, 112
      %v7587 = vpop.permute.xlu0 %7586
      %7588 = vrot.lane.b32.xlu0 %v7495, 112
      %v7589 = vpop.permute.xlu0 %7588
      %7590 = vrot.lane.b32.xlu0 %v7496, 112
      %v7591 = vpop.permute.xlu0 %7590
      %7592 = vrot.lane.b32.xlu0 %v7497, 112
      %v7593 = vpop.permute.xlu0 %7592
      %v7626 = vadd.f32 %v7306, %v7531
      %v7627 = vadd.f32 %v7307, %v7533
      %v7628 = vadd.f32 %v7308, %v7535
      %v7629 = vadd.f32 %v7309, %v7537
      %v7630 = vadd.f32 %v7310, %v7539
      %v7631 = vadd.f32 %v7311, %v7541
      %v7632 = vadd.f32 %v7312, %v7543
      %v7633 = vadd.f32 %v7313, %v7545
      %v7634 = vadd.f32 %v7314, %v7547
      %v7635 = vadd.f32 %v7315, %v7549
      %v7636 = vadd.f32 %v7316, %v7551
      %v7637 = vadd.f32 %v7317, %v7553
      %v7638 = vadd.f32 %v7318, %v7555
      %v7639 = vadd.f32 %v7319, %v7557
      %v7640 = vadd.f32 %v7320, %v7559
      %v7641 = vadd.f32 %v7321, %v7561
      %v7642 = vadd.f32 %v7322, %v7563
      %v7643 = vadd.f32 %v7323, %v7565
      %v7644 = vadd.f32 %v7324, %v7567
      %v7645 = vadd.f32 %v7325, %v7569
      %v7646 = vadd.f32 %v7326, %v7571
      %v7647 = vadd.f32 %v7327, %v7573
      %v7648 = vadd.f32 %v7328, %v7575
      %v7649 = vadd.f32 %v7329, %v7577
      %v7650 = vadd.f32 %v7330, %v7579
      %v7651 = vadd.f32 %v7331, %v7581
      %v7652 = vadd.f32 %v7332, %v7583
      %v7653 = vadd.f32 %v7333, %v7585
      %v7654 = vadd.f32 %v7334, %v7587
      %v7655 = vadd.f32 %v7335, %v7589
      %v7656 = vadd.f32 %v7336, %v7591
      %v7657 = vadd.f32 %v7337, %v7593
      %7658 = vst.msk [vmem:[%s244] sm:$0xff] %vm788, %v7626
      %7659 = vst.msk [vmem:[%s244 + $0x8] sm:$0xff] %vm788, %v7627
      %7660 = vst.msk [vmem:[%s244 + $0x10] sm:$0xff] %vm788, %v7628
      %7661 = vst.msk [vmem:[%s244 + $0x18] sm:$0xff] %vm788, %v7629
      %7662 = vst.msk [vmem:[%s244 + $0x20] sm:$0xff] %vm788, %v7630
      %7663 = vst.msk [vmem:[%s244 + $0x28] sm:$0xff] %vm788, %v7631
      %7664 = vst.msk [vmem:[%s244 + $0x30] sm:$0xff] %vm788, %v7632
      %7665 = vst.msk [vmem:[%s244 + $0x38] sm:$0xff] %vm788, %v7633
      %7666 = vst.msk [vmem:[%s244 + $0x40] sm:$0xff] %vm788, %v7634
      %7667 = vst.msk [vmem:[%s244 + $0x48] sm:$0xff] %vm788, %v7635
      %7668 = vst.msk [vmem:[%s244 + $0x50] sm:$0xff] %vm788, %v7636
      %7669 = vst.msk [vmem:[%s244 + $0x58] sm:$0xff] %vm788, %v7637
      %7670 = vst.msk [vmem:[%s244 + $0x60] sm:$0xff] %vm788, %v7638
      %7671 = vst.msk [vmem:[%s244 + $0x68] sm:$0xff] %vm788, %v7639
      %7672 = vst.msk [vmem:[%s244 + $0x70] sm:$0xff] %vm788, %v7640
      %7673 = vst.msk [vmem:[%s244 + $0x78] sm:$0xff] %vm788, %v7641
      %7674 = vst.msk [vmem:[%s244 + $0x80] sm:$0xff] %vm788, %v7642
      %7675 = vst.msk [vmem:[%s244 + $0x88] sm:$0xff] %vm788, %v7643
      %7676 = vst.msk [vmem:[%s244 + $0x90] sm:$0xff] %vm788, %v7644
      %7677 = vst.msk [vmem:[%s244 + $0x98] sm:$0xff] %vm788, %v7645
      %7678 = vst.msk [vmem:[%s244 + $0xa0] sm:$0xff] %vm788, %v7646
      %7679 = vst.msk [vmem:[%s244 + $0xa8] sm:$0xff] %vm788, %v7647
      %7680 = vst.msk [vmem:[%s244 + $0xb0] sm:$0xff] %vm788, %v7648
      %7681 = vst.msk [vmem:[%s244 + $0xb8] sm:$0xff] %vm788, %v7649
      %7682 = vst.msk [vmem:[%s244 + $0xc0] sm:$0xff] %vm788, %v7650
      %7683 = vst.msk [vmem:[%s244 + $0xc8] sm:$0xff] %vm788, %v7651
      %7684 = vst.msk [vmem:[%s244 + $0xd0] sm:$0xff] %vm788, %v7652
      %7685 = vst.msk [vmem:[%s244 + $0xd8] sm:$0xff] %vm788, %v7653
      %7686 = vst.msk [vmem:[%s244 + $0xe0] sm:$0xff] %vm788, %v7654
      %7687 = vst.msk [vmem:[%s244 + $0xe8] sm:$0xff] %vm788, %v7655
      %7688 = vst.msk [vmem:[%s244 + $0xf0] sm:$0xff] %vm788, %v7656
      %7689 = vst.msk [vmem:[%s244 + $0xf8] sm:$0xff] %vm788, %v7657
      %p7690 = scmp.lt.s32.totalorder %s16, 3
      %s7691 = scalar_select %p7690, %s16, 3
      %s7692 = smul.addr %s7691, 32
      %s7693 = smul.addr %s7692, 8
      %s7694 = scalar_lea.vmem %s5, %s7693
      // Predicated region
      $region41: #{hidden_reinforcer_forward.1} parent=39 // pred_check
        %p7695 = pneg %p149
      $region42: #{hidden_reinforcer_forward.1} parent=39 // pred_check_branch
        %7697 = sbr.rel (%p7695) target = $region44
      $region43: #{hidden_reinforcer_forward.1} parent=39 // pred_region
        _
      $region44: #{hidden_reinforcer_forward.1} parent=39 // pred_fallthru
        _
    $region40: #{hidden_reinforcer_forward.1} parent=5 // pred_fallthru
      _
    %p7698 = scmp.le.s32.totalorder 2, %s11
    // Predicated region
    $region45: #{hidden_reinforcer_forward.1} parent=5 // pred_check
      %p7699 = pneg %p7698
    $region46: #{hidden_reinforcer_forward.1} parent=5 // pred_check_branch
      %7701 = sbr.rel (%p7699) target = $region48
    $region47: #{hidden_reinforcer_forward.1} parent=5 // pred_region
      %s7702 = ssub.s32 %s11, 2
      // Predicated region
      $region49: #{hidden_reinforcer_forward.1} parent=47 // pred_check
        %p7703 = pneg %p155
      $region50: #{hidden_reinforcer_forward.1} parent=47 // pred_check_branch
        %7705 = sbr.rel (%p7703) target = $region52
      $region51: #{hidden_reinforcer_forward.1} parent=47 // pred_region
        %p7706 = scmp.lt.s32.totalorder %s17, 3
        %s7707 = scalar_select %p7706, %s17, 3
        %s7708 = smul.addr %s7707, 32
        %s7709 = smul.addr %s7708, 8
        %s7710 = scalar_lea.vmem %s5, %s7709
      $region52: #{hidden_reinforcer_forward.1} parent=47 // pred_fallthru
        _
    $region48: #{hidden_reinforcer_forward.1} parent=5 // pred_fallthru
      _
  $region6: #{hidden_reinforcer_forward.1} parent=0 // loop_footer
    %s15 = sadd.s32 1, %s11
  $region7: #{hidden_reinforcer_forward.1} parent=0 // loop_footer_branch
    %10 = sbr.rel target = $region3
  $region8: #{hidden_reinforcer_forward.1} parent=0 // loop_exit
    _

</llo_original>
